<compile_context>
chip_gen: v5e
topology: v5e:2x2
jax: 0.10.0
libtpu: 0.0.40
codegen_flags: <defaults>
</compile_context>

<pallas_src>
import jax
import jax.numpy as jnp
from jax.experimental import pallas as pl
from jax.experimental.pallas import tpu as pltpu


# ------------------------- static shape constants ---------------------------
H_IN, W_IN, C_IN = 30, 30, 3        # fc1's 720 = 20*6*6 features imply a 30x30 input
C1_OUT, C2_OUT = 10, 20
HO1, WO1 = H_IN - 2, W_IN - 2       # 28, 28  conv1 output
HP1, WP1 = HO1 // 2, WO1 // 2       # 14, 14  pooled conv1 (== conv2 input)
HO2, WO2 = HP1 - 2, WP1 - 2         # 12, 12  conv2 output
HP2, WP2 = HO2 // 2, WO2 // 2       # 6, 6    pooled conv2

K1_PAD = 32                         # conv1 im2col depth: 9 taps * 3 cin = 27 -> 32
C_PAD = 128                         # lane-dense channel padding for conv outputs
C2_PAD = 32                         # conv2 channels carried to the FC stage (20 -> 32)
OUT_ROWS = HP2 * WP2                # 36
FEAT_DIM = OUT_ROWS * C2_PAD        # 1152 = 9*128 (lane-aligned fc1 contraction)
MID_ROWS = 200                      # 14*14 pooled-conv1 rows + slack for shifted conv2 reads (<=198)
N_FC1 = 1024


def _pick_img_tile(B):
    """Images per grid step: amortize per-step overhead but keep >=2 steps for v7x's 2 TCs."""
    for t in (8, 4, 2):
        if B % t == 0 and B // t >= 2:
            return t
    return 1


# ----------------------------- Pallas kernels -------------------------------

def _conv_stack_kernel(x_ref, w1_ref, b1_ref, w2_ref, b2_ref, o_ref, mid_ref, chunk_ref):
    """Fused conv1(3x3)+pool+ReLU -> conv2(3x3)+pool+ReLU for one tile of images.

    x_ref    : (IMG_TILE, 784, 32) bf16   conv1 im2col (row = y*28+x, lane = 3*tap + cin)
    w1_ref   : (32, 128)   bf16           conv1 weights (K = tap*3+cin, N = out channel)
    b1_ref   : (1, 128)    f32
    w2_ref   : (1152, 128) bf16           conv2 weights, tap-major rows (t*128 + cin)
    b2_ref   : (1, 128)    f32
    o_ref    : (IMG_TILE, 36, 32) f32     pooled conv2 (row = y*6+x, lane = out channel)
    mid_ref  : (200, 128)  f32  scratch   pooled conv1, flat row = y*14+x (+ slack tail)
    chunk_ref: (56, 128)   f32  scratch   per-pooled-row staging for the 2x2 max-pool
    """
    img_tile = x_ref.shape[0]
    w1 = w1_ref[...]
    b1 = b1_ref[...]
    b2 = b2_ref[...]

    # Slack rows are only read through shifted conv2 loads that feed never-pooled garbage
    # output rows; zero them once anyway so every value in flight is deterministic.
    tail = MID_ROWS - HP1 * WP1
    mid_ref[pl.ds(HP1 * WP1, tail), :] = jnp.zeros((tail, C_PAD), jnp.float32)

    for img in range(img_tile):
        # ---- conv1: one K=32 matmul per 2-conv-row chunk, then 2x2 pool + bias + ReLU ----
        for py in range(HP1):                                   # 14 pooled rows
            lhs = x_ref[img, pl.ds(py * 2 * WO1, 2 * WO1), :]   # (56, 32) bf16
            chunk_ref[...] = jnp.dot(lhs, w1, preferred_element_type=jnp.float32)
            m = jnp.maximum(
                jnp.maximum(chunk_ref[pl.ds(0, WP1, stride=2), :],
                            chunk_ref[pl.ds(1, WP1, stride=2), :]),
                jnp.maximum(chunk_ref[pl.ds(WO1, WP1, stride=2), :],
                            chunk_ref[pl.ds(WO1 + 1, WP1, stride=2), :]))
            # Per-channel bias & ReLU commute with max-pool.
            mid_ref[pl.ds(py * WP1, WP1), :] = jnp.maximum(m + b1, 0.0)

        # ---- conv2: 9 taps register-accumulated per chunk, then 2x2 pool + bias + ReLU ----
        for py in range(HP2):                                   # 6 pooled rows
            base = 2 * py * WP1
            acc = None
            for t in range(9):
                dy, dx = divmod(t, 3)
                lhs = mid_ref[pl.ds(base + dy * WP1 + dx, 2 * WP1), :].astype(jnp.bfloat16)
                part = jnp.dot(lhs, w2_ref[pl.ds(t * C_PAD, C_PAD), :],
                               preferred_element_type=jnp.float32)          # (28, 128) f32
                acc = part if acc is None else acc + part
            chunk_ref[pl.ds(0, 2 * WP1), :] = acc
            m = jnp.maximum(
                jnp.maximum(chunk_ref[pl.ds(0, WP2, stride=2), :],
                            chunk_ref[pl.ds(1, WP2, stride=2), :]),
                jnp.maximum(chunk_ref[pl.ds(WP1, WP2, stride=2), :],
                            chunk_ref[pl.ds(WP1 + 1, WP2, stride=2), :]))
            o_ref[img, pl.ds(py * WP2, WP2), :] = jnp.maximum(m + b2, 0.0)[:, :C2_PAD]


def _fc_kernel(x_ref, w1_ref, b1_ref, w2_ref, b2_ref, o_ref):
    # fc1 + bias + ReLU, then fc2 + bias; bf16 MXU operands, f32 accumulation / elementwise.
    x = x_ref[...].astype(jnp.bfloat16)
    h = jnp.dot(x, w1_ref[...], preferred_element_type=jnp.float32) + b1_ref[...]
    h = jnp.maximum(h, 0.0)
    # dropout == identity in eval mode
    o_ref[...] = jnp.dot(h.astype(jnp.bfloat16), w2_ref[...],
                         preferred_element_type=jnp.float32) + b2_ref[...]


# ------------------------------ parameters ----------------------------------

def init_params(key):
    """PyTorch-layout CNN parameters."""
    ks = jax.random.split(key, 8)
    s = 0.05
    return {
        "conv1_w": s * jax.random.normal(ks[0], (C1_OUT, C_IN, 3, 3), jnp.float32),
        "conv1_b": s * jax.random.normal(ks[1], (C1_OUT,), jnp.float32),
        "conv2_w": s * jax.random.normal(ks[2], (C2_OUT, C1_OUT, 3, 3), jnp.float32),
        "conv2_b": s * jax.random.normal(ks[3], (C2_OUT,), jnp.float32),
        "fc1_w": s * jax.random.normal(ks[4], (N_FC1, 720), jnp.float32),   # (out, in)
        "fc1_b": s * jax.random.normal(ks[5], (N_FC1,), jnp.float32),
        "fc2_w": s * jax.random.normal(ks[6], (2, N_FC1), jnp.float32),
        "fc2_b": s * jax.random.normal(ks[7], (2,), jnp.float32),
    }


def prepare_params(p):
    """One-time weight preprocessing: padding / transposes / row permutations, all hoisted."""
    # conv1: OIHW (10,3,3,3) -> rows (dy,dx,cin) row-major = tap*3+cin, cols = out channel.
    w1 = jnp.transpose(p["conv1_w"], (2, 3, 1, 0)).reshape(9 * C_IN, C1_OUT)
    w1 = jnp.pad(w1, ((0, K1_PAD - 9 * C_IN), (0, C_PAD - C1_OUT))).astype(jnp.bfloat16)
    b1 = jnp.pad(p["conv1_b"].astype(jnp.float32), (0, C_PAD - C1_OUT)).reshape(1, C_PAD)

    # conv2: OIHW (20,10,3,3) -> (kh,kw,cin,cout), pad cin/cout to 128 -> (9*128, 128).
    w2 = jnp.transpose(p["conv2_w"], (2, 3, 1, 0))
    w2 = jnp.pad(w2, ((0, 0), (0, 0), (0, C_PAD - C1_OUT), (0, C_PAD - C2_OUT)))
    w2 = w2.reshape(9 * C_PAD, C_PAD).astype(jnp.bfloat16)
    b2 = jnp.pad(p["conv2_b"].astype(jnp.float32), (0, C_PAD - C2_OUT)).reshape(1, C_PAD)

    # fc1: PyTorch feature index = c*36 + s.  Permute rows to spatial-major with a 32-lane
    # channel pad (row = s*32 + c) so kernel-1's output reshapes straight into fc1's LHS.
    w_fc1 = p["fc1_w"].T.reshape(C2_OUT, OUT_ROWS, N_FC1)        # [c, s, out]
    w_fc1 = jnp.transpose(w_fc1, (1, 0, 2))                      # [s, c, out]
    w_fc1 = jnp.pad(w_fc1, ((0, 0), (0, C2_PAD - C2_OUT), (0, 0)))
    w_fc1 = w_fc1.reshape(FEAT_DIM, N_FC1).astype(jnp.bfloat16)  # (1152, 1024)
    fc1_b = p["fc1_b"].astype(jnp.float32).reshape(1, N_FC1)

    fc2_w = jnp.pad(p["fc2_w"].T, ((0, 0), (0, C_PAD - 2))).astype(jnp.bfloat16)  # (1024, 128)
    fc2_b = jnp.pad(p["fc2_b"].astype(jnp.float32), (0, C_PAD - 2)).reshape(1, C_PAD)

    return {"w1": w1, "b1": b1, "w2": w2, "b2": b2,
            "fc1_w": w_fc1, "fc1_b": fc1_b, "fc2_w": fc2_w, "fc2_b": fc2_b}


# ------------------------------ CNN forward ----------------------------------

@jax.jit
def cnn_forward(prep, x_nchw):
    B = x_nchw.shape[0]
    x = jnp.transpose(x_nchw, (0, 2, 3, 1)).astype(jnp.float32)            # (B, 30, 30, 3)

    # conv1 im2col (one-time, wrapper-side): row = output pixel y*28+x, lane = 3*tap + cin.
    patches = [x[:, dy:dy + HO1, dx:dx + WO1, :] for dy in range(3) for dx in range(3)]
    im = jnp.concatenate(patches, axis=-1)                                 # (B, 28, 28, 27)
    im = jnp.pad(im, ((0, 0), (0, 0), (0, 0), (0, K1_PAD - 9 * C_IN)))
    im = im.reshape(B, HO1 * WO1, K1_PAD).astype(jnp.bfloat16)             # (B, 784, 32)

    img_tile = _pick_img_tile(B)
    pooled = pl.pallas_call(
        _conv_stack_kernel,
        out_shape=jax.ShapeDtypeStruct((B, OUT_ROWS, C2_PAD), jnp.float32),
        grid=(B // img_tile,),
        in_specs=[
            pl.BlockSpec((img_tile, HO1 * WO1, K1_PAD), lambda i: (i, 0, 0)),
            pl.BlockSpec((K1_PAD, C_PAD), lambda i: (0, 0)),
            pl.BlockSpec((1, C_PAD), lambda i: (0, 0)),
            pl.BlockSpec((9 * C_PAD, C_PAD), lambda i: (0, 0)),
            pl.BlockSpec((1, C_PAD), lambda i: (0, 0)),
        ],
        out_specs=pl.BlockSpec((img_tile, OUT_ROWS, C2_PAD), lambda i: (i, 0, 0)),
        scratch_shapes=[
            pltpu.VMEM((MID_ROWS, C_PAD), jnp.float32),   # pooled conv1 (conv2 input)
            pltpu.VMEM((2 * WO1, C_PAD), jnp.float32),    # pooling staging chunk
        ],
        compiler_params=pltpu.CompilerParams(
            dimension_semantics=("parallel",),
            vmem_limit_bytes=32 * 1024 * 1024,            # ample; ~1.6 MB/step footprint
        ),
    )(im, prep["w1"], prep["b1"], prep["w2"], prep["b2"])

    # Spatial-major features with 32-lane channel pad: a free, contiguous reshape (no transpose,
    # no slice); fc1's weight rows were permuted to match in prepare_params.
    feats = pooled.reshape(B, FEAT_DIM)                                    # (B, 1152)

    fc_tile = min(B, 256)
    pad = (-B) % fc_tile
    if pad:
        feats = jnp.pad(feats, ((0, pad), (0, 0)))
    Bp = B + pad

    logits = pl.pallas_call(
        _fc_kernel,
        out_shape=jax.ShapeDtypeStruct((Bp, C_PAD), jnp.float32),
        grid=(Bp // fc_tile,),
        in_specs=[
            pl.BlockSpec((fc_tile, FEAT_DIM), lambda i: (i, 0)),
            pl.BlockSpec((FEAT_DIM, N_FC1), lambda i: (0, 0)),
            pl.BlockSpec((1, N_FC1), lambda i: (0, 0)),
            pl.BlockSpec((N_FC1, C_PAD), lambda i: (0, 0)),
            pl.BlockSpec((1, C_PAD), lambda i: (0, 0)),
        ],
        out_specs=pl.BlockSpec((fc_tile, C_PAD), lambda i: (i, 0)),
        compiler_params=pltpu.CompilerParams(
            dimension_semantics=("parallel",),
            vmem_limit_bytes=32 * 1024 * 1024,
        ),
    )(feats, prep["fc1_w"], prep["fc1_b"], prep["fc2_w"], prep["fc2_b"])
    return logits[:B, :2]


# --------------------------- pure-JAX reference -------------------------------

def reference_forward(p, x_nchw):
    x = jnp.transpose(x_nchw, (0, 2, 3, 1)).astype(jnp.float32)

    def conv(x, w, b):
        y = jax.lax.conv_general_dilated(
            x, jnp.transpose(w, (2, 3, 1, 0)), (1, 1), "VALID",
            dimension_numbers=("NHWC", "HWIO", "NHWC"))
        return y + b

    def pool2(x):
        return jax.lax.reduce_window(x, -jnp.inf, jax.lax.max,
                                     (1, 2, 2, 1), (1, 2, 2, 1), "VALID")

    x = jnp.maximum(pool2(conv(x, p["conv1_w"], p["conv1_b"])), 0.0)
    x = jnp.maximum(pool2(conv(x, p["conv2_w"], p["conv2_b"])), 0.0)
    B = x.shape[0]
    x = jnp.transpose(x, (0, 3, 1, 2)).reshape(B, -1)
    x = jnp.maximum(x @ p["fc1_w"].T + p["fc1_b"], 0.0)
    return x @ p["fc2_w"].T + p["fc2_b"]


if __name__ == "__main__":
    key = jax.random.PRNGKey(0)
    kx, kp = jax.random.split(key)
    # Input spatial size 30x30 is what fc1's 720 = 20*6*6 features imply.
    x = jax.random.normal(kx, (2, 3, 30, 30), dtype=jnp.float32)
    raw = init_params(kp)
    prep = prepare_params(raw)

    out = jax.block_until_ready(cnn_forward(prep, x))
    assert out.shape == (2, 2), out.shape

    ref = jax.block_until_ready(reference_forward(raw, x))
    err = float(jnp.max(jnp.abs(out - ref)))
    # bf16 MXU operands throughout (per perf review) add ~1e-3..1e-2 abs error vs the f32 ref.
    assert err < 4e-2, f"max abs error vs reference: {err}"
    print("KERNEL_OK")
</pallas_src>

<mosaic_0001>
module attributes {stable_mosaic.version = 11 : i64} {
  func.func @_conv_stack_kernel(%arg0: i32, %arg1: memref<1x784x32xbf16, #tpu.memory_space<vmem>>, %arg2: memref<32x128xbf16, #tpu.memory_space<vmem>>, %arg3: memref<1x128xf32, #tpu.memory_space<vmem>>, %arg4: memref<1152x128xbf16, #tpu.memory_space<vmem>>, %arg5: memref<1x128xf32, #tpu.memory_space<vmem>>, %arg6: memref<1x36x32xf32, #tpu.memory_space<vmem>>, %arg7: memref<200x128xf32, #tpu.memory_space<vmem>>, %arg8: memref<56x128xf32, #tpu.memory_space<vmem>>) attributes {dimension_semantics = [#tpu.dimension_semantics<parallel>], iteration_bounds = array<i64: 2>, scalar_prefetch = 0 : i64, scratch_operands = 2 : i64, tpu.core_type = #tpu.core_type<tc>, window_params = [{transform_indices = @transform_0, window_bounds = array<i64: 1, 784, 32>}, {pipeline_mode = #tpu.pipeline_mode<synchronous>, transform_indices = @transform_1, window_bounds = array<i64: 32, 128>}, {pipeline_mode = #tpu.pipeline_mode<synchronous>, transform_indices = @transform_2, window_bounds = array<i64: 1, 128>}, {pipeline_mode = #tpu.pipeline_mode<synchronous>, transform_indices = @transform_3, window_bounds = array<i64: 1152, 128>}, {pipeline_mode = #tpu.pipeline_mode<synchronous>, transform_indices = @transform_4, window_bounds = array<i64: 1, 128>}, {transform_indices = @transform_5, window_bounds = array<i64: 1, 36, 32>}]} {
    %c0 = arith.constant 0 : index
    %c0_0 = arith.constant 0 : index
    %0 = vector.load %arg2[%c0, %c0_0] : memref<32x128xbf16, #tpu.memory_space<vmem>>, vector<32x128xbf16>
    %c0_1 = arith.constant 0 : index
    %c0_2 = arith.constant 0 : index
    %1 = vector.load %arg3[%c0_1, %c0_2] : memref<1x128xf32, #tpu.memory_space<vmem>>, vector<1x128xf32>
    %c0_3 = arith.constant 0 : index
    %c0_4 = arith.constant 0 : index
    %2 = vector.load %arg5[%c0_3, %c0_4] : memref<1x128xf32, #tpu.memory_space<vmem>>, vector<1x128xf32>
    %cst = arith.constant 0.000000e+00 : f32
    %3 = vector.broadcast %cst : f32 to vector<4x128xf32>
    %c196 = arith.constant 196 : index
    %c0_5 = arith.constant 0 : index
    %4 = vector.load %arg7[%c196, %c0_5] : memref<200x128xf32, #tpu.memory_space<vmem>>, vector<4x128xf32>
    tpu.vector_store %arg7[%c196, %c0_5], %3 {strides = array<i32>} : memref<200x128xf32, #tpu.memory_space<vmem>>, vector<4x128xf32>,
    %c0_6 = arith.constant 0 : index
    %c0_7 = arith.constant 0 : index
    %c0_8 = arith.constant 0 : index
    %5 = vector.load %arg1[%c0_6, %c0_7, %c0_8] : memref<1x784x32xbf16, #tpu.memory_space<vmem>>, vector<1x56x32xbf16>
    %6 = vector.shape_cast %5 : vector<1x56x32xbf16> to vector<56x32xbf16>
    %cst_9 = arith.constant dense<0.000000e+00> : vector<56x128xf32>
    %7 = tpu.matmul %6, %0, %cst_9 {dimension_numbers = #tpu.dot_dimension_numbers<[1], [0], [0], [1], [0, 0, 1, 1], [], []>} : vector<56x32xbf16>, vector<32x128xbf16>, vector<56x128xf32> -> vector<56x128xf32>
    %c0_10 = arith.constant 0 : index
    %c0_11 = arith.constant 0 : index
    %8 = vector.load %arg8[%c0_10, %c0_11] : memref<56x128xf32, #tpu.memory_space<vmem>>, vector<56x128xf32>
    tpu.vector_store %arg8[%c0_10, %c0_11], %7 {strides = array<i32>} : memref<56x128xf32, #tpu.memory_space<vmem>>, vector<56x128xf32>,
    %c0_12 = arith.constant 0 : index
    %c0_13 = arith.constant 0 : index
    %9 = tpu.strided_load %arg8[%c0_12, %c0_13] {strides = array<i32: 2, 1>} : memref<56x128xf32, #tpu.memory_space<vmem>>, vector<14x128xf32>
    %c1 = arith.constant 1 : index
    %c0_14 = arith.constant 0 : index
    %10 = tpu.strided_load %arg8[%c1, %c0_14] {strides = array<i32: 2, 1>} : memref<56x128xf32, #tpu.memory_space<vmem>>, vector<14x128xf32>
    %11 = arith.maximumf %9, %10 : vector<14x128xf32>
    %c28 = arith.constant 28 : index
    %c0_15 = arith.constant 0 : index
    %12 = tpu.strided_load %arg8[%c28, %c0_15] {strides = array<i32: 2, 1>} : memref<56x128xf32, #tpu.memory_space<vmem>>, vector<14x128xf32>
    %c29 = arith.constant 29 : index
    %c0_16 = arith.constant 0 : index
    %13 = tpu.strided_load %arg8[%c29, %c0_16] {strides = array<i32: 2, 1>} : memref<56x128xf32, #tpu.memory_space<vmem>>, vector<14x128xf32>
    %14 = arith.maximumf %12, %13 : vector<14x128xf32>
    %15 = arith.maximumf %11, %14 : vector<14x128xf32>
    %16 = vector.broadcast %1 : vector<1x128xf32> to vector<14x128xf32>
    %17 = arith.addf %15, %16 : vector<14x128xf32>
    %cst_17 = arith.constant 0.000000e+00 : f32
    %18 = vector.broadcast %cst_17 : f32 to vector<14x128xf32>
    %19 = arith.maximumf %17, %18 : vector<14x128xf32>
    %c0_18 = arith.constant 0 : index
    %c0_19 = arith.constant 0 : index
    %20 = vector.load %arg7[%c0_18, %c0_19] : memref<200x128xf32, #tpu.memory_space<vmem>>, vector<14x128xf32>
    tpu.vector_store %arg7[%c0_18, %c0_19], %19 {strides = array<i32>} : memref<200x128xf32, #tpu.memory_space<vmem>>, vector<14x128xf32>,
    %c0_20 = arith.constant 0 : index
    %c56 = arith.constant 56 : index
    %c0_21 = arith.constant 0 : index
    %21 = vector.load %arg1[%c0_20, %c56, %c0_21] : memref<1x784x32xbf16, #tpu.memory_space<vmem>>, vector<1x56x32xbf16>
    %22 = vector.shape_cast %21 : vector<1x56x32xbf16> to vector<56x32xbf16>
    %cst_22 = arith.constant dense<0.000000e+00> : vector<56x128xf32>
    %23 = tpu.matmul %22, %0, %cst_22 {dimension_numbers = #tpu.dot_dimension_numbers<[1], [0], [0], [1], [0, 0, 1, 1], [], []>} : vector<56x32xbf16>, vector<32x128xbf16>, vector<56x128xf32> -> vector<56x128xf32>
    %c0_23 = arith.constant 0 : index
    %c0_24 = arith.constant 0 : index
    %24 = vector.load %arg8[%c0_23, %c0_24] : memref<56x128xf32, #tpu.memory_space<vmem>>, vector<56x128xf32>
    tpu.vector_store %arg8[%c0_23, %c0_24], %23 {strides = array<i32>} : memref<56x128xf32, #tpu.memory_space<vmem>>, vector<56x128xf32>,
    %c0_25 = arith.constant 0 : index
    %c0_26 = arith.constant 0 : index
    %25 = tpu.strided_load %arg8[%c0_25, %c0_26] {strides = array<i32: 2, 1>} : memref<56x128xf32, #tpu.memory_space<vmem>>, vector<14x128xf32>
    %c1_27 = arith.constant 1 : index
    %c0_28 = arith.constant 0 : index
    %26 = tpu.strided_load %arg8[%c1_27, %c0_28] {strides = array<i32: 2, 1>} : memref<56x128xf32, #tpu.memory_space<vmem>>, vector<14x128xf32>
    %27 = arith.maximumf %25, %26 : vector<14x128xf32>
    %c28_29 = arith.constant 28 : index
    %c0_30 = arith.constant 0 : index
    %28 = tpu.strided_load %arg8[%c28_29, %c0_30] {strides = array<i32: 2, 1>} : memref<56x128xf32, #tpu.memory_space<vmem>>, vector<14x128xf32>
    %c29_31 = arith.constant 29 : index
    %c0_32 = arith.constant 0 : index
    %29 = tpu.strided_load %arg8[%c29_31, %c0_32] {strides = array<i32: 2, 1>} : memref<56x128xf32, #tpu.memory_space<vmem>>, vector<14x128xf32>
    %30 = arith.maximumf %28, %29 : vector<14x128xf32>
    %31 = arith.maximumf %27, %30 : vector<14x128xf32>
    %32 = vector.broadcast %1 : vector<1x128xf32> to vector<14x128xf32>
    %33 = arith.addf %31, %32 : vector<14x128xf32>
    %cst_33 = arith.constant 0.000000e+00 : f32
    %34 = vector.broadcast %cst_33 : f32 to vector<14x128xf32>
    %35 = arith.maximumf %33, %34 : vector<14x128xf32>
    %c14 = arith.constant 14 : index
    %c0_34 = arith.constant 0 : index
    %36 = vector.load %arg7[%c14, %c0_34] : memref<200x128xf32, #tpu.memory_space<vmem>>, vector<14x128xf32>
    tpu.vector_store %arg7[%c14, %c0_34], %35 {strides = array<i32>} : memref<200x128xf32, #tpu.memory_space<vmem>>, vector<14x128xf32>,
    %c0_35 = arith.constant 0 : index
    %c112 = arith.constant 112 : index
    %c0_36 = arith.constant 0 : index
    %37 = vector.load %arg1[%c0_35, %c112, %c0_36] : memref<1x784x32xbf16, #tpu.memory_space<vmem>>, vector<1x56x32xbf16>
    %38 = vector.shape_cast %37 : vector<1x56x32xbf16> to vector<56x32xbf16>
    %cst_37 = arith.constant dense<0.000000e+00> : vector<56x128xf32>
    %39 = tpu.matmul %38, %0, %cst_37 {dimension_numbers = #tpu.dot_dimension_numbers<[1], [0], [0], [1], [0, 0, 1, 1], [], []>} : vector<56x32xbf16>, vector<32x128xbf16>, vector<56x128xf32> -> vector<56x128xf32>
    %c0_38 = arith.constant 0 : index
    %c0_39 = arith.constant 0 : index
    %40 = vector.load %arg8[%c0_38, %c0_39] : memref<56x128xf32, #tpu.memory_space<vmem>>, vector<56x128xf32>
    tpu.vector_store %arg8[%c0_38, %c0_39], %39 {strides = array<i32>} : memref<56x128xf32, #tpu.memory_space<vmem>>, vector<56x128xf32>,
    %c0_40 = arith.constant 0 : index
    %c0_41 = arith.constant 0 : index
    %41 = tpu.strided_load %arg8[%c0_40, %c0_41] {strides = array<i32: 2, 1>} : memref<56x128xf32, #tpu.memory_space<vmem>>, vector<14x128xf32>
    %c1_42 = arith.constant 1 : index
    %c0_43 = arith.constant 0 : index
    %42 = tpu.strided_load %arg8[%c1_42, %c0_43] {strides = array<i32: 2, 1>} : memref<56x128xf32, #tpu.memory_space<vmem>>, vector<14x128xf32>
    %43 = arith.maximumf %41, %42 : vector<14x128xf32>
    %c28_44 = arith.constant 28 : index
    %c0_45 = arith.constant 0 : index
    %44 = tpu.strided_load %arg8[%c28_44, %c0_45] {strides = array<i32: 2, 1>} : memref<56x128xf32, #tpu.memory_space<vmem>>, vector<14x128xf32>
    %c29_46 = arith.constant 29 : index
    %c0_47 = arith.constant 0 : index
    %45 = tpu.strided_load %arg8[%c29_46, %c0_47] {strides = array<i32: 2, 1>} : memref<56x128xf32, #tpu.memory_space<vmem>>, vector<14x128xf32>
    %46 = arith.maximumf %44, %45 : vector<14x128xf32>
    %47 = arith.maximumf %43, %46 : vector<14x128xf32>
    %48 = vector.broadcast %1 : vector<1x128xf32> to vector<14x128xf32>
    %49 = arith.addf %47, %48 : vector<14x128xf32>
    %cst_48 = arith.constant 0.000000e+00 : f32
    %50 = vector.broadcast %cst_48 : f32 to vector<14x128xf32>
    %51 = arith.maximumf %49, %50 : vector<14x128xf32>
    %c28_49 = arith.constant 28 : index
    %c0_50 = arith.constant 0 : index
    %52 = vector.load %arg7[%c28_49, %c0_50] : memref<200x128xf32, #tpu.memory_space<vmem>>, vector<14x128xf32>
    tpu.vector_store %arg7[%c28_49, %c0_50], %51 {strides = array<i32>} : memref<200x128xf32, #tpu.memory_space<vmem>>, vector<14x128xf32>,
    %c0_51 = arith.constant 0 : index
    %c168 = arith.constant 168 : index
    %c0_52 = arith.constant 0 : index
    %53 = vector.load %arg1[%c0_51, %c168, %c0_52] : memref<1x784x32xbf16, #tpu.memory_space<vmem>>, vector<1x56x32xbf16>
    %54 = vector.shape_cast %53 : vector<1x56x32xbf16> to vector<56x32xbf16>
    %cst_53 = arith.constant dense<0.000000e+00> : vector<56x128xf32>
    %55 = tpu.matmul %54, %0, %cst_53 {dimension_numbers = #tpu.dot_dimension_numbers<[1], [0], [0], [1], [0, 0, 1, 1], [], []>} : vector<56x32xbf16>, vector<32x128xbf16>, vector<56x128xf32> -> vector<56x128xf32>
    %c0_54 = arith.constant 0 : index
    %c0_55 = arith.constant 0 : index
    %56 = vector.load %arg8[%c0_54, %c0_55] : memref<56x128xf32, #tpu.memory_space<vmem>>, vector<56x128xf32>
    tpu.vector_store %arg8[%c0_54, %c0_55], %55 {strides = array<i32>} : memref<56x128xf32, #tpu.memory_space<vmem>>, vector<56x128xf32>,
    %c0_56 = arith.constant 0 : index
    %c0_57 = arith.constant 0 : index
    %57 = tpu.strided_load %arg8[%c0_56, %c0_57] {strides = array<i32: 2, 1>} : memref<56x128xf32, #tpu.memory_space<vmem>>, vector<14x128xf32>
    %c1_58 = arith.constant 1 : index
    %c0_59 = arith.constant 0 : index
    %58 = tpu.strided_load %arg8[%c1_58, %c0_59] {strides = array<i32: 2, 1>} : memref<56x128xf32, #tpu.memory_space<vmem>>, vector<14x128xf32>
    %59 = arith.maximumf %57, %58 : vector<14x128xf32>
    %c28_60 = arith.constant 28 : index
    %c0_61 = arith.constant 0 : index
    %60 = tpu.strided_load %arg8[%c28_60, %c0_61] {strides = array<i32: 2, 1>} : memref<56x128xf32, #tpu.memory_space<vmem>>, vector<14x128xf32>
    %c29_62 = arith.constant 29 : index
    %c0_63 = arith.constant 0 : index
    %61 = tpu.strided_load %arg8[%c29_62, %c0_63] {strides = array<i32: 2, 1>} : memref<56x128xf32, #tpu.memory_space<vmem>>, vector<14x128xf32>
    %62 = arith.maximumf %60, %61 : vector<14x128xf32>
    %63 = arith.maximumf %59, %62 : vector<14x128xf32>
    %64 = vector.broadcast %1 : vector<1x128xf32> to vector<14x128xf32>
    %65 = arith.addf %63, %64 : vector<14x128xf32>
    %cst_64 = arith.constant 0.000000e+00 : f32
    %66 = vector.broadcast %cst_64 : f32 to vector<14x128xf32>
    %67 = arith.maximumf %65, %66 : vector<14x128xf32>
    %c42 = arith.constant 42 : index
    %c0_65 = arith.constant 0 : index
    %68 = vector.load %arg7[%c42, %c0_65] : memref<200x128xf32, #tpu.memory_space<vmem>>, vector<14x128xf32>
    tpu.vector_store %arg7[%c42, %c0_65], %67 {strides = array<i32>} : memref<200x128xf32, #tpu.memory_space<vmem>>, vector<14x128xf32>,
    %c0_66 = arith.constant 0 : index
    %c224 = arith.constant 224 : index
    %c0_67 = arith.constant 0 : index
    %69 = vector.load %arg1[%c0_66, %c224, %c0_67] : memref<1x784x32xbf16, #tpu.memory_space<vmem>>, vector<1x56x32xbf16>
    %70 = vector.shape_cast %69 : vector<1x56x32xbf16> to vector<56x32xbf16>
    %cst_68 = arith.constant dense<0.000000e+00> : vector<56x128xf32>
    %71 = tpu.matmul %70, %0, %cst_68 {dimension_numbers = #tpu.dot_dimension_numbers<[1], [0], [0], [1], [0, 0, 1, 1], [], []>} : vector<56x32xbf16>, vector<32x128xbf16>, vector<56x128xf32> -> vector<56x128xf32>
    %c0_69 = arith.constant 0 : index
    %c0_70 = arith.constant 0 : index
    %72 = vector.load %arg8[%c0_69, %c0_70] : memref<56x128xf32, #tpu.memory_space<vmem>>, vector<56x128xf32>
    tpu.vector_store %arg8[%c0_69, %c0_70], %71 {strides = array<i32>} : memref<56x128xf32, #tpu.memory_space<vmem>>, vector<56x128xf32>,
    %c0_71 = arith.constant 0 : index
    %c0_72 = arith.constant 0 : index
    %73 = tpu.strided_load %arg8[%c0_71, %c0_72] {strides = array<i32: 2, 1>} : memref<56x128xf32, #tpu.memory_space<vmem>>, vector<14x128xf32>
    %c1_73 = arith.constant 1 : index
    %c0_74 = arith.constant 0 : index
    %74 = tpu.strided_load %arg8[%c1_73, %c0_74] {strides = array<i32: 2, 1>} : memref<56x128xf32, #tpu.memory_space<vmem>>, vector<14x128xf32>
    %75 = arith.maximumf %73, %74 : vector<14x128xf32>
    %c28_75 = arith.constant 28 : index
    %c0_76 = arith.constant 0 : index
    %76 = tpu.strided_load %arg8[%c28_75, %c0_76] {strides = array<i32: 2, 1>} : memref<56x128xf32, #tpu.memory_space<vmem>>, vector<14x128xf32>
    %c29_77 = arith.constant 29 : index
    %c0_78 = arith.constant 0 : index
    %77 = tpu.strided_load %arg8[%c29_77, %c0_78] {strides = array<i32: 2, 1>} : memref<56x128xf32, #tpu.memory_space<vmem>>, vector<14x128xf32>
    %78 = arith.maximumf %76, %77 : vector<14x128xf32>
    %79 = arith.maximumf %75, %78 : vector<14x128xf32>
    %80 = vector.broadcast %1 : vector<1x128xf32> to vector<14x128xf32>
    %81 = arith.addf %79, %80 : vector<14x128xf32>
    %cst_79 = arith.constant 0.000000e+00 : f32
    %82 = vector.broadcast %cst_79 : f32 to vector<14x128xf32>
    %83 = arith.maximumf %81, %82 : vector<14x128xf32>
    %c56_80 = arith.constant 56 : index
    %c0_81 = arith.constant 0 : index
    %84 = vector.load %arg7[%c56_80, %c0_81] : memref<200x128xf32, #tpu.memory_space<vmem>>, vector<14x128xf32>
    tpu.vector_store %arg7[%c56_80, %c0_81], %83 {strides = array<i32>} : memref<200x128xf32, #tpu.memory_space<vmem>>, vector<14x128xf32>,
    %c0_82 = arith.constant 0 : index
    %c280 = arith.constant 280 : index
    %c0_83 = arith.constant 0 : index
    %85 = vector.load %arg1[%c0_82, %c280, %c0_83] : memref<1x784x32xbf16, #tpu.memory_space<vmem>>, vector<1x56x32xbf16>
    %86 = vector.shape_cast %85 : vector<1x56x32xbf16> to vector<56x32xbf16>
    %cst_84 = arith.constant dense<0.000000e+00> : vector<56x128xf32>
    %87 = tpu.matmul %86, %0, %cst_84 {dimension_numbers = #tpu.dot_dimension_numbers<[1], [0], [0], [1], [0, 0, 1, 1], [], []>} : vector<56x32xbf16>, vector<32x128xbf16>, vector<56x128xf32> -> vector<56x128xf32>
    %c0_85 = arith.constant 0 : index
    %c0_86 = arith.constant 0 : index
    %88 = vector.load %arg8[%c0_85, %c0_86] : memref<56x128xf32, #tpu.memory_space<vmem>>, vector<56x128xf32>
    tpu.vector_store %arg8[%c0_85, %c0_86], %87 {strides = array<i32>} : memref<56x128xf32, #tpu.memory_space<vmem>>, vector<56x128xf32>,
    %c0_87 = arith.constant 0 : index
    %c0_88 = arith.constant 0 : index
    %89 = tpu.strided_load %arg8[%c0_87, %c0_88] {strides = array<i32: 2, 1>} : memref<56x128xf32, #tpu.memory_space<vmem>>, vector<14x128xf32>
    %c1_89 = arith.constant 1 : index
    %c0_90 = arith.constant 0 : index
    %90 = tpu.strided_load %arg8[%c1_89, %c0_90] {strides = array<i32: 2, 1>} : memref<56x128xf32, #tpu.memory_space<vmem>>, vector<14x128xf32>
    %91 = arith.maximumf %89, %90 : vector<14x128xf32>
    %c28_91 = arith.constant 28 : index
    %c0_92 = arith.constant 0 : index
    %92 = tpu.strided_load %arg8[%c28_91, %c0_92] {strides = array<i32: 2, 1>} : memref<56x128xf32, #tpu.memory_space<vmem>>, vector<14x128xf32>
    %c29_93 = arith.constant 29 : index
    %c0_94 = arith.constant 0 : index
    %93 = tpu.strided_load %arg8[%c29_93, %c0_94] {strides = array<i32: 2, 1>} : memref<56x128xf32, #tpu.memory_space<vmem>>, vector<14x128xf32>
    %94 = arith.maximumf %92, %93 : vector<14x128xf32>
    %95 = arith.maximumf %91, %94 : vector<14x128xf32>
    %96 = vector.broadcast %1 : vector<1x128xf32> to vector<14x128xf32>
    %97 = arith.addf %95, %96 : vector<14x128xf32>
    %cst_95 = arith.constant 0.000000e+00 : f32
    %98 = vector.broadcast %cst_95 : f32 to vector<14x128xf32>
    %99 = arith.maximumf %97, %98 : vector<14x128xf32>
    %c70 = arith.constant 70 : index
    %c0_96 = arith.constant 0 : index
    %100 = vector.load %arg7[%c70, %c0_96] : memref<200x128xf32, #tpu.memory_space<vmem>>, vector<14x128xf32>
    tpu.vector_store %arg7[%c70, %c0_96], %99 {strides = array<i32>} : memref<200x128xf32, #tpu.memory_space<vmem>>, vector<14x128xf32>,
    %c0_97 = arith.constant 0 : index
    %c336 = arith.constant 336 : index
    %c0_98 = arith.constant 0 : index
    %101 = vector.load %arg1[%c0_97, %c336, %c0_98] : memref<1x784x32xbf16, #tpu.memory_space<vmem>>, vector<1x56x32xbf16>
    %102 = vector.shape_cast %101 : vector<1x56x32xbf16> to vector<56x32xbf16>
    %cst_99 = arith.constant dense<0.000000e+00> : vector<56x128xf32>
    %103 = tpu.matmul %102, %0, %cst_99 {dimension_numbers = #tpu.dot_dimension_numbers<[1], [0], [0], [1], [0, 0, 1, 1], [], []>} : vector<56x32xbf16>, vector<32x128xbf16>, vector<56x128xf32> -> vector<56x128xf32>
    %c0_100 = arith.constant 0 : index
    %c0_101 = arith.constant 0 : index
    %104 = vector.load %arg8[%c0_100, %c0_101] : memref<56x128xf32, #tpu.memory_space<vmem>>, vector<56x128xf32>
    tpu.vector_store %arg8[%c0_100, %c0_101], %103 {strides = array<i32>} : memref<56x128xf32, #tpu.memory_space<vmem>>, vector<56x128xf32>,
    %c0_102 = arith.constant 0 : index
    %c0_103 = arith.constant 0 : index
    %105 = tpu.strided_load %arg8[%c0_102, %c0_103] {strides = array<i32: 2, 1>} : memref<56x128xf32, #tpu.memory_space<vmem>>, vector<14x128xf32>
    %c1_104 = arith.constant 1 : index
    %c0_105 = arith.constant 0 : index
    %106 = tpu.strided_load %arg8[%c1_104, %c0_105] {strides = array<i32: 2, 1>} : memref<56x128xf32, #tpu.memory_space<vmem>>, vector<14x128xf32>
    %107 = arith.maximumf %105, %106 : vector<14x128xf32>
    %c28_106 = arith.constant 28 : index
    %c0_107 = arith.constant 0 : index
    %108 = tpu.strided_load %arg8[%c28_106, %c0_107] {strides = array<i32: 2, 1>} : memref<56x128xf32, #tpu.memory_space<vmem>>, vector<14x128xf32>
    %c29_108 = arith.constant 29 : index
    %c0_109 = arith.constant 0 : index
    %109 = tpu.strided_load %arg8[%c29_108, %c0_109] {strides = array<i32: 2, 1>} : memref<56x128xf32, #tpu.memory_space<vmem>>, vector<14x128xf32>
    %110 = arith.maximumf %108, %109 : vector<14x128xf32>
    %111 = arith.maximumf %107, %110 : vector<14x128xf32>
    %112 = vector.broadcast %1 : vector<1x128xf32> to vector<14x128xf32>
    %113 = arith.addf %111, %112 : vector<14x128xf32>
    %cst_110 = arith.constant 0.000000e+00 : f32
    %114 = vector.broadcast %cst_110 : f32 to vector<14x128xf32>
    %115 = arith.maximumf %113, %114 : vector<14x128xf32>
    %c84 = arith.constant 84 : index
    %c0_111 = arith.constant 0 : index
    %116 = vector.load %arg7[%c84, %c0_111] : memref<200x128xf32, #tpu.memory_space<vmem>>, vector<14x128xf32>
    tpu.vector_store %arg7[%c84, %c0_111], %115 {strides = array<i32>} : memref<200x128xf32, #tpu.memory_space<vmem>>, vector<14x128xf32>,
    %c0_112 = arith.constant 0 : index
    %c392 = arith.constant 392 : index
    %c0_113 = arith.constant 0 : index
    %117 = vector.load %arg1[%c0_112, %c392, %c0_113] : memref<1x784x32xbf16, #tpu.memory_space<vmem>>, vector<1x56x32xbf16>
    %118 = vector.shape_cast %117 : vector<1x56x32xbf16> to vector<56x32xbf16>
    %cst_114 = arith.constant dense<0.000000e+00> : vector<56x128xf32>
    %119 = tpu.matmul %118, %0, %cst_114 {dimension_numbers = #tpu.dot_dimension_numbers<[1], [0], [0], [1], [0, 0, 1, 1], [], []>} : vector<56x32xbf16>, vector<32x128xbf16>, vector<56x128xf32> -> vector<56x128xf32>
    %c0_115 = arith.constant 0 : index
    %c0_116 = arith.constant 0 : index
    %120 = vector.load %arg8[%c0_115, %c0_116] : memref<56x128xf32, #tpu.memory_space<vmem>>, vector<56x128xf32>
    tpu.vector_store %arg8[%c0_115, %c0_116], %119 {strides = array<i32>} : memref<56x128xf32, #tpu.memory_space<vmem>>, vector<56x128xf32>,
    %c0_117 = arith.constant 0 : index
    %c0_118 = arith.constant 0 : index
    %121 = tpu.strided_load %arg8[%c0_117, %c0_118] {strides = array<i32: 2, 1>} : memref<56x128xf32, #tpu.memory_space<vmem>>, vector<14x128xf32>
    %c1_119 = arith.constant 1 : index
    %c0_120 = arith.constant 0 : index
    %122 = tpu.strided_load %arg8[%c1_119, %c0_120] {strides = array<i32: 2, 1>} : memref<56x128xf32, #tpu.memory_space<vmem>>, vector<14x128xf32>
    %123 = arith.maximumf %121, %122 : vector<14x128xf32>
    %c28_121 = arith.constant 28 : index
    %c0_122 = arith.constant 0 : index
    %124 = tpu.strided_load %arg8[%c28_121, %c0_122] {strides = array<i32: 2, 1>} : memref<56x128xf32, #tpu.memory_space<vmem>>, vector<14x128xf32>
    %c29_123 = arith.constant 29 : index
    %c0_124 = arith.constant 0 : index
    %125 = tpu.strided_load %arg8[%c29_123, %c0_124] {strides = array<i32: 2, 1>} : memref<56x128xf32, #tpu.memory_space<vmem>>, vector<14x128xf32>
    %126 = arith.maximumf %124, %125 : vector<14x128xf32>
    %127 = arith.maximumf %123, %126 : vector<14x128xf32>
    %128 = vector.broadcast %1 : vector<1x128xf32> to vector<14x128xf32>
    %129 = arith.addf %127, %128 : vector<14x128xf32>
    %cst_125 = arith.constant 0.000000e+00 : f32
    %130 = vector.broadcast %cst_125 : f32 to vector<14x128xf32>
    %131 = arith.maximumf %129, %130 : vector<14x128xf32>
    %c98 = arith.constant 98 : index
    %c0_126 = arith.constant 0 : index
    %132 = vector.load %arg7[%c98, %c0_126] : memref<200x128xf32, #tpu.memory_space<vmem>>, vector<14x128xf32>
    tpu.vector_store %arg7[%c98, %c0_126], %131 {strides = array<i32>} : memref<200x128xf32, #tpu.memory_space<vmem>>, vector<14x128xf32>,
    %c0_127 = arith.constant 0 : index
    %c448 = arith.constant 448 : index
    %c0_128 = arith.constant 0 : index
    %133 = vector.load %arg1[%c0_127, %c448, %c0_128] : memref<1x784x32xbf16, #tpu.memory_space<vmem>>, vector<1x56x32xbf16>
    %134 = vector.shape_cast %133 : vector<1x56x32xbf16> to vector<56x32xbf16>
    %cst_129 = arith.constant dense<0.000000e+00> : vector<56x128xf32>
    %135 = tpu.matmul %134, %0, %cst_129 {dimension_numbers = #tpu.dot_dimension_numbers<[1], [0], [0], [1], [0, 0, 1, 1], [], []>} : vector<56x32xbf16>, vector<32x128xbf16>, vector<56x128xf32> -> vector<56x128xf32>
    %c0_130 = arith.constant 0 : index
    %c0_131 = arith.constant 0 : index
    %136 = vector.load %arg8[%c0_130, %c0_131] : memref<56x128xf32, #tpu.memory_space<vmem>>, vector<56x128xf32>
    tpu.vector_store %arg8[%c0_130, %c0_131], %135 {strides = array<i32>} : memref<56x128xf32, #tpu.memory_space<vmem>>, vector<56x128xf32>,
    %c0_132 = arith.constant 0 : index
    %c0_133 = arith.constant 0 : index
    %137 = tpu.strided_load %arg8[%c0_132, %c0_133] {strides = array<i32: 2, 1>} : memref<56x128xf32, #tpu.memory_space<vmem>>, vector<14x128xf32>
    %c1_134 = arith.constant 1 : index
    %c0_135 = arith.constant 0 : index
    %138 = tpu.strided_load %arg8[%c1_134, %c0_135] {strides = array<i32: 2, 1>} : memref<56x128xf32, #tpu.memory_space<vmem>>, vector<14x128xf32>
    %139 = arith.maximumf %137, %138 : vector<14x128xf32>
    %c28_136 = arith.constant 28 : index
    %c0_137 = arith.constant 0 : index
    %140 = tpu.strided_load %arg8[%c28_136, %c0_137] {strides = array<i32: 2, 1>} : memref<56x128xf32, #tpu.memory_space<vmem>>, vector<14x128xf32>
    %c29_138 = arith.constant 29 : index
    %c0_139 = arith.constant 0 : index
    %141 = tpu.strided_load %arg8[%c29_138, %c0_139] {strides = array<i32: 2, 1>} : memref<56x128xf32, #tpu.memory_space<vmem>>, vector<14x128xf32>
    %142 = arith.maximumf %140, %141 : vector<14x128xf32>
    %143 = arith.maximumf %139, %142 : vector<14x128xf32>
    %144 = vector.broadcast %1 : vector<1x128xf32> to vector<14x128xf32>
    %145 = arith.addf %143, %144 : vector<14x128xf32>
    %cst_140 = arith.constant 0.000000e+00 : f32
    %146 = vector.broadcast %cst_140 : f32 to vector<14x128xf32>
    %147 = arith.maximumf %145, %146 : vector<14x128xf32>
    %c112_141 = arith.constant 112 : index
    %c0_142 = arith.constant 0 : index
    %148 = vector.load %arg7[%c112_141, %c0_142] : memref<200x128xf32, #tpu.memory_space<vmem>>, vector<14x128xf32>
    tpu.vector_store %arg7[%c112_141, %c0_142], %147 {strides = array<i32>} : memref<200x128xf32, #tpu.memory_space<vmem>>, vector<14x128xf32>,
    %c0_143 = arith.constant 0 : index
    %c504 = arith.constant 504 : index
    %c0_144 = arith.constant 0 : index
    %149 = vector.load %arg1[%c0_143, %c504, %c0_144] : memref<1x784x32xbf16, #tpu.memory_space<vmem>>, vector<1x56x32xbf16>
    %150 = vector.shape_cast %149 : vector<1x56x32xbf16> to vector<56x32xbf16>
    %cst_145 = arith.constant dense<0.000000e+00> : vector<56x128xf32>
    %151 = tpu.matmul %150, %0, %cst_145 {dimension_numbers = #tpu.dot_dimension_numbers<[1], [0], [0], [1], [0, 0, 1, 1], [], []>} : vector<56x32xbf16>, vector<32x128xbf16>, vector<56x128xf32> -> vector<56x128xf32>
    %c0_146 = arith.constant 0 : index
    %c0_147 = arith.constant 0 : index
    %152 = vector.load %arg8[%c0_146, %c0_147] : memref<56x128xf32, #tpu.memory_space<vmem>>, vector<56x128xf32>
    tpu.vector_store %arg8[%c0_146, %c0_147], %151 {strides = array<i32>} : memref<56x128xf32, #tpu.memory_space<vmem>>, vector<56x128xf32>,
    %c0_148 = arith.constant 0 : index
    %c0_149 = arith.constant 0 : index
    %153 = tpu.strided_load %arg8[%c0_148, %c0_149] {strides = array<i32: 2, 1>} : memref<56x128xf32, #tpu.memory_space<vmem>>, vector<14x128xf32>
    %c1_150 = arith.constant 1 : index
    %c0_151 = arith.constant 0 : index
    %154 = tpu.strided_load %arg8[%c1_150, %c0_151] {strides = array<i32: 2, 1>} : memref<56x128xf32, #tpu.memory_space<vmem>>, vector<14x128xf32>
    %155 = arith.maximumf %153, %154 : vector<14x128xf32>
    %c28_152 = arith.constant 28 : index
    %c0_153 = arith.constant 0 : index
    %156 = tpu.strided_load %arg8[%c28_152, %c0_153] {strides = array<i32: 2, 1>} : memref<56x128xf32, #tpu.memory_space<vmem>>, vector<14x128xf32>
    %c29_154 = arith.constant 29 : index
    %c0_155 = arith.constant 0 : index
    %157 = tpu.strided_load %arg8[%c29_154, %c0_155] {strides = array<i32: 2, 1>} : memref<56x128xf32, #tpu.memory_space<vmem>>, vector<14x128xf32>
    %158 = arith.maximumf %156, %157 : vector<14x128xf32>
    %159 = arith.maximumf %155, %158 : vector<14x128xf32>
    %160 = vector.broadcast %1 : vector<1x128xf32> to vector<14x128xf32>
    %161 = arith.addf %159, %160 : vector<14x128xf32>
    %cst_156 = arith.constant 0.000000e+00 : f32
    %162 = vector.broadcast %cst_156 : f32 to vector<14x128xf32>
    %163 = arith.maximumf %161, %162 : vector<14x128xf32>
    %c126 = arith.constant 126 : index
    %c0_157 = arith.constant 0 : index
    %164 = vector.load %arg7[%c126, %c0_157] : memref<200x128xf32, #tpu.memory_space<vmem>>, vector<14x128xf32>
    tpu.vector_store %arg7[%c126, %c0_157], %163 {strides = array<i32>} : memref<200x128xf32, #tpu.memory_space<vmem>>, vector<14x128xf32>,
    %c0_158 = arith.constant 0 : index
    %c560 = arith.constant 560 : index
    %c0_159 = arith.constant 0 : index
    %165 = vector.load %arg1[%c0_158, %c560, %c0_159] : memref<1x784x32xbf16, #tpu.memory_space<vmem>>, vector<1x56x32xbf16>
    %166 = vector.shape_cast %165 : vector<1x56x32xbf16> to vector<56x32xbf16>
    %cst_160 = arith.constant dense<0.000000e+00> : vector<56x128xf32>
    %167 = tpu.matmul %166, %0, %cst_160 {dimension_numbers = #tpu.dot_dimension_numbers<[1], [0], [0], [1], [0, 0, 1, 1], [], []>} : vector<56x32xbf16>, vector<32x128xbf16>, vector<56x128xf32> -> vector<56x128xf32>
    %c0_161 = arith.constant 0 : index
    %c0_162 = arith.constant 0 : index
    %168 = vector.load %arg8[%c0_161, %c0_162] : memref<56x128xf32, #tpu.memory_space<vmem>>, vector<56x128xf32>
    tpu.vector_store %arg8[%c0_161, %c0_162], %167 {strides = array<i32>} : memref<56x128xf32, #tpu.memory_space<vmem>>, vector<56x128xf32>,
    %c0_163 = arith.constant 0 : index
    %c0_164 = arith.constant 0 : index
    %169 = tpu.strided_load %arg8[%c0_163, %c0_164] {strides = array<i32: 2, 1>} : memref<56x128xf32, #tpu.memory_space<vmem>>, vector<14x128xf32>
    %c1_165 = arith.constant 1 : index
    %c0_166 = arith.constant 0 : index
    %170 = tpu.strided_load %arg8[%c1_165, %c0_166] {strides = array<i32: 2, 1>} : memref<56x128xf32, #tpu.memory_space<vmem>>, vector<14x128xf32>
    %171 = arith.maximumf %169, %170 : vector<14x128xf32>
    %c28_167 = arith.constant 28 : index
    %c0_168 = arith.constant 0 : index
    %172 = tpu.strided_load %arg8[%c28_167, %c0_168] {strides = array<i32: 2, 1>} : memref<56x128xf32, #tpu.memory_space<vmem>>, vector<14x128xf32>
    %c29_169 = arith.constant 29 : index
    %c0_170 = arith.constant 0 : index
    %173 = tpu.strided_load %arg8[%c29_169, %c0_170] {strides = array<i32: 2, 1>} : memref<56x128xf32, #tpu.memory_space<vmem>>, vector<14x128xf32>
    %174 = arith.maximumf %172, %173 : vector<14x128xf32>
    %175 = arith.maximumf %171, %174 : vector<14x128xf32>
    %176 = vector.broadcast %1 : vector<1x128xf32> to vector<14x128xf32>
    %177 = arith.addf %175, %176 : vector<14x128xf32>
    %cst_171 = arith.constant 0.000000e+00 : f32
    %178 = vector.broadcast %cst_171 : f32 to vector<14x128xf32>
    %179 = arith.maximumf %177, %178 : vector<14x128xf32>
    %c140 = arith.constant 140 : index
    %c0_172 = arith.constant 0 : index
    %180 = vector.load %arg7[%c140, %c0_172] : memref<200x128xf32, #tpu.memory_space<vmem>>, vector<14x128xf32>
    tpu.vector_store %arg7[%c140, %c0_172], %179 {strides = array<i32>} : memref<200x128xf32, #tpu.memory_space<vmem>>, vector<14x128xf32>,
    %c0_173 = arith.constant 0 : index
    %c616 = arith.constant 616 : index
    %c0_174 = arith.constant 0 : index
    %181 = vector.load %arg1[%c0_173, %c616, %c0_174] : memref<1x784x32xbf16, #tpu.memory_space<vmem>>, vector<1x56x32xbf16>
    %182 = vector.shape_cast %181 : vector<1x56x32xbf16> to vector<56x32xbf16>
    %cst_175 = arith.constant dense<0.000000e+00> : vector<56x128xf32>
    %183 = tpu.matmul %182, %0, %cst_175 {dimension_numbers = #tpu.dot_dimension_numbers<[1], [0], [0], [1], [0, 0, 1, 1], [], []>} : vector<56x32xbf16>, vector<32x128xbf16>, vector<56x128xf32> -> vector<56x128xf32>
    %c0_176 = arith.constant 0 : index
    %c0_177 = arith.constant 0 : index
    %184 = vector.load %arg8[%c0_176, %c0_177] : memref<56x128xf32, #tpu.memory_space<vmem>>, vector<56x128xf32>
    tpu.vector_store %arg8[%c0_176, %c0_177], %183 {strides = array<i32>} : memref<56x128xf32, #tpu.memory_space<vmem>>, vector<56x128xf32>,
    %c0_178 = arith.constant 0 : index
    %c0_179 = arith.constant 0 : index
    %185 = tpu.strided_load %arg8[%c0_178, %c0_179] {strides = array<i32: 2, 1>} : memref<56x128xf32, #tpu.memory_space<vmem>>, vector<14x128xf32>
    %c1_180 = arith.constant 1 : index
    %c0_181 = arith.constant 0 : index
    %186 = tpu.strided_load %arg8[%c1_180, %c0_181] {strides = array<i32: 2, 1>} : memref<56x128xf32, #tpu.memory_space<vmem>>, vector<14x128xf32>
    %187 = arith.maximumf %185, %186 : vector<14x128xf32>
    %c28_182 = arith.constant 28 : index
    %c0_183 = arith.constant 0 : index
    %188 = tpu.strided_load %arg8[%c28_182, %c0_183] {strides = array<i32: 2, 1>} : memref<56x128xf32, #tpu.memory_space<vmem>>, vector<14x128xf32>
    %c29_184 = arith.constant 29 : index
    %c0_185 = arith.constant 0 : index
    %189 = tpu.strided_load %arg8[%c29_184, %c0_185] {strides = array<i32: 2, 1>} : memref<56x128xf32, #tpu.memory_space<vmem>>, vector<14x128xf32>
    %190 = arith.maximumf %188, %189 : vector<14x128xf32>
    %191 = arith.maximumf %187, %190 : vector<14x128xf32>
    %192 = vector.broadcast %1 : vector<1x128xf32> to vector<14x128xf32>
    %193 = arith.addf %191, %192 : vector<14x128xf32>
    %cst_186 = arith.constant 0.000000e+00 : f32
    %194 = vector.broadcast %cst_186 : f32 to vector<14x128xf32>
    %195 = arith.maximumf %193, %194 : vector<14x128xf32>
    %c154 = arith.constant 154 : index
    %c0_187 = arith.constant 0 : index
    %196 = vector.load %arg7[%c154, %c0_187] : memref<200x128xf32, #tpu.memory_space<vmem>>, vector<14x128xf32>
    tpu.vector_store %arg7[%c154, %c0_187], %195 {strides = array<i32>} : memref<200x128xf32, #tpu.memory_space<vmem>>, vector<14x128xf32>,
    %c0_188 = arith.constant 0 : index
    %c672 = arith.constant 672 : index
    %c0_189 = arith.constant 0 : index
    %197 = vector.load %arg1[%c0_188, %c672, %c0_189] : memref<1x784x32xbf16, #tpu.memory_space<vmem>>, vector<1x56x32xbf16>
    %198 = vector.shape_cast %197 : vector<1x56x32xbf16> to vector<56x32xbf16>
    %cst_190 = arith.constant dense<0.000000e+00> : vector<56x128xf32>
    %199 = tpu.matmul %198, %0, %cst_190 {dimension_numbers = #tpu.dot_dimension_numbers<[1], [0], [0], [1], [0, 0, 1, 1], [], []>} : vector<56x32xbf16>, vector<32x128xbf16>, vector<56x128xf32> -> vector<56x128xf32>
    %c0_191 = arith.constant 0 : index
    %c0_192 = arith.constant 0 : index
    %200 = vector.load %arg8[%c0_191, %c0_192] : memref<56x128xf32, #tpu.memory_space<vmem>>, vector<56x128xf32>
    tpu.vector_store %arg8[%c0_191, %c0_192], %199 {strides = array<i32>} : memref<56x128xf32, #tpu.memory_space<vmem>>, vector<56x128xf32>,
    %c0_193 = arith.constant 0 : index
    %c0_194 = arith.constant 0 : index
    %201 = tpu.strided_load %arg8[%c0_193, %c0_194] {strides = array<i32: 2, 1>} : memref<56x128xf32, #tpu.memory_space<vmem>>, vector<14x128xf32>
    %c1_195 = arith.constant 1 : index
    %c0_196 = arith.constant 0 : index
    %202 = tpu.strided_load %arg8[%c1_195, %c0_196] {strides = array<i32: 2, 1>} : memref<56x128xf32, #tpu.memory_space<vmem>>, vector<14x128xf32>
    %203 = arith.maximumf %201, %202 : vector<14x128xf32>
    %c28_197 = arith.constant 28 : index
    %c0_198 = arith.constant 0 : index
    %204 = tpu.strided_load %arg8[%c28_197, %c0_198] {strides = array<i32: 2, 1>} : memref<56x128xf32, #tpu.memory_space<vmem>>, vector<14x128xf32>
    %c29_199 = arith.constant 29 : index
    %c0_200 = arith.constant 0 : index
    %205 = tpu.strided_load %arg8[%c29_199, %c0_200] {strides = array<i32: 2, 1>} : memref<56x128xf32, #tpu.memory_space<vmem>>, vector<14x128xf32>
    %206 = arith.maximumf %204, %205 : vector<14x128xf32>
    %207 = arith.maximumf %203, %206 : vector<14x128xf32>
    %208 = vector.broadcast %1 : vector<1x128xf32> to vector<14x128xf32>
    %209 = arith.addf %207, %208 : vector<14x128xf32>
    %cst_201 = arith.constant 0.000000e+00 : f32
    %210 = vector.broadcast %cst_201 : f32 to vector<14x128xf32>
    %211 = arith.maximumf %209, %210 : vector<14x128xf32>
    %c168_202 = arith.constant 168 : index
    %c0_203 = arith.constant 0 : index
    %212 = vector.load %arg7[%c168_202, %c0_203] : memref<200x128xf32, #tpu.memory_space<vmem>>, vector<14x128xf32>
    tpu.vector_store %arg7[%c168_202, %c0_203], %211 {strides = array<i32>} : memref<200x128xf32, #tpu.memory_space<vmem>>, vector<14x128xf32>,
    %c0_204 = arith.constant 0 : index
    %c728 = arith.constant 728 : index
    %c0_205 = arith.constant 0 : index
    %213 = vector.load %arg1[%c0_204, %c728, %c0_205] : memref<1x784x32xbf16, #tpu.memory_space<vmem>>, vector<1x56x32xbf16>
    %214 = vector.shape_cast %213 : vector<1x56x32xbf16> to vector<56x32xbf16>
    %cst_206 = arith.constant dense<0.000000e+00> : vector<56x128xf32>
    %215 = tpu.matmul %214, %0, %cst_206 {dimension_numbers = #tpu.dot_dimension_numbers<[1], [0], [0], [1], [0, 0, 1, 1], [], []>} : vector<56x32xbf16>, vector<32x128xbf16>, vector<56x128xf32> -> vector<56x128xf32>
    %c0_207 = arith.constant 0 : index
    %c0_208 = arith.constant 0 : index
    %216 = vector.load %arg8[%c0_207, %c0_208] : memref<56x128xf32, #tpu.memory_space<vmem>>, vector<56x128xf32>
    tpu.vector_store %arg8[%c0_207, %c0_208], %215 {strides = array<i32>} : memref<56x128xf32, #tpu.memory_space<vmem>>, vector<56x128xf32>,
    %c0_209 = arith.constant 0 : index
    %c0_210 = arith.constant 0 : index
    %217 = tpu.strided_load %arg8[%c0_209, %c0_210] {strides = array<i32: 2, 1>} : memref<56x128xf32, #tpu.memory_space<vmem>>, vector<14x128xf32>
    %c1_211 = arith.constant 1 : index
    %c0_212 = arith.constant 0 : index
    %218 = tpu.strided_load %arg8[%c1_211, %c0_212] {strides = array<i32: 2, 1>} : memref<56x128xf32, #tpu.memory_space<vmem>>, vector<14x128xf32>
    %219 = arith.maximumf %217, %218 : vector<14x128xf32>
    %c28_213 = arith.constant 28 : index
    %c0_214 = arith.constant 0 : index
    %220 = tpu.strided_load %arg8[%c28_213, %c0_214] {strides = array<i32: 2, 1>} : memref<56x128xf32, #tpu.memory_space<vmem>>, vector<14x128xf32>
    %c29_215 = arith.constant 29 : index
    %c0_216 = arith.constant 0 : index
    %221 = tpu.strided_load %arg8[%c29_215, %c0_216] {strides = array<i32: 2, 1>} : memref<56x128xf32, #tpu.memory_space<vmem>>, vector<14x128xf32>
    %222 = arith.maximumf %220, %221 : vector<14x128xf32>
    %223 = arith.maximumf %219, %222 : vector<14x128xf32>
    %224 = vector.broadcast %1 : vector<1x128xf32> to vector<14x128xf32>
    %225 = arith.addf %223, %224 : vector<14x128xf32>
    %cst_217 = arith.constant 0.000000e+00 : f32
    %226 = vector.broadcast %cst_217 : f32 to vector<14x128xf32>
    %227 = arith.maximumf %225, %226 : vector<14x128xf32>
    %c182 = arith.constant 182 : index
    %c0_218 = arith.constant 0 : index
    %228 = vector.load %arg7[%c182, %c0_218] : memref<200x128xf32, #tpu.memory_space<vmem>>, vector<14x128xf32>
    tpu.vector_store %arg7[%c182, %c0_218], %227 {strides = array<i32>} : memref<200x128xf32, #tpu.memory_space<vmem>>, vector<14x128xf32>,
    %c0_219 = arith.constant 0 : index
    %c0_220 = arith.constant 0 : index
    %229 = vector.load %arg7[%c0_219, %c0_220] : memref<200x128xf32, #tpu.memory_space<vmem>>, vector<28x128xf32>
    %230 = arith.truncf %229 : vector<28x128xf32> to vector<28x128xbf16>
    %c0_221 = arith.constant 0 : index
    %c0_222 = arith.constant 0 : index
    %231 = vector.load %arg4[%c0_221, %c0_222] : memref<1152x128xbf16, #tpu.memory_space<vmem>>, vector<128x128xbf16>
    %cst_223 = arith.constant dense<0.000000e+00> : vector<28x128xf32>
    %232 = tpu.matmul %230, %231, %cst_223 {dimension_numbers = #tpu.dot_dimension_numbers<[1], [0], [0], [1], [0, 0, 1, 1], [], []>} : vector<28x128xbf16>, vector<128x128xbf16>, vector<28x128xf32> -> vector<28x128xf32>
    %c1_224 = arith.constant 1 : index
    %c0_225 = arith.constant 0 : index
    %233 = vector.load %arg7[%c1_224, %c0_225] : memref<200x128xf32, #tpu.memory_space<vmem>>, vector<28x128xf32>
    %234 = arith.truncf %233 : vector<28x128xf32> to vector<28x128xbf16>
    %c128 = arith.constant 128 : index
    %c0_226 = arith.constant 0 : index
    %235 = vector.load %arg4[%c128, %c0_226] : memref<1152x128xbf16, #tpu.memory_space<vmem>>, vector<128x128xbf16>
    %cst_227 = arith.constant dense<0.000000e+00> : vector<28x128xf32>
    %236 = tpu.matmul %234, %235, %cst_227 {dimension_numbers = #tpu.dot_dimension_numbers<[1], [0], [0], [1], [0, 0, 1, 1], [], []>} : vector<28x128xbf16>, vector<128x128xbf16>, vector<28x128xf32> -> vector<28x128xf32>
    %237 = arith.addf %232, %236 : vector<28x128xf32>
    %c2 = arith.constant 2 : index
    %c0_228 = arith.constant 0 : index
    %238 = vector.load %arg7[%c2, %c0_228] : memref<200x128xf32, #tpu.memory_space<vmem>>, vector<28x128xf32>
    %239 = arith.truncf %238 : vector<28x128xf32> to vector<28x128xbf16>
    %c256 = arith.constant 256 : index
    %c0_229 = arith.constant 0 : index
    %240 = vector.load %arg4[%c256, %c0_229] : memref<1152x128xbf16, #tpu.memory_space<vmem>>, vector<128x128xbf16>
    %cst_230 = arith.constant dense<0.000000e+00> : vector<28x128xf32>
    %241 = tpu.matmul %239, %240, %cst_230 {dimension_numbers = #tpu.dot_dimension_numbers<[1], [0], [0], [1], [0, 0, 1, 1], [], []>} : vector<28x128xbf16>, vector<128x128xbf16>, vector<28x128xf32> -> vector<28x128xf32>
    %242 = arith.addf %237, %241 : vector<28x128xf32>
    %c14_231 = arith.constant 14 : index
    %c0_232 = arith.constant 0 : index
    %243 = vector.load %arg7[%c14_231, %c0_232] : memref<200x128xf32, #tpu.memory_space<vmem>>, vector<28x128xf32>
    %244 = arith.truncf %243 : vector<28x128xf32> to vector<28x128xbf16>
    %c384 = arith.constant 384 : index
    %c0_233 = arith.constant 0 : index
    %245 = vector.load %arg4[%c384, %c0_233] : memref<1152x128xbf16, #tpu.memory_space<vmem>>, vector<128x128xbf16>
    %cst_234 = arith.constant dense<0.000000e+00> : vector<28x128xf32>
    %246 = tpu.matmul %244, %245, %cst_234 {dimension_numbers = #tpu.dot_dimension_numbers<[1], [0], [0], [1], [0, 0, 1, 1], [], []>} : vector<28x128xbf16>, vector<128x128xbf16>, vector<28x128xf32> -> vector<28x128xf32>
    %247 = arith.addf %242, %246 : vector<28x128xf32>
    %c15 = arith.constant 15 : index
    %c0_235 = arith.constant 0 : index
    %248 = vector.load %arg7[%c15, %c0_235] : memref<200x128xf32, #tpu.memory_space<vmem>>, vector<28x128xf32>
    %249 = arith.truncf %248 : vector<28x128xf32> to vector<28x128xbf16>
    %c512 = arith.constant 512 : index
    %c0_236 = arith.constant 0 : index
    %250 = vector.load %arg4[%c512, %c0_236] : memref<1152x128xbf16, #tpu.memory_space<vmem>>, vector<128x128xbf16>
    %cst_237 = arith.constant dense<0.000000e+00> : vector<28x128xf32>
    %251 = tpu.matmul %249, %250, %cst_237 {dimension_numbers = #tpu.dot_dimension_numbers<[1], [0], [0], [1], [0, 0, 1, 1], [], []>} : vector<28x128xbf16>, vector<128x128xbf16>, vector<28x128xf32> -> vector<28x128xf32>
    %252 = arith.addf %247, %251 : vector<28x128xf32>
    %c16 = arith.constant 16 : index
    %c0_238 = arith.constant 0 : index
    %253 = vector.load %arg7[%c16, %c0_238] : memref<200x128xf32, #tpu.memory_space<vmem>>, vector<28x128xf32>
    %254 = arith.truncf %253 : vector<28x128xf32> to vector<28x128xbf16>
    %c640 = arith.constant 640 : index
    %c0_239 = arith.constant 0 : index
    %255 = vector.load %arg4[%c640, %c0_239] : memref<1152x128xbf16, #tpu.memory_space<vmem>>, vector<128x128xbf16>
    %cst_240 = arith.constant dense<0.000000e+00> : vector<28x128xf32>
    %256 = tpu.matmul %254, %255, %cst_240 {dimension_numbers = #tpu.dot_dimension_numbers<[1], [0], [0], [1], [0, 0, 1, 1], [], []>} : vector<28x128xbf16>, vector<128x128xbf16>, vector<28x128xf32> -> vector<28x128xf32>
    %257 = arith.addf %252, %256 : vector<28x128xf32>
    %c28_241 = arith.constant 28 : index
    %c0_242 = arith.constant 0 : index
    %258 = vector.load %arg7[%c28_241, %c0_242] : memref<200x128xf32, #tpu.memory_space<vmem>>, vector<28x128xf32>
    %259 = arith.truncf %258 : vector<28x128xf32> to vector<28x128xbf16>
    %c768 = arith.constant 768 : index
    %c0_243 = arith.constant 0 : index
    %260 = vector.load %arg4[%c768, %c0_243] : memref<1152x128xbf16, #tpu.memory_space<vmem>>, vector<128x128xbf16>
    %cst_244 = arith.constant dense<0.000000e+00> : vector<28x128xf32>
    %261 = tpu.matmul %259, %260, %cst_244 {dimension_numbers = #tpu.dot_dimension_numbers<[1], [0], [0], [1], [0, 0, 1, 1], [], []>} : vector<28x128xbf16>, vector<128x128xbf16>, vector<28x128xf32> -> vector<28x128xf32>
    %262 = arith.addf %257, %261 : vector<28x128xf32>
    %c29_245 = arith.constant 29 : index
    %c0_246 = arith.constant 0 : index
    %263 = vector.load %arg7[%c29_245, %c0_246] : memref<200x128xf32, #tpu.memory_space<vmem>>, vector<28x128xf32>
    %264 = arith.truncf %263 : vector<28x128xf32> to vector<28x128xbf16>
    %c896 = arith.constant 896 : index
    %c0_247 = arith.constant 0 : index
    %265 = vector.load %arg4[%c896, %c0_247] : memref<1152x128xbf16, #tpu.memory_space<vmem>>, vector<128x128xbf16>
    %cst_248 = arith.constant dense<0.000000e+00> : vector<28x128xf32>
    %266 = tpu.matmul %264, %265, %cst_248 {dimension_numbers = #tpu.dot_dimension_numbers<[1], [0], [0], [1], [0, 0, 1, 1], [], []>} : vector<28x128xbf16>, vector<128x128xbf16>, vector<28x128xf32> -> vector<28x128xf32>
    %267 = arith.addf %262, %266 : vector<28x128xf32>
    %c30 = arith.constant 30 : index
    %c0_249 = arith.constant 0 : index
    %268 = vector.load %arg7[%c30, %c0_249] : memref<200x128xf32, #tpu.memory_space<vmem>>, vector<28x128xf32>
    %269 = arith.truncf %268 : vector<28x128xf32> to vector<28x128xbf16>
    %c1024 = arith.constant 1024 : index
    %c0_250 = arith.constant 0 : index
    %270 = vector.load %arg4[%c1024, %c0_250] : memref<1152x128xbf16, #tpu.memory_space<vmem>>, vector<128x128xbf16>
    %cst_251 = arith.constant dense<0.000000e+00> : vector<28x128xf32>
    %271 = tpu.matmul %269, %270, %cst_251 {dimension_numbers = #tpu.dot_dimension_numbers<[1], [0], [0], [1], [0, 0, 1, 1], [], []>} : vector<28x128xbf16>, vector<128x128xbf16>, vector<28x128xf32> -> vector<28x128xf32>
    %272 = arith.addf %267, %271 : vector<28x128xf32>
    %c0_252 = arith.constant 0 : index
    %c0_253 = arith.constant 0 : index
    %273 = vector.load %arg8[%c0_252, %c0_253] : memref<56x128xf32, #tpu.memory_space<vmem>>, vector<28x128xf32>
    tpu.vector_store %arg8[%c0_252, %c0_253], %272 {strides = array<i32>} : memref<56x128xf32, #tpu.memory_space<vmem>>, vector<28x128xf32>,
    %c0_254 = arith.constant 0 : index
    %c0_255 = arith.constant 0 : index
    %274 = tpu.strided_load %arg8[%c0_254, %c0_255] {strides = array<i32: 2, 1>} : memref<56x128xf32, #tpu.memory_space<vmem>>, vector<6x128xf32>
    %c1_256 = arith.constant 1 : index
    %c0_257 = arith.constant 0 : index
    %275 = tpu.strided_load %arg8[%c1_256, %c0_257] {strides = array<i32: 2, 1>} : memref<56x128xf32, #tpu.memory_space<vmem>>, vector<6x128xf32>
    %276 = arith.maximumf %274, %275 : vector<6x128xf32>
    %c14_258 = arith.constant 14 : index
    %c0_259 = arith.constant 0 : index
    %277 = tpu.strided_load %arg8[%c14_258, %c0_259] {strides = array<i32: 2, 1>} : memref<56x128xf32, #tpu.memory_space<vmem>>, vector<6x128xf32>
    %c15_260 = arith.constant 15 : index
    %c0_261 = arith.constant 0 : index
    %278 = tpu.strided_load %arg8[%c15_260, %c0_261] {strides = array<i32: 2, 1>} : memref<56x128xf32, #tpu.memory_space<vmem>>, vector<6x128xf32>
    %279 = arith.maximumf %277, %278 : vector<6x128xf32>
    %280 = arith.maximumf %276, %279 : vector<6x128xf32>
    %281 = vector.broadcast %2 : vector<1x128xf32> to vector<6x128xf32>
    %282 = arith.addf %280, %281 : vector<6x128xf32>
    %cst_262 = arith.constant 0.000000e+00 : f32
    %283 = vector.broadcast %cst_262 : f32 to vector<6x128xf32>
    %284 = arith.maximumf %282, %283 : vector<6x128xf32>
    %285 = vector.extract_strided_slice %284 {offsets = [0, 0], sizes = [6, 32], strides = [1, 1]} : vector<6x128xf32> to vector<6x32xf32>
    %c0_263 = arith.constant 0 : index
    %c0_264 = arith.constant 0 : index
    %c0_265 = arith.constant 0 : index
    %286 = vector.load %arg6[%c0_263, %c0_264, %c0_265] : memref<1x36x32xf32, #tpu.memory_space<vmem>>, vector<1x6x32xf32>
    %287 = vector.shape_cast %286 : vector<1x6x32xf32> to vector<6x32xf32>
    %288 = vector.shape_cast %285 : vector<6x32xf32> to vector<1x6x32xf32>
    tpu.vector_store %arg6[%c0_263, %c0_264, %c0_265], %288 {strides = array<i32>} : memref<1x36x32xf32, #tpu.memory_space<vmem>>, vector<1x6x32xf32>,
    %c28_266 = arith.constant 28 : index
    %c0_267 = arith.constant 0 : index
    %289 = vector.load %arg7[%c28_266, %c0_267] : memref<200x128xf32, #tpu.memory_space<vmem>>, vector<28x128xf32>
    %290 = arith.truncf %289 : vector<28x128xf32> to vector<28x128xbf16>
    %c0_268 = arith.constant 0 : index
    %c0_269 = arith.constant 0 : index
    %291 = vector.load %arg4[%c0_268, %c0_269] : memref<1152x128xbf16, #tpu.memory_space<vmem>>, vector<128x128xbf16>
    %cst_270 = arith.constant dense<0.000000e+00> : vector<28x128xf32>
    %292 = tpu.matmul %290, %291, %cst_270 {dimension_numbers = #tpu.dot_dimension_numbers<[1], [0], [0], [1], [0, 0, 1, 1], [], []>} : vector<28x128xbf16>, vector<128x128xbf16>, vector<28x128xf32> -> vector<28x128xf32>
    %c29_271 = arith.constant 29 : index
    %c0_272 = arith.constant 0 : index
    %293 = vector.load %arg7[%c29_271, %c0_272] : memref<200x128xf32, #tpu.memory_space<vmem>>, vector<28x128xf32>
    %294 = arith.truncf %293 : vector<28x128xf32> to vector<28x128xbf16>
    %c128_273 = arith.constant 128 : index
    %c0_274 = arith.constant 0 : index
    %295 = vector.load %arg4[%c128_273, %c0_274] : memref<1152x128xbf16, #tpu.memory_space<vmem>>, vector<128x128xbf16>
    %cst_275 = arith.constant dense<0.000000e+00> : vector<28x128xf32>
    %296 = tpu.matmul %294, %295, %cst_275 {dimension_numbers = #tpu.dot_dimension_numbers<[1], [0], [0], [1], [0, 0, 1, 1], [], []>} : vector<28x128xbf16>, vector<128x128xbf16>, vector<28x128xf32> -> vector<28x128xf32>
    %297 = arith.addf %292, %296 : vector<28x128xf32>
    %c30_276 = arith.constant 30 : index
    %c0_277 = arith.constant 0 : index
    %298 = vector.load %arg7[%c30_276, %c0_277] : memref<200x128xf32, #tpu.memory_space<vmem>>, vector<28x128xf32>
    %299 = arith.truncf %298 : vector<28x128xf32> to vector<28x128xbf16>
    %c256_278 = arith.constant 256 : index
    %c0_279 = arith.constant 0 : index
    %300 = vector.load %arg4[%c256_278, %c0_279] : memref<1152x128xbf16, #tpu.memory_space<vmem>>, vector<128x128xbf16>
    %cst_280 = arith.constant dense<0.000000e+00> : vector<28x128xf32>
    %301 = tpu.matmul %299, %300, %cst_280 {dimension_numbers = #tpu.dot_dimension_numbers<[1], [0], [0], [1], [0, 0, 1, 1], [], []>} : vector<28x128xbf16>, vector<128x128xbf16>, vector<28x128xf32> -> vector<28x128xf32>
    %302 = arith.addf %297, %301 : vector<28x128xf32>
    %c42_281 = arith.constant 42 : index
    %c0_282 = arith.constant 0 : index
    %303 = vector.load %arg7[%c42_281, %c0_282] : memref<200x128xf32, #tpu.memory_space<vmem>>, vector<28x128xf32>
    %304 = arith.truncf %303 : vector<28x128xf32> to vector<28x128xbf16>
    %c384_283 = arith.constant 384 : index
    %c0_284 = arith.constant 0 : index
    %305 = vector.load %arg4[%c384_283, %c0_284] : memref<1152x128xbf16, #tpu.memory_space<vmem>>, vector<128x128xbf16>
    %cst_285 = arith.constant dense<0.000000e+00> : vector<28x128xf32>
    %306 = tpu.matmul %304, %305, %cst_285 {dimension_numbers = #tpu.dot_dimension_numbers<[1], [0], [0], [1], [0, 0, 1, 1], [], []>} : vector<28x128xbf16>, vector<128x128xbf16>, vector<28x128xf32> -> vector<28x128xf32>
    %307 = arith.addf %302, %306 : vector<28x128xf32>
    %c43 = arith.constant 43 : index
    %c0_286 = arith.constant 0 : index
    %308 = vector.load %arg7[%c43, %c0_286] : memref<200x128xf32, #tpu.memory_space<vmem>>, vector<28x128xf32>
    %309 = arith.truncf %308 : vector<28x128xf32> to vector<28x128xbf16>
    %c512_287 = arith.constant 512 : index
    %c0_288 = arith.constant 0 : index
    %310 = vector.load %arg4[%c512_287, %c0_288] : memref<1152x128xbf16, #tpu.memory_space<vmem>>, vector<128x128xbf16>
    %cst_289 = arith.constant dense<0.000000e+00> : vector<28x128xf32>
    %311 = tpu.matmul %309, %310, %cst_289 {dimension_numbers = #tpu.dot_dimension_numbers<[1], [0], [0], [1], [0, 0, 1, 1], [], []>} : vector<28x128xbf16>, vector<128x128xbf16>, vector<28x128xf32> -> vector<28x128xf32>
    %312 = arith.addf %307, %311 : vector<28x128xf32>
    %c44 = arith.constant 44 : index
    %c0_290 = arith.constant 0 : index
    %313 = vector.load %arg7[%c44, %c0_290] : memref<200x128xf32, #tpu.memory_space<vmem>>, vector<28x128xf32>
    %314 = arith.truncf %313 : vector<28x128xf32> to vector<28x128xbf16>
    %c640_291 = arith.constant 640 : index
    %c0_292 = arith.constant 0 : index
    %315 = vector.load %arg4[%c640_291, %c0_292] : memref<1152x128xbf16, #tpu.memory_space<vmem>>, vector<128x128xbf16>
    %cst_293 = arith.constant dense<0.000000e+00> : vector<28x128xf32>
    %316 = tpu.matmul %314, %315, %cst_293 {dimension_numbers = #tpu.dot_dimension_numbers<[1], [0], [0], [1], [0, 0, 1, 1], [], []>} : vector<28x128xbf16>, vector<128x128xbf16>, vector<28x128xf32> -> vector<28x128xf32>
    %317 = arith.addf %312, %316 : vector<28x128xf32>
    %c56_294 = arith.constant 56 : index
    %c0_295 = arith.constant 0 : index
    %318 = vector.load %arg7[%c56_294, %c0_295] : memref<200x128xf32, #tpu.memory_space<vmem>>, vector<28x128xf32>
    %319 = arith.truncf %318 : vector<28x128xf32> to vector<28x128xbf16>
    %c768_296 = arith.constant 768 : index
    %c0_297 = arith.constant 0 : index
    %320 = vector.load %arg4[%c768_296, %c0_297] : memref<1152x128xbf16, #tpu.memory_space<vmem>>, vector<128x128xbf16>
    %cst_298 = arith.constant dense<0.000000e+00> : vector<28x128xf32>
    %321 = tpu.matmul %319, %320, %cst_298 {dimension_numbers = #tpu.dot_dimension_numbers<[1], [0], [0], [1], [0, 0, 1, 1], [], []>} : vector<28x128xbf16>, vector<128x128xbf16>, vector<28x128xf32> -> vector<28x128xf32>
    %322 = arith.addf %317, %321 : vector<28x128xf32>
    %c57 = arith.constant 57 : index
    %c0_299 = arith.constant 0 : index
    %323 = vector.load %arg7[%c57, %c0_299] : memref<200x128xf32, #tpu.memory_space<vmem>>, vector<28x128xf32>
    %324 = arith.truncf %323 : vector<28x128xf32> to vector<28x128xbf16>
    %c896_300 = arith.constant 896 : index
    %c0_301 = arith.constant 0 : index
    %325 = vector.load %arg4[%c896_300, %c0_301] : memref<1152x128xbf16, #tpu.memory_space<vmem>>, vector<128x128xbf16>
    %cst_302 = arith.constant dense<0.000000e+00> : vector<28x128xf32>
    %326 = tpu.matmul %324, %325, %cst_302 {dimension_numbers = #tpu.dot_dimension_numbers<[1], [0], [0], [1], [0, 0, 1, 1], [], []>} : vector<28x128xbf16>, vector<128x128xbf16>, vector<28x128xf32> -> vector<28x128xf32>
    %327 = arith.addf %322, %326 : vector<28x128xf32>
    %c58 = arith.constant 58 : index
    %c0_303 = arith.constant 0 : index
    %328 = vector.load %arg7[%c58, %c0_303] : memref<200x128xf32, #tpu.memory_space<vmem>>, vector<28x128xf32>
    %329 = arith.truncf %328 : vector<28x128xf32> to vector<28x128xbf16>
    %c1024_304 = arith.constant 1024 : index
    %c0_305 = arith.constant 0 : index
    %330 = vector.load %arg4[%c1024_304, %c0_305] : memref<1152x128xbf16, #tpu.memory_space<vmem>>, vector<128x128xbf16>
    %cst_306 = arith.constant dense<0.000000e+00> : vector<28x128xf32>
    %331 = tpu.matmul %329, %330, %cst_306 {dimension_numbers = #tpu.dot_dimension_numbers<[1], [0], [0], [1], [0, 0, 1, 1], [], []>} : vector<28x128xbf16>, vector<128x128xbf16>, vector<28x128xf32> -> vector<28x128xf32>
    %332 = arith.addf %327, %331 : vector<28x128xf32>
    %c0_307 = arith.constant 0 : index
    %c0_308 = arith.constant 0 : index
    %333 = vector.load %arg8[%c0_307, %c0_308] : memref<56x128xf32, #tpu.memory_space<vmem>>, vector<28x128xf32>
    tpu.vector_store %arg8[%c0_307, %c0_308], %332 {strides = array<i32>} : memref<56x128xf32, #tpu.memory_space<vmem>>, vector<28x128xf32>,
    %c0_309 = arith.constant 0 : index
    %c0_310 = arith.constant 0 : index
    %334 = tpu.strided_load %arg8[%c0_309, %c0_310] {strides = array<i32: 2, 1>} : memref<56x128xf32, #tpu.memory_space<vmem>>, vector<6x128xf32>
    %c1_311 = arith.constant 1 : index
    %c0_312 = arith.constant 0 : index
    %335 = tpu.strided_load %arg8[%c1_311, %c0_312] {strides = array<i32: 2, 1>} : memref<56x128xf32, #tpu.memory_space<vmem>>, vector<6x128xf32>
    %336 = arith.maximumf %334, %335 : vector<6x128xf32>
    %c14_313 = arith.constant 14 : index
    %c0_314 = arith.constant 0 : index
    %337 = tpu.strided_load %arg8[%c14_313, %c0_314] {strides = array<i32: 2, 1>} : memref<56x128xf32, #tpu.memory_space<vmem>>, vector<6x128xf32>
    %c15_315 = arith.constant 15 : index
    %c0_316 = arith.constant 0 : index
    %338 = tpu.strided_load %arg8[%c15_315, %c0_316] {strides = array<i32: 2, 1>} : memref<56x128xf32, #tpu.memory_space<vmem>>, vector<6x128xf32>
    %339 = arith.maximumf %337, %338 : vector<6x128xf32>
    %340 = arith.maximumf %336, %339 : vector<6x128xf32>
    %341 = vector.broadcast %2 : vector<1x128xf32> to vector<6x128xf32>
    %342 = arith.addf %340, %341 : vector<6x128xf32>
    %cst_317 = arith.constant 0.000000e+00 : f32
    %343 = vector.broadcast %cst_317 : f32 to vector<6x128xf32>
    %344 = arith.maximumf %342, %343 : vector<6x128xf32>
    %345 = vector.extract_strided_slice %344 {offsets = [0, 0], sizes = [6, 32], strides = [1, 1]} : vector<6x128xf32> to vector<6x32xf32>
    %c0_318 = arith.constant 0 : index
    %c6 = arith.constant 6 : index
    %c0_319 = arith.constant 0 : index
    %346 = vector.load %arg6[%c0_318, %c6, %c0_319] : memref<1x36x32xf32, #tpu.memory_space<vmem>>, vector<1x6x32xf32>
    %347 = vector.shape_cast %346 : vector<1x6x32xf32> to vector<6x32xf32>
    %348 = vector.shape_cast %345 : vector<6x32xf32> to vector<1x6x32xf32>
    tpu.vector_store %arg6[%c0_318, %c6, %c0_319], %348 {strides = array<i32>} : memref<1x36x32xf32, #tpu.memory_space<vmem>>, vector<1x6x32xf32>,
    %c56_320 = arith.constant 56 : index
    %c0_321 = arith.constant 0 : index
    %349 = vector.load %arg7[%c56_320, %c0_321] : memref<200x128xf32, #tpu.memory_space<vmem>>, vector<28x128xf32>
    %350 = arith.truncf %349 : vector<28x128xf32> to vector<28x128xbf16>
    %c0_322 = arith.constant 0 : index
    %c0_323 = arith.constant 0 : index
    %351 = vector.load %arg4[%c0_322, %c0_323] : memref<1152x128xbf16, #tpu.memory_space<vmem>>, vector<128x128xbf16>
    %cst_324 = arith.constant dense<0.000000e+00> : vector<28x128xf32>
    %352 = tpu.matmul %350, %351, %cst_324 {dimension_numbers = #tpu.dot_dimension_numbers<[1], [0], [0], [1], [0, 0, 1, 1], [], []>} : vector<28x128xbf16>, vector<128x128xbf16>, vector<28x128xf32> -> vector<28x128xf32>
    %c57_325 = arith.constant 57 : index
    %c0_326 = arith.constant 0 : index
    %353 = vector.load %arg7[%c57_325, %c0_326] : memref<200x128xf32, #tpu.memory_space<vmem>>, vector<28x128xf32>
    %354 = arith.truncf %353 : vector<28x128xf32> to vector<28x128xbf16>
    %c128_327 = arith.constant 128 : index
    %c0_328 = arith.constant 0 : index
    %355 = vector.load %arg4[%c128_327, %c0_328] : memref<1152x128xbf16, #tpu.memory_space<vmem>>, vector<128x128xbf16>
    %cst_329 = arith.constant dense<0.000000e+00> : vector<28x128xf32>
    %356 = tpu.matmul %354, %355, %cst_329 {dimension_numbers = #tpu.dot_dimension_numbers<[1], [0], [0], [1], [0, 0, 1, 1], [], []>} : vector<28x128xbf16>, vector<128x128xbf16>, vector<28x128xf32> -> vector<28x128xf32>
    %357 = arith.addf %352, %356 : vector<28x128xf32>
    %c58_330 = arith.constant 58 : index
    %c0_331 = arith.constant 0 : index
    %358 = vector.load %arg7[%c58_330, %c0_331] : memref<200x128xf32, #tpu.memory_space<vmem>>, vector<28x128xf32>
    %359 = arith.truncf %358 : vector<28x128xf32> to vector<28x128xbf16>
    %c256_332 = arith.constant 256 : index
    %c0_333 = arith.constant 0 : index
    %360 = vector.load %arg4[%c256_332, %c0_333] : memref<1152x128xbf16, #tpu.memory_space<vmem>>, vector<128x128xbf16>
    %cst_334 = arith.constant dense<0.000000e+00> : vector<28x128xf32>
    %361 = tpu.matmul %359, %360, %cst_334 {dimension_numbers = #tpu.dot_dimension_numbers<[1], [0], [0], [1], [0, 0, 1, 1], [], []>} : vector<28x128xbf16>, vector<128x128xbf16>, vector<28x128xf32> -> vector<28x128xf32>
    %362 = arith.addf %357, %361 : vector<28x128xf32>
    %c70_335 = arith.constant 70 : index
    %c0_336 = arith.constant 0 : index
    %363 = vector.load %arg7[%c70_335, %c0_336] : memref<200x128xf32, #tpu.memory_space<vmem>>, vector<28x128xf32>
    %364 = arith.truncf %363 : vector<28x128xf32> to vector<28x128xbf16>
    %c384_337 = arith.constant 384 : index
    %c0_338 = arith.constant 0 : index
    %365 = vector.load %arg4[%c384_337, %c0_338] : memref<1152x128xbf16, #tpu.memory_space<vmem>>, vector<128x128xbf16>
    %cst_339 = arith.constant dense<0.000000e+00> : vector<28x128xf32>
    %366 = tpu.matmul %364, %365, %cst_339 {dimension_numbers = #tpu.dot_dimension_numbers<[1], [0], [0], [1], [0, 0, 1, 1], [], []>} : vector<28x128xbf16>, vector<128x128xbf16>, vector<28x128xf32> -> vector<28x128xf32>
    %367 = arith.addf %362, %366 : vector<28x128xf32>
    %c71 = arith.constant 71 : index
    %c0_340 = arith.constant 0 : index
    %368 = vector.load %arg7[%c71, %c0_340] : memref<200x128xf32, #tpu.memory_space<vmem>>, vector<28x128xf32>
    %369 = arith.truncf %368 : vector<28x128xf32> to vector<28x128xbf16>
    %c512_341 = arith.constant 512 : index
    %c0_342 = arith.constant 0 : index
    %370 = vector.load %arg4[%c512_341, %c0_342] : memref<1152x128xbf16, #tpu.memory_space<vmem>>, vector<128x128xbf16>
    %cst_343 = arith.constant dense<0.000000e+00> : vector<28x128xf32>
    %371 = tpu.matmul %369, %370, %cst_343 {dimension_numbers = #tpu.dot_dimension_numbers<[1], [0], [0], [1], [0, 0, 1, 1], [], []>} : vector<28x128xbf16>, vector<128x128xbf16>, vector<28x128xf32> -> vector<28x128xf32>
    %372 = arith.addf %367, %371 : vector<28x128xf32>
    %c72 = arith.constant 72 : index
    %c0_344 = arith.constant 0 : index
    %373 = vector.load %arg7[%c72, %c0_344] : memref<200x128xf32, #tpu.memory_space<vmem>>, vector<28x128xf32>
    %374 = arith.truncf %373 : vector<28x128xf32> to vector<28x128xbf16>
    %c640_345 = arith.constant 640 : index
    %c0_346 = arith.constant 0 : index
    %375 = vector.load %arg4[%c640_345, %c0_346] : memref<1152x128xbf16, #tpu.memory_space<vmem>>, vector<128x128xbf16>
    %cst_347 = arith.constant dense<0.000000e+00> : vector<28x128xf32>
    %376 = tpu.matmul %374, %375, %cst_347 {dimension_numbers = #tpu.dot_dimension_numbers<[1], [0], [0], [1], [0, 0, 1, 1], [], []>} : vector<28x128xbf16>, vector<128x128xbf16>, vector<28x128xf32> -> vector<28x128xf32>
    %377 = arith.addf %372, %376 : vector<28x128xf32>
    %c84_348 = arith.constant 84 : index
    %c0_349 = arith.constant 0 : index
    %378 = vector.load %arg7[%c84_348, %c0_349] : memref<200x128xf32, #tpu.memory_space<vmem>>, vector<28x128xf32>
    %379 = arith.truncf %378 : vector<28x128xf32> to vector<28x128xbf16>
    %c768_350 = arith.constant 768 : index
    %c0_351 = arith.constant 0 : index
    %380 = vector.load %arg4[%c768_350, %c0_351] : memref<1152x128xbf16, #tpu.memory_space<vmem>>, vector<128x128xbf16>
    %cst_352 = arith.constant dense<0.000000e+00> : vector<28x128xf32>
    %381 = tpu.matmul %379, %380, %cst_352 {dimension_numbers = #tpu.dot_dimension_numbers<[1], [0], [0], [1], [0, 0, 1, 1], [], []>} : vector<28x128xbf16>, vector<128x128xbf16>, vector<28x128xf32> -> vector<28x128xf32>
    %382 = arith.addf %377, %381 : vector<28x128xf32>
    %c85 = arith.constant 85 : index
    %c0_353 = arith.constant 0 : index
    %383 = vector.load %arg7[%c85, %c0_353] : memref<200x128xf32, #tpu.memory_space<vmem>>, vector<28x128xf32>
    %384 = arith.truncf %383 : vector<28x128xf32> to vector<28x128xbf16>
    %c896_354 = arith.constant 896 : index
    %c0_355 = arith.constant 0 : index
    %385 = vector.load %arg4[%c896_354, %c0_355] : memref<1152x128xbf16, #tpu.memory_space<vmem>>, vector<128x128xbf16>
    %cst_356 = arith.constant dense<0.000000e+00> : vector<28x128xf32>
    %386 = tpu.matmul %384, %385, %cst_356 {dimension_numbers = #tpu.dot_dimension_numbers<[1], [0], [0], [1], [0, 0, 1, 1], [], []>} : vector<28x128xbf16>, vector<128x128xbf16>, vector<28x128xf32> -> vector<28x128xf32>
    %387 = arith.addf %382, %386 : vector<28x128xf32>
    %c86 = arith.constant 86 : index
    %c0_357 = arith.constant 0 : index
    %388 = vector.load %arg7[%c86, %c0_357] : memref<200x128xf32, #tpu.memory_space<vmem>>, vector<28x128xf32>
    %389 = arith.truncf %388 : vector<28x128xf32> to vector<28x128xbf16>
    %c1024_358 = arith.constant 1024 : index
    %c0_359 = arith.constant 0 : index
    %390 = vector.load %arg4[%c1024_358, %c0_359] : memref<1152x128xbf16, #tpu.memory_space<vmem>>, vector<128x128xbf16>
    %cst_360 = arith.constant dense<0.000000e+00> : vector<28x128xf32>
    %391 = tpu.matmul %389, %390, %cst_360 {dimension_numbers = #tpu.dot_dimension_numbers<[1], [0], [0], [1], [0, 0, 1, 1], [], []>} : vector<28x128xbf16>, vector<128x128xbf16>, vector<28x128xf32> -> vector<28x128xf32>
    %392 = arith.addf %387, %391 : vector<28x128xf32>
    %c0_361 = arith.constant 0 : index
    %c0_362 = arith.constant 0 : index
    %393 = vector.load %arg8[%c0_361, %c0_362] : memref<56x128xf32, #tpu.memory_space<vmem>>, vector<28x128xf32>
    tpu.vector_store %arg8[%c0_361, %c0_362], %392 {strides = array<i32>} : memref<56x128xf32, #tpu.memory_space<vmem>>, vector<28x128xf32>,
    %c0_363 = arith.constant 0 : index
    %c0_364 = arith.constant 0 : index
    %394 = tpu.strided_load %arg8[%c0_363, %c0_364] {strides = array<i32: 2, 1>} : memref<56x128xf32, #tpu.memory_space<vmem>>, vector<6x128xf32>
    %c1_365 = arith.constant 1 : index
    %c0_366 = arith.constant 0 : index
    %395 = tpu.strided_load %arg8[%c1_365, %c0_366] {strides = array<i32: 2, 1>} : memref<56x128xf32, #tpu.memory_space<vmem>>, vector<6x128xf32>
    %396 = arith.maximumf %394, %395 : vector<6x128xf32>
    %c14_367 = arith.constant 14 : index
    %c0_368 = arith.constant 0 : index
    %397 = tpu.strided_load %arg8[%c14_367, %c0_368] {strides = array<i32: 2, 1>} : memref<56x128xf32, #tpu.memory_space<vmem>>, vector<6x128xf32>
    %c15_369 = arith.constant 15 : index
    %c0_370 = arith.constant 0 : index
    %398 = tpu.strided_load %arg8[%c15_369, %c0_370] {strides = array<i32: 2, 1>} : memref<56x128xf32, #tpu.memory_space<vmem>>, vector<6x128xf32>
    %399 = arith.maximumf %397, %398 : vector<6x128xf32>
    %400 = arith.maximumf %396, %399 : vector<6x128xf32>
    %401 = vector.broadcast %2 : vector<1x128xf32> to vector<6x128xf32>
    %402 = arith.addf %400, %401 : vector<6x128xf32>
    %cst_371 = arith.constant 0.000000e+00 : f32
    %403 = vector.broadcast %cst_371 : f32 to vector<6x128xf32>
    %404 = arith.maximumf %402, %403 : vector<6x128xf32>
    %405 = vector.extract_strided_slice %404 {offsets = [0, 0], sizes = [6, 32], strides = [1, 1]} : vector<6x128xf32> to vector<6x32xf32>
    %c0_372 = arith.constant 0 : index
    %c12 = arith.constant 12 : index
    %c0_373 = arith.constant 0 : index
    %406 = vector.load %arg6[%c0_372, %c12, %c0_373] : memref<1x36x32xf32, #tpu.memory_space<vmem>>, vector<1x6x32xf32>
    %407 = vector.shape_cast %406 : vector<1x6x32xf32> to vector<6x32xf32>
    %408 = vector.shape_cast %405 : vector<6x32xf32> to vector<1x6x32xf32>
    tpu.vector_store %arg6[%c0_372, %c12, %c0_373], %408 {strides = array<i32>} : memref<1x36x32xf32, #tpu.memory_space<vmem>>, vector<1x6x32xf32>,
    %c84_374 = arith.constant 84 : index
    %c0_375 = arith.constant 0 : index
    %409 = vector.load %arg7[%c84_374, %c0_375] : memref<200x128xf32, #tpu.memory_space<vmem>>, vector<28x128xf32>
    %410 = arith.truncf %409 : vector<28x128xf32> to vector<28x128xbf16>
    %c0_376 = arith.constant 0 : index
    %c0_377 = arith.constant 0 : index
    %411 = vector.load %arg4[%c0_376, %c0_377] : memref<1152x128xbf16, #tpu.memory_space<vmem>>, vector<128x128xbf16>
    %cst_378 = arith.constant dense<0.000000e+00> : vector<28x128xf32>
    %412 = tpu.matmul %410, %411, %cst_378 {dimension_numbers = #tpu.dot_dimension_numbers<[1], [0], [0], [1], [0, 0, 1, 1], [], []>} : vector<28x128xbf16>, vector<128x128xbf16>, vector<28x128xf32> -> vector<28x128xf32>
    %c85_379 = arith.constant 85 : index
    %c0_380 = arith.constant 0 : index
    %413 = vector.load %arg7[%c85_379, %c0_380] : memref<200x128xf32, #tpu.memory_space<vmem>>, vector<28x128xf32>
    %414 = arith.truncf %413 : vector<28x128xf32> to vector<28x128xbf16>
    %c128_381 = arith.constant 128 : index
    %c0_382 = arith.constant 0 : index
    %415 = vector.load %arg4[%c128_381, %c0_382] : memref<1152x128xbf16, #tpu.memory_space<vmem>>, vector<128x128xbf16>
    %cst_383 = arith.constant dense<0.000000e+00> : vector<28x128xf32>
    %416 = tpu.matmul %414, %415, %cst_383 {dimension_numbers = #tpu.dot_dimension_numbers<[1], [0], [0], [1], [0, 0, 1, 1], [], []>} : vector<28x128xbf16>, vector<128x128xbf16>, vector<28x128xf32> -> vector<28x128xf32>
    %417 = arith.addf %412, %416 : vector<28x128xf32>
    %c86_384 = arith.constant 86 : index
    %c0_385 = arith.constant 0 : index
    %418 = vector.load %arg7[%c86_384, %c0_385] : memref<200x128xf32, #tpu.memory_space<vmem>>, vector<28x128xf32>
    %419 = arith.truncf %418 : vector<28x128xf32> to vector<28x128xbf16>
    %c256_386 = arith.constant 256 : index
    %c0_387 = arith.constant 0 : index
    %420 = vector.load %arg4[%c256_386, %c0_387] : memref<1152x128xbf16, #tpu.memory_space<vmem>>, vector<128x128xbf16>
    %cst_388 = arith.constant dense<0.000000e+00> : vector<28x128xf32>
    %421 = tpu.matmul %419, %420, %cst_388 {dimension_numbers = #tpu.dot_dimension_numbers<[1], [0], [0], [1], [0, 0, 1, 1], [], []>} : vector<28x128xbf16>, vector<128x128xbf16>, vector<28x128xf32> -> vector<28x128xf32>
    %422 = arith.addf %417, %421 : vector<28x128xf32>
    %c98_389 = arith.constant 98 : index
    %c0_390 = arith.constant 0 : index
    %423 = vector.load %arg7[%c98_389, %c0_390] : memref<200x128xf32, #tpu.memory_space<vmem>>, vector<28x128xf32>
    %424 = arith.truncf %423 : vector<28x128xf32> to vector<28x128xbf16>
    %c384_391 = arith.constant 384 : index
    %c0_392 = arith.constant 0 : index
    %425 = vector.load %arg4[%c384_391, %c0_392] : memref<1152x128xbf16, #tpu.memory_space<vmem>>, vector<128x128xbf16>
    %cst_393 = arith.constant dense<0.000000e+00> : vector<28x128xf32>
    %426 = tpu.matmul %424, %425, %cst_393 {dimension_numbers = #tpu.dot_dimension_numbers<[1], [0], [0], [1], [0, 0, 1, 1], [], []>} : vector<28x128xbf16>, vector<128x128xbf16>, vector<28x128xf32> -> vector<28x128xf32>
    %427 = arith.addf %422, %426 : vector<28x128xf32>
    %c99 = arith.constant 99 : index
    %c0_394 = arith.constant 0 : index
    %428 = vector.load %arg7[%c99, %c0_394] : memref<200x128xf32, #tpu.memory_space<vmem>>, vector<28x128xf32>
    %429 = arith.truncf %428 : vector<28x128xf32> to vector<28x128xbf16>
    %c512_395 = arith.constant 512 : index
    %c0_396 = arith.constant 0 : index
    %430 = vector.load %arg4[%c512_395, %c0_396] : memref<1152x128xbf16, #tpu.memory_space<vmem>>, vector<128x128xbf16>
    %cst_397 = arith.constant dense<0.000000e+00> : vector<28x128xf32>
    %431 = tpu.matmul %429, %430, %cst_397 {dimension_numbers = #tpu.dot_dimension_numbers<[1], [0], [0], [1], [0, 0, 1, 1], [], []>} : vector<28x128xbf16>, vector<128x128xbf16>, vector<28x128xf32> -> vector<28x128xf32>
    %432 = arith.addf %427, %431 : vector<28x128xf32>
    %c100 = arith.constant 100 : index
    %c0_398 = arith.constant 0 : index
    %433 = vector.load %arg7[%c100, %c0_398] : memref<200x128xf32, #tpu.memory_space<vmem>>, vector<28x128xf32>
    %434 = arith.truncf %433 : vector<28x128xf32> to vector<28x128xbf16>
    %c640_399 = arith.constant 640 : index
    %c0_400 = arith.constant 0 : index
    %435 = vector.load %arg4[%c640_399, %c0_400] : memref<1152x128xbf16, #tpu.memory_space<vmem>>, vector<128x128xbf16>
    %cst_401 = arith.constant dense<0.000000e+00> : vector<28x128xf32>
    %436 = tpu.matmul %434, %435, %cst_401 {dimension_numbers = #tpu.dot_dimension_numbers<[1], [0], [0], [1], [0, 0, 1, 1], [], []>} : vector<28x128xbf16>, vector<128x128xbf16>, vector<28x128xf32> -> vector<28x128xf32>
    %437 = arith.addf %432, %436 : vector<28x128xf32>
    %c112_402 = arith.constant 112 : index
    %c0_403 = arith.constant 0 : index
    %438 = vector.load %arg7[%c112_402, %c0_403] : memref<200x128xf32, #tpu.memory_space<vmem>>, vector<28x128xf32>
    %439 = arith.truncf %438 : vector<28x128xf32> to vector<28x128xbf16>
    %c768_404 = arith.constant 768 : index
    %c0_405 = arith.constant 0 : index
    %440 = vector.load %arg4[%c768_404, %c0_405] : memref<1152x128xbf16, #tpu.memory_space<vmem>>, vector<128x128xbf16>
    %cst_406 = arith.constant dense<0.000000e+00> : vector<28x128xf32>
    %441 = tpu.matmul %439, %440, %cst_406 {dimension_numbers = #tpu.dot_dimension_numbers<[1], [0], [0], [1], [0, 0, 1, 1], [], []>} : vector<28x128xbf16>, vector<128x128xbf16>, vector<28x128xf32> -> vector<28x128xf32>
    %442 = arith.addf %437, %441 : vector<28x128xf32>
    %c113 = arith.constant 113 : index
    %c0_407 = arith.constant 0 : index
    %443 = vector.load %arg7[%c113, %c0_407] : memref<200x128xf32, #tpu.memory_space<vmem>>, vector<28x128xf32>
    %444 = arith.truncf %443 : vector<28x128xf32> to vector<28x128xbf16>
    %c896_408 = arith.constant 896 : index
    %c0_409 = arith.constant 0 : index
    %445 = vector.load %arg4[%c896_408, %c0_409] : memref<1152x128xbf16, #tpu.memory_space<vmem>>, vector<128x128xbf16>
    %cst_410 = arith.constant dense<0.000000e+00> : vector<28x128xf32>
    %446 = tpu.matmul %444, %445, %cst_410 {dimension_numbers = #tpu.dot_dimension_numbers<[1], [0], [0], [1], [0, 0, 1, 1], [], []>} : vector<28x128xbf16>, vector<128x128xbf16>, vector<28x128xf32> -> vector<28x128xf32>
    %447 = arith.addf %442, %446 : vector<28x128xf32>
    %c114 = arith.constant 114 : index
    %c0_411 = arith.constant 0 : index
    %448 = vector.load %arg7[%c114, %c0_411] : memref<200x128xf32, #tpu.memory_space<vmem>>, vector<28x128xf32>
    %449 = arith.truncf %448 : vector<28x128xf32> to vector<28x128xbf16>
    %c1024_412 = arith.constant 1024 : index
    %c0_413 = arith.constant 0 : index
    %450 = vector.load %arg4[%c1024_412, %c0_413] : memref<1152x128xbf16, #tpu.memory_space<vmem>>, vector<128x128xbf16>
    %cst_414 = arith.constant dense<0.000000e+00> : vector<28x128xf32>
    %451 = tpu.matmul %449, %450, %cst_414 {dimension_numbers = #tpu.dot_dimension_numbers<[1], [0], [0], [1], [0, 0, 1, 1], [], []>} : vector<28x128xbf16>, vector<128x128xbf16>, vector<28x128xf32> -> vector<28x128xf32>
    %452 = arith.addf %447, %451 : vector<28x128xf32>
    %c0_415 = arith.constant 0 : index
    %c0_416 = arith.constant 0 : index
    %453 = vector.load %arg8[%c0_415, %c0_416] : memref<56x128xf32, #tpu.memory_space<vmem>>, vector<28x128xf32>
    tpu.vector_store %arg8[%c0_415, %c0_416], %452 {strides = array<i32>} : memref<56x128xf32, #tpu.memory_space<vmem>>, vector<28x128xf32>,
    %c0_417 = arith.constant 0 : index
    %c0_418 = arith.constant 0 : index
    %454 = tpu.strided_load %arg8[%c0_417, %c0_418] {strides = array<i32: 2, 1>} : memref<56x128xf32, #tpu.memory_space<vmem>>, vector<6x128xf32>
    %c1_419 = arith.constant 1 : index
    %c0_420 = arith.constant 0 : index
    %455 = tpu.strided_load %arg8[%c1_419, %c0_420] {strides = array<i32: 2, 1>} : memref<56x128xf32, #tpu.memory_space<vmem>>, vector<6x128xf32>
    %456 = arith.maximumf %454, %455 : vector<6x128xf32>
    %c14_421 = arith.constant 14 : index
    %c0_422 = arith.constant 0 : index
    %457 = tpu.strided_load %arg8[%c14_421, %c0_422] {strides = array<i32: 2, 1>} : memref<56x128xf32, #tpu.memory_space<vmem>>, vector<6x128xf32>
    %c15_423 = arith.constant 15 : index
    %c0_424 = arith.constant 0 : index
    %458 = tpu.strided_load %arg8[%c15_423, %c0_424] {strides = array<i32: 2, 1>} : memref<56x128xf32, #tpu.memory_space<vmem>>, vector<6x128xf32>
    %459 = arith.maximumf %457, %458 : vector<6x128xf32>
    %460 = arith.maximumf %456, %459 : vector<6x128xf32>
    %461 = vector.broadcast %2 : vector<1x128xf32> to vector<6x128xf32>
    %462 = arith.addf %460, %461 : vector<6x128xf32>
    %cst_425 = arith.constant 0.000000e+00 : f32
    %463 = vector.broadcast %cst_425 : f32 to vector<6x128xf32>
    %464 = arith.maximumf %462, %463 : vector<6x128xf32>
    %465 = vector.extract_strided_slice %464 {offsets = [0, 0], sizes = [6, 32], strides = [1, 1]} : vector<6x128xf32> to vector<6x32xf32>
    %c0_426 = arith.constant 0 : index
    %c18 = arith.constant 18 : index
    %c0_427 = arith.constant 0 : index
    %466 = vector.load %arg6[%c0_426, %c18, %c0_427] : memref<1x36x32xf32, #tpu.memory_space<vmem>>, vector<1x6x32xf32>
    %467 = vector.shape_cast %466 : vector<1x6x32xf32> to vector<6x32xf32>
    %468 = vector.shape_cast %465 : vector<6x32xf32> to vector<1x6x32xf32>
    tpu.vector_store %arg6[%c0_426, %c18, %c0_427], %468 {strides = array<i32>} : memref<1x36x32xf32, #tpu.memory_space<vmem>>, vector<1x6x32xf32>,
    %c112_428 = arith.constant 112 : index
    %c0_429 = arith.constant 0 : index
    %469 = vector.load %arg7[%c112_428, %c0_429] : memref<200x128xf32, #tpu.memory_space<vmem>>, vector<28x128xf32>
    %470 = arith.truncf %469 : vector<28x128xf32> to vector<28x128xbf16>
    %c0_430 = arith.constant 0 : index
    %c0_431 = arith.constant 0 : index
    %471 = vector.load %arg4[%c0_430, %c0_431] : memref<1152x128xbf16, #tpu.memory_space<vmem>>, vector<128x128xbf16>
    %cst_432 = arith.constant dense<0.000000e+00> : vector<28x128xf32>
    %472 = tpu.matmul %470, %471, %cst_432 {dimension_numbers = #tpu.dot_dimension_numbers<[1], [0], [0], [1], [0, 0, 1, 1], [], []>} : vector<28x128xbf16>, vector<128x128xbf16>, vector<28x128xf32> -> vector<28x128xf32>
    %c113_433 = arith.constant 113 : index
    %c0_434 = arith.constant 0 : index
    %473 = vector.load %arg7[%c113_433, %c0_434] : memref<200x128xf32, #tpu.memory_space<vmem>>, vector<28x128xf32>
    %474 = arith.truncf %473 : vector<28x128xf32> to vector<28x128xbf16>
    %c128_435 = arith.constant 128 : index
    %c0_436 = arith.constant 0 : index
    %475 = vector.load %arg4[%c128_435, %c0_436] : memref<1152x128xbf16, #tpu.memory_space<vmem>>, vector<128x128xbf16>
    %cst_437 = arith.constant dense<0.000000e+00> : vector<28x128xf32>
    %476 = tpu.matmul %474, %475, %cst_437 {dimension_numbers = #tpu.dot_dimension_numbers<[1], [0], [0], [1], [0, 0, 1, 1], [], []>} : vector<28x128xbf16>, vector<128x128xbf16>, vector<28x128xf32> -> vector<28x128xf32>
    %477 = arith.addf %472, %476 : vector<28x128xf32>
    %c114_438 = arith.constant 114 : index
    %c0_439 = arith.constant 0 : index
    %478 = vector.load %arg7[%c114_438, %c0_439] : memref<200x128xf32, #tpu.memory_space<vmem>>, vector<28x128xf32>
    %479 = arith.truncf %478 : vector<28x128xf32> to vector<28x128xbf16>
    %c256_440 = arith.constant 256 : index
    %c0_441 = arith.constant 0 : index
    %480 = vector.load %arg4[%c256_440, %c0_441] : memref<1152x128xbf16, #tpu.memory_space<vmem>>, vector<128x128xbf16>
    %cst_442 = arith.constant dense<0.000000e+00> : vector<28x128xf32>
    %481 = tpu.matmul %479, %480, %cst_442 {dimension_numbers = #tpu.dot_dimension_numbers<[1], [0], [0], [1], [0, 0, 1, 1], [], []>} : vector<28x128xbf16>, vector<128x128xbf16>, vector<28x128xf32> -> vector<28x128xf32>
    %482 = arith.addf %477, %481 : vector<28x128xf32>
    %c126_443 = arith.constant 126 : index
    %c0_444 = arith.constant 0 : index
    %483 = vector.load %arg7[%c126_443, %c0_444] : memref<200x128xf32, #tpu.memory_space<vmem>>, vector<28x128xf32>
    %484 = arith.truncf %483 : vector<28x128xf32> to vector<28x128xbf16>
    %c384_445 = arith.constant 384 : index
    %c0_446 = arith.constant 0 : index
    %485 = vector.load %arg4[%c384_445, %c0_446] : memref<1152x128xbf16, #tpu.memory_space<vmem>>, vector<128x128xbf16>
    %cst_447 = arith.constant dense<0.000000e+00> : vector<28x128xf32>
    %486 = tpu.matmul %484, %485, %cst_447 {dimension_numbers = #tpu.dot_dimension_numbers<[1], [0], [0], [1], [0, 0, 1, 1], [], []>} : vector<28x128xbf16>, vector<128x128xbf16>, vector<28x128xf32> -> vector<28x128xf32>
    %487 = arith.addf %482, %486 : vector<28x128xf32>
    %c127 = arith.constant 127 : index
    %c0_448 = arith.constant 0 : index
    %488 = vector.load %arg7[%c127, %c0_448] : memref<200x128xf32, #tpu.memory_space<vmem>>, vector<28x128xf32>
    %489 = arith.truncf %488 : vector<28x128xf32> to vector<28x128xbf16>
    %c512_449 = arith.constant 512 : index
    %c0_450 = arith.constant 0 : index
    %490 = vector.load %arg4[%c512_449, %c0_450] : memref<1152x128xbf16, #tpu.memory_space<vmem>>, vector<128x128xbf16>
    %cst_451 = arith.constant dense<0.000000e+00> : vector<28x128xf32>
    %491 = tpu.matmul %489, %490, %cst_451 {dimension_numbers = #tpu.dot_dimension_numbers<[1], [0], [0], [1], [0, 0, 1, 1], [], []>} : vector<28x128xbf16>, vector<128x128xbf16>, vector<28x128xf32> -> vector<28x128xf32>
    %492 = arith.addf %487, %491 : vector<28x128xf32>
    %c128_452 = arith.constant 128 : index
    %c0_453 = arith.constant 0 : index
    %493 = vector.load %arg7[%c128_452, %c0_453] : memref<200x128xf32, #tpu.memory_space<vmem>>, vector<28x128xf32>
    %494 = arith.truncf %493 : vector<28x128xf32> to vector<28x128xbf16>
    %c640_454 = arith.constant 640 : index
    %c0_455 = arith.constant 0 : index
    %495 = vector.load %arg4[%c640_454, %c0_455] : memref<1152x128xbf16, #tpu.memory_space<vmem>>, vector<128x128xbf16>
    %cst_456 = arith.constant dense<0.000000e+00> : vector<28x128xf32>
    %496 = tpu.matmul %494, %495, %cst_456 {dimension_numbers = #tpu.dot_dimension_numbers<[1], [0], [0], [1], [0, 0, 1, 1], [], []>} : vector<28x128xbf16>, vector<128x128xbf16>, vector<28x128xf32> -> vector<28x128xf32>
    %497 = arith.addf %492, %496 : vector<28x128xf32>
    %c140_457 = arith.constant 140 : index
    %c0_458 = arith.constant 0 : index
    %498 = vector.load %arg7[%c140_457, %c0_458] : memref<200x128xf32, #tpu.memory_space<vmem>>, vector<28x128xf32>
    %499 = arith.truncf %498 : vector<28x128xf32> to vector<28x128xbf16>
    %c768_459 = arith.constant 768 : index
    %c0_460 = arith.constant 0 : index
    %500 = vector.load %arg4[%c768_459, %c0_460] : memref<1152x128xbf16, #tpu.memory_space<vmem>>, vector<128x128xbf16>
    %cst_461 = arith.constant dense<0.000000e+00> : vector<28x128xf32>
    %501 = tpu.matmul %499, %500, %cst_461 {dimension_numbers = #tpu.dot_dimension_numbers<[1], [0], [0], [1], [0, 0, 1, 1], [], []>} : vector<28x128xbf16>, vector<128x128xbf16>, vector<28x128xf32> -> vector<28x128xf32>
    %502 = arith.addf %497, %501 : vector<28x128xf32>
    %c141 = arith.constant 141 : index
    %c0_462 = arith.constant 0 : index
    %503 = vector.load %arg7[%c141, %c0_462] : memref<200x128xf32, #tpu.memory_space<vmem>>, vector<28x128xf32>
    %504 = arith.truncf %503 : vector<28x128xf32> to vector<28x128xbf16>
    %c896_463 = arith.constant 896 : index
    %c0_464 = arith.constant 0 : index
    %505 = vector.load %arg4[%c896_463, %c0_464] : memref<1152x128xbf16, #tpu.memory_space<vmem>>, vector<128x128xbf16>
    %cst_465 = arith.constant dense<0.000000e+00> : vector<28x128xf32>
    %506 = tpu.matmul %504, %505, %cst_465 {dimension_numbers = #tpu.dot_dimension_numbers<[1], [0], [0], [1], [0, 0, 1, 1], [], []>} : vector<28x128xbf16>, vector<128x128xbf16>, vector<28x128xf32> -> vector<28x128xf32>
    %507 = arith.addf %502, %506 : vector<28x128xf32>
    %c142 = arith.constant 142 : index
    %c0_466 = arith.constant 0 : index
    %508 = vector.load %arg7[%c142, %c0_466] : memref<200x128xf32, #tpu.memory_space<vmem>>, vector<28x128xf32>
    %509 = arith.truncf %508 : vector<28x128xf32> to vector<28x128xbf16>
    %c1024_467 = arith.constant 1024 : index
    %c0_468 = arith.constant 0 : index
    %510 = vector.load %arg4[%c1024_467, %c0_468] : memref<1152x128xbf16, #tpu.memory_space<vmem>>, vector<128x128xbf16>
    %cst_469 = arith.constant dense<0.000000e+00> : vector<28x128xf32>
    %511 = tpu.matmul %509, %510, %cst_469 {dimension_numbers = #tpu.dot_dimension_numbers<[1], [0], [0], [1], [0, 0, 1, 1], [], []>} : vector<28x128xbf16>, vector<128x128xbf16>, vector<28x128xf32> -> vector<28x128xf32>
    %512 = arith.addf %507, %511 : vector<28x128xf32>
    %c0_470 = arith.constant 0 : index
    %c0_471 = arith.constant 0 : index
    %513 = vector.load %arg8[%c0_470, %c0_471] : memref<56x128xf32, #tpu.memory_space<vmem>>, vector<28x128xf32>
    tpu.vector_store %arg8[%c0_470, %c0_471], %512 {strides = array<i32>} : memref<56x128xf32, #tpu.memory_space<vmem>>, vector<28x128xf32>,
    %c0_472 = arith.constant 0 : index
    %c0_473 = arith.constant 0 : index
    %514 = tpu.strided_load %arg8[%c0_472, %c0_473] {strides = array<i32: 2, 1>} : memref<56x128xf32, #tpu.memory_space<vmem>>, vector<6x128xf32>
    %c1_474 = arith.constant 1 : index
    %c0_475 = arith.constant 0 : index
    %515 = tpu.strided_load %arg8[%c1_474, %c0_475] {strides = array<i32: 2, 1>} : memref<56x128xf32, #tpu.memory_space<vmem>>, vector<6x128xf32>
    %516 = arith.maximumf %514, %515 : vector<6x128xf32>
    %c14_476 = arith.constant 14 : index
    %c0_477 = arith.constant 0 : index
    %517 = tpu.strided_load %arg8[%c14_476, %c0_477] {strides = array<i32: 2, 1>} : memref<56x128xf32, #tpu.memory_space<vmem>>, vector<6x128xf32>
    %c15_478 = arith.constant 15 : index
    %c0_479 = arith.constant 0 : index
    %518 = tpu.strided_load %arg8[%c15_478, %c0_479] {strides = array<i32: 2, 1>} : memref<56x128xf32, #tpu.memory_space<vmem>>, vector<6x128xf32>
    %519 = arith.maximumf %517, %518 : vector<6x128xf32>
    %520 = arith.maximumf %516, %519 : vector<6x128xf32>
    %521 = vector.broadcast %2 : vector<1x128xf32> to vector<6x128xf32>
    %522 = arith.addf %520, %521 : vector<6x128xf32>
    %cst_480 = arith.constant 0.000000e+00 : f32
    %523 = vector.broadcast %cst_480 : f32 to vector<6x128xf32>
    %524 = arith.maximumf %522, %523 : vector<6x128xf32>
    %525 = vector.extract_strided_slice %524 {offsets = [0, 0], sizes = [6, 32], strides = [1, 1]} : vector<6x128xf32> to vector<6x32xf32>
    %c0_481 = arith.constant 0 : index
    %c24 = arith.constant 24 : index
    %c0_482 = arith.constant 0 : index
    %526 = vector.load %arg6[%c0_481, %c24, %c0_482] : memref<1x36x32xf32, #tpu.memory_space<vmem>>, vector<1x6x32xf32>
    %527 = vector.shape_cast %526 : vector<1x6x32xf32> to vector<6x32xf32>
    %528 = vector.shape_cast %525 : vector<6x32xf32> to vector<1x6x32xf32>
    tpu.vector_store %arg6[%c0_481, %c24, %c0_482], %528 {strides = array<i32>} : memref<1x36x32xf32, #tpu.memory_space<vmem>>, vector<1x6x32xf32>,
    %c140_483 = arith.constant 140 : index
    %c0_484 = arith.constant 0 : index
    %529 = vector.load %arg7[%c140_483, %c0_484] : memref<200x128xf32, #tpu.memory_space<vmem>>, vector<28x128xf32>
    %530 = arith.truncf %529 : vector<28x128xf32> to vector<28x128xbf16>
    %c0_485 = arith.constant 0 : index
    %c0_486 = arith.constant 0 : index
    %531 = vector.load %arg4[%c0_485, %c0_486] : memref<1152x128xbf16, #tpu.memory_space<vmem>>, vector<128x128xbf16>
    %cst_487 = arith.constant dense<0.000000e+00> : vector<28x128xf32>
    %532 = tpu.matmul %530, %531, %cst_487 {dimension_numbers = #tpu.dot_dimension_numbers<[1], [0], [0], [1], [0, 0, 1, 1], [], []>} : vector<28x128xbf16>, vector<128x128xbf16>, vector<28x128xf32> -> vector<28x128xf32>
    %c141_488 = arith.constant 141 : index
    %c0_489 = arith.constant 0 : index
    %533 = vector.load %arg7[%c141_488, %c0_489] : memref<200x128xf32, #tpu.memory_space<vmem>>, vector<28x128xf32>
    %534 = arith.truncf %533 : vector<28x128xf32> to vector<28x128xbf16>
    %c128_490 = arith.constant 128 : index
    %c0_491 = arith.constant 0 : index
    %535 = vector.load %arg4[%c128_490, %c0_491] : memref<1152x128xbf16, #tpu.memory_space<vmem>>, vector<128x128xbf16>
    %cst_492 = arith.constant dense<0.000000e+00> : vector<28x128xf32>
    %536 = tpu.matmul %534, %535, %cst_492 {dimension_numbers = #tpu.dot_dimension_numbers<[1], [0], [0], [1], [0, 0, 1, 1], [], []>} : vector<28x128xbf16>, vector<128x128xbf16>, vector<28x128xf32> -> vector<28x128xf32>
    %537 = arith.addf %532, %536 : vector<28x128xf32>
    %c142_493 = arith.constant 142 : index
    %c0_494 = arith.constant 0 : index
    %538 = vector.load %arg7[%c142_493, %c0_494] : memref<200x128xf32, #tpu.memory_space<vmem>>, vector<28x128xf32>
    %539 = arith.truncf %538 : vector<28x128xf32> to vector<28x128xbf16>
    %c256_495 = arith.constant 256 : index
    %c0_496 = arith.constant 0 : index
    %540 = vector.load %arg4[%c256_495, %c0_496] : memref<1152x128xbf16, #tpu.memory_space<vmem>>, vector<128x128xbf16>
    %cst_497 = arith.constant dense<0.000000e+00> : vector<28x128xf32>
    %541 = tpu.matmul %539, %540, %cst_497 {dimension_numbers = #tpu.dot_dimension_numbers<[1], [0], [0], [1], [0, 0, 1, 1], [], []>} : vector<28x128xbf16>, vector<128x128xbf16>, vector<28x128xf32> -> vector<28x128xf32>
    %542 = arith.addf %537, %541 : vector<28x128xf32>
    %c154_498 = arith.constant 154 : index
    %c0_499 = arith.constant 0 : index
    %543 = vector.load %arg7[%c154_498, %c0_499] : memref<200x128xf32, #tpu.memory_space<vmem>>, vector<28x128xf32>
    %544 = arith.truncf %543 : vector<28x128xf32> to vector<28x128xbf16>
    %c384_500 = arith.constant 384 : index
    %c0_501 = arith.constant 0 : index
    %545 = vector.load %arg4[%c384_500, %c0_501] : memref<1152x128xbf16, #tpu.memory_space<vmem>>, vector<128x128xbf16>
    %cst_502 = arith.constant dense<0.000000e+00> : vector<28x128xf32>
    %546 = tpu.matmul %544, %545, %cst_502 {dimension_numbers = #tpu.dot_dimension_numbers<[1], [0], [0], [1], [0, 0, 1, 1], [], []>} : vector<28x128xbf16>, vector<128x128xbf16>, vector<28x128xf32> -> vector<28x128xf32>
    %547 = arith.addf %542, %546 : vector<28x128xf32>
    %c155 = arith.constant 155 : index
    %c0_503 = arith.constant 0 : index
    %548 = vector.load %arg7[%c155, %c0_503] : memref<200x128xf32, #tpu.memory_space<vmem>>, vector<28x128xf32>
    %549 = arith.truncf %548 : vector<28x128xf32> to vector<28x128xbf16>
    %c512_504 = arith.constant 512 : index
    %c0_505 = arith.constant 0 : index
    %550 = vector.load %arg4[%c512_504, %c0_505] : memref<1152x128xbf16, #tpu.memory_space<vmem>>, vector<128x128xbf16>
    %cst_506 = arith.constant dense<0.000000e+00> : vector<28x128xf32>
    %551 = tpu.matmul %549, %550, %cst_506 {dimension_numbers = #tpu.dot_dimension_numbers<[1], [0], [0], [1], [0, 0, 1, 1], [], []>} : vector<28x128xbf16>, vector<128x128xbf16>, vector<28x128xf32> -> vector<28x128xf32>
    %552 = arith.addf %547, %551 : vector<28x128xf32>
    %c156 = arith.constant 156 : index
    %c0_507 = arith.constant 0 : index
    %553 = vector.load %arg7[%c156, %c0_507] : memref<200x128xf32, #tpu.memory_space<vmem>>, vector<28x128xf32>
    %554 = arith.truncf %553 : vector<28x128xf32> to vector<28x128xbf16>
    %c640_508 = arith.constant 640 : index
    %c0_509 = arith.constant 0 : index
    %555 = vector.load %arg4[%c640_508, %c0_509] : memref<1152x128xbf16, #tpu.memory_space<vmem>>, vector<128x128xbf16>
    %cst_510 = arith.constant dense<0.000000e+00> : vector<28x128xf32>
    %556 = tpu.matmul %554, %555, %cst_510 {dimension_numbers = #tpu.dot_dimension_numbers<[1], [0], [0], [1], [0, 0, 1, 1], [], []>} : vector<28x128xbf16>, vector<128x128xbf16>, vector<28x128xf32> -> vector<28x128xf32>
    %557 = arith.addf %552, %556 : vector<28x128xf32>
    %c168_511 = arith.constant 168 : index
    %c0_512 = arith.constant 0 : index
    %558 = vector.load %arg7[%c168_511, %c0_512] : memref<200x128xf32, #tpu.memory_space<vmem>>, vector<28x128xf32>
    %559 = arith.truncf %558 : vector<28x128xf32> to vector<28x128xbf16>
    %c768_513 = arith.constant 768 : index
    %c0_514 = arith.constant 0 : index
    %560 = vector.load %arg4[%c768_513, %c0_514] : memref<1152x128xbf16, #tpu.memory_space<vmem>>, vector<128x128xbf16>
    %cst_515 = arith.constant dense<0.000000e+00> : vector<28x128xf32>
    %561 = tpu.matmul %559, %560, %cst_515 {dimension_numbers = #tpu.dot_dimension_numbers<[1], [0], [0], [1], [0, 0, 1, 1], [], []>} : vector<28x128xbf16>, vector<128x128xbf16>, vector<28x128xf32> -> vector<28x128xf32>
    %562 = arith.addf %557, %561 : vector<28x128xf32>
    %c169 = arith.constant 169 : index
    %c0_516 = arith.constant 0 : index
    %563 = vector.load %arg7[%c169, %c0_516] : memref<200x128xf32, #tpu.memory_space<vmem>>, vector<28x128xf32>
    %564 = arith.truncf %563 : vector<28x128xf32> to vector<28x128xbf16>
    %c896_517 = arith.constant 896 : index
    %c0_518 = arith.constant 0 : index
    %565 = vector.load %arg4[%c896_517, %c0_518] : memref<1152x128xbf16, #tpu.memory_space<vmem>>, vector<128x128xbf16>
    %cst_519 = arith.constant dense<0.000000e+00> : vector<28x128xf32>
    %566 = tpu.matmul %564, %565, %cst_519 {dimension_numbers = #tpu.dot_dimension_numbers<[1], [0], [0], [1], [0, 0, 1, 1], [], []>} : vector<28x128xbf16>, vector<128x128xbf16>, vector<28x128xf32> -> vector<28x128xf32>
    %567 = arith.addf %562, %566 : vector<28x128xf32>
    %c170 = arith.constant 170 : index
    %c0_520 = arith.constant 0 : index
    %568 = vector.load %arg7[%c170, %c0_520] : memref<200x128xf32, #tpu.memory_space<vmem>>, vector<28x128xf32>
    %569 = arith.truncf %568 : vector<28x128xf32> to vector<28x128xbf16>
    %c1024_521 = arith.constant 1024 : index
    %c0_522 = arith.constant 0 : index
    %570 = vector.load %arg4[%c1024_521, %c0_522] : memref<1152x128xbf16, #tpu.memory_space<vmem>>, vector<128x128xbf16>
    %cst_523 = arith.constant dense<0.000000e+00> : vector<28x128xf32>
    %571 = tpu.matmul %569, %570, %cst_523 {dimension_numbers = #tpu.dot_dimension_numbers<[1], [0], [0], [1], [0, 0, 1, 1], [], []>} : vector<28x128xbf16>, vector<128x128xbf16>, vector<28x128xf32> -> vector<28x128xf32>
    %572 = arith.addf %567, %571 : vector<28x128xf32>
    %c0_524 = arith.constant 0 : index
    %c0_525 = arith.constant 0 : index
    %573 = vector.load %arg8[%c0_524, %c0_525] : memref<56x128xf32, #tpu.memory_space<vmem>>, vector<28x128xf32>
    tpu.vector_store %arg8[%c0_524, %c0_525], %572 {strides = array<i32>} : memref<56x128xf32, #tpu.memory_space<vmem>>, vector<28x128xf32>,
    %c0_526 = arith.constant 0 : index
    %c0_527 = arith.constant 0 : index
    %574 = tpu.strided_load %arg8[%c0_526, %c0_527] {strides = array<i32: 2, 1>} : memref<56x128xf32, #tpu.memory_space<vmem>>, vector<6x128xf32>
    %c1_528 = arith.constant 1 : index
    %c0_529 = arith.constant 0 : index
    %575 = tpu.strided_load %arg8[%c1_528, %c0_529] {strides = array<i32: 2, 1>} : memref<56x128xf32, #tpu.memory_space<vmem>>, vector<6x128xf32>
    %576 = arith.maximumf %574, %575 : vector<6x128xf32>
    %c14_530 = arith.constant 14 : index
    %c0_531 = arith.constant 0 : index
    %577 = tpu.strided_load %arg8[%c14_530, %c0_531] {strides = array<i32: 2, 1>} : memref<56x128xf32, #tpu.memory_space<vmem>>, vector<6x128xf32>
    %c15_532 = arith.constant 15 : index
    %c0_533 = arith.constant 0 : index
    %578 = tpu.strided_load %arg8[%c15_532, %c0_533] {strides = array<i32: 2, 1>} : memref<56x128xf32, #tpu.memory_space<vmem>>, vector<6x128xf32>
    %579 = arith.maximumf %577, %578 : vector<6x128xf32>
    %580 = arith.maximumf %576, %579 : vector<6x128xf32>
    %581 = vector.broadcast %2 : vector<1x128xf32> to vector<6x128xf32>
    %582 = arith.addf %580, %581 : vector<6x128xf32>
    %cst_534 = arith.constant 0.000000e+00 : f32
    %583 = vector.broadcast %cst_534 : f32 to vector<6x128xf32>
    %584 = arith.maximumf %582, %583 : vector<6x128xf32>
    %585 = vector.extract_strided_slice %584 {offsets = [0, 0], sizes = [6, 32], strides = [1, 1]} : vector<6x128xf32> to vector<6x32xf32>
    %c0_535 = arith.constant 0 : index
    %c30_536 = arith.constant 30 : index
    %c0_537 = arith.constant 0 : index
    %586 = vector.load %arg6[%c0_535, %c30_536, %c0_537] : memref<1x36x32xf32, #tpu.memory_space<vmem>>, vector<1x6x32xf32>
    %587 = vector.shape_cast %586 : vector<1x6x32xf32> to vector<6x32xf32>
    %588 = vector.shape_cast %585 : vector<6x32xf32> to vector<1x6x32xf32>
    tpu.vector_store %arg6[%c0_535, %c30_536, %c0_537], %588 {strides = array<i32>} : memref<1x36x32xf32, #tpu.memory_space<vmem>>, vector<1x6x32xf32>,
    return
  }
  func.func @transform_0(%arg0: i32) -> (i32, i32, i32) {
    %c0_i32 = arith.constant 0 : i32
    %c0_i32_0 = arith.constant 0 : i32
    %c0_i32_1 = arith.constant 0 : i32
    return %arg0, %c0_i32, %c0_i32_0 : i32, i32, i32
  }
  func.func @transform_1(%arg0: i32) -> (i32, i32) {
    %c0_i32 = arith.constant 0 : i32
    %c0_i32_0 = arith.constant 0 : i32
    %c0_i32_1 = arith.constant 0 : i32
    return %c0_i32, %c0_i32_0 : i32, i32
  }
  func.func @transform_2(%arg0: i32) -> (i32, i32) {
    %c0_i32 = arith.constant 0 : i32
    %c0_i32_0 = arith.constant 0 : i32
    %c0_i32_1 = arith.constant 0 : i32
    return %c0_i32, %c0_i32_0 : i32, i32
  }
  func.func @transform_3(%arg0: i32) -> (i32, i32) {
    %c0_i32 = arith.constant 0 : i32
    %c0_i32_0 = arith.constant 0 : i32
    %c0_i32_1 = arith.constant 0 : i32
    return %c0_i32, %c0_i32_0 : i32, i32
  }
  func.func @transform_4(%arg0: i32) -> (i32, i32) {
    %c0_i32 = arith.constant 0 : i32
    %c0_i32_0 = arith.constant 0 : i32
    %c0_i32_1 = arith.constant 0 : i32
    return %c0_i32, %c0_i32_0 : i32, i32
  }
  func.func @transform_5(%arg0: i32) -> (i32, i32, i32) {
    %c0_i32 = arith.constant 0 : i32
    %c0_i32_0 = arith.constant 0 : i32
    %c0_i32_1 = arith.constant 0 : i32
    return %arg0, %c0_i32, %c0_i32_0 : i32, i32, i32
  }
}

module attributes {stable_mosaic.version = 11 : i64} {
  func.func @_fc_kernel(%arg0: i32, %arg1: memref<2x1152xf32, #tpu.memory_space<vmem>>, %arg2: memref<1152x1024xbf16, #tpu.memory_space<vmem>>, %arg3: memref<1x1024xf32, #tpu.memory_space<vmem>>, %arg4: memref<1024x128xbf16, #tpu.memory_space<vmem>>, %arg5: memref<1x128xf32, #tpu.memory_space<vmem>>, %arg6: memref<2x128xf32, #tpu.memory_space<vmem>>) attributes {dimension_semantics = [#tpu.dimension_semantics<parallel>], iteration_bounds = array<i64: 1>, scalar_prefetch = 0 : i64, scratch_operands = 0 : i64, tpu.core_type = #tpu.core_type<tc>, window_params = [{transform_indices = @transform_0, window_bounds = array<i64: 2, 1152>}, {pipeline_mode = #tpu.pipeline_mode<synchronous>, transform_indices = @transform_1, window_bounds = array<i64: 1152, 1024>}, {pipeline_mode = #tpu.pipeline_mode<synchronous>, transform_indices = @transform_2, window_bounds = array<i64: 1, 1024>}, {pipeline_mode = #tpu.pipeline_mode<synchronous>, transform_indices = @transform_3, window_bounds = array<i64: 1024, 128>}, {pipeline_mode = #tpu.pipeline_mode<synchronous>, transform_indices = @transform_4, window_bounds = array<i64: 1, 128>}, {transform_indices = @transform_5, window_bounds = array<i64: 2, 128>}]} {
    %c0 = arith.constant 0 : index
    %c0_0 = arith.constant 0 : index
    %0 = vector.load %arg1[%c0, %c0_0] : memref<2x1152xf32, #tpu.memory_space<vmem>>, vector<2x1152xf32>
    %1 = arith.truncf %0 : vector<2x1152xf32> to vector<2x1152xbf16>
    %c0_1 = arith.constant 0 : index
    %c0_2 = arith.constant 0 : index
    %2 = vector.load %arg2[%c0_1, %c0_2] : memref<1152x1024xbf16, #tpu.memory_space<vmem>>, vector<1152x1024xbf16>
    %cst = arith.constant dense<0.000000e+00> : vector<2x1024xf32>
    %3 = tpu.matmul %1, %2, %cst {dimension_numbers = #tpu.dot_dimension_numbers<[1], [0], [0], [1], [0, 0, 1, 1], [], []>} : vector<2x1152xbf16>, vector<1152x1024xbf16>, vector<2x1024xf32> -> vector<2x1024xf32>
    %c0_3 = arith.constant 0 : index
    %c0_4 = arith.constant 0 : index
    %4 = vector.load %arg3[%c0_3, %c0_4] : memref<1x1024xf32, #tpu.memory_space<vmem>>, vector<1x1024xf32>
    %5 = vector.broadcast %4 : vector<1x1024xf32> to vector<2x1024xf32>
    %6 = arith.addf %3, %5 : vector<2x1024xf32>
    %cst_5 = arith.constant 0.000000e+00 : f32
    %7 = vector.broadcast %cst_5 : f32 to vector<2x1024xf32>
    %8 = arith.maximumf %6, %7 : vector<2x1024xf32>
    %9 = arith.truncf %8 : vector<2x1024xf32> to vector<2x1024xbf16>
    %c0_6 = arith.constant 0 : index
    %c0_7 = arith.constant 0 : index
    %10 = vector.load %arg4[%c0_6, %c0_7] : memref<1024x128xbf16, #tpu.memory_space<vmem>>, vector<1024x128xbf16>
    %cst_8 = arith.constant dense<0.000000e+00> : vector<2x128xf32>
    %11 = tpu.matmul %9, %10, %cst_8 {dimension_numbers = #tpu.dot_dimension_numbers<[1], [0], [0], [1], [0, 0, 1, 1], [], []>} : vector<2x1024xbf16>, vector<1024x128xbf16>, vector<2x128xf32> -> vector<2x128xf32>
    %c0_9 = arith.constant 0 : index
    %c0_10 = arith.constant 0 : index
    %12 = vector.load %arg5[%c0_9, %c0_10] : memref<1x128xf32, #tpu.memory_space<vmem>>, vector<1x128xf32>
    %13 = vector.broadcast %12 : vector<1x128xf32> to vector<2x128xf32>
    %14 = arith.addf %11, %13 : vector<2x128xf32>
    %c0_11 = arith.constant 0 : index
    %c0_12 = arith.constant 0 : index
    %15 = vector.load %arg6[%c0_11, %c0_12] : memref<2x128xf32, #tpu.memory_space<vmem>>, vector<2x128xf32>
    tpu.vector_store %arg6[%c0_11, %c0_12], %14 {strides = array<i32>} : memref<2x128xf32, #tpu.memory_space<vmem>>, vector<2x128xf32>,
    return
  }
  func.func @transform_0(%arg0: i32) -> (i32, i32) {
    %c0_i32 = arith.constant 0 : i32
    %c0_i32_0 = arith.constant 0 : i32
    return %arg0, %c0_i32 : i32, i32
  }
  func.func @transform_1(%arg0: i32) -> (i32, i32) {
    %c0_i32 = arith.constant 0 : i32
    %c0_i32_0 = arith.constant 0 : i32
    %c0_i32_1 = arith.constant 0 : i32
    return %c0_i32, %c0_i32_0 : i32, i32
  }
  func.func @transform_2(%arg0: i32) -> (i32, i32) {
    %c0_i32 = arith.constant 0 : i32
    %c0_i32_0 = arith.constant 0 : i32
    %c0_i32_1 = arith.constant 0 : i32
    return %c0_i32, %c0_i32_0 : i32, i32
  }
  func.func @transform_3(%arg0: i32) -> (i32, i32) {
    %c0_i32 = arith.constant 0 : i32
    %c0_i32_0 = arith.constant 0 : i32
    %c0_i32_1 = arith.constant 0 : i32
    return %c0_i32, %c0_i32_0 : i32, i32
  }
  func.func @transform_4(%arg0: i32) -> (i32, i32) {
    %c0_i32 = arith.constant 0 : i32
    %c0_i32_0 = arith.constant 0 : i32
    %c0_i32_1 = arith.constant 0 : i32
    return %c0_i32, %c0_i32_0 : i32, i32
  }
  func.func @transform_5(%arg0: i32) -> (i32, i32) {
    %c0_i32 = arith.constant 0 : i32
    %c0_i32_0 = arith.constant 0 : i32
    return %arg0, %c0_i32 : i32, i32
  }
}

</mosaic_0001>

<llo_original>
// kernel: cnn_forward.3
$region0: #{cnn_forward.3}
  #allocation0 [shape = 'u32[]', space=smem, size = 0x4, offset = 0x4, fixed_abs, tag = 'smem constant byte address 0x4 - core index']
  #allocation1 [shape = 'u32[72,128]{1,0:T(1,128)}', space=vmem, size = 0x9000, scoped, tag = 'internal scratch']
  %s0 = inlined_call_operand.vmem [shape: f32[2,1152], index: 0, kind: input, shape index: {}]
  %s1 = inlined_call_operand.vmem [shape: bf16[1152,1024], index: 1, kind: input, shape index: {}]
  %s2 = inlined_call_operand.vmem [shape: f32[1,1024], index: 2, kind: input, shape index: {}]
  %s3 = inlined_call_operand.vmem [shape: bf16[1024,128], index: 3, kind: input, shape index: {}]
  %s4 = inlined_call_operand.vmem [shape: f32[1,128], index: 4, kind: input, shape index: {}]
  %s5 = inlined_call_operand.hbm [shape: f32[2,128], index: 5, kind: output, shape index: {}]
  %s6 = sld [smem:[#allocation0]]
  $region30: #{cnn_forward.3} parent=0
    _
  %s8 = ssub.s32 1, %s6
  %s9 = scalar_select 0, %s8, %s6
  $region1: #{cnn_forward.3} parent=0
    #allocation2 [shape = 'u8[1024]{0}', space=vmem, size = 0x400, scoped, tag = 'output window, operand 0, single buffered']
    #allocation3 [shape = 's32[1]{0}', space=sflag, size = 0x4, scoped, tag = 'scoped memory for cnn_forward.3']
    %10 = vsyncpa [#allocation3], 0
    // Predicated region
    $region2: #{cnn_forward.3} parent=1 // pred_check
      _
    $region3: #{cnn_forward.3} parent=1 // pred_check_branch
      %12 = sbr.rel (0) target = $region5
    $region4: #{cnn_forward.3} parent=1 // pred_region
      _
    $region5: #{cnn_forward.3} parent=1 // pred_fallthru
      _
    // Predicated region
    $region6: #{cnn_forward.3} parent=1 // pred_check
      _
    $region7: #{cnn_forward.3} parent=1 // pred_check_branch
      %14 = sbr.rel (0) target = $region9
    $region8: #{cnn_forward.3} parent=1 // pred_region
      _
    $region9: #{cnn_forward.3} parent=1 // pred_fallthru
      _
    // Predicated region
    $region10: #{cnn_forward.3} parent=1 // pred_check
      _
    $region11: #{cnn_forward.3} parent=1 // pred_check_branch
      %16 = sbr.rel (0) target = $region13
    $region12: #{cnn_forward.3} parent=1 // pred_region
      _
    $region13: #{cnn_forward.3} parent=1 // pred_fallthru
      _
    // Predicated region
    $region14: #{cnn_forward.3} parent=1 // pred_check
      _
    $region15: #{cnn_forward.3} parent=1 // pred_check_branch
      %18 = sbr.rel (0) target = $region17
    $region16: #{cnn_forward.3} parent=1 // pred_region
      _
    $region17: #{cnn_forward.3} parent=1 // pred_fallthru
      _
    // Predicated region
    $region18: #{cnn_forward.3} parent=1 // pred_check
      _
    $region19: #{cnn_forward.3} parent=1 // pred_check_branch
      %20 = sbr.rel (0) target = $region21
    $region20: #{cnn_forward.3} parent=1 // pred_region
      _
    $region21: #{cnn_forward.3} parent=1 // pred_fallthru
      _
    %v21 = vld [vmem:[%s0] sm:$0xff]
    %v22 = vld [vmem:[%s0 + $0x8] sm:$0xff]
    %v23 = vld [vmem:[%s0 + $0x10] sm:$0x3]
    %27 = vst [vmem:[#allocation1] ss:$4 sm:$0xff] %v21
    %s28 = scalar_lea.vmem [#allocation1], 32
    %29 = vst [vmem:[%s28] ss:$4 sm:$0xff] %v22
    %v30 = vld.sshfl [vmem:[#allocation1] sm:$0xff pattern:$0x73625140]
    %v31 = vld.sshfl [vmem:[#allocation1 + $0x8] sm:$0xff pattern:$0x73625140]
    %v32 = vld.sshfl [vmem:[#allocation1 + $0x10] sm:$0xff pattern:$0x73625140]
    %v33 = vld.sshfl [vmem:[#allocation1 + $0x18] sm:$0xff pattern:$0x73625140]
    %v34 = vld.sshfl [vmem:[#allocation1 + $0x20] sm:$0xff pattern:$0x73625140]
    %v35 = vld.sshfl [vmem:[#allocation1 + $0x28] sm:$0xff pattern:$0x73625140]
    %v36 = vld.sshfl [vmem:[#allocation1 + $0x30] sm:$0xff pattern:$0x73625140]
    %v37 = vld.sshfl [vmem:[#allocation1 + $0x38] sm:$0xff pattern:$0x73625140]
    %38 = vst [vmem:[#allocation1] ss:$4 sm:$0xff] %v23
    %v39 = vld.sshfl [vmem:[#allocation1] sm:$0xff pattern:$0x73625140]
    %v49 = vpack.c.bf16 %v30, %v30
    %v50 = vpack.c.bf16 %v31, %v31
    %v51 = vpack.c.bf16 %v32, %v32
    %v52 = vpack.c.bf16 %v33, %v33
    %v53 = vpack.c.bf16 %v34, %v34
    %v54 = vpack.c.bf16 %v35, %v35
    %v55 = vpack.c.bf16 %v36, %v36
    %v56 = vpack.c.bf16 %v37, %v37
    %v57 = vpack.c.bf16 %v39, %v39
    %v58 = vld [vmem:[%s1] sm:$0xff]
    %v59 = vld [vmem:[%s1 + $0x8] sm:$0xff]
    %v60 = vld [vmem:[%s1 + $0x10] sm:$0xff]
    %v61 = vld [vmem:[%s1 + $0x18] sm:$0xff]
    %v62 = vld [vmem:[%s1 + $0x20] sm:$0xff]
    %v63 = vld [vmem:[%s1 + $0x28] sm:$0xff]
    %v64 = vld [vmem:[%s1 + $0x30] sm:$0xff]
    %v65 = vld [vmem:[%s1 + $0x38] sm:$0xff]
    %v66 = vld [vmem:[%s1 + $0x40] sm:$0xff]
    %v67 = vld [vmem:[%s1 + $0x48] sm:$0xff]
    %v68 = vld [vmem:[%s1 + $0x50] sm:$0xff]
    %v69 = vld [vmem:[%s1 + $0x58] sm:$0xff]
    %v70 = vld [vmem:[%s1 + $0x60] sm:$0xff]
    %v71 = vld [vmem:[%s1 + $0x68] sm:$0xff]
    %v72 = vld [vmem:[%s1 + $0x70] sm:$0xff]
    %v73 = vld [vmem:[%s1 + $0x78] sm:$0xff]
    %v74 = vld [vmem:[%s1 + $0x80] sm:$0xff]
    %v75 = vld [vmem:[%s1 + $0x88] sm:$0xff]
    %v76 = vld [vmem:[%s1 + $0x90] sm:$0xff]
    %v77 = vld [vmem:[%s1 + $0x98] sm:$0xff]
    %v78 = vld [vmem:[%s1 + $0xa0] sm:$0xff]
    %v79 = vld [vmem:[%s1 + $0xa8] sm:$0xff]
    %v80 = vld [vmem:[%s1 + $0xb0] sm:$0xff]
    %v81 = vld [vmem:[%s1 + $0xb8] sm:$0xff]
    %v82 = vld [vmem:[%s1 + $0xc0] sm:$0xff]
    %v83 = vld [vmem:[%s1 + $0xc8] sm:$0xff]
    %v84 = vld [vmem:[%s1 + $0xd0] sm:$0xff]
    %v85 = vld [vmem:[%s1 + $0xd8] sm:$0xff]
    %v86 = vld [vmem:[%s1 + $0xe0] sm:$0xff]
    %v87 = vld [vmem:[%s1 + $0xe8] sm:$0xff]
    %v88 = vld [vmem:[%s1 + $0xf0] sm:$0xff]
    %v89 = vld [vmem:[%s1 + $0xf8] sm:$0xff]
    %v90 = vld [vmem:[%s1 + $0x100] sm:$0xff]
    %v91 = vld [vmem:[%s1 + $0x108] sm:$0xff]
    %v92 = vld [vmem:[%s1 + $0x110] sm:$0xff]
    %v93 = vld [vmem:[%s1 + $0x118] sm:$0xff]
    %v94 = vld [vmem:[%s1 + $0x120] sm:$0xff]
    %v95 = vld [vmem:[%s1 + $0x128] sm:$0xff]
    %v96 = vld [vmem:[%s1 + $0x130] sm:$0xff]
    %v97 = vld [vmem:[%s1 + $0x138] sm:$0xff]
    %v98 = vld [vmem:[%s1 + $0x140] sm:$0xff]
    %v99 = vld [vmem:[%s1 + $0x148] sm:$0xff]
    %v100 = vld [vmem:[%s1 + $0x150] sm:$0xff]
    %v101 = vld [vmem:[%s1 + $0x158] sm:$0xff]
    %v102 = vld [vmem:[%s1 + $0x160] sm:$0xff]
    %v103 = vld [vmem:[%s1 + $0x168] sm:$0xff]
    %v104 = vld [vmem:[%s1 + $0x170] sm:$0xff]
    %v105 = vld [vmem:[%s1 + $0x178] sm:$0xff]
    %v106 = vld [vmem:[%s1 + $0x180] sm:$0xff]
    %v107 = vld [vmem:[%s1 + $0x188] sm:$0xff]
    %v108 = vld [vmem:[%s1 + $0x190] sm:$0xff]
    %v109 = vld [vmem:[%s1 + $0x198] sm:$0xff]
    %v110 = vld [vmem:[%s1 + $0x1a0] sm:$0xff]
    %v111 = vld [vmem:[%s1 + $0x1a8] sm:$0xff]
    %v112 = vld [vmem:[%s1 + $0x1b0] sm:$0xff]
    %v113 = vld [vmem:[%s1 + $0x1b8] sm:$0xff]
    %v114 = vld [vmem:[%s1 + $0x1c0] sm:$0xff]
    %v115 = vld [vmem:[%s1 + $0x1c8] sm:$0xff]
    %v116 = vld [vmem:[%s1 + $0x1d0] sm:$0xff]
    %v117 = vld [vmem:[%s1 + $0x1d8] sm:$0xff]
    %v118 = vld [vmem:[%s1 + $0x1e0] sm:$0xff]
    %v119 = vld [vmem:[%s1 + $0x1e8] sm:$0xff]
    %v120 = vld [vmem:[%s1 + $0x1f0] sm:$0xff]
    %v121 = vld [vmem:[%s1 + $0x1f8] sm:$0xff]
    %v122 = vld [vmem:[%s1 + $0x200] sm:$0xff]
    %v123 = vld [vmem:[%s1 + $0x208] sm:$0xff]
    %v124 = vld [vmem:[%s1 + $0x210] sm:$0xff]
    %v125 = vld [vmem:[%s1 + $0x218] sm:$0xff]
    %v126 = vld [vmem:[%s1 + $0x220] sm:$0xff]
    %v127 = vld [vmem:[%s1 + $0x228] sm:$0xff]
    %v128 = vld [vmem:[%s1 + $0x230] sm:$0xff]
    %v129 = vld [vmem:[%s1 + $0x238] sm:$0xff]
    %v130 = vld [vmem:[%s1 + $0x240] sm:$0xff]
    %v131 = vld [vmem:[%s1 + $0x248] sm:$0xff]
    %v132 = vld [vmem:[%s1 + $0x250] sm:$0xff]
    %v133 = vld [vmem:[%s1 + $0x258] sm:$0xff]
    %v134 = vld [vmem:[%s1 + $0x260] sm:$0xff]
    %v135 = vld [vmem:[%s1 + $0x268] sm:$0xff]
    %v136 = vld [vmem:[%s1 + $0x270] sm:$0xff]
    %v137 = vld [vmem:[%s1 + $0x278] sm:$0xff]
    %v138 = vld [vmem:[%s1 + $0x280] sm:$0xff]
    %v139 = vld [vmem:[%s1 + $0x288] sm:$0xff]
    %v140 = vld [vmem:[%s1 + $0x290] sm:$0xff]
    %v141 = vld [vmem:[%s1 + $0x298] sm:$0xff]
    %v142 = vld [vmem:[%s1 + $0x2a0] sm:$0xff]
    %v143 = vld [vmem:[%s1 + $0x2a8] sm:$0xff]
    %v144 = vld [vmem:[%s1 + $0x2b0] sm:$0xff]
    %v145 = vld [vmem:[%s1 + $0x2b8] sm:$0xff]
    %v146 = vld [vmem:[%s1 + $0x2c0] sm:$0xff]
    %v147 = vld [vmem:[%s1 + $0x2c8] sm:$0xff]
    %v148 = vld [vmem:[%s1 + $0x2d0] sm:$0xff]
    %v149 = vld [vmem:[%s1 + $0x2d8] sm:$0xff]
    %v150 = vld [vmem:[%s1 + $0x2e0] sm:$0xff]
    %v151 = vld [vmem:[%s1 + $0x2e8] sm:$0xff]
    %v152 = vld [vmem:[%s1 + $0x2f0] sm:$0xff]
    %v153 = vld [vmem:[%s1 + $0x2f8] sm:$0xff]
    %v154 = vld [vmem:[%s1 + $0x300] sm:$0xff]
    %v155 = vld [vmem:[%s1 + $0x308] sm:$0xff]
    %v156 = vld [vmem:[%s1 + $0x310] sm:$0xff]
    %v157 = vld [vmem:[%s1 + $0x318] sm:$0xff]
    %v158 = vld [vmem:[%s1 + $0x320] sm:$0xff]
    %v159 = vld [vmem:[%s1 + $0x328] sm:$0xff]
    %v160 = vld [vmem:[%s1 + $0x330] sm:$0xff]
    %v161 = vld [vmem:[%s1 + $0x338] sm:$0xff]
    %v162 = vld [vmem:[%s1 + $0x340] sm:$0xff]
    %v163 = vld [vmem:[%s1 + $0x348] sm:$0xff]
    %v164 = vld [vmem:[%s1 + $0x350] sm:$0xff]
    %v165 = vld [vmem:[%s1 + $0x358] sm:$0xff]
    %v166 = vld [vmem:[%s1 + $0x360] sm:$0xff]
    %v167 = vld [vmem:[%s1 + $0x368] sm:$0xff]
    %v168 = vld [vmem:[%s1 + $0x370] sm:$0xff]
    %v169 = vld [vmem:[%s1 + $0x378] sm:$0xff]
    %v170 = vld [vmem:[%s1 + $0x380] sm:$0xff]
    %v171 = vld [vmem:[%s1 + $0x388] sm:$0xff]
    %v172 = vld [vmem:[%s1 + $0x390] sm:$0xff]
    %v173 = vld [vmem:[%s1 + $0x398] sm:$0xff]
    %v174 = vld [vmem:[%s1 + $0x3a0] sm:$0xff]
    %v175 = vld [vmem:[%s1 + $0x3a8] sm:$0xff]
    %v176 = vld [vmem:[%s1 + $0x3b0] sm:$0xff]
    %v177 = vld [vmem:[%s1 + $0x3b8] sm:$0xff]
    %v178 = vld [vmem:[%s1 + $0x3c0] sm:$0xff]
    %v179 = vld [vmem:[%s1 + $0x3c8] sm:$0xff]
    %v180 = vld [vmem:[%s1 + $0x3d0] sm:$0xff]
    %v181 = vld [vmem:[%s1 + $0x3d8] sm:$0xff]
    %v182 = vld [vmem:[%s1 + $0x3e0] sm:$0xff]
    %v183 = vld [vmem:[%s1 + $0x3e8] sm:$0xff]
    %v184 = vld [vmem:[%s1 + $0x3f0] sm:$0xff]
    %v185 = vld [vmem:[%s1 + $0x3f8] sm:$0xff]
    %v186 = vld [vmem:[%s1 + $0x400] sm:$0xff]
    %v187 = vld [vmem:[%s1 + $0x408] sm:$0xff]
    %v188 = vld [vmem:[%s1 + $0x410] sm:$0xff]
    %v189 = vld [vmem:[%s1 + $0x418] sm:$0xff]
    %v190 = vld [vmem:[%s1 + $0x420] sm:$0xff]
    %v191 = vld [vmem:[%s1 + $0x428] sm:$0xff]
    %v192 = vld [vmem:[%s1 + $0x430] sm:$0xff]
    %v193 = vld [vmem:[%s1 + $0x438] sm:$0xff]
    %v194 = vld [vmem:[%s1 + $0x440] sm:$0xff]
    %v195 = vld [vmem:[%s1 + $0x448] sm:$0xff]
    %v196 = vld [vmem:[%s1 + $0x450] sm:$0xff]
    %v197 = vld [vmem:[%s1 + $0x458] sm:$0xff]
    %v198 = vld [vmem:[%s1 + $0x460] sm:$0xff]
    %v199 = vld [vmem:[%s1 + $0x468] sm:$0xff]
    %v200 = vld [vmem:[%s1 + $0x470] sm:$0xff]
    %v201 = vld [vmem:[%s1 + $0x478] sm:$0xff]
    %v202 = vld [vmem:[%s1 + $0x480] sm:$0xff]
    %v203 = vld [vmem:[%s1 + $0x488] sm:$0xff]
    %v204 = vld [vmem:[%s1 + $0x490] sm:$0xff]
    %v205 = vld [vmem:[%s1 + $0x498] sm:$0xff]
    %v206 = vld [vmem:[%s1 + $0x4a0] sm:$0xff]
    %v207 = vld [vmem:[%s1 + $0x4a8] sm:$0xff]
    %v208 = vld [vmem:[%s1 + $0x4b0] sm:$0xff]
    %v209 = vld [vmem:[%s1 + $0x4b8] sm:$0xff]
    %v210 = vld [vmem:[%s1 + $0x4c0] sm:$0xff]
    %v211 = vld [vmem:[%s1 + $0x4c8] sm:$0xff]
    %v212 = vld [vmem:[%s1 + $0x4d0] sm:$0xff]
    %v213 = vld [vmem:[%s1 + $0x4d8] sm:$0xff]
    %v214 = vld [vmem:[%s1 + $0x4e0] sm:$0xff]
    %v215 = vld [vmem:[%s1 + $0x4e8] sm:$0xff]
    %v216 = vld [vmem:[%s1 + $0x4f0] sm:$0xff]
    %v217 = vld [vmem:[%s1 + $0x4f8] sm:$0xff]
    %v218 = vld [vmem:[%s1 + $0x500] sm:$0xff]
    %v219 = vld [vmem:[%s1 + $0x508] sm:$0xff]
    %v220 = vld [vmem:[%s1 + $0x510] sm:$0xff]
    %v221 = vld [vmem:[%s1 + $0x518] sm:$0xff]
    %v222 = vld [vmem:[%s1 + $0x520] sm:$0xff]
    %v223 = vld [vmem:[%s1 + $0x528] sm:$0xff]
    %v224 = vld [vmem:[%s1 + $0x530] sm:$0xff]
    %v225 = vld [vmem:[%s1 + $0x538] sm:$0xff]
    %v226 = vld [vmem:[%s1 + $0x540] sm:$0xff]
    %v227 = vld [vmem:[%s1 + $0x548] sm:$0xff]
    %v228 = vld [vmem:[%s1 + $0x550] sm:$0xff]
    %v229 = vld [vmem:[%s1 + $0x558] sm:$0xff]
    %v230 = vld [vmem:[%s1 + $0x560] sm:$0xff]
    %v231 = vld [vmem:[%s1 + $0x568] sm:$0xff]
    %v232 = vld [vmem:[%s1 + $0x570] sm:$0xff]
    %v233 = vld [vmem:[%s1 + $0x578] sm:$0xff]
    %v234 = vld [vmem:[%s1 + $0x580] sm:$0xff]
    %v235 = vld [vmem:[%s1 + $0x588] sm:$0xff]
    %v236 = vld [vmem:[%s1 + $0x590] sm:$0xff]
    %v237 = vld [vmem:[%s1 + $0x598] sm:$0xff]
    %v238 = vld [vmem:[%s1 + $0x5a0] sm:$0xff]
    %v239 = vld [vmem:[%s1 + $0x5a8] sm:$0xff]
    %v240 = vld [vmem:[%s1 + $0x5b0] sm:$0xff]
    %v241 = vld [vmem:[%s1 + $0x5b8] sm:$0xff]
    %v242 = vld [vmem:[%s1 + $0x5c0] sm:$0xff]
    %v243 = vld [vmem:[%s1 + $0x5c8] sm:$0xff]
    %v244 = vld [vmem:[%s1 + $0x5d0] sm:$0xff]
    %v245 = vld [vmem:[%s1 + $0x5d8] sm:$0xff]
    %v246 = vld [vmem:[%s1 + $0x5e0] sm:$0xff]
    %v247 = vld [vmem:[%s1 + $0x5e8] sm:$0xff]
    %v248 = vld [vmem:[%s1 + $0x5f0] sm:$0xff]
    %v249 = vld [vmem:[%s1 + $0x5f8] sm:$0xff]
    %v250 = vld [vmem:[%s1 + $0x600] sm:$0xff]
    %v251 = vld [vmem:[%s1 + $0x608] sm:$0xff]
    %v252 = vld [vmem:[%s1 + $0x610] sm:$0xff]
    %v253 = vld [vmem:[%s1 + $0x618] sm:$0xff]
    %v254 = vld [vmem:[%s1 + $0x620] sm:$0xff]
    %v255 = vld [vmem:[%s1 + $0x628] sm:$0xff]
    %v256 = vld [vmem:[%s1 + $0x630] sm:$0xff]
    %v257 = vld [vmem:[%s1 + $0x638] sm:$0xff]
    %v258 = vld [vmem:[%s1 + $0x640] sm:$0xff]
    %v259 = vld [vmem:[%s1 + $0x648] sm:$0xff]
    %v260 = vld [vmem:[%s1 + $0x650] sm:$0xff]
    %v261 = vld [vmem:[%s1 + $0x658] sm:$0xff]
    %v262 = vld [vmem:[%s1 + $0x660] sm:$0xff]
    %v263 = vld [vmem:[%s1 + $0x668] sm:$0xff]
    %v264 = vld [vmem:[%s1 + $0x670] sm:$0xff]
    %v265 = vld [vmem:[%s1 + $0x678] sm:$0xff]
    %v266 = vld [vmem:[%s1 + $0x680] sm:$0xff]
    %v267 = vld [vmem:[%s1 + $0x688] sm:$0xff]
    %v268 = vld [vmem:[%s1 + $0x690] sm:$0xff]
    %v269 = vld [vmem:[%s1 + $0x698] sm:$0xff]
    %v270 = vld [vmem:[%s1 + $0x6a0] sm:$0xff]
    %v271 = vld [vmem:[%s1 + $0x6a8] sm:$0xff]
    %v272 = vld [vmem:[%s1 + $0x6b0] sm:$0xff]
    %v273 = vld [vmem:[%s1 + $0x6b8] sm:$0xff]
    %v274 = vld [vmem:[%s1 + $0x6c0] sm:$0xff]
    %v275 = vld [vmem:[%s1 + $0x6c8] sm:$0xff]
    %v276 = vld [vmem:[%s1 + $0x6d0] sm:$0xff]
    %v277 = vld [vmem:[%s1 + $0x6d8] sm:$0xff]
    %v278 = vld [vmem:[%s1 + $0x6e0] sm:$0xff]
    %v279 = vld [vmem:[%s1 + $0x6e8] sm:$0xff]
    %v280 = vld [vmem:[%s1 + $0x6f0] sm:$0xff]
    %v281 = vld [vmem:[%s1 + $0x6f8] sm:$0xff]
    %v282 = vld [vmem:[%s1 + $0x700] sm:$0xff]
    %v283 = vld [vmem:[%s1 + $0x708] sm:$0xff]
    %v284 = vld [vmem:[%s1 + $0x710] sm:$0xff]
    %v285 = vld [vmem:[%s1 + $0x718] sm:$0xff]
    %v286 = vld [vmem:[%s1 + $0x720] sm:$0xff]
    %v287 = vld [vmem:[%s1 + $0x728] sm:$0xff]
    %v288 = vld [vmem:[%s1 + $0x730] sm:$0xff]
    %v289 = vld [vmem:[%s1 + $0x738] sm:$0xff]
    %v290 = vld [vmem:[%s1 + $0x740] sm:$0xff]
    %v291 = vld [vmem:[%s1 + $0x748] sm:$0xff]
    %v292 = vld [vmem:[%s1 + $0x750] sm:$0xff]
    %v293 = vld [vmem:[%s1 + $0x758] sm:$0xff]
    %v294 = vld [vmem:[%s1 + $0x760] sm:$0xff]
    %v295 = vld [vmem:[%s1 + $0x768] sm:$0xff]
    %v296 = vld [vmem:[%s1 + $0x770] sm:$0xff]
    %v297 = vld [vmem:[%s1 + $0x778] sm:$0xff]
    %v298 = vld [vmem:[%s1 + $0x780] sm:$0xff]
    %v299 = vld [vmem:[%s1 + $0x788] sm:$0xff]
    %v300 = vld [vmem:[%s1 + $0x790] sm:$0xff]
    %v301 = vld [vmem:[%s1 + $0x798] sm:$0xff]
    %v302 = vld [vmem:[%s1 + $0x7a0] sm:$0xff]
    %v303 = vld [vmem:[%s1 + $0x7a8] sm:$0xff]
    %v304 = vld [vmem:[%s1 + $0x7b0] sm:$0xff]
    %v305 = vld [vmem:[%s1 + $0x7b8] sm:$0xff]
    %v306 = vld [vmem:[%s1 + $0x7c0] sm:$0xff]
    %v307 = vld [vmem:[%s1 + $0x7c8] sm:$0xff]
    %v308 = vld [vmem:[%s1 + $0x7d0] sm:$0xff]
    %v309 = vld [vmem:[%s1 + $0x7d8] sm:$0xff]
    %v310 = vld [vmem:[%s1 + $0x7e0] sm:$0xff]
    %v311 = vld [vmem:[%s1 + $0x7e8] sm:$0xff]
    %v312 = vld [vmem:[%s1 + $0x7f0] sm:$0xff]
    %v313 = vld [vmem:[%s1 + $0x7f8] sm:$0xff]
    %v314 = vld [vmem:[%s1 + $0x800] sm:$0xff]
    %v315 = vld [vmem:[%s1 + $0x808] sm:$0xff]
    %v316 = vld [vmem:[%s1 + $0x810] sm:$0xff]
    %v317 = vld [vmem:[%s1 + $0x818] sm:$0xff]
    %v318 = vld [vmem:[%s1 + $0x820] sm:$0xff]
    %v319 = vld [vmem:[%s1 + $0x828] sm:$0xff]
    %v320 = vld [vmem:[%s1 + $0x830] sm:$0xff]
    %v321 = vld [vmem:[%s1 + $0x838] sm:$0xff]
    %v322 = vld [vmem:[%s1 + $0x840] sm:$0xff]
    %v323 = vld [vmem:[%s1 + $0x848] sm:$0xff]
    %v324 = vld [vmem:[%s1 + $0x850] sm:$0xff]
    %v325 = vld [vmem:[%s1 + $0x858] sm:$0xff]
    %v326 = vld [vmem:[%s1 + $0x860] sm:$0xff]
    %v327 = vld [vmem:[%s1 + $0x868] sm:$0xff]
    %v328 = vld [vmem:[%s1 + $0x870] sm:$0xff]
    %v329 = vld [vmem:[%s1 + $0x878] sm:$0xff]
    %v330 = vld [vmem:[%s1 + $0x880] sm:$0xff]
    %v331 = vld [vmem:[%s1 + $0x888] sm:$0xff]
    %v332 = vld [vmem:[%s1 + $0x890] sm:$0xff]
    %v333 = vld [vmem:[%s1 + $0x898] sm:$0xff]
    %v334 = vld [vmem:[%s1 + $0x8a0] sm:$0xff]
    %v335 = vld [vmem:[%s1 + $0x8a8] sm:$0xff]
    %v336 = vld [vmem:[%s1 + $0x8b0] sm:$0xff]
    %v337 = vld [vmem:[%s1 + $0x8b8] sm:$0xff]
    %v338 = vld [vmem:[%s1 + $0x8c0] sm:$0xff]
    %v339 = vld [vmem:[%s1 + $0x8c8] sm:$0xff]
    %v340 = vld [vmem:[%s1 + $0x8d0] sm:$0xff]
    %v341 = vld [vmem:[%s1 + $0x8d8] sm:$0xff]
    %v342 = vld [vmem:[%s1 + $0x8e0] sm:$0xff]
    %v343 = vld [vmem:[%s1 + $0x8e8] sm:$0xff]
    %v344 = vld [vmem:[%s1 + $0x8f0] sm:$0xff]
    %v345 = vld [vmem:[%s1 + $0x8f8] sm:$0xff]
    %v346 = vld [vmem:[%s1 + $0x900] sm:$0xff]
    %v347 = vld [vmem:[%s1 + $0x908] sm:$0xff]
    %v348 = vld [vmem:[%s1 + $0x910] sm:$0xff]
    %v349 = vld [vmem:[%s1 + $0x918] sm:$0xff]
    %v350 = vld [vmem:[%s1 + $0x920] sm:$0xff]
    %v351 = vld [vmem:[%s1 + $0x928] sm:$0xff]
    %v352 = vld [vmem:[%s1 + $0x930] sm:$0xff]
    %v353 = vld [vmem:[%s1 + $0x938] sm:$0xff]
    %v354 = vld [vmem:[%s1 + $0x940] sm:$0xff]
    %v355 = vld [vmem:[%s1 + $0x948] sm:$0xff]
    %v356 = vld [vmem:[%s1 + $0x950] sm:$0xff]
    %v357 = vld [vmem:[%s1 + $0x958] sm:$0xff]
    %v358 = vld [vmem:[%s1 + $0x960] sm:$0xff]
    %v359 = vld [vmem:[%s1 + $0x968] sm:$0xff]
    %v360 = vld [vmem:[%s1 + $0x970] sm:$0xff]
    %v361 = vld [vmem:[%s1 + $0x978] sm:$0xff]
    %v362 = vld [vmem:[%s1 + $0x980] sm:$0xff]
    %v363 = vld [vmem:[%s1 + $0x988] sm:$0xff]
    %v364 = vld [vmem:[%s1 + $0x990] sm:$0xff]
    %v365 = vld [vmem:[%s1 + $0x998] sm:$0xff]
    %v366 = vld [vmem:[%s1 + $0x9a0] sm:$0xff]
    %v367 = vld [vmem:[%s1 + $0x9a8] sm:$0xff]
    %v368 = vld [vmem:[%s1 + $0x9b0] sm:$0xff]
    %v369 = vld [vmem:[%s1 + $0x9b8] sm:$0xff]
    %v370 = vld [vmem:[%s1 + $0x9c0] sm:$0xff]
    %v371 = vld [vmem:[%s1 + $0x9c8] sm:$0xff]
    %v372 = vld [vmem:[%s1 + $0x9d0] sm:$0xff]
    %v373 = vld [vmem:[%s1 + $0x9d8] sm:$0xff]
    %v374 = vld [vmem:[%s1 + $0x9e0] sm:$0xff]
    %v375 = vld [vmem:[%s1 + $0x9e8] sm:$0xff]
    %v376 = vld [vmem:[%s1 + $0x9f0] sm:$0xff]
    %v377 = vld [vmem:[%s1 + $0x9f8] sm:$0xff]
    %v378 = vld [vmem:[%s1 + $0xa00] sm:$0xff]
    %v379 = vld [vmem:[%s1 + $0xa08] sm:$0xff]
    %v380 = vld [vmem:[%s1 + $0xa10] sm:$0xff]
    %v381 = vld [vmem:[%s1 + $0xa18] sm:$0xff]
    %v382 = vld [vmem:[%s1 + $0xa20] sm:$0xff]
    %v383 = vld [vmem:[%s1 + $0xa28] sm:$0xff]
    %v384 = vld [vmem:[%s1 + $0xa30] sm:$0xff]
    %v385 = vld [vmem:[%s1 + $0xa38] sm:$0xff]
    %v386 = vld [vmem:[%s1 + $0xa40] sm:$0xff]
    %v387 = vld [vmem:[%s1 + $0xa48] sm:$0xff]
    %v388 = vld [vmem:[%s1 + $0xa50] sm:$0xff]
    %v389 = vld [vmem:[%s1 + $0xa58] sm:$0xff]
    %v390 = vld [vmem:[%s1 + $0xa60] sm:$0xff]
    %v391 = vld [vmem:[%s1 + $0xa68] sm:$0xff]
    %v392 = vld [vmem:[%s1 + $0xa70] sm:$0xff]
    %v393 = vld [vmem:[%s1 + $0xa78] sm:$0xff]
    %v394 = vld [vmem:[%s1 + $0xa80] sm:$0xff]
    %v395 = vld [vmem:[%s1 + $0xa88] sm:$0xff]
    %v396 = vld [vmem:[%s1 + $0xa90] sm:$0xff]
    %v397 = vld [vmem:[%s1 + $0xa98] sm:$0xff]
    %v398 = vld [vmem:[%s1 + $0xaa0] sm:$0xff]
    %v399 = vld [vmem:[%s1 + $0xaa8] sm:$0xff]
    %v400 = vld [vmem:[%s1 + $0xab0] sm:$0xff]
    %v401 = vld [vmem:[%s1 + $0xab8] sm:$0xff]
    %v402 = vld [vmem:[%s1 + $0xac0] sm:$0xff]
    %v403 = vld [vmem:[%s1 + $0xac8] sm:$0xff]
    %v404 = vld [vmem:[%s1 + $0xad0] sm:$0xff]
    %v405 = vld [vmem:[%s1 + $0xad8] sm:$0xff]
    %v406 = vld [vmem:[%s1 + $0xae0] sm:$0xff]
    %v407 = vld [vmem:[%s1 + $0xae8] sm:$0xff]
    %v408 = vld [vmem:[%s1 + $0xaf0] sm:$0xff]
    %v409 = vld [vmem:[%s1 + $0xaf8] sm:$0xff]
    %v410 = vld [vmem:[%s1 + $0xb00] sm:$0xff]
    %v411 = vld [vmem:[%s1 + $0xb08] sm:$0xff]
    %v412 = vld [vmem:[%s1 + $0xb10] sm:$0xff]
    %v413 = vld [vmem:[%s1 + $0xb18] sm:$0xff]
    %v414 = vld [vmem:[%s1 + $0xb20] sm:$0xff]
    %v415 = vld [vmem:[%s1 + $0xb28] sm:$0xff]
    %v416 = vld [vmem:[%s1 + $0xb30] sm:$0xff]
    %v417 = vld [vmem:[%s1 + $0xb38] sm:$0xff]
    %v418 = vld [vmem:[%s1 + $0xb40] sm:$0xff]
    %v419 = vld [vmem:[%s1 + $0xb48] sm:$0xff]
    %v420 = vld [vmem:[%s1 + $0xb50] sm:$0xff]
    %v421 = vld [vmem:[%s1 + $0xb58] sm:$0xff]
    %v422 = vld [vmem:[%s1 + $0xb60] sm:$0xff]
    %v423 = vld [vmem:[%s1 + $0xb68] sm:$0xff]
    %v424 = vld [vmem:[%s1 + $0xb70] sm:$0xff]
    %v425 = vld [vmem:[%s1 + $0xb78] sm:$0xff]
    %v426 = vld [vmem:[%s1 + $0xb80] sm:$0xff]
    %v427 = vld [vmem:[%s1 + $0xb88] sm:$0xff]
    %v428 = vld [vmem:[%s1 + $0xb90] sm:$0xff]
    %v429 = vld [vmem:[%s1 + $0xb98] sm:$0xff]
    %v430 = vld [vmem:[%s1 + $0xba0] sm:$0xff]
    %v431 = vld [vmem:[%s1 + $0xba8] sm:$0xff]
    %v432 = vld [vmem:[%s1 + $0xbb0] sm:$0xff]
    %v433 = vld [vmem:[%s1 + $0xbb8] sm:$0xff]
    %v434 = vld [vmem:[%s1 + $0xbc0] sm:$0xff]
    %v435 = vld [vmem:[%s1 + $0xbc8] sm:$0xff]
    %v436 = vld [vmem:[%s1 + $0xbd0] sm:$0xff]
    %v437 = vld [vmem:[%s1 + $0xbd8] sm:$0xff]
    %v438 = vld [vmem:[%s1 + $0xbe0] sm:$0xff]
    %v439 = vld [vmem:[%s1 + $0xbe8] sm:$0xff]
    %v440 = vld [vmem:[%s1 + $0xbf0] sm:$0xff]
    %v441 = vld [vmem:[%s1 + $0xbf8] sm:$0xff]
    %v442 = vld [vmem:[%s1 + $0xc00] sm:$0xff]
    %v443 = vld [vmem:[%s1 + $0xc08] sm:$0xff]
    %v444 = vld [vmem:[%s1 + $0xc10] sm:$0xff]
    %v445 = vld [vmem:[%s1 + $0xc18] sm:$0xff]
    %v446 = vld [vmem:[%s1 + $0xc20] sm:$0xff]
    %v447 = vld [vmem:[%s1 + $0xc28] sm:$0xff]
    %v448 = vld [vmem:[%s1 + $0xc30] sm:$0xff]
    %v449 = vld [vmem:[%s1 + $0xc38] sm:$0xff]
    %v450 = vld [vmem:[%s1 + $0xc40] sm:$0xff]
    %v451 = vld [vmem:[%s1 + $0xc48] sm:$0xff]
    %v452 = vld [vmem:[%s1 + $0xc50] sm:$0xff]
    %v453 = vld [vmem:[%s1 + $0xc58] sm:$0xff]
    %v454 = vld [vmem:[%s1 + $0xc60] sm:$0xff]
    %v455 = vld [vmem:[%s1 + $0xc68] sm:$0xff]
    %v456 = vld [vmem:[%s1 + $0xc70] sm:$0xff]
    %v457 = vld [vmem:[%s1 + $0xc78] sm:$0xff]
    %v458 = vld [vmem:[%s1 + $0xc80] sm:$0xff]
    %v459 = vld [vmem:[%s1 + $0xc88] sm:$0xff]
    %v460 = vld [vmem:[%s1 + $0xc90] sm:$0xff]
    %v461 = vld [vmem:[%s1 + $0xc98] sm:$0xff]
    %v462 = vld [vmem:[%s1 + $0xca0] sm:$0xff]
    %v463 = vld [vmem:[%s1 + $0xca8] sm:$0xff]
    %v464 = vld [vmem:[%s1 + $0xcb0] sm:$0xff]
    %v465 = vld [vmem:[%s1 + $0xcb8] sm:$0xff]
    %v466 = vld [vmem:[%s1 + $0xcc0] sm:$0xff]
    %v467 = vld [vmem:[%s1 + $0xcc8] sm:$0xff]
    %v468 = vld [vmem:[%s1 + $0xcd0] sm:$0xff]
    %v469 = vld [vmem:[%s1 + $0xcd8] sm:$0xff]
    %v470 = vld [vmem:[%s1 + $0xce0] sm:$0xff]
    %v471 = vld [vmem:[%s1 + $0xce8] sm:$0xff]
    %v472 = vld [vmem:[%s1 + $0xcf0] sm:$0xff]
    %v473 = vld [vmem:[%s1 + $0xcf8] sm:$0xff]
    %v474 = vld [vmem:[%s1 + $0xd00] sm:$0xff]
    %v475 = vld [vmem:[%s1 + $0xd08] sm:$0xff]
    %v476 = vld [vmem:[%s1 + $0xd10] sm:$0xff]
    %v477 = vld [vmem:[%s1 + $0xd18] sm:$0xff]
    %v478 = vld [vmem:[%s1 + $0xd20] sm:$0xff]
    %v479 = vld [vmem:[%s1 + $0xd28] sm:$0xff]
    %v480 = vld [vmem:[%s1 + $0xd30] sm:$0xff]
    %v481 = vld [vmem:[%s1 + $0xd38] sm:$0xff]
    %v482 = vld [vmem:[%s1 + $0xd40] sm:$0xff]
    %v483 = vld [vmem:[%s1 + $0xd48] sm:$0xff]
    %v484 = vld [vmem:[%s1 + $0xd50] sm:$0xff]
    %v485 = vld [vmem:[%s1 + $0xd58] sm:$0xff]
    %v486 = vld [vmem:[%s1 + $0xd60] sm:$0xff]
    %v487 = vld [vmem:[%s1 + $0xd68] sm:$0xff]
    %v488 = vld [vmem:[%s1 + $0xd70] sm:$0xff]
    %v489 = vld [vmem:[%s1 + $0xd78] sm:$0xff]
    %v490 = vld [vmem:[%s1 + $0xd80] sm:$0xff]
    %v491 = vld [vmem:[%s1 + $0xd88] sm:$0xff]
    %v492 = vld [vmem:[%s1 + $0xd90] sm:$0xff]
    %v493 = vld [vmem:[%s1 + $0xd98] sm:$0xff]
    %v494 = vld [vmem:[%s1 + $0xda0] sm:$0xff]
    %v495 = vld [vmem:[%s1 + $0xda8] sm:$0xff]
    %v496 = vld [vmem:[%s1 + $0xdb0] sm:$0xff]
    %v497 = vld [vmem:[%s1 + $0xdb8] sm:$0xff]
    %v498 = vld [vmem:[%s1 + $0xdc0] sm:$0xff]
    %v499 = vld [vmem:[%s1 + $0xdc8] sm:$0xff]
    %v500 = vld [vmem:[%s1 + $0xdd0] sm:$0xff]
    %v501 = vld [vmem:[%s1 + $0xdd8] sm:$0xff]
    %v502 = vld [vmem:[%s1 + $0xde0] sm:$0xff]
    %v503 = vld [vmem:[%s1 + $0xde8] sm:$0xff]
    %v504 = vld [vmem:[%s1 + $0xdf0] sm:$0xff]
    %v505 = vld [vmem:[%s1 + $0xdf8] sm:$0xff]
    %v506 = vld [vmem:[%s1 + $0xe00] sm:$0xff]
    %v507 = vld [vmem:[%s1 + $0xe08] sm:$0xff]
    %v508 = vld [vmem:[%s1 + $0xe10] sm:$0xff]
    %v509 = vld [vmem:[%s1 + $0xe18] sm:$0xff]
    %v510 = vld [vmem:[%s1 + $0xe20] sm:$0xff]
    %v511 = vld [vmem:[%s1 + $0xe28] sm:$0xff]
    %v512 = vld [vmem:[%s1 + $0xe30] sm:$0xff]
    %v513 = vld [vmem:[%s1 + $0xe38] sm:$0xff]
    %v514 = vld [vmem:[%s1 + $0xe40] sm:$0xff]
    %v515 = vld [vmem:[%s1 + $0xe48] sm:$0xff]
    %v516 = vld [vmem:[%s1 + $0xe50] sm:$0xff]
    %v517 = vld [vmem:[%s1 + $0xe58] sm:$0xff]
    %v518 = vld [vmem:[%s1 + $0xe60] sm:$0xff]
    %v519 = vld [vmem:[%s1 + $0xe68] sm:$0xff]
    %v520 = vld [vmem:[%s1 + $0xe70] sm:$0xff]
    %v521 = vld [vmem:[%s1 + $0xe78] sm:$0xff]
    %v522 = vld [vmem:[%s1 + $0xe80] sm:$0xff]
    %v523 = vld [vmem:[%s1 + $0xe88] sm:$0xff]
    %v524 = vld [vmem:[%s1 + $0xe90] sm:$0xff]
    %v525 = vld [vmem:[%s1 + $0xe98] sm:$0xff]
    %v526 = vld [vmem:[%s1 + $0xea0] sm:$0xff]
    %v527 = vld [vmem:[%s1 + $0xea8] sm:$0xff]
    %v528 = vld [vmem:[%s1 + $0xeb0] sm:$0xff]
    %v529 = vld [vmem:[%s1 + $0xeb8] sm:$0xff]
    %v530 = vld [vmem:[%s1 + $0xec0] sm:$0xff]
    %v531 = vld [vmem:[%s1 + $0xec8] sm:$0xff]
    %v532 = vld [vmem:[%s1 + $0xed0] sm:$0xff]
    %v533 = vld [vmem:[%s1 + $0xed8] sm:$0xff]
    %v534 = vld [vmem:[%s1 + $0xee0] sm:$0xff]
    %v535 = vld [vmem:[%s1 + $0xee8] sm:$0xff]
    %v536 = vld [vmem:[%s1 + $0xef0] sm:$0xff]
    %v537 = vld [vmem:[%s1 + $0xef8] sm:$0xff]
    %v538 = vld [vmem:[%s1 + $0xf00] sm:$0xff]
    %v539 = vld [vmem:[%s1 + $0xf08] sm:$0xff]
    %v540 = vld [vmem:[%s1 + $0xf10] sm:$0xff]
    %v541 = vld [vmem:[%s1 + $0xf18] sm:$0xff]
    %v542 = vld [vmem:[%s1 + $0xf20] sm:$0xff]
    %v543 = vld [vmem:[%s1 + $0xf28] sm:$0xff]
    %v544 = vld [vmem:[%s1 + $0xf30] sm:$0xff]
    %v545 = vld [vmem:[%s1 + $0xf38] sm:$0xff]
    %v546 = vld [vmem:[%s1 + $0xf40] sm:$0xff]
    %v547 = vld [vmem:[%s1 + $0xf48] sm:$0xff]
    %v548 = vld [vmem:[%s1 + $0xf50] sm:$0xff]
    %v549 = vld [vmem:[%s1 + $0xf58] sm:$0xff]
    %v550 = vld [vmem:[%s1 + $0xf60] sm:$0xff]
    %v551 = vld [vmem:[%s1 + $0xf68] sm:$0xff]
    %v552 = vld [vmem:[%s1 + $0xf70] sm:$0xff]
    %v553 = vld [vmem:[%s1 + $0xf78] sm:$0xff]
    %v554 = vld [vmem:[%s1 + $0xf80] sm:$0xff]
    %v555 = vld [vmem:[%s1 + $0xf88] sm:$0xff]
    %v556 = vld [vmem:[%s1 + $0xf90] sm:$0xff]
    %v557 = vld [vmem:[%s1 + $0xf98] sm:$0xff]
    %v558 = vld [vmem:[%s1 + $0xfa0] sm:$0xff]
    %v559 = vld [vmem:[%s1 + $0xfa8] sm:$0xff]
    %v560 = vld [vmem:[%s1 + $0xfb0] sm:$0xff]
    %v561 = vld [vmem:[%s1 + $0xfb8] sm:$0xff]
    %v562 = vld [vmem:[%s1 + $0xfc0] sm:$0xff]
    %v563 = vld [vmem:[%s1 + $0xfc8] sm:$0xff]
    %v564 = vld [vmem:[%s1 + $0xfd0] sm:$0xff]
    %v565 = vld [vmem:[%s1 + $0xfd8] sm:$0xff]
    %v566 = vld [vmem:[%s1 + $0xfe0] sm:$0xff]
    %v567 = vld [vmem:[%s1 + $0xfe8] sm:$0xff]
    %v568 = vld [vmem:[%s1 + $0xff0] sm:$0xff]
    %v569 = vld [vmem:[%s1 + $0xff8] sm:$0xff]
    %v570 = vld [vmem:[%s1 + $0x1000] sm:$0xff]
    %v571 = vld [vmem:[%s1 + $0x1008] sm:$0xff]
    %v572 = vld [vmem:[%s1 + $0x1010] sm:$0xff]
    %v573 = vld [vmem:[%s1 + $0x1018] sm:$0xff]
    %v574 = vld [vmem:[%s1 + $0x1020] sm:$0xff]
    %v575 = vld [vmem:[%s1 + $0x1028] sm:$0xff]
    %v576 = vld [vmem:[%s1 + $0x1030] sm:$0xff]
    %v577 = vld [vmem:[%s1 + $0x1038] sm:$0xff]
    %v578 = vld [vmem:[%s1 + $0x1040] sm:$0xff]
    %v579 = vld [vmem:[%s1 + $0x1048] sm:$0xff]
    %v580 = vld [vmem:[%s1 + $0x1050] sm:$0xff]
    %v581 = vld [vmem:[%s1 + $0x1058] sm:$0xff]
    %v582 = vld [vmem:[%s1 + $0x1060] sm:$0xff]
    %v583 = vld [vmem:[%s1 + $0x1068] sm:$0xff]
    %v584 = vld [vmem:[%s1 + $0x1070] sm:$0xff]
    %v585 = vld [vmem:[%s1 + $0x1078] sm:$0xff]
    %v586 = vld [vmem:[%s1 + $0x1080] sm:$0xff]
    %v587 = vld [vmem:[%s1 + $0x1088] sm:$0xff]
    %v588 = vld [vmem:[%s1 + $0x1090] sm:$0xff]
    %v589 = vld [vmem:[%s1 + $0x1098] sm:$0xff]
    %v590 = vld [vmem:[%s1 + $0x10a0] sm:$0xff]
    %v591 = vld [vmem:[%s1 + $0x10a8] sm:$0xff]
    %v592 = vld [vmem:[%s1 + $0x10b0] sm:$0xff]
    %v593 = vld [vmem:[%s1 + $0x10b8] sm:$0xff]
    %v594 = vld [vmem:[%s1 + $0x10c0] sm:$0xff]
    %v595 = vld [vmem:[%s1 + $0x10c8] sm:$0xff]
    %v596 = vld [vmem:[%s1 + $0x10d0] sm:$0xff]
    %v597 = vld [vmem:[%s1 + $0x10d8] sm:$0xff]
    %v598 = vld [vmem:[%s1 + $0x10e0] sm:$0xff]
    %v599 = vld [vmem:[%s1 + $0x10e8] sm:$0xff]
    %v600 = vld [vmem:[%s1 + $0x10f0] sm:$0xff]
    %v601 = vld [vmem:[%s1 + $0x10f8] sm:$0xff]
    %v602 = vld [vmem:[%s1 + $0x1100] sm:$0xff]
    %v603 = vld [vmem:[%s1 + $0x1108] sm:$0xff]
    %v604 = vld [vmem:[%s1 + $0x1110] sm:$0xff]
    %v605 = vld [vmem:[%s1 + $0x1118] sm:$0xff]
    %v606 = vld [vmem:[%s1 + $0x1120] sm:$0xff]
    %v607 = vld [vmem:[%s1 + $0x1128] sm:$0xff]
    %v608 = vld [vmem:[%s1 + $0x1130] sm:$0xff]
    %v609 = vld [vmem:[%s1 + $0x1138] sm:$0xff]
    %v610 = vld [vmem:[%s1 + $0x1140] sm:$0xff]
    %v611 = vld [vmem:[%s1 + $0x1148] sm:$0xff]
    %v612 = vld [vmem:[%s1 + $0x1150] sm:$0xff]
    %v613 = vld [vmem:[%s1 + $0x1158] sm:$0xff]
    %v614 = vld [vmem:[%s1 + $0x1160] sm:$0xff]
    %v615 = vld [vmem:[%s1 + $0x1168] sm:$0xff]
    %v616 = vld [vmem:[%s1 + $0x1170] sm:$0xff]
    %v617 = vld [vmem:[%s1 + $0x1178] sm:$0xff]
    %v618 = vld [vmem:[%s1 + $0x1180] sm:$0xff]
    %v619 = vld [vmem:[%s1 + $0x1188] sm:$0xff]
    %v620 = vld [vmem:[%s1 + $0x1190] sm:$0xff]
    %v621 = vld [vmem:[%s1 + $0x1198] sm:$0xff]
    %v622 = vld [vmem:[%s1 + $0x11a0] sm:$0xff]
    %v623 = vld [vmem:[%s1 + $0x11a8] sm:$0xff]
    %v624 = vld [vmem:[%s1 + $0x11b0] sm:$0xff]
    %v625 = vld [vmem:[%s1 + $0x11b8] sm:$0xff]
    %v626 = vld [vmem:[%s1 + $0x11c0] sm:$0xff]
    %v627 = vld [vmem:[%s1 + $0x11c8] sm:$0xff]
    %v628 = vld [vmem:[%s1 + $0x11d0] sm:$0xff]
    %v629 = vld [vmem:[%s1 + $0x11d8] sm:$0xff]
    %v630 = vld [vmem:[%s1 + $0x11e0] sm:$0xff]
    %v631 = vld [vmem:[%s1 + $0x11e8] sm:$0xff]
    %v632 = vld [vmem:[%s1 + $0x11f0] sm:$0xff]
    %v633 = vld [vmem:[%s1 + $0x11f8] sm:$0xff]
    %v634 = vld [vmem:[%s2] sm:$0xff]
    %v636 = vperm.slane %v634, 0
    %v637 = vperm.slane %v634, 1
    %v638 = vperm.slane %v634, 2
    %v639 = vperm.slane %v634, 3
    %v640 = vperm.slane %v634, 4
    %v641 = vperm.slane %v634, 5
    %v642 = vperm.slane %v634, 6
    %v643 = vperm.slane %v634, 7
    %v1228 = vunpack.c.l.b16 %v58
    %v1229 = vunpack.c.h.b16 %v58
    %v1230 = vunpack.c.l.b16 %v59
    %v1231 = vunpack.c.h.b16 %v59
    %v1232 = vunpack.c.l.b16 %v60
    %v1233 = vunpack.c.h.b16 %v60
    %v1234 = vunpack.c.l.b16 %v61
    %v1235 = vunpack.c.h.b16 %v61
    %v1236 = vunpack.c.l.b16 %v62
    %v1237 = vunpack.c.h.b16 %v62
    %v1238 = vunpack.c.l.b16 %v63
    %v1239 = vunpack.c.h.b16 %v63
    %v1240 = vunpack.c.l.b16 %v64
    %v1241 = vunpack.c.h.b16 %v64
    %v1242 = vunpack.c.l.b16 %v65
    %v1243 = vunpack.c.h.b16 %v65
    %v1244 = vunpack.c.l.b16 %v66
    %v1245 = vunpack.c.h.b16 %v66
    %v1246 = vunpack.c.l.b16 %v67
    %v1247 = vunpack.c.h.b16 %v67
    %v1248 = vunpack.c.l.b16 %v68
    %v1249 = vunpack.c.h.b16 %v68
    %v1250 = vunpack.c.l.b16 %v69
    %v1251 = vunpack.c.h.b16 %v69
    %v1252 = vunpack.c.l.b16 %v70
    %v1253 = vunpack.c.h.b16 %v70
    %v1254 = vunpack.c.l.b16 %v71
    %v1255 = vunpack.c.h.b16 %v71
    %v1256 = vunpack.c.l.b16 %v72
    %v1257 = vunpack.c.h.b16 %v72
    %v1258 = vunpack.c.l.b16 %v73
    %v1259 = vunpack.c.h.b16 %v73
    %v1260 = vunpack.c.l.b16 %v74
    %v1261 = vunpack.c.h.b16 %v74
    %v1262 = vunpack.c.l.b16 %v75
    %v1263 = vunpack.c.h.b16 %v75
    %v1264 = vunpack.c.l.b16 %v76
    %v1265 = vunpack.c.h.b16 %v76
    %v1266 = vunpack.c.l.b16 %v77
    %v1267 = vunpack.c.h.b16 %v77
    %v1268 = vunpack.c.l.b16 %v78
    %v1269 = vunpack.c.h.b16 %v78
    %v1270 = vunpack.c.l.b16 %v79
    %v1271 = vunpack.c.h.b16 %v79
    %v1272 = vunpack.c.l.b16 %v80
    %v1273 = vunpack.c.h.b16 %v80
    %v1274 = vunpack.c.l.b16 %v81
    %v1275 = vunpack.c.h.b16 %v81
    %v1276 = vunpack.c.l.b16 %v82
    %v1277 = vunpack.c.h.b16 %v82
    %v1278 = vunpack.c.l.b16 %v83
    %v1279 = vunpack.c.h.b16 %v83
    %v1280 = vunpack.c.l.b16 %v84
    %v1281 = vunpack.c.h.b16 %v84
    %v1282 = vunpack.c.l.b16 %v85
    %v1283 = vunpack.c.h.b16 %v85
    %v1284 = vunpack.c.l.b16 %v86
    %v1285 = vunpack.c.h.b16 %v86
    %v1286 = vunpack.c.l.b16 %v87
    %v1287 = vunpack.c.h.b16 %v87
    %v1288 = vunpack.c.l.b16 %v88
    %v1289 = vunpack.c.h.b16 %v88
    %v1290 = vunpack.c.l.b16 %v89
    %v1291 = vunpack.c.h.b16 %v89
    %v1292 = vunpack.c.l.b16 %v90
    %v1293 = vunpack.c.h.b16 %v90
    %v1294 = vunpack.c.l.b16 %v91
    %v1295 = vunpack.c.h.b16 %v91
    %v1296 = vunpack.c.l.b16 %v92
    %v1297 = vunpack.c.h.b16 %v92
    %v1298 = vunpack.c.l.b16 %v93
    %v1299 = vunpack.c.h.b16 %v93
    %v1300 = vunpack.c.l.b16 %v94
    %v1301 = vunpack.c.h.b16 %v94
    %v1302 = vunpack.c.l.b16 %v95
    %v1303 = vunpack.c.h.b16 %v95
    %v1304 = vunpack.c.l.b16 %v96
    %v1305 = vunpack.c.h.b16 %v96
    %v1306 = vunpack.c.l.b16 %v97
    %v1307 = vunpack.c.h.b16 %v97
    %v1308 = vunpack.c.l.b16 %v98
    %v1309 = vunpack.c.h.b16 %v98
    %v1310 = vunpack.c.l.b16 %v99
    %v1311 = vunpack.c.h.b16 %v99
    %v1312 = vunpack.c.l.b16 %v100
    %v1313 = vunpack.c.h.b16 %v100
    %v1314 = vunpack.c.l.b16 %v101
    %v1315 = vunpack.c.h.b16 %v101
    %v1316 = vunpack.c.l.b16 %v102
    %v1317 = vunpack.c.h.b16 %v102
    %v1318 = vunpack.c.l.b16 %v103
    %v1319 = vunpack.c.h.b16 %v103
    %v1320 = vunpack.c.l.b16 %v104
    %v1321 = vunpack.c.h.b16 %v104
    %v1322 = vunpack.c.l.b16 %v105
    %v1323 = vunpack.c.h.b16 %v105
    %v1324 = vunpack.c.l.b16 %v106
    %v1325 = vunpack.c.h.b16 %v106
    %v1326 = vunpack.c.l.b16 %v107
    %v1327 = vunpack.c.h.b16 %v107
    %v1328 = vunpack.c.l.b16 %v108
    %v1329 = vunpack.c.h.b16 %v108
    %v1330 = vunpack.c.l.b16 %v109
    %v1331 = vunpack.c.h.b16 %v109
    %v1332 = vunpack.c.l.b16 %v110
    %v1333 = vunpack.c.h.b16 %v110
    %v1334 = vunpack.c.l.b16 %v111
    %v1335 = vunpack.c.h.b16 %v111
    %v1336 = vunpack.c.l.b16 %v112
    %v1337 = vunpack.c.h.b16 %v112
    %v1338 = vunpack.c.l.b16 %v113
    %v1339 = vunpack.c.h.b16 %v113
    %v1340 = vunpack.c.l.b16 %v114
    %v1341 = vunpack.c.h.b16 %v114
    %v1342 = vunpack.c.l.b16 %v115
    %v1343 = vunpack.c.h.b16 %v115
    %v1344 = vunpack.c.l.b16 %v116
    %v1345 = vunpack.c.h.b16 %v116
    %v1346 = vunpack.c.l.b16 %v117
    %v1347 = vunpack.c.h.b16 %v117
    %v1348 = vunpack.c.l.b16 %v118
    %v1349 = vunpack.c.h.b16 %v118
    %v1350 = vunpack.c.l.b16 %v119
    %v1351 = vunpack.c.h.b16 %v119
    %v1352 = vunpack.c.l.b16 %v120
    %v1353 = vunpack.c.h.b16 %v120
    %v1354 = vunpack.c.l.b16 %v121
    %v1355 = vunpack.c.h.b16 %v121
    %v1356 = vunpack.c.l.b16 %v122
    %v1357 = vunpack.c.h.b16 %v122
    %v1358 = vunpack.c.l.b16 %v123
    %v1359 = vunpack.c.h.b16 %v123
    %v1360 = vunpack.c.l.b16 %v124
    %v1361 = vunpack.c.h.b16 %v124
    %v1362 = vunpack.c.l.b16 %v125
    %v1363 = vunpack.c.h.b16 %v125
    %v1364 = vunpack.c.l.b16 %v126
    %v1365 = vunpack.c.h.b16 %v126
    %v1366 = vunpack.c.l.b16 %v127
    %v1367 = vunpack.c.h.b16 %v127
    %v1368 = vunpack.c.l.b16 %v128
    %v1369 = vunpack.c.h.b16 %v128
    %v1370 = vunpack.c.l.b16 %v129
    %v1371 = vunpack.c.h.b16 %v129
    %v1372 = vunpack.c.l.b16 %v130
    %v1373 = vunpack.c.h.b16 %v130
    %v1374 = vunpack.c.l.b16 %v131
    %v1375 = vunpack.c.h.b16 %v131
    %v1376 = vunpack.c.l.b16 %v132
    %v1377 = vunpack.c.h.b16 %v132
    %v1378 = vunpack.c.l.b16 %v133
    %v1379 = vunpack.c.h.b16 %v133
    %v1380 = vunpack.c.l.b16 %v134
    %v1381 = vunpack.c.h.b16 %v134
    %v1382 = vunpack.c.l.b16 %v135
    %v1383 = vunpack.c.h.b16 %v135
    %v1384 = vunpack.c.l.b16 %v136
    %v1385 = vunpack.c.h.b16 %v136
    %v1386 = vunpack.c.l.b16 %v137
    %v1387 = vunpack.c.h.b16 %v137
    %v1388 = vunpack.c.l.b16 %v138
    %v1389 = vunpack.c.h.b16 %v138
    %v1390 = vunpack.c.l.b16 %v139
    %v1391 = vunpack.c.h.b16 %v139
    %v1392 = vunpack.c.l.b16 %v140
    %v1393 = vunpack.c.h.b16 %v140
    %v1394 = vunpack.c.l.b16 %v141
    %v1395 = vunpack.c.h.b16 %v141
    %v1396 = vunpack.c.l.b16 %v142
    %v1397 = vunpack.c.h.b16 %v142
    %v1398 = vunpack.c.l.b16 %v143
    %v1399 = vunpack.c.h.b16 %v143
    %v1400 = vunpack.c.l.b16 %v144
    %v1401 = vunpack.c.h.b16 %v144
    %v1402 = vunpack.c.l.b16 %v145
    %v1403 = vunpack.c.h.b16 %v145
    %v1404 = vunpack.c.l.b16 %v146
    %v1405 = vunpack.c.h.b16 %v146
    %v1406 = vunpack.c.l.b16 %v147
    %v1407 = vunpack.c.h.b16 %v147
    %v1408 = vunpack.c.l.b16 %v148
    %v1409 = vunpack.c.h.b16 %v148
    %v1410 = vunpack.c.l.b16 %v149
    %v1411 = vunpack.c.h.b16 %v149
    %v1412 = vunpack.c.l.b16 %v150
    %v1413 = vunpack.c.h.b16 %v150
    %v1414 = vunpack.c.l.b16 %v151
    %v1415 = vunpack.c.h.b16 %v151
    %v1416 = vunpack.c.l.b16 %v152
    %v1417 = vunpack.c.h.b16 %v152
    %v1418 = vunpack.c.l.b16 %v153
    %v1419 = vunpack.c.h.b16 %v153
    %v1420 = vunpack.c.l.b16 %v154
    %v1421 = vunpack.c.h.b16 %v154
    %v1422 = vunpack.c.l.b16 %v155
    %v1423 = vunpack.c.h.b16 %v155
    %v1424 = vunpack.c.l.b16 %v156
    %v1425 = vunpack.c.h.b16 %v156
    %v1426 = vunpack.c.l.b16 %v157
    %v1427 = vunpack.c.h.b16 %v157
    %v1428 = vunpack.c.l.b16 %v158
    %v1429 = vunpack.c.h.b16 %v158
    %v1430 = vunpack.c.l.b16 %v159
    %v1431 = vunpack.c.h.b16 %v159
    %v1432 = vunpack.c.l.b16 %v160
    %v1433 = vunpack.c.h.b16 %v160
    %v1434 = vunpack.c.l.b16 %v161
    %v1435 = vunpack.c.h.b16 %v161
    %v1436 = vunpack.c.l.b16 %v162
    %v1437 = vunpack.c.h.b16 %v162
    %v1438 = vunpack.c.l.b16 %v163
    %v1439 = vunpack.c.h.b16 %v163
    %v1440 = vunpack.c.l.b16 %v164
    %v1441 = vunpack.c.h.b16 %v164
    %v1442 = vunpack.c.l.b16 %v165
    %v1443 = vunpack.c.h.b16 %v165
    %v1444 = vunpack.c.l.b16 %v166
    %v1445 = vunpack.c.h.b16 %v166
    %v1446 = vunpack.c.l.b16 %v167
    %v1447 = vunpack.c.h.b16 %v167
    %v1448 = vunpack.c.l.b16 %v168
    %v1449 = vunpack.c.h.b16 %v168
    %v1450 = vunpack.c.l.b16 %v169
    %v1451 = vunpack.c.h.b16 %v169
    %v1452 = vunpack.c.l.b16 %v170
    %v1453 = vunpack.c.h.b16 %v170
    %v1454 = vunpack.c.l.b16 %v171
    %v1455 = vunpack.c.h.b16 %v171
    %v1456 = vunpack.c.l.b16 %v172
    %v1457 = vunpack.c.h.b16 %v172
    %v1458 = vunpack.c.l.b16 %v173
    %v1459 = vunpack.c.h.b16 %v173
    %v1460 = vunpack.c.l.b16 %v174
    %v1461 = vunpack.c.h.b16 %v174
    %v1462 = vunpack.c.l.b16 %v175
    %v1463 = vunpack.c.h.b16 %v175
    %v1464 = vunpack.c.l.b16 %v176
    %v1465 = vunpack.c.h.b16 %v176
    %v1466 = vunpack.c.l.b16 %v177
    %v1467 = vunpack.c.h.b16 %v177
    %v1468 = vunpack.c.l.b16 %v178
    %v1469 = vunpack.c.h.b16 %v178
    %v1470 = vunpack.c.l.b16 %v179
    %v1471 = vunpack.c.h.b16 %v179
    %v1472 = vunpack.c.l.b16 %v180
    %v1473 = vunpack.c.h.b16 %v180
    %v1474 = vunpack.c.l.b16 %v181
    %v1475 = vunpack.c.h.b16 %v181
    %v1476 = vunpack.c.l.b16 %v182
    %v1477 = vunpack.c.h.b16 %v182
    %v1478 = vunpack.c.l.b16 %v183
    %v1479 = vunpack.c.h.b16 %v183
    %v1480 = vunpack.c.l.b16 %v184
    %v1481 = vunpack.c.h.b16 %v184
    %v1482 = vunpack.c.l.b16 %v185
    %v1483 = vunpack.c.h.b16 %v185
    %v1484 = vunpack.c.l.b16 %v186
    %v1485 = vunpack.c.h.b16 %v186
    %v1486 = vunpack.c.l.b16 %v187
    %v1487 = vunpack.c.h.b16 %v187
    %v1488 = vunpack.c.l.b16 %v188
    %v1489 = vunpack.c.h.b16 %v188
    %v1490 = vunpack.c.l.b16 %v189
    %v1491 = vunpack.c.h.b16 %v189
    %v1492 = vunpack.c.l.b16 %v190
    %v1493 = vunpack.c.h.b16 %v190
    %v1494 = vunpack.c.l.b16 %v191
    %v1495 = vunpack.c.h.b16 %v191
    %v1496 = vunpack.c.l.b16 %v192
    %v1497 = vunpack.c.h.b16 %v192
    %v1498 = vunpack.c.l.b16 %v193
    %v1499 = vunpack.c.h.b16 %v193
    %v1500 = vunpack.c.l.b16 %v194
    %v1501 = vunpack.c.h.b16 %v194
    %v1502 = vunpack.c.l.b16 %v195
    %v1503 = vunpack.c.h.b16 %v195
    %v1504 = vunpack.c.l.b16 %v196
    %v1505 = vunpack.c.h.b16 %v196
    %v1506 = vunpack.c.l.b16 %v197
    %v1507 = vunpack.c.h.b16 %v197
    %v1508 = vunpack.c.l.b16 %v198
    %v1509 = vunpack.c.h.b16 %v198
    %v1510 = vunpack.c.l.b16 %v199
    %v1511 = vunpack.c.h.b16 %v199
    %v1512 = vunpack.c.l.b16 %v200
    %v1513 = vunpack.c.h.b16 %v200
    %v1514 = vunpack.c.l.b16 %v201
    %v1515 = vunpack.c.h.b16 %v201
    %v1516 = vunpack.c.l.b16 %v202
    %v1517 = vunpack.c.h.b16 %v202
    %v1518 = vunpack.c.l.b16 %v203
    %v1519 = vunpack.c.h.b16 %v203
    %v1520 = vunpack.c.l.b16 %v204
    %v1521 = vunpack.c.h.b16 %v204
    %v1522 = vunpack.c.l.b16 %v205
    %v1523 = vunpack.c.h.b16 %v205
    %v1524 = vunpack.c.l.b16 %v206
    %v1525 = vunpack.c.h.b16 %v206
    %v1526 = vunpack.c.l.b16 %v207
    %v1527 = vunpack.c.h.b16 %v207
    %v1528 = vunpack.c.l.b16 %v208
    %v1529 = vunpack.c.h.b16 %v208
    %v1530 = vunpack.c.l.b16 %v209
    %v1531 = vunpack.c.h.b16 %v209
    %v1532 = vunpack.c.l.b16 %v210
    %v1533 = vunpack.c.h.b16 %v210
    %v1534 = vunpack.c.l.b16 %v211
    %v1535 = vunpack.c.h.b16 %v211
    %v1536 = vunpack.c.l.b16 %v212
    %v1537 = vunpack.c.h.b16 %v212
    %v1538 = vunpack.c.l.b16 %v213
    %v1539 = vunpack.c.h.b16 %v213
    %v1540 = vunpack.c.l.b16 %v214
    %v1541 = vunpack.c.h.b16 %v214
    %v1542 = vunpack.c.l.b16 %v215
    %v1543 = vunpack.c.h.b16 %v215
    %v1544 = vunpack.c.l.b16 %v216
    %v1545 = vunpack.c.h.b16 %v216
    %v1546 = vunpack.c.l.b16 %v217
    %v1547 = vunpack.c.h.b16 %v217
    %v1548 = vunpack.c.l.b16 %v218
    %v1549 = vunpack.c.h.b16 %v218
    %v1550 = vunpack.c.l.b16 %v219
    %v1551 = vunpack.c.h.b16 %v219
    %v1552 = vunpack.c.l.b16 %v220
    %v1553 = vunpack.c.h.b16 %v220
    %v1554 = vunpack.c.l.b16 %v221
    %v1555 = vunpack.c.h.b16 %v221
    %v1556 = vunpack.c.l.b16 %v222
    %v1557 = vunpack.c.h.b16 %v222
    %v1558 = vunpack.c.l.b16 %v223
    %v1559 = vunpack.c.h.b16 %v223
    %v1560 = vunpack.c.l.b16 %v224
    %v1561 = vunpack.c.h.b16 %v224
    %v1562 = vunpack.c.l.b16 %v225
    %v1563 = vunpack.c.h.b16 %v225
    %v1564 = vunpack.c.l.b16 %v226
    %v1565 = vunpack.c.h.b16 %v226
    %v1566 = vunpack.c.l.b16 %v227
    %v1567 = vunpack.c.h.b16 %v227
    %v1568 = vunpack.c.l.b16 %v228
    %v1569 = vunpack.c.h.b16 %v228
    %v1570 = vunpack.c.l.b16 %v229
    %v1571 = vunpack.c.h.b16 %v229
    %v1572 = vunpack.c.l.b16 %v230
    %v1573 = vunpack.c.h.b16 %v230
    %v1574 = vunpack.c.l.b16 %v231
    %v1575 = vunpack.c.h.b16 %v231
    %v1576 = vunpack.c.l.b16 %v232
    %v1577 = vunpack.c.h.b16 %v232
    %v1578 = vunpack.c.l.b16 %v233
    %v1579 = vunpack.c.h.b16 %v233
    %v1580 = vunpack.c.l.b16 %v234
    %v1581 = vunpack.c.h.b16 %v234
    %v1582 = vunpack.c.l.b16 %v235
    %v1583 = vunpack.c.h.b16 %v235
    %v1584 = vunpack.c.l.b16 %v236
    %v1585 = vunpack.c.h.b16 %v236
    %v1586 = vunpack.c.l.b16 %v237
    %v1587 = vunpack.c.h.b16 %v237
    %v1588 = vunpack.c.l.b16 %v238
    %v1589 = vunpack.c.h.b16 %v238
    %v1590 = vunpack.c.l.b16 %v239
    %v1591 = vunpack.c.h.b16 %v239
    %v1592 = vunpack.c.l.b16 %v240
    %v1593 = vunpack.c.h.b16 %v240
    %v1594 = vunpack.c.l.b16 %v241
    %v1595 = vunpack.c.h.b16 %v241
    %v1596 = vunpack.c.l.b16 %v242
    %v1597 = vunpack.c.h.b16 %v242
    %v1598 = vunpack.c.l.b16 %v243
    %v1599 = vunpack.c.h.b16 %v243
    %v1600 = vunpack.c.l.b16 %v244
    %v1601 = vunpack.c.h.b16 %v244
    %v1602 = vunpack.c.l.b16 %v245
    %v1603 = vunpack.c.h.b16 %v245
    %v1604 = vunpack.c.l.b16 %v246
    %v1605 = vunpack.c.h.b16 %v246
    %v1606 = vunpack.c.l.b16 %v247
    %v1607 = vunpack.c.h.b16 %v247
    %v1608 = vunpack.c.l.b16 %v248
    %v1609 = vunpack.c.h.b16 %v248
    %v1610 = vunpack.c.l.b16 %v249
    %v1611 = vunpack.c.h.b16 %v249
    %v1612 = vunpack.c.l.b16 %v250
    %v1613 = vunpack.c.h.b16 %v250
    %v1614 = vunpack.c.l.b16 %v251
    %v1615 = vunpack.c.h.b16 %v251
    %v1616 = vunpack.c.l.b16 %v252
    %v1617 = vunpack.c.h.b16 %v252
    %v1618 = vunpack.c.l.b16 %v253
    %v1619 = vunpack.c.h.b16 %v253
    %v1620 = vunpack.c.l.b16 %v254
    %v1621 = vunpack.c.h.b16 %v254
    %v1622 = vunpack.c.l.b16 %v255
    %v1623 = vunpack.c.h.b16 %v255
    %v1624 = vunpack.c.l.b16 %v256
    %v1625 = vunpack.c.h.b16 %v256
    %v1626 = vunpack.c.l.b16 %v257
    %v1627 = vunpack.c.h.b16 %v257
    %v1628 = vunpack.c.l.b16 %v258
    %v1629 = vunpack.c.h.b16 %v258
    %v1630 = vunpack.c.l.b16 %v259
    %v1631 = vunpack.c.h.b16 %v259
    %v1632 = vunpack.c.l.b16 %v260
    %v1633 = vunpack.c.h.b16 %v260
    %v1634 = vunpack.c.l.b16 %v261
    %v1635 = vunpack.c.h.b16 %v261
    %v1636 = vunpack.c.l.b16 %v262
    %v1637 = vunpack.c.h.b16 %v262
    %v1638 = vunpack.c.l.b16 %v263
    %v1639 = vunpack.c.h.b16 %v263
    %v1640 = vunpack.c.l.b16 %v264
    %v1641 = vunpack.c.h.b16 %v264
    %v1642 = vunpack.c.l.b16 %v265
    %v1643 = vunpack.c.h.b16 %v265
    %v1644 = vunpack.c.l.b16 %v266
    %v1645 = vunpack.c.h.b16 %v266
    %v1646 = vunpack.c.l.b16 %v267
    %v1647 = vunpack.c.h.b16 %v267
    %v1648 = vunpack.c.l.b16 %v268
    %v1649 = vunpack.c.h.b16 %v268
    %v1650 = vunpack.c.l.b16 %v269
    %v1651 = vunpack.c.h.b16 %v269
    %v1652 = vunpack.c.l.b16 %v270
    %v1653 = vunpack.c.h.b16 %v270
    %v1654 = vunpack.c.l.b16 %v271
    %v1655 = vunpack.c.h.b16 %v271
    %v1656 = vunpack.c.l.b16 %v272
    %v1657 = vunpack.c.h.b16 %v272
    %v1658 = vunpack.c.l.b16 %v273
    %v1659 = vunpack.c.h.b16 %v273
    %v1660 = vunpack.c.l.b16 %v274
    %v1661 = vunpack.c.h.b16 %v274
    %v1662 = vunpack.c.l.b16 %v275
    %v1663 = vunpack.c.h.b16 %v275
    %v1664 = vunpack.c.l.b16 %v276
    %v1665 = vunpack.c.h.b16 %v276
    %v1666 = vunpack.c.l.b16 %v277
    %v1667 = vunpack.c.h.b16 %v277
    %v1668 = vunpack.c.l.b16 %v278
    %v1669 = vunpack.c.h.b16 %v278
    %v1670 = vunpack.c.l.b16 %v279
    %v1671 = vunpack.c.h.b16 %v279
    %v1672 = vunpack.c.l.b16 %v280
    %v1673 = vunpack.c.h.b16 %v280
    %v1674 = vunpack.c.l.b16 %v281
    %v1675 = vunpack.c.h.b16 %v281
    %v1676 = vunpack.c.l.b16 %v282
    %v1677 = vunpack.c.h.b16 %v282
    %v1678 = vunpack.c.l.b16 %v283
    %v1679 = vunpack.c.h.b16 %v283
    %v1680 = vunpack.c.l.b16 %v284
    %v1681 = vunpack.c.h.b16 %v284
    %v1682 = vunpack.c.l.b16 %v285
    %v1683 = vunpack.c.h.b16 %v285
    %v1684 = vunpack.c.l.b16 %v286
    %v1685 = vunpack.c.h.b16 %v286
    %v1686 = vunpack.c.l.b16 %v287
    %v1687 = vunpack.c.h.b16 %v287
    %v1688 = vunpack.c.l.b16 %v288
    %v1689 = vunpack.c.h.b16 %v288
    %v1690 = vunpack.c.l.b16 %v289
    %v1691 = vunpack.c.h.b16 %v289
    %v1692 = vunpack.c.l.b16 %v290
    %v1693 = vunpack.c.h.b16 %v290
    %v1694 = vunpack.c.l.b16 %v291
    %v1695 = vunpack.c.h.b16 %v291
    %v1696 = vunpack.c.l.b16 %v292
    %v1697 = vunpack.c.h.b16 %v292
    %v1698 = vunpack.c.l.b16 %v293
    %v1699 = vunpack.c.h.b16 %v293
    %v1700 = vunpack.c.l.b16 %v294
    %v1701 = vunpack.c.h.b16 %v294
    %v1702 = vunpack.c.l.b16 %v295
    %v1703 = vunpack.c.h.b16 %v295
    %v1704 = vunpack.c.l.b16 %v296
    %v1705 = vunpack.c.h.b16 %v296
    %v1706 = vunpack.c.l.b16 %v297
    %v1707 = vunpack.c.h.b16 %v297
    %v1708 = vunpack.c.l.b16 %v298
    %v1709 = vunpack.c.h.b16 %v298
    %v1710 = vunpack.c.l.b16 %v299
    %v1711 = vunpack.c.h.b16 %v299
    %v1712 = vunpack.c.l.b16 %v300
    %v1713 = vunpack.c.h.b16 %v300
    %v1714 = vunpack.c.l.b16 %v301
    %v1715 = vunpack.c.h.b16 %v301
    %v1716 = vunpack.c.l.b16 %v302
    %v1717 = vunpack.c.h.b16 %v302
    %v1718 = vunpack.c.l.b16 %v303
    %v1719 = vunpack.c.h.b16 %v303
    %v1720 = vunpack.c.l.b16 %v304
    %v1721 = vunpack.c.h.b16 %v304
    %v1722 = vunpack.c.l.b16 %v305
    %v1723 = vunpack.c.h.b16 %v305
    %v1724 = vunpack.c.l.b16 %v306
    %v1725 = vunpack.c.h.b16 %v306
    %v1726 = vunpack.c.l.b16 %v307
    %v1727 = vunpack.c.h.b16 %v307
    %v1728 = vunpack.c.l.b16 %v308
    %v1729 = vunpack.c.h.b16 %v308
    %v1730 = vunpack.c.l.b16 %v309
    %v1731 = vunpack.c.h.b16 %v309
    %v1732 = vunpack.c.l.b16 %v310
    %v1733 = vunpack.c.h.b16 %v310
    %v1734 = vunpack.c.l.b16 %v311
    %v1735 = vunpack.c.h.b16 %v311
    %v1736 = vunpack.c.l.b16 %v312
    %v1737 = vunpack.c.h.b16 %v312
    %v1738 = vunpack.c.l.b16 %v313
    %v1739 = vunpack.c.h.b16 %v313
    %v1740 = vunpack.c.l.b16 %v314
    %v1741 = vunpack.c.h.b16 %v314
    %v1742 = vunpack.c.l.b16 %v315
    %v1743 = vunpack.c.h.b16 %v315
    %v1744 = vunpack.c.l.b16 %v316
    %v1745 = vunpack.c.h.b16 %v316
    %v1746 = vunpack.c.l.b16 %v317
    %v1747 = vunpack.c.h.b16 %v317
    %v1748 = vunpack.c.l.b16 %v318
    %v1749 = vunpack.c.h.b16 %v318
    %v1750 = vunpack.c.l.b16 %v319
    %v1751 = vunpack.c.h.b16 %v319
    %v1752 = vunpack.c.l.b16 %v320
    %v1753 = vunpack.c.h.b16 %v320
    %v1754 = vunpack.c.l.b16 %v321
    %v1755 = vunpack.c.h.b16 %v321
    %v1756 = vunpack.c.l.b16 %v322
    %v1757 = vunpack.c.h.b16 %v322
    %v1758 = vunpack.c.l.b16 %v323
    %v1759 = vunpack.c.h.b16 %v323
    %v1760 = vunpack.c.l.b16 %v324
    %v1761 = vunpack.c.h.b16 %v324
    %v1762 = vunpack.c.l.b16 %v325
    %v1763 = vunpack.c.h.b16 %v325
    %v1764 = vunpack.c.l.b16 %v326
    %v1765 = vunpack.c.h.b16 %v326
    %v1766 = vunpack.c.l.b16 %v327
    %v1767 = vunpack.c.h.b16 %v327
    %v1768 = vunpack.c.l.b16 %v328
    %v1769 = vunpack.c.h.b16 %v328
    %v1770 = vunpack.c.l.b16 %v329
    %v1771 = vunpack.c.h.b16 %v329
    %v1772 = vunpack.c.l.b16 %v330
    %v1773 = vunpack.c.h.b16 %v330
    %v1774 = vunpack.c.l.b16 %v331
    %v1775 = vunpack.c.h.b16 %v331
    %v1776 = vunpack.c.l.b16 %v332
    %v1777 = vunpack.c.h.b16 %v332
    %v1778 = vunpack.c.l.b16 %v333
    %v1779 = vunpack.c.h.b16 %v333
    %v1780 = vunpack.c.l.b16 %v334
    %v1781 = vunpack.c.h.b16 %v334
    %v1782 = vunpack.c.l.b16 %v335
    %v1783 = vunpack.c.h.b16 %v335
    %v1784 = vunpack.c.l.b16 %v336
    %v1785 = vunpack.c.h.b16 %v336
    %v1786 = vunpack.c.l.b16 %v337
    %v1787 = vunpack.c.h.b16 %v337
    %v1788 = vunpack.c.l.b16 %v338
    %v1789 = vunpack.c.h.b16 %v338
    %v1790 = vunpack.c.l.b16 %v339
    %v1791 = vunpack.c.h.b16 %v339
    %v1792 = vunpack.c.l.b16 %v340
    %v1793 = vunpack.c.h.b16 %v340
    %v1794 = vunpack.c.l.b16 %v341
    %v1795 = vunpack.c.h.b16 %v341
    %v1796 = vunpack.c.l.b16 %v342
    %v1797 = vunpack.c.h.b16 %v342
    %v1798 = vunpack.c.l.b16 %v343
    %v1799 = vunpack.c.h.b16 %v343
    %v1800 = vunpack.c.l.b16 %v344
    %v1801 = vunpack.c.h.b16 %v344
    %v1802 = vunpack.c.l.b16 %v345
    %v1803 = vunpack.c.h.b16 %v345
    %v1804 = vunpack.c.l.b16 %v346
    %v1805 = vunpack.c.h.b16 %v346
    %v1806 = vunpack.c.l.b16 %v347
    %v1807 = vunpack.c.h.b16 %v347
    %v1808 = vunpack.c.l.b16 %v348
    %v1809 = vunpack.c.h.b16 %v348
    %v1810 = vunpack.c.l.b16 %v349
    %v1811 = vunpack.c.h.b16 %v349
    %v1812 = vunpack.c.l.b16 %v350
    %v1813 = vunpack.c.h.b16 %v350
    %v1814 = vunpack.c.l.b16 %v351
    %v1815 = vunpack.c.h.b16 %v351
    %v1816 = vunpack.c.l.b16 %v352
    %v1817 = vunpack.c.h.b16 %v352
    %v1818 = vunpack.c.l.b16 %v353
    %v1819 = vunpack.c.h.b16 %v353
    %v1820 = vunpack.c.l.b16 %v354
    %v1821 = vunpack.c.h.b16 %v354
    %v1822 = vunpack.c.l.b16 %v355
    %v1823 = vunpack.c.h.b16 %v355
    %v1824 = vunpack.c.l.b16 %v356
    %v1825 = vunpack.c.h.b16 %v356
    %v1826 = vunpack.c.l.b16 %v357
    %v1827 = vunpack.c.h.b16 %v357
    %v1828 = vunpack.c.l.b16 %v358
    %v1829 = vunpack.c.h.b16 %v358
    %v1830 = vunpack.c.l.b16 %v359
    %v1831 = vunpack.c.h.b16 %v359
    %v1832 = vunpack.c.l.b16 %v360
    %v1833 = vunpack.c.h.b16 %v360
    %v1834 = vunpack.c.l.b16 %v361
    %v1835 = vunpack.c.h.b16 %v361
    %v1836 = vunpack.c.l.b16 %v362
    %v1837 = vunpack.c.h.b16 %v362
    %v1838 = vunpack.c.l.b16 %v363
    %v1839 = vunpack.c.h.b16 %v363
    %v1840 = vunpack.c.l.b16 %v364
    %v1841 = vunpack.c.h.b16 %v364
    %v1842 = vunpack.c.l.b16 %v365
    %v1843 = vunpack.c.h.b16 %v365
    %v1844 = vunpack.c.l.b16 %v366
    %v1845 = vunpack.c.h.b16 %v366
    %v1846 = vunpack.c.l.b16 %v367
    %v1847 = vunpack.c.h.b16 %v367
    %v1848 = vunpack.c.l.b16 %v368
    %v1849 = vunpack.c.h.b16 %v368
    %v1850 = vunpack.c.l.b16 %v369
    %v1851 = vunpack.c.h.b16 %v369
    %v1852 = vunpack.c.l.b16 %v370
    %v1853 = vunpack.c.h.b16 %v370
    %v1854 = vunpack.c.l.b16 %v371
    %v1855 = vunpack.c.h.b16 %v371
    %v1856 = vunpack.c.l.b16 %v372
    %v1857 = vunpack.c.h.b16 %v372
    %v1858 = vunpack.c.l.b16 %v373
    %v1859 = vunpack.c.h.b16 %v373
    %v1860 = vunpack.c.l.b16 %v374
    %v1861 = vunpack.c.h.b16 %v374
    %v1862 = vunpack.c.l.b16 %v375
    %v1863 = vunpack.c.h.b16 %v375
    %v1864 = vunpack.c.l.b16 %v376
    %v1865 = vunpack.c.h.b16 %v376
    %v1866 = vunpack.c.l.b16 %v377
    %v1867 = vunpack.c.h.b16 %v377
    %v1868 = vunpack.c.l.b16 %v378
    %v1869 = vunpack.c.h.b16 %v378
    %v1870 = vunpack.c.l.b16 %v379
    %v1871 = vunpack.c.h.b16 %v379
    %v1872 = vunpack.c.l.b16 %v380
    %v1873 = vunpack.c.h.b16 %v380
    %v1874 = vunpack.c.l.b16 %v381
    %v1875 = vunpack.c.h.b16 %v381
    %v1876 = vunpack.c.l.b16 %v382
    %v1877 = vunpack.c.h.b16 %v382
    %v1878 = vunpack.c.l.b16 %v383
    %v1879 = vunpack.c.h.b16 %v383
    %v1880 = vunpack.c.l.b16 %v384
    %v1881 = vunpack.c.h.b16 %v384
    %v1882 = vunpack.c.l.b16 %v385
    %v1883 = vunpack.c.h.b16 %v385
    %v1884 = vunpack.c.l.b16 %v386
    %v1885 = vunpack.c.h.b16 %v386
    %v1886 = vunpack.c.l.b16 %v387
    %v1887 = vunpack.c.h.b16 %v387
    %v1888 = vunpack.c.l.b16 %v388
    %v1889 = vunpack.c.h.b16 %v388
    %v1890 = vunpack.c.l.b16 %v389
    %v1891 = vunpack.c.h.b16 %v389
    %v1892 = vunpack.c.l.b16 %v390
    %v1893 = vunpack.c.h.b16 %v390
    %v1894 = vunpack.c.l.b16 %v391
    %v1895 = vunpack.c.h.b16 %v391
    %v1896 = vunpack.c.l.b16 %v392
    %v1897 = vunpack.c.h.b16 %v392
    %v1898 = vunpack.c.l.b16 %v393
    %v1899 = vunpack.c.h.b16 %v393
    %v1900 = vunpack.c.l.b16 %v394
    %v1901 = vunpack.c.h.b16 %v394
    %v1902 = vunpack.c.l.b16 %v395
    %v1903 = vunpack.c.h.b16 %v395
    %v1904 = vunpack.c.l.b16 %v396
    %v1905 = vunpack.c.h.b16 %v396
    %v1906 = vunpack.c.l.b16 %v397
    %v1907 = vunpack.c.h.b16 %v397
    %v1908 = vunpack.c.l.b16 %v398
    %v1909 = vunpack.c.h.b16 %v398
    %v1910 = vunpack.c.l.b16 %v399
    %v1911 = vunpack.c.h.b16 %v399
    %v1912 = vunpack.c.l.b16 %v400
    %v1913 = vunpack.c.h.b16 %v400
    %v1914 = vunpack.c.l.b16 %v401
    %v1915 = vunpack.c.h.b16 %v401
    %v1916 = vunpack.c.l.b16 %v402
    %v1917 = vunpack.c.h.b16 %v402
    %v1918 = vunpack.c.l.b16 %v403
    %v1919 = vunpack.c.h.b16 %v403
    %v1920 = vunpack.c.l.b16 %v404
    %v1921 = vunpack.c.h.b16 %v404
    %v1922 = vunpack.c.l.b16 %v405
    %v1923 = vunpack.c.h.b16 %v405
    %v1924 = vunpack.c.l.b16 %v406
    %v1925 = vunpack.c.h.b16 %v406
    %v1926 = vunpack.c.l.b16 %v407
    %v1927 = vunpack.c.h.b16 %v407
    %v1928 = vunpack.c.l.b16 %v408
    %v1929 = vunpack.c.h.b16 %v408
    %v1930 = vunpack.c.l.b16 %v409
    %v1931 = vunpack.c.h.b16 %v409
    %v1932 = vunpack.c.l.b16 %v410
    %v1933 = vunpack.c.h.b16 %v410
    %v1934 = vunpack.c.l.b16 %v411
    %v1935 = vunpack.c.h.b16 %v411
    %v1936 = vunpack.c.l.b16 %v412
    %v1937 = vunpack.c.h.b16 %v412
    %v1938 = vunpack.c.l.b16 %v413
    %v1939 = vunpack.c.h.b16 %v413
    %v1940 = vunpack.c.l.b16 %v414
    %v1941 = vunpack.c.h.b16 %v414
    %v1942 = vunpack.c.l.b16 %v415
    %v1943 = vunpack.c.h.b16 %v415
    %v1944 = vunpack.c.l.b16 %v416
    %v1945 = vunpack.c.h.b16 %v416
    %v1946 = vunpack.c.l.b16 %v417
    %v1947 = vunpack.c.h.b16 %v417
    %v1948 = vunpack.c.l.b16 %v418
    %v1949 = vunpack.c.h.b16 %v418
    %v1950 = vunpack.c.l.b16 %v419
    %v1951 = vunpack.c.h.b16 %v419
    %v1952 = vunpack.c.l.b16 %v420
    %v1953 = vunpack.c.h.b16 %v420
    %v1954 = vunpack.c.l.b16 %v421
    %v1955 = vunpack.c.h.b16 %v421
    %v1956 = vunpack.c.l.b16 %v422
    %v1957 = vunpack.c.h.b16 %v422
    %v1958 = vunpack.c.l.b16 %v423
    %v1959 = vunpack.c.h.b16 %v423
    %v1960 = vunpack.c.l.b16 %v424
    %v1961 = vunpack.c.h.b16 %v424
    %v1962 = vunpack.c.l.b16 %v425
    %v1963 = vunpack.c.h.b16 %v425
    %v1964 = vunpack.c.l.b16 %v426
    %v1965 = vunpack.c.h.b16 %v426
    %v1966 = vunpack.c.l.b16 %v427
    %v1967 = vunpack.c.h.b16 %v427
    %v1968 = vunpack.c.l.b16 %v428
    %v1969 = vunpack.c.h.b16 %v428
    %v1970 = vunpack.c.l.b16 %v429
    %v1971 = vunpack.c.h.b16 %v429
    %v1972 = vunpack.c.l.b16 %v430
    %v1973 = vunpack.c.h.b16 %v430
    %v1974 = vunpack.c.l.b16 %v431
    %v1975 = vunpack.c.h.b16 %v431
    %v1976 = vunpack.c.l.b16 %v432
    %v1977 = vunpack.c.h.b16 %v432
    %v1978 = vunpack.c.l.b16 %v433
    %v1979 = vunpack.c.h.b16 %v433
    %v1980 = vunpack.c.l.b16 %v434
    %v1981 = vunpack.c.h.b16 %v434
    %v1982 = vunpack.c.l.b16 %v435
    %v1983 = vunpack.c.h.b16 %v435
    %v1984 = vunpack.c.l.b16 %v436
    %v1985 = vunpack.c.h.b16 %v436
    %v1986 = vunpack.c.l.b16 %v437
    %v1987 = vunpack.c.h.b16 %v437
    %v1988 = vunpack.c.l.b16 %v438
    %v1989 = vunpack.c.h.b16 %v438
    %v1990 = vunpack.c.l.b16 %v439
    %v1991 = vunpack.c.h.b16 %v439
    %v1992 = vunpack.c.l.b16 %v440
    %v1993 = vunpack.c.h.b16 %v440
    %v1994 = vunpack.c.l.b16 %v441
    %v1995 = vunpack.c.h.b16 %v441
    %v1996 = vunpack.c.l.b16 %v442
    %v1997 = vunpack.c.h.b16 %v442
    %v1998 = vunpack.c.l.b16 %v443
    %v1999 = vunpack.c.h.b16 %v443
    %v2000 = vunpack.c.l.b16 %v444
    %v2001 = vunpack.c.h.b16 %v444
    %v2002 = vunpack.c.l.b16 %v445
    %v2003 = vunpack.c.h.b16 %v445
    %v2004 = vunpack.c.l.b16 %v446
    %v2005 = vunpack.c.h.b16 %v446
    %v2006 = vunpack.c.l.b16 %v447
    %v2007 = vunpack.c.h.b16 %v447
    %v2008 = vunpack.c.l.b16 %v448
    %v2009 = vunpack.c.h.b16 %v448
    %v2010 = vunpack.c.l.b16 %v449
    %v2011 = vunpack.c.h.b16 %v449
    %v2012 = vunpack.c.l.b16 %v450
    %v2013 = vunpack.c.h.b16 %v450
    %v2014 = vunpack.c.l.b16 %v451
    %v2015 = vunpack.c.h.b16 %v451
    %v2016 = vunpack.c.l.b16 %v452
    %v2017 = vunpack.c.h.b16 %v452
    %v2018 = vunpack.c.l.b16 %v453
    %v2019 = vunpack.c.h.b16 %v453
    %v2020 = vunpack.c.l.b16 %v454
    %v2021 = vunpack.c.h.b16 %v454
    %v2022 = vunpack.c.l.b16 %v455
    %v2023 = vunpack.c.h.b16 %v455
    %v2024 = vunpack.c.l.b16 %v456
    %v2025 = vunpack.c.h.b16 %v456
    %v2026 = vunpack.c.l.b16 %v457
    %v2027 = vunpack.c.h.b16 %v457
    %v2028 = vunpack.c.l.b16 %v458
    %v2029 = vunpack.c.h.b16 %v458
    %v2030 = vunpack.c.l.b16 %v459
    %v2031 = vunpack.c.h.b16 %v459
    %v2032 = vunpack.c.l.b16 %v460
    %v2033 = vunpack.c.h.b16 %v460
    %v2034 = vunpack.c.l.b16 %v461
    %v2035 = vunpack.c.h.b16 %v461
    %v2036 = vunpack.c.l.b16 %v462
    %v2037 = vunpack.c.h.b16 %v462
    %v2038 = vunpack.c.l.b16 %v463
    %v2039 = vunpack.c.h.b16 %v463
    %v2040 = vunpack.c.l.b16 %v464
    %v2041 = vunpack.c.h.b16 %v464
    %v2042 = vunpack.c.l.b16 %v465
    %v2043 = vunpack.c.h.b16 %v465
    %v2044 = vunpack.c.l.b16 %v466
    %v2045 = vunpack.c.h.b16 %v466
    %v2046 = vunpack.c.l.b16 %v467
    %v2047 = vunpack.c.h.b16 %v467
    %v2048 = vunpack.c.l.b16 %v468
    %v2049 = vunpack.c.h.b16 %v468
    %v2050 = vunpack.c.l.b16 %v469
    %v2051 = vunpack.c.h.b16 %v469
    %v2052 = vunpack.c.l.b16 %v470
    %v2053 = vunpack.c.h.b16 %v470
    %v2054 = vunpack.c.l.b16 %v471
    %v2055 = vunpack.c.h.b16 %v471
    %v2056 = vunpack.c.l.b16 %v472
    %v2057 = vunpack.c.h.b16 %v472
    %v2058 = vunpack.c.l.b16 %v473
    %v2059 = vunpack.c.h.b16 %v473
    %v2060 = vunpack.c.l.b16 %v474
    %v2061 = vunpack.c.h.b16 %v474
    %v2062 = vunpack.c.l.b16 %v475
    %v2063 = vunpack.c.h.b16 %v475
    %v2064 = vunpack.c.l.b16 %v476
    %v2065 = vunpack.c.h.b16 %v476
    %v2066 = vunpack.c.l.b16 %v477
    %v2067 = vunpack.c.h.b16 %v477
    %v2068 = vunpack.c.l.b16 %v478
    %v2069 = vunpack.c.h.b16 %v478
    %v2070 = vunpack.c.l.b16 %v479
    %v2071 = vunpack.c.h.b16 %v479
    %v2072 = vunpack.c.l.b16 %v480
    %v2073 = vunpack.c.h.b16 %v480
    %v2074 = vunpack.c.l.b16 %v481
    %v2075 = vunpack.c.h.b16 %v481
    %v2076 = vunpack.c.l.b16 %v482
    %v2077 = vunpack.c.h.b16 %v482
    %v2078 = vunpack.c.l.b16 %v483
    %v2079 = vunpack.c.h.b16 %v483
    %v2080 = vunpack.c.l.b16 %v484
    %v2081 = vunpack.c.h.b16 %v484
    %v2082 = vunpack.c.l.b16 %v485
    %v2083 = vunpack.c.h.b16 %v485
    %v2084 = vunpack.c.l.b16 %v486
    %v2085 = vunpack.c.h.b16 %v486
    %v2086 = vunpack.c.l.b16 %v487
    %v2087 = vunpack.c.h.b16 %v487
    %v2088 = vunpack.c.l.b16 %v488
    %v2089 = vunpack.c.h.b16 %v488
    %v2090 = vunpack.c.l.b16 %v489
    %v2091 = vunpack.c.h.b16 %v489
    %v2092 = vunpack.c.l.b16 %v490
    %v2093 = vunpack.c.h.b16 %v490
    %v2094 = vunpack.c.l.b16 %v491
    %v2095 = vunpack.c.h.b16 %v491
    %v2096 = vunpack.c.l.b16 %v492
    %v2097 = vunpack.c.h.b16 %v492
    %v2098 = vunpack.c.l.b16 %v493
    %v2099 = vunpack.c.h.b16 %v493
    %v2100 = vunpack.c.l.b16 %v494
    %v2101 = vunpack.c.h.b16 %v494
    %v2102 = vunpack.c.l.b16 %v495
    %v2103 = vunpack.c.h.b16 %v495
    %v2104 = vunpack.c.l.b16 %v496
    %v2105 = vunpack.c.h.b16 %v496
    %v2106 = vunpack.c.l.b16 %v497
    %v2107 = vunpack.c.h.b16 %v497
    %v2108 = vunpack.c.l.b16 %v498
    %v2109 = vunpack.c.h.b16 %v498
    %v2110 = vunpack.c.l.b16 %v499
    %v2111 = vunpack.c.h.b16 %v499
    %v2112 = vunpack.c.l.b16 %v500
    %v2113 = vunpack.c.h.b16 %v500
    %v2114 = vunpack.c.l.b16 %v501
    %v2115 = vunpack.c.h.b16 %v501
    %v2116 = vunpack.c.l.b16 %v502
    %v2117 = vunpack.c.h.b16 %v502
    %v2118 = vunpack.c.l.b16 %v503
    %v2119 = vunpack.c.h.b16 %v503
    %v2120 = vunpack.c.l.b16 %v504
    %v2121 = vunpack.c.h.b16 %v504
    %v2122 = vunpack.c.l.b16 %v505
    %v2123 = vunpack.c.h.b16 %v505
    %v2124 = vunpack.c.l.b16 %v506
    %v2125 = vunpack.c.h.b16 %v506
    %v2126 = vunpack.c.l.b16 %v507
    %v2127 = vunpack.c.h.b16 %v507
    %v2128 = vunpack.c.l.b16 %v508
    %v2129 = vunpack.c.h.b16 %v508
    %v2130 = vunpack.c.l.b16 %v509
    %v2131 = vunpack.c.h.b16 %v509
    %v2132 = vunpack.c.l.b16 %v510
    %v2133 = vunpack.c.h.b16 %v510
    %v2134 = vunpack.c.l.b16 %v511
    %v2135 = vunpack.c.h.b16 %v511
    %v2136 = vunpack.c.l.b16 %v512
    %v2137 = vunpack.c.h.b16 %v512
    %v2138 = vunpack.c.l.b16 %v513
    %v2139 = vunpack.c.h.b16 %v513
    %v2140 = vunpack.c.l.b16 %v514
    %v2141 = vunpack.c.h.b16 %v514
    %v2142 = vunpack.c.l.b16 %v515
    %v2143 = vunpack.c.h.b16 %v515
    %v2144 = vunpack.c.l.b16 %v516
    %v2145 = vunpack.c.h.b16 %v516
    %v2146 = vunpack.c.l.b16 %v517
    %v2147 = vunpack.c.h.b16 %v517
    %v2148 = vunpack.c.l.b16 %v518
    %v2149 = vunpack.c.h.b16 %v518
    %v2150 = vunpack.c.l.b16 %v519
    %v2151 = vunpack.c.h.b16 %v519
    %v2152 = vunpack.c.l.b16 %v520
    %v2153 = vunpack.c.h.b16 %v520
    %v2154 = vunpack.c.l.b16 %v521
    %v2155 = vunpack.c.h.b16 %v521
    %v2156 = vunpack.c.l.b16 %v522
    %v2157 = vunpack.c.h.b16 %v522
    %v2158 = vunpack.c.l.b16 %v523
    %v2159 = vunpack.c.h.b16 %v523
    %v2160 = vunpack.c.l.b16 %v524
    %v2161 = vunpack.c.h.b16 %v524
    %v2162 = vunpack.c.l.b16 %v525
    %v2163 = vunpack.c.h.b16 %v525
    %v2164 = vunpack.c.l.b16 %v526
    %v2165 = vunpack.c.h.b16 %v526
    %v2166 = vunpack.c.l.b16 %v527
    %v2167 = vunpack.c.h.b16 %v527
    %v2168 = vunpack.c.l.b16 %v528
    %v2169 = vunpack.c.h.b16 %v528
    %v2170 = vunpack.c.l.b16 %v529
    %v2171 = vunpack.c.h.b16 %v529
    %v2172 = vunpack.c.l.b16 %v530
    %v2173 = vunpack.c.h.b16 %v530
    %v2174 = vunpack.c.l.b16 %v531
    %v2175 = vunpack.c.h.b16 %v531
    %v2176 = vunpack.c.l.b16 %v532
    %v2177 = vunpack.c.h.b16 %v532
    %v2178 = vunpack.c.l.b16 %v533
    %v2179 = vunpack.c.h.b16 %v533
    %v2180 = vunpack.c.l.b16 %v534
    %v2181 = vunpack.c.h.b16 %v534
    %v2182 = vunpack.c.l.b16 %v535
    %v2183 = vunpack.c.h.b16 %v535
    %v2184 = vunpack.c.l.b16 %v536
    %v2185 = vunpack.c.h.b16 %v536
    %v2186 = vunpack.c.l.b16 %v537
    %v2187 = vunpack.c.h.b16 %v537
    %v2188 = vunpack.c.l.b16 %v538
    %v2189 = vunpack.c.h.b16 %v538
    %v2190 = vunpack.c.l.b16 %v539
    %v2191 = vunpack.c.h.b16 %v539
    %v2192 = vunpack.c.l.b16 %v540
    %v2193 = vunpack.c.h.b16 %v540
    %v2194 = vunpack.c.l.b16 %v541
    %v2195 = vunpack.c.h.b16 %v541
    %v2196 = vunpack.c.l.b16 %v542
    %v2197 = vunpack.c.h.b16 %v542
    %v2198 = vunpack.c.l.b16 %v543
    %v2199 = vunpack.c.h.b16 %v543
    %v2200 = vunpack.c.l.b16 %v544
    %v2201 = vunpack.c.h.b16 %v544
    %v2202 = vunpack.c.l.b16 %v545
    %v2203 = vunpack.c.h.b16 %v545
    %v2204 = vunpack.c.l.b16 %v546
    %v2205 = vunpack.c.h.b16 %v546
    %v2206 = vunpack.c.l.b16 %v547
    %v2207 = vunpack.c.h.b16 %v547
    %v2208 = vunpack.c.l.b16 %v548
    %v2209 = vunpack.c.h.b16 %v548
    %v2210 = vunpack.c.l.b16 %v549
    %v2211 = vunpack.c.h.b16 %v549
    %v2212 = vunpack.c.l.b16 %v550
    %v2213 = vunpack.c.h.b16 %v550
    %v2214 = vunpack.c.l.b16 %v551
    %v2215 = vunpack.c.h.b16 %v551
    %v2216 = vunpack.c.l.b16 %v552
    %v2217 = vunpack.c.h.b16 %v552
    %v2218 = vunpack.c.l.b16 %v553
    %v2219 = vunpack.c.h.b16 %v553
    %v2220 = vunpack.c.l.b16 %v554
    %v2221 = vunpack.c.h.b16 %v554
    %v2222 = vunpack.c.l.b16 %v555
    %v2223 = vunpack.c.h.b16 %v555
    %v2224 = vunpack.c.l.b16 %v556
    %v2225 = vunpack.c.h.b16 %v556
    %v2226 = vunpack.c.l.b16 %v557
    %v2227 = vunpack.c.h.b16 %v557
    %v2228 = vunpack.c.l.b16 %v558
    %v2229 = vunpack.c.h.b16 %v558
    %v2230 = vunpack.c.l.b16 %v559
    %v2231 = vunpack.c.h.b16 %v559
    %v2232 = vunpack.c.l.b16 %v560
    %v2233 = vunpack.c.h.b16 %v560
    %v2234 = vunpack.c.l.b16 %v561
    %v2235 = vunpack.c.h.b16 %v561
    %v2236 = vunpack.c.l.b16 %v562
    %v2237 = vunpack.c.h.b16 %v562
    %v2238 = vunpack.c.l.b16 %v563
    %v2239 = vunpack.c.h.b16 %v563
    %v2240 = vunpack.c.l.b16 %v564
    %v2241 = vunpack.c.h.b16 %v564
    %v2242 = vunpack.c.l.b16 %v565
    %v2243 = vunpack.c.h.b16 %v565
    %v2244 = vunpack.c.l.b16 %v566
    %v2245 = vunpack.c.h.b16 %v566
    %v2246 = vunpack.c.l.b16 %v567
    %v2247 = vunpack.c.h.b16 %v567
    %v2248 = vunpack.c.l.b16 %v568
    %v2249 = vunpack.c.h.b16 %v568
    %v2250 = vunpack.c.l.b16 %v569
    %v2251 = vunpack.c.h.b16 %v569
    %v2252 = vunpack.c.l.b16 %v570
    %v2253 = vunpack.c.h.b16 %v570
    %v2254 = vunpack.c.l.b16 %v571
    %v2255 = vunpack.c.h.b16 %v571
    %v2256 = vunpack.c.l.b16 %v572
    %v2257 = vunpack.c.h.b16 %v572
    %v2258 = vunpack.c.l.b16 %v573
    %v2259 = vunpack.c.h.b16 %v573
    %v2260 = vunpack.c.l.b16 %v574
    %v2261 = vunpack.c.h.b16 %v574
    %v2262 = vunpack.c.l.b16 %v575
    %v2263 = vunpack.c.h.b16 %v575
    %v2264 = vunpack.c.l.b16 %v576
    %v2265 = vunpack.c.h.b16 %v576
    %v2266 = vunpack.c.l.b16 %v577
    %v2267 = vunpack.c.h.b16 %v577
    %v2268 = vunpack.c.l.b16 %v578
    %v2269 = vunpack.c.h.b16 %v578
    %v2270 = vunpack.c.l.b16 %v579
    %v2271 = vunpack.c.h.b16 %v579
    %v2272 = vunpack.c.l.b16 %v580
    %v2273 = vunpack.c.h.b16 %v580
    %v2274 = vunpack.c.l.b16 %v581
    %v2275 = vunpack.c.h.b16 %v581
    %v2276 = vunpack.c.l.b16 %v582
    %v2277 = vunpack.c.h.b16 %v582
    %v2278 = vunpack.c.l.b16 %v583
    %v2279 = vunpack.c.h.b16 %v583
    %v2280 = vunpack.c.l.b16 %v584
    %v2281 = vunpack.c.h.b16 %v584
    %v2282 = vunpack.c.l.b16 %v585
    %v2283 = vunpack.c.h.b16 %v585
    %v2284 = vunpack.c.l.b16 %v586
    %v2285 = vunpack.c.h.b16 %v586
    %v2286 = vunpack.c.l.b16 %v587
    %v2287 = vunpack.c.h.b16 %v587
    %v2288 = vunpack.c.l.b16 %v588
    %v2289 = vunpack.c.h.b16 %v588
    %v2290 = vunpack.c.l.b16 %v589
    %v2291 = vunpack.c.h.b16 %v589
    %v2292 = vunpack.c.l.b16 %v590
    %v2293 = vunpack.c.h.b16 %v590
    %v2294 = vunpack.c.l.b16 %v591
    %v2295 = vunpack.c.h.b16 %v591
    %v2296 = vunpack.c.l.b16 %v592
    %v2297 = vunpack.c.h.b16 %v592
    %v2298 = vunpack.c.l.b16 %v593
    %v2299 = vunpack.c.h.b16 %v593
    %v2300 = vunpack.c.l.b16 %v594
    %v2301 = vunpack.c.h.b16 %v594
    %v2302 = vunpack.c.l.b16 %v595
    %v2303 = vunpack.c.h.b16 %v595
    %v2304 = vunpack.c.l.b16 %v596
    %v2305 = vunpack.c.h.b16 %v596
    %v2306 = vunpack.c.l.b16 %v597
    %v2307 = vunpack.c.h.b16 %v597
    %v2308 = vunpack.c.l.b16 %v598
    %v2309 = vunpack.c.h.b16 %v598
    %v2310 = vunpack.c.l.b16 %v599
    %v2311 = vunpack.c.h.b16 %v599
    %v2312 = vunpack.c.l.b16 %v600
    %v2313 = vunpack.c.h.b16 %v600
    %v2314 = vunpack.c.l.b16 %v601
    %v2315 = vunpack.c.h.b16 %v601
    %v2316 = vunpack.c.l.b16 %v602
    %v2317 = vunpack.c.h.b16 %v602
    %v2318 = vunpack.c.l.b16 %v603
    %v2319 = vunpack.c.h.b16 %v603
    %v2320 = vunpack.c.l.b16 %v604
    %v2321 = vunpack.c.h.b16 %v604
    %v2322 = vunpack.c.l.b16 %v605
    %v2323 = vunpack.c.h.b16 %v605
    %v2324 = vunpack.c.l.b16 %v606
    %v2325 = vunpack.c.h.b16 %v606
    %v2326 = vunpack.c.l.b16 %v607
    %v2327 = vunpack.c.h.b16 %v607
    %v2328 = vunpack.c.l.b16 %v608
    %v2329 = vunpack.c.h.b16 %v608
    %v2330 = vunpack.c.l.b16 %v609
    %v2331 = vunpack.c.h.b16 %v609
    %v2332 = vunpack.c.l.b16 %v610
    %v2333 = vunpack.c.h.b16 %v610
    %v2334 = vunpack.c.l.b16 %v611
    %v2335 = vunpack.c.h.b16 %v611
    %v2336 = vunpack.c.l.b16 %v612
    %v2337 = vunpack.c.h.b16 %v612
    %v2338 = vunpack.c.l.b16 %v613
    %v2339 = vunpack.c.h.b16 %v613
    %v2340 = vunpack.c.l.b16 %v614
    %v2341 = vunpack.c.h.b16 %v614
    %v2342 = vunpack.c.l.b16 %v615
    %v2343 = vunpack.c.h.b16 %v615
    %v2344 = vunpack.c.l.b16 %v616
    %v2345 = vunpack.c.h.b16 %v616
    %v2346 = vunpack.c.l.b16 %v617
    %v2347 = vunpack.c.h.b16 %v617
    %v2348 = vunpack.c.l.b16 %v618
    %v2349 = vunpack.c.h.b16 %v618
    %v2350 = vunpack.c.l.b16 %v619
    %v2351 = vunpack.c.h.b16 %v619
    %v2352 = vunpack.c.l.b16 %v620
    %v2353 = vunpack.c.h.b16 %v620
    %v2354 = vunpack.c.l.b16 %v621
    %v2355 = vunpack.c.h.b16 %v621
    %v2356 = vunpack.c.l.b16 %v622
    %v2357 = vunpack.c.h.b16 %v622
    %v2358 = vunpack.c.l.b16 %v623
    %v2359 = vunpack.c.h.b16 %v623
    %v2360 = vunpack.c.l.b16 %v624
    %v2361 = vunpack.c.h.b16 %v624
    %v2362 = vunpack.c.l.b16 %v625
    %v2363 = vunpack.c.h.b16 %v625
    %v2364 = vunpack.c.l.b16 %v626
    %v2365 = vunpack.c.h.b16 %v626
    %v2366 = vunpack.c.l.b16 %v627
    %v2367 = vunpack.c.h.b16 %v627
    %v2368 = vunpack.c.l.b16 %v628
    %v2369 = vunpack.c.h.b16 %v628
    %v2370 = vunpack.c.l.b16 %v629
    %v2371 = vunpack.c.h.b16 %v629
    %v2372 = vunpack.c.l.b16 %v630
    %v2373 = vunpack.c.h.b16 %v630
    %v2374 = vunpack.c.l.b16 %v631
    %v2375 = vunpack.c.h.b16 %v631
    %v2376 = vunpack.c.l.b16 %v632
    %v2377 = vunpack.c.h.b16 %v632
    %v2378 = vunpack.c.l.b16 %v633
    %v2379 = vunpack.c.h.b16 %v633
    %v2380 = vpack.c.b16 %v1236, %v1228
    %v2381 = vpack.c.b16 %v1237, %v1229
    %v2382 = vpack.c.b16 %v1238, %v1230
    %v2383 = vpack.c.b16 %v1239, %v1231
    %v2384 = vpack.c.b16 %v1240, %v1232
    %v2385 = vpack.c.b16 %v1241, %v1233
    %v2386 = vpack.c.b16 %v1242, %v1234
    %v2387 = vpack.c.b16 %v1243, %v1235
    %v2388 = vpack.c.b16 %v1252, %v1244
    %v2389 = vpack.c.b16 %v1253, %v1245
    %v2390 = vpack.c.b16 %v1254, %v1246
    %v2391 = vpack.c.b16 %v1255, %v1247
    %v2392 = vpack.c.b16 %v1256, %v1248
    %v2393 = vpack.c.b16 %v1257, %v1249
    %v2394 = vpack.c.b16 %v1258, %v1250
    %v2395 = vpack.c.b16 %v1259, %v1251
    %v2396 = vpack.c.b16 %v1268, %v1260
    %v2397 = vpack.c.b16 %v1269, %v1261
    %v2398 = vpack.c.b16 %v1270, %v1262
    %v2399 = vpack.c.b16 %v1271, %v1263
    %v2400 = vpack.c.b16 %v1272, %v1264
    %v2401 = vpack.c.b16 %v1273, %v1265
    %v2402 = vpack.c.b16 %v1274, %v1266
    %v2403 = vpack.c.b16 %v1275, %v1267
    %v2404 = vpack.c.b16 %v1284, %v1276
    %v2405 = vpack.c.b16 %v1285, %v1277
    %v2406 = vpack.c.b16 %v1286, %v1278
    %v2407 = vpack.c.b16 %v1287, %v1279
    %v2408 = vpack.c.b16 %v1288, %v1280
    %v2409 = vpack.c.b16 %v1289, %v1281
    %v2410 = vpack.c.b16 %v1290, %v1282
    %v2411 = vpack.c.b16 %v1291, %v1283
    %v2412 = vpack.c.b16 %v1300, %v1292
    %v2413 = vpack.c.b16 %v1301, %v1293
    %v2414 = vpack.c.b16 %v1302, %v1294
    %v2415 = vpack.c.b16 %v1303, %v1295
    %v2416 = vpack.c.b16 %v1304, %v1296
    %v2417 = vpack.c.b16 %v1305, %v1297
    %v2418 = vpack.c.b16 %v1306, %v1298
    %v2419 = vpack.c.b16 %v1307, %v1299
    %v2420 = vpack.c.b16 %v1316, %v1308
    %v2421 = vpack.c.b16 %v1317, %v1309
    %v2422 = vpack.c.b16 %v1318, %v1310
    %v2423 = vpack.c.b16 %v1319, %v1311
    %v2424 = vpack.c.b16 %v1320, %v1312
    %v2425 = vpack.c.b16 %v1321, %v1313
    %v2426 = vpack.c.b16 %v1322, %v1314
    %v2427 = vpack.c.b16 %v1323, %v1315
    %v2428 = vpack.c.b16 %v1332, %v1324
    %v2429 = vpack.c.b16 %v1333, %v1325
    %v2430 = vpack.c.b16 %v1334, %v1326
    %v2431 = vpack.c.b16 %v1335, %v1327
    %v2432 = vpack.c.b16 %v1336, %v1328
    %v2433 = vpack.c.b16 %v1337, %v1329
    %v2434 = vpack.c.b16 %v1338, %v1330
    %v2435 = vpack.c.b16 %v1339, %v1331
    %v2436 = vpack.c.b16 %v1348, %v1340
    %v2437 = vpack.c.b16 %v1349, %v1341
    %v2438 = vpack.c.b16 %v1350, %v1342
    %v2439 = vpack.c.b16 %v1351, %v1343
    %v2440 = vpack.c.b16 %v1352, %v1344
    %v2441 = vpack.c.b16 %v1353, %v1345
    %v2442 = vpack.c.b16 %v1354, %v1346
    %v2443 = vpack.c.b16 %v1355, %v1347
    %v2444 = vpack.c.b16 %v1364, %v1356
    %v2445 = vpack.c.b16 %v1365, %v1357
    %v2446 = vpack.c.b16 %v1366, %v1358
    %v2447 = vpack.c.b16 %v1367, %v1359
    %v2448 = vpack.c.b16 %v1368, %v1360
    %v2449 = vpack.c.b16 %v1369, %v1361
    %v2450 = vpack.c.b16 %v1370, %v1362
    %v2451 = vpack.c.b16 %v1371, %v1363
    %v2452 = vpack.c.b16 %v1380, %v1372
    %v2453 = vpack.c.b16 %v1381, %v1373
    %v2454 = vpack.c.b16 %v1382, %v1374
    %v2455 = vpack.c.b16 %v1383, %v1375
    %v2456 = vpack.c.b16 %v1384, %v1376
    %v2457 = vpack.c.b16 %v1385, %v1377
    %v2458 = vpack.c.b16 %v1386, %v1378
    %v2459 = vpack.c.b16 %v1387, %v1379
    %v2460 = vpack.c.b16 %v1396, %v1388
    %v2461 = vpack.c.b16 %v1397, %v1389
    %v2462 = vpack.c.b16 %v1398, %v1390
    %v2463 = vpack.c.b16 %v1399, %v1391
    %v2464 = vpack.c.b16 %v1400, %v1392
    %v2465 = vpack.c.b16 %v1401, %v1393
    %v2466 = vpack.c.b16 %v1402, %v1394
    %v2467 = vpack.c.b16 %v1403, %v1395
    %v2468 = vpack.c.b16 %v1412, %v1404
    %v2469 = vpack.c.b16 %v1413, %v1405
    %v2470 = vpack.c.b16 %v1414, %v1406
    %v2471 = vpack.c.b16 %v1415, %v1407
    %v2472 = vpack.c.b16 %v1416, %v1408
    %v2473 = vpack.c.b16 %v1417, %v1409
    %v2474 = vpack.c.b16 %v1418, %v1410
    %v2475 = vpack.c.b16 %v1419, %v1411
    %v2476 = vpack.c.b16 %v1428, %v1420
    %v2477 = vpack.c.b16 %v1429, %v1421
    %v2478 = vpack.c.b16 %v1430, %v1422
    %v2479 = vpack.c.b16 %v1431, %v1423
    %v2480 = vpack.c.b16 %v1432, %v1424
    %v2481 = vpack.c.b16 %v1433, %v1425
    %v2482 = vpack.c.b16 %v1434, %v1426
    %v2483 = vpack.c.b16 %v1435, %v1427
    %v2484 = vpack.c.b16 %v1444, %v1436
    %v2485 = vpack.c.b16 %v1445, %v1437
    %v2486 = vpack.c.b16 %v1446, %v1438
    %v2487 = vpack.c.b16 %v1447, %v1439
    %v2488 = vpack.c.b16 %v1448, %v1440
    %v2489 = vpack.c.b16 %v1449, %v1441
    %v2490 = vpack.c.b16 %v1450, %v1442
    %v2491 = vpack.c.b16 %v1451, %v1443
    %v2492 = vpack.c.b16 %v1460, %v1452
    %v2493 = vpack.c.b16 %v1461, %v1453
    %v2494 = vpack.c.b16 %v1462, %v1454
    %v2495 = vpack.c.b16 %v1463, %v1455
    %v2496 = vpack.c.b16 %v1464, %v1456
    %v2497 = vpack.c.b16 %v1465, %v1457
    %v2498 = vpack.c.b16 %v1466, %v1458
    %v2499 = vpack.c.b16 %v1467, %v1459
    %v2500 = vpack.c.b16 %v1476, %v1468
    %v2501 = vpack.c.b16 %v1477, %v1469
    %v2502 = vpack.c.b16 %v1478, %v1470
    %v2503 = vpack.c.b16 %v1479, %v1471
    %v2504 = vpack.c.b16 %v1480, %v1472
    %v2505 = vpack.c.b16 %v1481, %v1473
    %v2506 = vpack.c.b16 %v1482, %v1474
    %v2507 = vpack.c.b16 %v1483, %v1475
    %v2508 = vpack.c.b16 %v1492, %v1484
    %v2509 = vpack.c.b16 %v1493, %v1485
    %v2510 = vpack.c.b16 %v1494, %v1486
    %v2511 = vpack.c.b16 %v1495, %v1487
    %v2512 = vpack.c.b16 %v1496, %v1488
    %v2513 = vpack.c.b16 %v1497, %v1489
    %v2514 = vpack.c.b16 %v1498, %v1490
    %v2515 = vpack.c.b16 %v1499, %v1491
    %v2516 = vpack.c.b16 %v1508, %v1500
    %v2517 = vpack.c.b16 %v1509, %v1501
    %v2518 = vpack.c.b16 %v1510, %v1502
    %v2519 = vpack.c.b16 %v1511, %v1503
    %v2520 = vpack.c.b16 %v1512, %v1504
    %v2521 = vpack.c.b16 %v1513, %v1505
    %v2522 = vpack.c.b16 %v1514, %v1506
    %v2523 = vpack.c.b16 %v1515, %v1507
    %v2524 = vpack.c.b16 %v1524, %v1516
    %v2525 = vpack.c.b16 %v1525, %v1517
    %v2526 = vpack.c.b16 %v1526, %v1518
    %v2527 = vpack.c.b16 %v1527, %v1519
    %v2528 = vpack.c.b16 %v1528, %v1520
    %v2529 = vpack.c.b16 %v1529, %v1521
    %v2530 = vpack.c.b16 %v1530, %v1522
    %v2531 = vpack.c.b16 %v1531, %v1523
    %v2532 = vpack.c.b16 %v1540, %v1532
    %v2533 = vpack.c.b16 %v1541, %v1533
    %v2534 = vpack.c.b16 %v1542, %v1534
    %v2535 = vpack.c.b16 %v1543, %v1535
    %v2536 = vpack.c.b16 %v1544, %v1536
    %v2537 = vpack.c.b16 %v1545, %v1537
    %v2538 = vpack.c.b16 %v1546, %v1538
    %v2539 = vpack.c.b16 %v1547, %v1539
    %v2540 = vpack.c.b16 %v1556, %v1548
    %v2541 = vpack.c.b16 %v1557, %v1549
    %v2542 = vpack.c.b16 %v1558, %v1550
    %v2543 = vpack.c.b16 %v1559, %v1551
    %v2544 = vpack.c.b16 %v1560, %v1552
    %v2545 = vpack.c.b16 %v1561, %v1553
    %v2546 = vpack.c.b16 %v1562, %v1554
    %v2547 = vpack.c.b16 %v1563, %v1555
    %v2548 = vpack.c.b16 %v1572, %v1564
    %v2549 = vpack.c.b16 %v1573, %v1565
    %v2550 = vpack.c.b16 %v1574, %v1566
    %v2551 = vpack.c.b16 %v1575, %v1567
    %v2552 = vpack.c.b16 %v1576, %v1568
    %v2553 = vpack.c.b16 %v1577, %v1569
    %v2554 = vpack.c.b16 %v1578, %v1570
    %v2555 = vpack.c.b16 %v1579, %v1571
    %v2556 = vpack.c.b16 %v1588, %v1580
    %v2557 = vpack.c.b16 %v1589, %v1581
    %v2558 = vpack.c.b16 %v1590, %v1582
    %v2559 = vpack.c.b16 %v1591, %v1583
    %v2560 = vpack.c.b16 %v1592, %v1584
    %v2561 = vpack.c.b16 %v1593, %v1585
    %v2562 = vpack.c.b16 %v1594, %v1586
    %v2563 = vpack.c.b16 %v1595, %v1587
    %v2564 = vpack.c.b16 %v1604, %v1596
    %v2565 = vpack.c.b16 %v1605, %v1597
    %v2566 = vpack.c.b16 %v1606, %v1598
    %v2567 = vpack.c.b16 %v1607, %v1599
    %v2568 = vpack.c.b16 %v1608, %v1600
    %v2569 = vpack.c.b16 %v1609, %v1601
    %v2570 = vpack.c.b16 %v1610, %v1602
    %v2571 = vpack.c.b16 %v1611, %v1603
    %v2572 = vpack.c.b16 %v1620, %v1612
    %v2573 = vpack.c.b16 %v1621, %v1613
    %v2574 = vpack.c.b16 %v1622, %v1614
    %v2575 = vpack.c.b16 %v1623, %v1615
    %v2576 = vpack.c.b16 %v1624, %v1616
    %v2577 = vpack.c.b16 %v1625, %v1617
    %v2578 = vpack.c.b16 %v1626, %v1618
    %v2579 = vpack.c.b16 %v1627, %v1619
    %v2580 = vpack.c.b16 %v1636, %v1628
    %v2581 = vpack.c.b16 %v1637, %v1629
    %v2582 = vpack.c.b16 %v1638, %v1630
    %v2583 = vpack.c.b16 %v1639, %v1631
    %v2584 = vpack.c.b16 %v1640, %v1632
    %v2585 = vpack.c.b16 %v1641, %v1633
    %v2586 = vpack.c.b16 %v1642, %v1634
    %v2587 = vpack.c.b16 %v1643, %v1635
    %v2588 = vpack.c.b16 %v1652, %v1644
    %v2589 = vpack.c.b16 %v1653, %v1645
    %v2590 = vpack.c.b16 %v1654, %v1646
    %v2591 = vpack.c.b16 %v1655, %v1647
    %v2592 = vpack.c.b16 %v1656, %v1648
    %v2593 = vpack.c.b16 %v1657, %v1649
    %v2594 = vpack.c.b16 %v1658, %v1650
    %v2595 = vpack.c.b16 %v1659, %v1651
    %v2596 = vpack.c.b16 %v1668, %v1660
    %v2597 = vpack.c.b16 %v1669, %v1661
    %v2598 = vpack.c.b16 %v1670, %v1662
    %v2599 = vpack.c.b16 %v1671, %v1663
    %v2600 = vpack.c.b16 %v1672, %v1664
    %v2601 = vpack.c.b16 %v1673, %v1665
    %v2602 = vpack.c.b16 %v1674, %v1666
    %v2603 = vpack.c.b16 %v1675, %v1667
    %v2604 = vpack.c.b16 %v1684, %v1676
    %v2605 = vpack.c.b16 %v1685, %v1677
    %v2606 = vpack.c.b16 %v1686, %v1678
    %v2607 = vpack.c.b16 %v1687, %v1679
    %v2608 = vpack.c.b16 %v1688, %v1680
    %v2609 = vpack.c.b16 %v1689, %v1681
    %v2610 = vpack.c.b16 %v1690, %v1682
    %v2611 = vpack.c.b16 %v1691, %v1683
    %v2612 = vpack.c.b16 %v1700, %v1692
    %v2613 = vpack.c.b16 %v1701, %v1693
    %v2614 = vpack.c.b16 %v1702, %v1694
    %v2615 = vpack.c.b16 %v1703, %v1695
    %v2616 = vpack.c.b16 %v1704, %v1696
    %v2617 = vpack.c.b16 %v1705, %v1697
    %v2618 = vpack.c.b16 %v1706, %v1698
    %v2619 = vpack.c.b16 %v1707, %v1699
    %v2620 = vpack.c.b16 %v1716, %v1708
    %v2621 = vpack.c.b16 %v1717, %v1709
    %v2622 = vpack.c.b16 %v1718, %v1710
    %v2623 = vpack.c.b16 %v1719, %v1711
    %v2624 = vpack.c.b16 %v1720, %v1712
    %v2625 = vpack.c.b16 %v1721, %v1713
    %v2626 = vpack.c.b16 %v1722, %v1714
    %v2627 = vpack.c.b16 %v1723, %v1715
    %v2628 = vpack.c.b16 %v1732, %v1724
    %v2629 = vpack.c.b16 %v1733, %v1725
    %v2630 = vpack.c.b16 %v1734, %v1726
    %v2631 = vpack.c.b16 %v1735, %v1727
    %v2632 = vpack.c.b16 %v1736, %v1728
    %v2633 = vpack.c.b16 %v1737, %v1729
    %v2634 = vpack.c.b16 %v1738, %v1730
    %v2635 = vpack.c.b16 %v1739, %v1731
    %v2636 = vpack.c.b16 %v1748, %v1740
    %v2637 = vpack.c.b16 %v1749, %v1741
    %v2638 = vpack.c.b16 %v1750, %v1742
    %v2639 = vpack.c.b16 %v1751, %v1743
    %v2640 = vpack.c.b16 %v1752, %v1744
    %v2641 = vpack.c.b16 %v1753, %v1745
    %v2642 = vpack.c.b16 %v1754, %v1746
    %v2643 = vpack.c.b16 %v1755, %v1747
    %v2644 = vpack.c.b16 %v1764, %v1756
    %v2645 = vpack.c.b16 %v1765, %v1757
    %v2646 = vpack.c.b16 %v1766, %v1758
    %v2647 = vpack.c.b16 %v1767, %v1759
    %v2648 = vpack.c.b16 %v1768, %v1760
    %v2649 = vpack.c.b16 %v1769, %v1761
    %v2650 = vpack.c.b16 %v1770, %v1762
    %v2651 = vpack.c.b16 %v1771, %v1763
    %v2652 = vpack.c.b16 %v1780, %v1772
    %v2653 = vpack.c.b16 %v1781, %v1773
    %v2654 = vpack.c.b16 %v1782, %v1774
    %v2655 = vpack.c.b16 %v1783, %v1775
    %v2656 = vpack.c.b16 %v1784, %v1776
    %v2657 = vpack.c.b16 %v1785, %v1777
    %v2658 = vpack.c.b16 %v1786, %v1778
    %v2659 = vpack.c.b16 %v1787, %v1779
    %v2660 = vpack.c.b16 %v1796, %v1788
    %v2661 = vpack.c.b16 %v1797, %v1789
    %v2662 = vpack.c.b16 %v1798, %v1790
    %v2663 = vpack.c.b16 %v1799, %v1791
    %v2664 = vpack.c.b16 %v1800, %v1792
    %v2665 = vpack.c.b16 %v1801, %v1793
    %v2666 = vpack.c.b16 %v1802, %v1794
    %v2667 = vpack.c.b16 %v1803, %v1795
    %v2668 = vpack.c.b16 %v1812, %v1804
    %v2669 = vpack.c.b16 %v1813, %v1805
    %v2670 = vpack.c.b16 %v1814, %v1806
    %v2671 = vpack.c.b16 %v1815, %v1807
    %v2672 = vpack.c.b16 %v1816, %v1808
    %v2673 = vpack.c.b16 %v1817, %v1809
    %v2674 = vpack.c.b16 %v1818, %v1810
    %v2675 = vpack.c.b16 %v1819, %v1811
    %v2676 = vpack.c.b16 %v1828, %v1820
    %v2677 = vpack.c.b16 %v1829, %v1821
    %v2678 = vpack.c.b16 %v1830, %v1822
    %v2679 = vpack.c.b16 %v1831, %v1823
    %v2680 = vpack.c.b16 %v1832, %v1824
    %v2681 = vpack.c.b16 %v1833, %v1825
    %v2682 = vpack.c.b16 %v1834, %v1826
    %v2683 = vpack.c.b16 %v1835, %v1827
    %v2684 = vpack.c.b16 %v1844, %v1836
    %v2685 = vpack.c.b16 %v1845, %v1837
    %v2686 = vpack.c.b16 %v1846, %v1838
    %v2687 = vpack.c.b16 %v1847, %v1839
    %v2688 = vpack.c.b16 %v1848, %v1840
    %v2689 = vpack.c.b16 %v1849, %v1841
    %v2690 = vpack.c.b16 %v1850, %v1842
    %v2691 = vpack.c.b16 %v1851, %v1843
    %v2692 = vpack.c.b16 %v1860, %v1852
    %v2693 = vpack.c.b16 %v1861, %v1853
    %v2694 = vpack.c.b16 %v1862, %v1854
    %v2695 = vpack.c.b16 %v1863, %v1855
    %v2696 = vpack.c.b16 %v1864, %v1856
    %v2697 = vpack.c.b16 %v1865, %v1857
    %v2698 = vpack.c.b16 %v1866, %v1858
    %v2699 = vpack.c.b16 %v1867, %v1859
    %v2700 = vpack.c.b16 %v1876, %v1868
    %v2701 = vpack.c.b16 %v1877, %v1869
    %v2702 = vpack.c.b16 %v1878, %v1870
    %v2703 = vpack.c.b16 %v1879, %v1871
    %v2704 = vpack.c.b16 %v1880, %v1872
    %v2705 = vpack.c.b16 %v1881, %v1873
    %v2706 = vpack.c.b16 %v1882, %v1874
    %v2707 = vpack.c.b16 %v1883, %v1875
    %v2708 = vpack.c.b16 %v1892, %v1884
    %v2709 = vpack.c.b16 %v1893, %v1885
    %v2710 = vpack.c.b16 %v1894, %v1886
    %v2711 = vpack.c.b16 %v1895, %v1887
    %v2712 = vpack.c.b16 %v1896, %v1888
    %v2713 = vpack.c.b16 %v1897, %v1889
    %v2714 = vpack.c.b16 %v1898, %v1890
    %v2715 = vpack.c.b16 %v1899, %v1891
    %v2716 = vpack.c.b16 %v1908, %v1900
    %v2717 = vpack.c.b16 %v1909, %v1901
    %v2718 = vpack.c.b16 %v1910, %v1902
    %v2719 = vpack.c.b16 %v1911, %v1903
    %v2720 = vpack.c.b16 %v1912, %v1904
    %v2721 = vpack.c.b16 %v1913, %v1905
    %v2722 = vpack.c.b16 %v1914, %v1906
    %v2723 = vpack.c.b16 %v1915, %v1907
    %v2724 = vpack.c.b16 %v1924, %v1916
    %v2725 = vpack.c.b16 %v1925, %v1917
    %v2726 = vpack.c.b16 %v1926, %v1918
    %v2727 = vpack.c.b16 %v1927, %v1919
    %v2728 = vpack.c.b16 %v1928, %v1920
    %v2729 = vpack.c.b16 %v1929, %v1921
    %v2730 = vpack.c.b16 %v1930, %v1922
    %v2731 = vpack.c.b16 %v1931, %v1923
    %v2732 = vpack.c.b16 %v1940, %v1932
    %v2733 = vpack.c.b16 %v1941, %v1933
    %v2734 = vpack.c.b16 %v1942, %v1934
    %v2735 = vpack.c.b16 %v1943, %v1935
    %v2736 = vpack.c.b16 %v1944, %v1936
    %v2737 = vpack.c.b16 %v1945, %v1937
    %v2738 = vpack.c.b16 %v1946, %v1938
    %v2739 = vpack.c.b16 %v1947, %v1939
    %v2740 = vpack.c.b16 %v1956, %v1948
    %v2741 = vpack.c.b16 %v1957, %v1949
    %v2742 = vpack.c.b16 %v1958, %v1950
    %v2743 = vpack.c.b16 %v1959, %v1951
    %v2744 = vpack.c.b16 %v1960, %v1952
    %v2745 = vpack.c.b16 %v1961, %v1953
    %v2746 = vpack.c.b16 %v1962, %v1954
    %v2747 = vpack.c.b16 %v1963, %v1955
    %v2748 = vpack.c.b16 %v1972, %v1964
    %v2749 = vpack.c.b16 %v1973, %v1965
    %v2750 = vpack.c.b16 %v1974, %v1966
    %v2751 = vpack.c.b16 %v1975, %v1967
    %v2752 = vpack.c.b16 %v1976, %v1968
    %v2753 = vpack.c.b16 %v1977, %v1969
    %v2754 = vpack.c.b16 %v1978, %v1970
    %v2755 = vpack.c.b16 %v1979, %v1971
    %v2756 = vpack.c.b16 %v1988, %v1980
    %v2757 = vpack.c.b16 %v1989, %v1981
    %v2758 = vpack.c.b16 %v1990, %v1982
    %v2759 = vpack.c.b16 %v1991, %v1983
    %v2760 = vpack.c.b16 %v1992, %v1984
    %v2761 = vpack.c.b16 %v1993, %v1985
    %v2762 = vpack.c.b16 %v1994, %v1986
    %v2763 = vpack.c.b16 %v1995, %v1987
    %v2764 = vpack.c.b16 %v2004, %v1996
    %v2765 = vpack.c.b16 %v2005, %v1997
    %v2766 = vpack.c.b16 %v2006, %v1998
    %v2767 = vpack.c.b16 %v2007, %v1999
    %v2768 = vpack.c.b16 %v2008, %v2000
    %v2769 = vpack.c.b16 %v2009, %v2001
    %v2770 = vpack.c.b16 %v2010, %v2002
    %v2771 = vpack.c.b16 %v2011, %v2003
    %v2772 = vpack.c.b16 %v2020, %v2012
    %v2773 = vpack.c.b16 %v2021, %v2013
    %v2774 = vpack.c.b16 %v2022, %v2014
    %v2775 = vpack.c.b16 %v2023, %v2015
    %v2776 = vpack.c.b16 %v2024, %v2016
    %v2777 = vpack.c.b16 %v2025, %v2017
    %v2778 = vpack.c.b16 %v2026, %v2018
    %v2779 = vpack.c.b16 %v2027, %v2019
    %v2780 = vpack.c.b16 %v2036, %v2028
    %v2781 = vpack.c.b16 %v2037, %v2029
    %v2782 = vpack.c.b16 %v2038, %v2030
    %v2783 = vpack.c.b16 %v2039, %v2031
    %v2784 = vpack.c.b16 %v2040, %v2032
    %v2785 = vpack.c.b16 %v2041, %v2033
    %v2786 = vpack.c.b16 %v2042, %v2034
    %v2787 = vpack.c.b16 %v2043, %v2035
    %v2788 = vpack.c.b16 %v2052, %v2044
    %v2789 = vpack.c.b16 %v2053, %v2045
    %v2790 = vpack.c.b16 %v2054, %v2046
    %v2791 = vpack.c.b16 %v2055, %v2047
    %v2792 = vpack.c.b16 %v2056, %v2048
    %v2793 = vpack.c.b16 %v2057, %v2049
    %v2794 = vpack.c.b16 %v2058, %v2050
    %v2795 = vpack.c.b16 %v2059, %v2051
    %v2796 = vpack.c.b16 %v2068, %v2060
    %v2797 = vpack.c.b16 %v2069, %v2061
    %v2798 = vpack.c.b16 %v2070, %v2062
    %v2799 = vpack.c.b16 %v2071, %v2063
    %v2800 = vpack.c.b16 %v2072, %v2064
    %v2801 = vpack.c.b16 %v2073, %v2065
    %v2802 = vpack.c.b16 %v2074, %v2066
    %v2803 = vpack.c.b16 %v2075, %v2067
    %v2804 = vpack.c.b16 %v2084, %v2076
    %v2805 = vpack.c.b16 %v2085, %v2077
    %v2806 = vpack.c.b16 %v2086, %v2078
    %v2807 = vpack.c.b16 %v2087, %v2079
    %v2808 = vpack.c.b16 %v2088, %v2080
    %v2809 = vpack.c.b16 %v2089, %v2081
    %v2810 = vpack.c.b16 %v2090, %v2082
    %v2811 = vpack.c.b16 %v2091, %v2083
    %v2812 = vpack.c.b16 %v2100, %v2092
    %v2813 = vpack.c.b16 %v2101, %v2093
    %v2814 = vpack.c.b16 %v2102, %v2094
    %v2815 = vpack.c.b16 %v2103, %v2095
    %v2816 = vpack.c.b16 %v2104, %v2096
    %v2817 = vpack.c.b16 %v2105, %v2097
    %v2818 = vpack.c.b16 %v2106, %v2098
    %v2819 = vpack.c.b16 %v2107, %v2099
    %v2820 = vpack.c.b16 %v2116, %v2108
    %v2821 = vpack.c.b16 %v2117, %v2109
    %v2822 = vpack.c.b16 %v2118, %v2110
    %v2823 = vpack.c.b16 %v2119, %v2111
    %v2824 = vpack.c.b16 %v2120, %v2112
    %v2825 = vpack.c.b16 %v2121, %v2113
    %v2826 = vpack.c.b16 %v2122, %v2114
    %v2827 = vpack.c.b16 %v2123, %v2115
    %v2828 = vpack.c.b16 %v2132, %v2124
    %v2829 = vpack.c.b16 %v2133, %v2125
    %v2830 = vpack.c.b16 %v2134, %v2126
    %v2831 = vpack.c.b16 %v2135, %v2127
    %v2832 = vpack.c.b16 %v2136, %v2128
    %v2833 = vpack.c.b16 %v2137, %v2129
    %v2834 = vpack.c.b16 %v2138, %v2130
    %v2835 = vpack.c.b16 %v2139, %v2131
    %v2836 = vpack.c.b16 %v2148, %v2140
    %v2837 = vpack.c.b16 %v2149, %v2141
    %v2838 = vpack.c.b16 %v2150, %v2142
    %v2839 = vpack.c.b16 %v2151, %v2143
    %v2840 = vpack.c.b16 %v2152, %v2144
    %v2841 = vpack.c.b16 %v2153, %v2145
    %v2842 = vpack.c.b16 %v2154, %v2146
    %v2843 = vpack.c.b16 %v2155, %v2147
    %v2844 = vpack.c.b16 %v2164, %v2156
    %v2845 = vpack.c.b16 %v2165, %v2157
    %v2846 = vpack.c.b16 %v2166, %v2158
    %v2847 = vpack.c.b16 %v2167, %v2159
    %v2848 = vpack.c.b16 %v2168, %v2160
    %v2849 = vpack.c.b16 %v2169, %v2161
    %v2850 = vpack.c.b16 %v2170, %v2162
    %v2851 = vpack.c.b16 %v2171, %v2163
    %v2852 = vpack.c.b16 %v2180, %v2172
    %v2853 = vpack.c.b16 %v2181, %v2173
    %v2854 = vpack.c.b16 %v2182, %v2174
    %v2855 = vpack.c.b16 %v2183, %v2175
    %v2856 = vpack.c.b16 %v2184, %v2176
    %v2857 = vpack.c.b16 %v2185, %v2177
    %v2858 = vpack.c.b16 %v2186, %v2178
    %v2859 = vpack.c.b16 %v2187, %v2179
    %v2860 = vpack.c.b16 %v2196, %v2188
    %v2861 = vpack.c.b16 %v2197, %v2189
    %v2862 = vpack.c.b16 %v2198, %v2190
    %v2863 = vpack.c.b16 %v2199, %v2191
    %v2864 = vpack.c.b16 %v2200, %v2192
    %v2865 = vpack.c.b16 %v2201, %v2193
    %v2866 = vpack.c.b16 %v2202, %v2194
    %v2867 = vpack.c.b16 %v2203, %v2195
    %v2868 = vpack.c.b16 %v2212, %v2204
    %v2869 = vpack.c.b16 %v2213, %v2205
    %v2870 = vpack.c.b16 %v2214, %v2206
    %v2871 = vpack.c.b16 %v2215, %v2207
    %v2872 = vpack.c.b16 %v2216, %v2208
    %v2873 = vpack.c.b16 %v2217, %v2209
    %v2874 = vpack.c.b16 %v2218, %v2210
    %v2875 = vpack.c.b16 %v2219, %v2211
    %v2876 = vpack.c.b16 %v2228, %v2220
    %v2877 = vpack.c.b16 %v2229, %v2221
    %v2878 = vpack.c.b16 %v2230, %v2222
    %v2879 = vpack.c.b16 %v2231, %v2223
    %v2880 = vpack.c.b16 %v2232, %v2224
    %v2881 = vpack.c.b16 %v2233, %v2225
    %v2882 = vpack.c.b16 %v2234, %v2226
    %v2883 = vpack.c.b16 %v2235, %v2227
    %v2884 = vpack.c.b16 %v2244, %v2236
    %v2885 = vpack.c.b16 %v2245, %v2237
    %v2886 = vpack.c.b16 %v2246, %v2238
    %v2887 = vpack.c.b16 %v2247, %v2239
    %v2888 = vpack.c.b16 %v2248, %v2240
    %v2889 = vpack.c.b16 %v2249, %v2241
    %v2890 = vpack.c.b16 %v2250, %v2242
    %v2891 = vpack.c.b16 %v2251, %v2243
    %v2892 = vpack.c.b16 %v2260, %v2252
    %v2893 = vpack.c.b16 %v2261, %v2253
    %v2894 = vpack.c.b16 %v2262, %v2254
    %v2895 = vpack.c.b16 %v2263, %v2255
    %v2896 = vpack.c.b16 %v2264, %v2256
    %v2897 = vpack.c.b16 %v2265, %v2257
    %v2898 = vpack.c.b16 %v2266, %v2258
    %v2899 = vpack.c.b16 %v2267, %v2259
    %v2900 = vpack.c.b16 %v2276, %v2268
    %v2901 = vpack.c.b16 %v2277, %v2269
    %v2902 = vpack.c.b16 %v2278, %v2270
    %v2903 = vpack.c.b16 %v2279, %v2271
    %v2904 = vpack.c.b16 %v2280, %v2272
    %v2905 = vpack.c.b16 %v2281, %v2273
    %v2906 = vpack.c.b16 %v2282, %v2274
    %v2907 = vpack.c.b16 %v2283, %v2275
    %v2908 = vpack.c.b16 %v2292, %v2284
    %v2909 = vpack.c.b16 %v2293, %v2285
    %v2910 = vpack.c.b16 %v2294, %v2286
    %v2911 = vpack.c.b16 %v2295, %v2287
    %v2912 = vpack.c.b16 %v2296, %v2288
    %v2913 = vpack.c.b16 %v2297, %v2289
    %v2914 = vpack.c.b16 %v2298, %v2290
    %v2915 = vpack.c.b16 %v2299, %v2291
    %v2916 = vpack.c.b16 %v2308, %v2300
    %v2917 = vpack.c.b16 %v2309, %v2301
    %v2918 = vpack.c.b16 %v2310, %v2302
    %v2919 = vpack.c.b16 %v2311, %v2303
    %v2920 = vpack.c.b16 %v2312, %v2304
    %v2921 = vpack.c.b16 %v2313, %v2305
    %v2922 = vpack.c.b16 %v2314, %v2306
    %v2923 = vpack.c.b16 %v2315, %v2307
    %v2924 = vpack.c.b16 %v2324, %v2316
    %v2925 = vpack.c.b16 %v2325, %v2317
    %v2926 = vpack.c.b16 %v2326, %v2318
    %v2927 = vpack.c.b16 %v2327, %v2319
    %v2928 = vpack.c.b16 %v2328, %v2320
    %v2929 = vpack.c.b16 %v2329, %v2321
    %v2930 = vpack.c.b16 %v2330, %v2322
    %v2931 = vpack.c.b16 %v2331, %v2323
    %v2932 = vpack.c.b16 %v2340, %v2332
    %v2933 = vpack.c.b16 %v2341, %v2333
    %v2934 = vpack.c.b16 %v2342, %v2334
    %v2935 = vpack.c.b16 %v2343, %v2335
    %v2936 = vpack.c.b16 %v2344, %v2336
    %v2937 = vpack.c.b16 %v2345, %v2337
    %v2938 = vpack.c.b16 %v2346, %v2338
    %v2939 = vpack.c.b16 %v2347, %v2339
    %v2940 = vpack.c.b16 %v2356, %v2348
    %v2941 = vpack.c.b16 %v2357, %v2349
    %v2942 = vpack.c.b16 %v2358, %v2350
    %v2943 = vpack.c.b16 %v2359, %v2351
    %v2944 = vpack.c.b16 %v2360, %v2352
    %v2945 = vpack.c.b16 %v2361, %v2353
    %v2946 = vpack.c.b16 %v2362, %v2354
    %v2947 = vpack.c.b16 %v2363, %v2355
    %v2948 = vpack.c.b16 %v2372, %v2364
    %v2949 = vpack.c.b16 %v2373, %v2365
    %v2950 = vpack.c.b16 %v2374, %v2366
    %v2951 = vpack.c.b16 %v2375, %v2367
    %v2952 = vpack.c.b16 %v2376, %v2368
    %v2953 = vpack.c.b16 %v2377, %v2369
    %v2954 = vpack.c.b16 %v2378, %v2370
    %v2955 = vpack.c.b16 %v2379, %v2371
    %3532 = vmatpush.bf16.msra.mxu0 %v2436
    %3533 = vmatpush.bf16.msra.mxu0 %v2428
    %3534 = vmatpush.bf16.msra.mxu0 %v2420
    %3535 = vmatpush.bf16.msra.mxu0 %v2412
    %3536 = vmatpush.bf16.msra.mxu0 %v2404
    %3537 = vmatpush.bf16.msra.mxu0 %v2396
    %3538 = vmatpush.bf16.msra.mxu0 %v2388
    %3539 = vmatpush.bf16.msra.mxu0 %v2380
    %3540 = vmatmul.bf16.gmra.mxu0 %v49
    %v3541 = vpop.f32.mrf.mxu0
    %v3542 = vadd.f32 %v636, %v3541
    %v3543 = vpop.f32.mrf.mxu0
    %3544 = vdwg.mxu0
    %3545 = vmatpush.bf16.msra.mxu0 %v2500
    %3546 = vmatpush.bf16.msra.mxu0 %v2492
    %3547 = vmatpush.bf16.msra.mxu0 %v2484
    %3548 = vmatpush.bf16.msra.mxu0 %v2476
    %3549 = vmatpush.bf16.msra.mxu0 %v2468
    %3550 = vmatpush.bf16.msra.mxu0 %v2460
    %3551 = vmatpush.bf16.msra.mxu0 %v2452
    %3552 = vmatpush.bf16.msra.mxu0 %v2444
    %3553 = vmatmul.bf16.gmra.mxu0 %v50
    %v3554 = vpop.f32.mrf.mxu0
    %v3555 = vadd.f32 %v3542, %v3554
    %v3556 = vpop.f32.mrf.mxu0
    %3557 = vdwg.mxu0
    %3558 = vmatpush.bf16.msra.mxu0 %v2564
    %3559 = vmatpush.bf16.msra.mxu0 %v2556
    %3560 = vmatpush.bf16.msra.mxu0 %v2548
    %3561 = vmatpush.bf16.msra.mxu0 %v2540
    %3562 = vmatpush.bf16.msra.mxu0 %v2532
    %3563 = vmatpush.bf16.msra.mxu0 %v2524
    %3564 = vmatpush.bf16.msra.mxu0 %v2516
    %3565 = vmatpush.bf16.msra.mxu0 %v2508
    %3566 = vmatmul.bf16.gmra.mxu0 %v51
    %v3567 = vpop.f32.mrf.mxu0
    %v3568 = vadd.f32 %v3555, %v3567
    %v3569 = vpop.f32.mrf.mxu0
    %3570 = vdwg.mxu0
    %3571 = vmatpush.bf16.msra.mxu0 %v2628
    %3572 = vmatpush.bf16.msra.mxu0 %v2620
    %3573 = vmatpush.bf16.msra.mxu0 %v2612
    %3574 = vmatpush.bf16.msra.mxu0 %v2604
    %3575 = vmatpush.bf16.msra.mxu0 %v2596
    %3576 = vmatpush.bf16.msra.mxu0 %v2588
    %3577 = vmatpush.bf16.msra.mxu0 %v2580
    %3578 = vmatpush.bf16.msra.mxu0 %v2572
    %3579 = vmatmul.bf16.gmra.mxu0 %v52
    %v3580 = vpop.f32.mrf.mxu0
    %v3581 = vadd.f32 %v3568, %v3580
    %v3582 = vpop.f32.mrf.mxu0
    %3583 = vdwg.mxu0
    %3584 = vmatpush.bf16.msra.mxu0 %v2692
    %3585 = vmatpush.bf16.msra.mxu0 %v2684
    %3586 = vmatpush.bf16.msra.mxu0 %v2676
    %3587 = vmatpush.bf16.msra.mxu0 %v2668
    %3588 = vmatpush.bf16.msra.mxu0 %v2660
    %3589 = vmatpush.bf16.msra.mxu0 %v2652
    %3590 = vmatpush.bf16.msra.mxu0 %v2644
    %3591 = vmatpush.bf16.msra.mxu0 %v2636
    %3592 = vmatmul.bf16.gmra.mxu0 %v53
    %v3593 = vpop.f32.mrf.mxu0
    %v3594 = vadd.f32 %v3581, %v3593
    %v3595 = vpop.f32.mrf.mxu0
    %3596 = vdwg.mxu0
    %3597 = vmatpush.bf16.msra.mxu0 %v2756
    %3598 = vmatpush.bf16.msra.mxu0 %v2748
    %3599 = vmatpush.bf16.msra.mxu0 %v2740
    %3600 = vmatpush.bf16.msra.mxu0 %v2732
    %3601 = vmatpush.bf16.msra.mxu0 %v2724
    %3602 = vmatpush.bf16.msra.mxu0 %v2716
    %3603 = vmatpush.bf16.msra.mxu0 %v2708
    %3604 = vmatpush.bf16.msra.mxu0 %v2700
    %3605 = vmatmul.bf16.gmra.mxu0 %v54
    %v3606 = vpop.f32.mrf.mxu0
    %v3607 = vadd.f32 %v3594, %v3606
    %v3608 = vpop.f32.mrf.mxu0
    %3609 = vdwg.mxu0
    %3610 = vmatpush.bf16.msra.mxu0 %v2820
    %3611 = vmatpush.bf16.msra.mxu0 %v2812
    %3612 = vmatpush.bf16.msra.mxu0 %v2804
    %3613 = vmatpush.bf16.msra.mxu0 %v2796
    %3614 = vmatpush.bf16.msra.mxu0 %v2788
    %3615 = vmatpush.bf16.msra.mxu0 %v2780
    %3616 = vmatpush.bf16.msra.mxu0 %v2772
    %3617 = vmatpush.bf16.msra.mxu0 %v2764
    %3618 = vmatmul.bf16.gmra.mxu0 %v55
    %v3619 = vpop.f32.mrf.mxu0
    %v3620 = vadd.f32 %v3607, %v3619
    %v3621 = vpop.f32.mrf.mxu0
    %3622 = vdwg.mxu0
    %3623 = vmatpush.bf16.msra.mxu0 %v2884
    %3624 = vmatpush.bf16.msra.mxu0 %v2876
    %3625 = vmatpush.bf16.msra.mxu0 %v2868
    %3626 = vmatpush.bf16.msra.mxu0 %v2860
    %3627 = vmatpush.bf16.msra.mxu0 %v2852
    %3628 = vmatpush.bf16.msra.mxu0 %v2844
    %3629 = vmatpush.bf16.msra.mxu0 %v2836
    %3630 = vmatpush.bf16.msra.mxu0 %v2828
    %3631 = vmatmul.bf16.gmra.mxu0 %v56
    %v3632 = vpop.f32.mrf.mxu0
    %v3633 = vadd.f32 %v3620, %v3632
    %v3634 = vpop.f32.mrf.mxu0
    %3635 = vdwg.mxu0
    %3636 = vmatpush.bf16.msra.mxu0 %v2948
    %3637 = vmatpush.bf16.msra.mxu0 %v2940
    %3638 = vmatpush.bf16.msra.mxu0 %v2932
    %3639 = vmatpush.bf16.msra.mxu0 %v2924
    %3640 = vmatpush.bf16.msra.mxu0 %v2916
    %3641 = vmatpush.bf16.msra.mxu0 %v2908
    %3642 = vmatpush.bf16.msra.mxu0 %v2900
    %3643 = vmatpush.bf16.msra.mxu0 %v2892
    %3644 = vmatmul.bf16.gmra.mxu0 %v57
    %v3645 = vpop.f32.mrf.mxu0
    %v3646 = vadd.f32 %v3633, %v3645
    %v3647 = vpop.f32.mrf.mxu0
    %3648 = vdwg.mxu0
    %3649 = vmatpush.bf16.msra.mxu0 %v2437
    %3650 = vmatpush.bf16.msra.mxu0 %v2429
    %3651 = vmatpush.bf16.msra.mxu0 %v2421
    %3652 = vmatpush.bf16.msra.mxu0 %v2413
    %3653 = vmatpush.bf16.msra.mxu0 %v2405
    %3654 = vmatpush.bf16.msra.mxu0 %v2397
    %3655 = vmatpush.bf16.msra.mxu0 %v2389
    %3656 = vmatpush.bf16.msra.mxu0 %v2381
    %3657 = vmatmul.bf16.gmra.mxu0 %v49
    %v3658 = vpop.f32.mrf.mxu0
    %v3659 = vadd.f32 %v637, %v3658
    %v3660 = vpop.f32.mrf.mxu0
    %3661 = vdwg.mxu0
    %3662 = vmatpush.bf16.msra.mxu0 %v2501
    %3663 = vmatpush.bf16.msra.mxu0 %v2493
    %3664 = vmatpush.bf16.msra.mxu0 %v2485
    %3665 = vmatpush.bf16.msra.mxu0 %v2477
    %3666 = vmatpush.bf16.msra.mxu0 %v2469
    %3667 = vmatpush.bf16.msra.mxu0 %v2461
    %3668 = vmatpush.bf16.msra.mxu0 %v2453
    %3669 = vmatpush.bf16.msra.mxu0 %v2445
    %3670 = vmatmul.bf16.gmra.mxu0 %v50
    %v3671 = vpop.f32.mrf.mxu0
    %v3672 = vadd.f32 %v3659, %v3671
    %v3673 = vpop.f32.mrf.mxu0
    %3674 = vdwg.mxu0
    %3675 = vmatpush.bf16.msra.mxu0 %v2565
    %3676 = vmatpush.bf16.msra.mxu0 %v2557
    %3677 = vmatpush.bf16.msra.mxu0 %v2549
    %3678 = vmatpush.bf16.msra.mxu0 %v2541
    %3679 = vmatpush.bf16.msra.mxu0 %v2533
    %3680 = vmatpush.bf16.msra.mxu0 %v2525
    %3681 = vmatpush.bf16.msra.mxu0 %v2517
    %3682 = vmatpush.bf16.msra.mxu0 %v2509
    %3683 = vmatmul.bf16.gmra.mxu0 %v51
    %v3684 = vpop.f32.mrf.mxu0
    %v3685 = vadd.f32 %v3672, %v3684
    %v3686 = vpop.f32.mrf.mxu0
    %3687 = vdwg.mxu0
    %3688 = vmatpush.bf16.msra.mxu0 %v2629
    %3689 = vmatpush.bf16.msra.mxu0 %v2621
    %3690 = vmatpush.bf16.msra.mxu0 %v2613
    %3691 = vmatpush.bf16.msra.mxu0 %v2605
    %3692 = vmatpush.bf16.msra.mxu0 %v2597
    %3693 = vmatpush.bf16.msra.mxu0 %v2589
    %3694 = vmatpush.bf16.msra.mxu0 %v2581
    %3695 = vmatpush.bf16.msra.mxu0 %v2573
    %3696 = vmatmul.bf16.gmra.mxu0 %v52
    %v3697 = vpop.f32.mrf.mxu0
    %v3698 = vadd.f32 %v3685, %v3697
    %v3699 = vpop.f32.mrf.mxu0
    %3700 = vdwg.mxu0
    %3701 = vmatpush.bf16.msra.mxu0 %v2693
    %3702 = vmatpush.bf16.msra.mxu0 %v2685
    %3703 = vmatpush.bf16.msra.mxu0 %v2677
    %3704 = vmatpush.bf16.msra.mxu0 %v2669
    %3705 = vmatpush.bf16.msra.mxu0 %v2661
    %3706 = vmatpush.bf16.msra.mxu0 %v2653
    %3707 = vmatpush.bf16.msra.mxu0 %v2645
    %3708 = vmatpush.bf16.msra.mxu0 %v2637
    %3709 = vmatmul.bf16.gmra.mxu0 %v53
    %v3710 = vpop.f32.mrf.mxu0
    %v3711 = vadd.f32 %v3698, %v3710
    %v3712 = vpop.f32.mrf.mxu0
    %3713 = vdwg.mxu0
    %3714 = vmatpush.bf16.msra.mxu0 %v2757
    %3715 = vmatpush.bf16.msra.mxu0 %v2749
    %3716 = vmatpush.bf16.msra.mxu0 %v2741
    %3717 = vmatpush.bf16.msra.mxu0 %v2733
    %3718 = vmatpush.bf16.msra.mxu0 %v2725
    %3719 = vmatpush.bf16.msra.mxu0 %v2717
    %3720 = vmatpush.bf16.msra.mxu0 %v2709
    %3721 = vmatpush.bf16.msra.mxu0 %v2701
    %3722 = vmatmul.bf16.gmra.mxu0 %v54
    %v3723 = vpop.f32.mrf.mxu0
    %v3724 = vadd.f32 %v3711, %v3723
    %v3725 = vpop.f32.mrf.mxu0
    %3726 = vdwg.mxu0
    %3727 = vmatpush.bf16.msra.mxu0 %v2821
    %3728 = vmatpush.bf16.msra.mxu0 %v2813
    %3729 = vmatpush.bf16.msra.mxu0 %v2805
    %3730 = vmatpush.bf16.msra.mxu0 %v2797
    %3731 = vmatpush.bf16.msra.mxu0 %v2789
    %3732 = vmatpush.bf16.msra.mxu0 %v2781
    %3733 = vmatpush.bf16.msra.mxu0 %v2773
    %3734 = vmatpush.bf16.msra.mxu0 %v2765
    %3735 = vmatmul.bf16.gmra.mxu0 %v55
    %v3736 = vpop.f32.mrf.mxu0
    %v3737 = vadd.f32 %v3724, %v3736
    %v3738 = vpop.f32.mrf.mxu0
    %3739 = vdwg.mxu0
    %3740 = vmatpush.bf16.msra.mxu0 %v2885
    %3741 = vmatpush.bf16.msra.mxu0 %v2877
    %3742 = vmatpush.bf16.msra.mxu0 %v2869
    %3743 = vmatpush.bf16.msra.mxu0 %v2861
    %3744 = vmatpush.bf16.msra.mxu0 %v2853
    %3745 = vmatpush.bf16.msra.mxu0 %v2845
    %3746 = vmatpush.bf16.msra.mxu0 %v2837
    %3747 = vmatpush.bf16.msra.mxu0 %v2829
    %3748 = vmatmul.bf16.gmra.mxu0 %v56
    %v3749 = vpop.f32.mrf.mxu0
    %v3750 = vadd.f32 %v3737, %v3749
    %v3751 = vpop.f32.mrf.mxu0
    %3752 = vdwg.mxu0
    %3753 = vmatpush.bf16.msra.mxu0 %v2949
    %3754 = vmatpush.bf16.msra.mxu0 %v2941
    %3755 = vmatpush.bf16.msra.mxu0 %v2933
    %3756 = vmatpush.bf16.msra.mxu0 %v2925
    %3757 = vmatpush.bf16.msra.mxu0 %v2917
    %3758 = vmatpush.bf16.msra.mxu0 %v2909
    %3759 = vmatpush.bf16.msra.mxu0 %v2901
    %3760 = vmatpush.bf16.msra.mxu0 %v2893
    %3761 = vmatmul.bf16.gmra.mxu0 %v57
    %v3762 = vpop.f32.mrf.mxu0
    %v3763 = vadd.f32 %v3750, %v3762
    %v3764 = vpop.f32.mrf.mxu0
    %3765 = vdwg.mxu0
    %3766 = vmatpush.bf16.msra.mxu0 %v2438
    %3767 = vmatpush.bf16.msra.mxu0 %v2430
    %3768 = vmatpush.bf16.msra.mxu0 %v2422
    %3769 = vmatpush.bf16.msra.mxu0 %v2414
    %3770 = vmatpush.bf16.msra.mxu0 %v2406
    %3771 = vmatpush.bf16.msra.mxu0 %v2398
    %3772 = vmatpush.bf16.msra.mxu0 %v2390
    %3773 = vmatpush.bf16.msra.mxu0 %v2382
    %3774 = vmatmul.bf16.gmra.mxu0 %v49
    %v3775 = vpop.f32.mrf.mxu0
    %v3776 = vadd.f32 %v638, %v3775
    %v3777 = vpop.f32.mrf.mxu0
    %3778 = vdwg.mxu0
    %3779 = vmatpush.bf16.msra.mxu0 %v2502
    %3780 = vmatpush.bf16.msra.mxu0 %v2494
    %3781 = vmatpush.bf16.msra.mxu0 %v2486
    %3782 = vmatpush.bf16.msra.mxu0 %v2478
    %3783 = vmatpush.bf16.msra.mxu0 %v2470
    %3784 = vmatpush.bf16.msra.mxu0 %v2462
    %3785 = vmatpush.bf16.msra.mxu0 %v2454
    %3786 = vmatpush.bf16.msra.mxu0 %v2446
    %3787 = vmatmul.bf16.gmra.mxu0 %v50
    %v3788 = vpop.f32.mrf.mxu0
    %v3789 = vadd.f32 %v3776, %v3788
    %v3790 = vpop.f32.mrf.mxu0
    %3791 = vdwg.mxu0
    %3792 = vmatpush.bf16.msra.mxu0 %v2566
    %3793 = vmatpush.bf16.msra.mxu0 %v2558
    %3794 = vmatpush.bf16.msra.mxu0 %v2550
    %3795 = vmatpush.bf16.msra.mxu0 %v2542
    %3796 = vmatpush.bf16.msra.mxu0 %v2534
    %3797 = vmatpush.bf16.msra.mxu0 %v2526
    %3798 = vmatpush.bf16.msra.mxu0 %v2518
    %3799 = vmatpush.bf16.msra.mxu0 %v2510
    %3800 = vmatmul.bf16.gmra.mxu0 %v51
    %v3801 = vpop.f32.mrf.mxu0
    %v3802 = vadd.f32 %v3789, %v3801
    %v3803 = vpop.f32.mrf.mxu0
    %3804 = vdwg.mxu0
    %3805 = vmatpush.bf16.msra.mxu0 %v2630
    %3806 = vmatpush.bf16.msra.mxu0 %v2622
    %3807 = vmatpush.bf16.msra.mxu0 %v2614
    %3808 = vmatpush.bf16.msra.mxu0 %v2606
    %3809 = vmatpush.bf16.msra.mxu0 %v2598
    %3810 = vmatpush.bf16.msra.mxu0 %v2590
    %3811 = vmatpush.bf16.msra.mxu0 %v2582
    %3812 = vmatpush.bf16.msra.mxu0 %v2574
    %3813 = vmatmul.bf16.gmra.mxu0 %v52
    %v3814 = vpop.f32.mrf.mxu0
    %v3815 = vadd.f32 %v3802, %v3814
    %v3816 = vpop.f32.mrf.mxu0
    %3817 = vdwg.mxu0
    %3818 = vmatpush.bf16.msra.mxu0 %v2694
    %3819 = vmatpush.bf16.msra.mxu0 %v2686
    %3820 = vmatpush.bf16.msra.mxu0 %v2678
    %3821 = vmatpush.bf16.msra.mxu0 %v2670
    %3822 = vmatpush.bf16.msra.mxu0 %v2662
    %3823 = vmatpush.bf16.msra.mxu0 %v2654
    %3824 = vmatpush.bf16.msra.mxu0 %v2646
    %3825 = vmatpush.bf16.msra.mxu0 %v2638
    %3826 = vmatmul.bf16.gmra.mxu0 %v53
    %v3827 = vpop.f32.mrf.mxu0
    %v3828 = vadd.f32 %v3815, %v3827
    %v3829 = vpop.f32.mrf.mxu0
    %3830 = vdwg.mxu0
    %3831 = vmatpush.bf16.msra.mxu0 %v2758
    %3832 = vmatpush.bf16.msra.mxu0 %v2750
    %3833 = vmatpush.bf16.msra.mxu0 %v2742
    %3834 = vmatpush.bf16.msra.mxu0 %v2734
    %3835 = vmatpush.bf16.msra.mxu0 %v2726
    %3836 = vmatpush.bf16.msra.mxu0 %v2718
    %3837 = vmatpush.bf16.msra.mxu0 %v2710
    %3838 = vmatpush.bf16.msra.mxu0 %v2702
    %3839 = vmatmul.bf16.gmra.mxu0 %v54
    %v3840 = vpop.f32.mrf.mxu0
    %v3841 = vadd.f32 %v3828, %v3840
    %v3842 = vpop.f32.mrf.mxu0
    %3843 = vdwg.mxu0
    %3844 = vmatpush.bf16.msra.mxu0 %v2822
    %3845 = vmatpush.bf16.msra.mxu0 %v2814
    %3846 = vmatpush.bf16.msra.mxu0 %v2806
    %3847 = vmatpush.bf16.msra.mxu0 %v2798
    %3848 = vmatpush.bf16.msra.mxu0 %v2790
    %3849 = vmatpush.bf16.msra.mxu0 %v2782
    %3850 = vmatpush.bf16.msra.mxu0 %v2774
    %3851 = vmatpush.bf16.msra.mxu0 %v2766
    %3852 = vmatmul.bf16.gmra.mxu0 %v55
    %v3853 = vpop.f32.mrf.mxu0
    %v3854 = vadd.f32 %v3841, %v3853
    %v3855 = vpop.f32.mrf.mxu0
    %3856 = vdwg.mxu0
    %3857 = vmatpush.bf16.msra.mxu0 %v2886
    %3858 = vmatpush.bf16.msra.mxu0 %v2878
    %3859 = vmatpush.bf16.msra.mxu0 %v2870
    %3860 = vmatpush.bf16.msra.mxu0 %v2862
    %3861 = vmatpush.bf16.msra.mxu0 %v2854
    %3862 = vmatpush.bf16.msra.mxu0 %v2846
    %3863 = vmatpush.bf16.msra.mxu0 %v2838
    %3864 = vmatpush.bf16.msra.mxu0 %v2830
    %3865 = vmatmul.bf16.gmra.mxu0 %v56
    %v3866 = vpop.f32.mrf.mxu0
    %v3867 = vadd.f32 %v3854, %v3866
    %v3868 = vpop.f32.mrf.mxu0
    %3869 = vdwg.mxu0
    %3870 = vmatpush.bf16.msra.mxu0 %v2950
    %3871 = vmatpush.bf16.msra.mxu0 %v2942
    %3872 = vmatpush.bf16.msra.mxu0 %v2934
    %3873 = vmatpush.bf16.msra.mxu0 %v2926
    %3874 = vmatpush.bf16.msra.mxu0 %v2918
    %3875 = vmatpush.bf16.msra.mxu0 %v2910
    %3876 = vmatpush.bf16.msra.mxu0 %v2902
    %3877 = vmatpush.bf16.msra.mxu0 %v2894
    %3878 = vmatmul.bf16.gmra.mxu0 %v57
    %v3879 = vpop.f32.mrf.mxu0
    %v3880 = vadd.f32 %v3867, %v3879
    %v3881 = vpop.f32.mrf.mxu0
    %3882 = vdwg.mxu0
    %3883 = vmatpush.bf16.msra.mxu0 %v2439
    %3884 = vmatpush.bf16.msra.mxu0 %v2431
    %3885 = vmatpush.bf16.msra.mxu0 %v2423
    %3886 = vmatpush.bf16.msra.mxu0 %v2415
    %3887 = vmatpush.bf16.msra.mxu0 %v2407
    %3888 = vmatpush.bf16.msra.mxu0 %v2399
    %3889 = vmatpush.bf16.msra.mxu0 %v2391
    %3890 = vmatpush.bf16.msra.mxu0 %v2383
    %3891 = vmatmul.bf16.gmra.mxu0 %v49
    %v3892 = vpop.f32.mrf.mxu0
    %v3893 = vadd.f32 %v639, %v3892
    %v3894 = vpop.f32.mrf.mxu0
    %3895 = vdwg.mxu0
    %3896 = vmatpush.bf16.msra.mxu0 %v2503
    %3897 = vmatpush.bf16.msra.mxu0 %v2495
    %3898 = vmatpush.bf16.msra.mxu0 %v2487
    %3899 = vmatpush.bf16.msra.mxu0 %v2479
    %3900 = vmatpush.bf16.msra.mxu0 %v2471
    %3901 = vmatpush.bf16.msra.mxu0 %v2463
    %3902 = vmatpush.bf16.msra.mxu0 %v2455
    %3903 = vmatpush.bf16.msra.mxu0 %v2447
    %3904 = vmatmul.bf16.gmra.mxu0 %v50
    %v3905 = vpop.f32.mrf.mxu0
    %v3906 = vadd.f32 %v3893, %v3905
    %v3907 = vpop.f32.mrf.mxu0
    %3908 = vdwg.mxu0
    %3909 = vmatpush.bf16.msra.mxu0 %v2567
    %3910 = vmatpush.bf16.msra.mxu0 %v2559
    %3911 = vmatpush.bf16.msra.mxu0 %v2551
    %3912 = vmatpush.bf16.msra.mxu0 %v2543
    %3913 = vmatpush.bf16.msra.mxu0 %v2535
    %3914 = vmatpush.bf16.msra.mxu0 %v2527
    %3915 = vmatpush.bf16.msra.mxu0 %v2519
    %3916 = vmatpush.bf16.msra.mxu0 %v2511
    %3917 = vmatmul.bf16.gmra.mxu0 %v51
    %v3918 = vpop.f32.mrf.mxu0
    %v3919 = vadd.f32 %v3906, %v3918
    %v3920 = vpop.f32.mrf.mxu0
    %3921 = vdwg.mxu0
    %3922 = vmatpush.bf16.msra.mxu0 %v2631
    %3923 = vmatpush.bf16.msra.mxu0 %v2623
    %3924 = vmatpush.bf16.msra.mxu0 %v2615
    %3925 = vmatpush.bf16.msra.mxu0 %v2607
    %3926 = vmatpush.bf16.msra.mxu0 %v2599
    %3927 = vmatpush.bf16.msra.mxu0 %v2591
    %3928 = vmatpush.bf16.msra.mxu0 %v2583
    %3929 = vmatpush.bf16.msra.mxu0 %v2575
    %3930 = vmatmul.bf16.gmra.mxu0 %v52
    %v3931 = vpop.f32.mrf.mxu0
    %v3932 = vadd.f32 %v3919, %v3931
    %v3933 = vpop.f32.mrf.mxu0
    %3934 = vdwg.mxu0
    %3935 = vmatpush.bf16.msra.mxu0 %v2695
    %3936 = vmatpush.bf16.msra.mxu0 %v2687
    %3937 = vmatpush.bf16.msra.mxu0 %v2679
    %3938 = vmatpush.bf16.msra.mxu0 %v2671
    %3939 = vmatpush.bf16.msra.mxu0 %v2663
    %3940 = vmatpush.bf16.msra.mxu0 %v2655
    %3941 = vmatpush.bf16.msra.mxu0 %v2647
    %3942 = vmatpush.bf16.msra.mxu0 %v2639
    %3943 = vmatmul.bf16.gmra.mxu0 %v53
    %v3944 = vpop.f32.mrf.mxu0
    %v3945 = vadd.f32 %v3932, %v3944
    %v3946 = vpop.f32.mrf.mxu0
    %3947 = vdwg.mxu0
    %3948 = vmatpush.bf16.msra.mxu0 %v2759
    %3949 = vmatpush.bf16.msra.mxu0 %v2751
    %3950 = vmatpush.bf16.msra.mxu0 %v2743
    %3951 = vmatpush.bf16.msra.mxu0 %v2735
    %3952 = vmatpush.bf16.msra.mxu0 %v2727
    %3953 = vmatpush.bf16.msra.mxu0 %v2719
    %3954 = vmatpush.bf16.msra.mxu0 %v2711
    %3955 = vmatpush.bf16.msra.mxu0 %v2703
    %3956 = vmatmul.bf16.gmra.mxu0 %v54
    %v3957 = vpop.f32.mrf.mxu0
    %v3958 = vadd.f32 %v3945, %v3957
    %v3959 = vpop.f32.mrf.mxu0
    %3960 = vdwg.mxu0
    %3961 = vmatpush.bf16.msra.mxu0 %v2823
    %3962 = vmatpush.bf16.msra.mxu0 %v2815
    %3963 = vmatpush.bf16.msra.mxu0 %v2807
    %3964 = vmatpush.bf16.msra.mxu0 %v2799
    %3965 = vmatpush.bf16.msra.mxu0 %v2791
    %3966 = vmatpush.bf16.msra.mxu0 %v2783
    %3967 = vmatpush.bf16.msra.mxu0 %v2775
    %3968 = vmatpush.bf16.msra.mxu0 %v2767
    %3969 = vmatmul.bf16.gmra.mxu0 %v55
    %v3970 = vpop.f32.mrf.mxu0
    %v3971 = vadd.f32 %v3958, %v3970
    %v3972 = vpop.f32.mrf.mxu0
    %3973 = vdwg.mxu0
    %3974 = vmatpush.bf16.msra.mxu0 %v2887
    %3975 = vmatpush.bf16.msra.mxu0 %v2879
    %3976 = vmatpush.bf16.msra.mxu0 %v2871
    %3977 = vmatpush.bf16.msra.mxu0 %v2863
    %3978 = vmatpush.bf16.msra.mxu0 %v2855
    %3979 = vmatpush.bf16.msra.mxu0 %v2847
    %3980 = vmatpush.bf16.msra.mxu0 %v2839
    %3981 = vmatpush.bf16.msra.mxu0 %v2831
    %3982 = vmatmul.bf16.gmra.mxu0 %v56
    %v3983 = vpop.f32.mrf.mxu0
    %v3984 = vadd.f32 %v3971, %v3983
    %v3985 = vpop.f32.mrf.mxu0
    %3986 = vdwg.mxu0
    %3987 = vmatpush.bf16.msra.mxu0 %v2951
    %3988 = vmatpush.bf16.msra.mxu0 %v2943
    %3989 = vmatpush.bf16.msra.mxu0 %v2935
    %3990 = vmatpush.bf16.msra.mxu0 %v2927
    %3991 = vmatpush.bf16.msra.mxu0 %v2919
    %3992 = vmatpush.bf16.msra.mxu0 %v2911
    %3993 = vmatpush.bf16.msra.mxu0 %v2903
    %3994 = vmatpush.bf16.msra.mxu0 %v2895
    %3995 = vmatmul.bf16.gmra.mxu0 %v57
    %v3996 = vpop.f32.mrf.mxu0
    %v3997 = vadd.f32 %v3984, %v3996
    %v3998 = vpop.f32.mrf.mxu0
    %3999 = vdwg.mxu0
    %4000 = vmatpush.bf16.msra.mxu0 %v2440
    %4001 = vmatpush.bf16.msra.mxu0 %v2432
    %4002 = vmatpush.bf16.msra.mxu0 %v2424
    %4003 = vmatpush.bf16.msra.mxu0 %v2416
    %4004 = vmatpush.bf16.msra.mxu0 %v2408
    %4005 = vmatpush.bf16.msra.mxu0 %v2400
    %4006 = vmatpush.bf16.msra.mxu0 %v2392
    %4007 = vmatpush.bf16.msra.mxu0 %v2384
    %4008 = vmatmul.bf16.gmra.mxu0 %v49
    %v4009 = vpop.f32.mrf.mxu0
    %v4010 = vadd.f32 %v640, %v4009
    %v4011 = vpop.f32.mrf.mxu0
    %4012 = vdwg.mxu0
    %4013 = vmatpush.bf16.msra.mxu0 %v2504
    %4014 = vmatpush.bf16.msra.mxu0 %v2496
    %4015 = vmatpush.bf16.msra.mxu0 %v2488
    %4016 = vmatpush.bf16.msra.mxu0 %v2480
    %4017 = vmatpush.bf16.msra.mxu0 %v2472
    %4018 = vmatpush.bf16.msra.mxu0 %v2464
    %4019 = vmatpush.bf16.msra.mxu0 %v2456
    %4020 = vmatpush.bf16.msra.mxu0 %v2448
    %4021 = vmatmul.bf16.gmra.mxu0 %v50
    %v4022 = vpop.f32.mrf.mxu0
    %v4023 = vadd.f32 %v4010, %v4022
    %v4024 = vpop.f32.mrf.mxu0
    %4025 = vdwg.mxu0
    %4026 = vmatpush.bf16.msra.mxu0 %v2568
    %4027 = vmatpush.bf16.msra.mxu0 %v2560
    %4028 = vmatpush.bf16.msra.mxu0 %v2552
    %4029 = vmatpush.bf16.msra.mxu0 %v2544
    %4030 = vmatpush.bf16.msra.mxu0 %v2536
    %4031 = vmatpush.bf16.msra.mxu0 %v2528
    %4032 = vmatpush.bf16.msra.mxu0 %v2520
    %4033 = vmatpush.bf16.msra.mxu0 %v2512
    %4034 = vmatmul.bf16.gmra.mxu0 %v51
    %v4035 = vpop.f32.mrf.mxu0
    %v4036 = vadd.f32 %v4023, %v4035
    %v4037 = vpop.f32.mrf.mxu0
    %4038 = vdwg.mxu0
    %4039 = vmatpush.bf16.msra.mxu0 %v2632
    %4040 = vmatpush.bf16.msra.mxu0 %v2624
    %4041 = vmatpush.bf16.msra.mxu0 %v2616
    %4042 = vmatpush.bf16.msra.mxu0 %v2608
    %4043 = vmatpush.bf16.msra.mxu0 %v2600
    %4044 = vmatpush.bf16.msra.mxu0 %v2592
    %4045 = vmatpush.bf16.msra.mxu0 %v2584
    %4046 = vmatpush.bf16.msra.mxu0 %v2576
    %4047 = vmatmul.bf16.gmra.mxu0 %v52
    %v4048 = vpop.f32.mrf.mxu0
    %v4049 = vadd.f32 %v4036, %v4048
    %v4050 = vpop.f32.mrf.mxu0
    %4051 = vdwg.mxu0
    %4052 = vmatpush.bf16.msra.mxu0 %v2696
    %4053 = vmatpush.bf16.msra.mxu0 %v2688
    %4054 = vmatpush.bf16.msra.mxu0 %v2680
    %4055 = vmatpush.bf16.msra.mxu0 %v2672
    %4056 = vmatpush.bf16.msra.mxu0 %v2664
    %4057 = vmatpush.bf16.msra.mxu0 %v2656
    %4058 = vmatpush.bf16.msra.mxu0 %v2648
    %4059 = vmatpush.bf16.msra.mxu0 %v2640
    %4060 = vmatmul.bf16.gmra.mxu0 %v53
    %v4061 = vpop.f32.mrf.mxu0
    %v4062 = vadd.f32 %v4049, %v4061
    %v4063 = vpop.f32.mrf.mxu0
    %4064 = vdwg.mxu0
    %4065 = vmatpush.bf16.msra.mxu0 %v2760
    %4066 = vmatpush.bf16.msra.mxu0 %v2752
    %4067 = vmatpush.bf16.msra.mxu0 %v2744
    %4068 = vmatpush.bf16.msra.mxu0 %v2736
    %4069 = vmatpush.bf16.msra.mxu0 %v2728
    %4070 = vmatpush.bf16.msra.mxu0 %v2720
    %4071 = vmatpush.bf16.msra.mxu0 %v2712
    %4072 = vmatpush.bf16.msra.mxu0 %v2704
    %4073 = vmatmul.bf16.gmra.mxu0 %v54
    %v4074 = vpop.f32.mrf.mxu0
    %v4075 = vadd.f32 %v4062, %v4074
    %v4076 = vpop.f32.mrf.mxu0
    %4077 = vdwg.mxu0
    %4078 = vmatpush.bf16.msra.mxu0 %v2824
    %4079 = vmatpush.bf16.msra.mxu0 %v2816
    %4080 = vmatpush.bf16.msra.mxu0 %v2808
    %4081 = vmatpush.bf16.msra.mxu0 %v2800
    %4082 = vmatpush.bf16.msra.mxu0 %v2792
    %4083 = vmatpush.bf16.msra.mxu0 %v2784
    %4084 = vmatpush.bf16.msra.mxu0 %v2776
    %4085 = vmatpush.bf16.msra.mxu0 %v2768
    %4086 = vmatmul.bf16.gmra.mxu0 %v55
    %v4087 = vpop.f32.mrf.mxu0
    %v4088 = vadd.f32 %v4075, %v4087
    %v4089 = vpop.f32.mrf.mxu0
    %4090 = vdwg.mxu0
    %4091 = vmatpush.bf16.msra.mxu0 %v2888
    %4092 = vmatpush.bf16.msra.mxu0 %v2880
    %4093 = vmatpush.bf16.msra.mxu0 %v2872
    %4094 = vmatpush.bf16.msra.mxu0 %v2864
    %4095 = vmatpush.bf16.msra.mxu0 %v2856
    %4096 = vmatpush.bf16.msra.mxu0 %v2848
    %4097 = vmatpush.bf16.msra.mxu0 %v2840
    %4098 = vmatpush.bf16.msra.mxu0 %v2832
    %4099 = vmatmul.bf16.gmra.mxu0 %v56
    %v4100 = vpop.f32.mrf.mxu0
    %v4101 = vadd.f32 %v4088, %v4100
    %v4102 = vpop.f32.mrf.mxu0
    %4103 = vdwg.mxu0
    %4104 = vmatpush.bf16.msra.mxu0 %v2952
    %4105 = vmatpush.bf16.msra.mxu0 %v2944
    %4106 = vmatpush.bf16.msra.mxu0 %v2936
    %4107 = vmatpush.bf16.msra.mxu0 %v2928
    %4108 = vmatpush.bf16.msra.mxu0 %v2920
    %4109 = vmatpush.bf16.msra.mxu0 %v2912
    %4110 = vmatpush.bf16.msra.mxu0 %v2904
    %4111 = vmatpush.bf16.msra.mxu0 %v2896
    %4112 = vmatmul.bf16.gmra.mxu0 %v57
    %v4113 = vpop.f32.mrf.mxu0
    %v4114 = vadd.f32 %v4101, %v4113
    %v4115 = vpop.f32.mrf.mxu0
    %4116 = vdwg.mxu0
    %4117 = vmatpush.bf16.msra.mxu0 %v2441
    %4118 = vmatpush.bf16.msra.mxu0 %v2433
    %4119 = vmatpush.bf16.msra.mxu0 %v2425
    %4120 = vmatpush.bf16.msra.mxu0 %v2417
    %4121 = vmatpush.bf16.msra.mxu0 %v2409
    %4122 = vmatpush.bf16.msra.mxu0 %v2401
    %4123 = vmatpush.bf16.msra.mxu0 %v2393
    %4124 = vmatpush.bf16.msra.mxu0 %v2385
    %4125 = vmatmul.bf16.gmra.mxu0 %v49
    %v4126 = vpop.f32.mrf.mxu0
    %v4127 = vadd.f32 %v641, %v4126
    %v4128 = vpop.f32.mrf.mxu0
    %4129 = vdwg.mxu0
    %4130 = vmatpush.bf16.msra.mxu0 %v2505
    %4131 = vmatpush.bf16.msra.mxu0 %v2497
    %4132 = vmatpush.bf16.msra.mxu0 %v2489
    %4133 = vmatpush.bf16.msra.mxu0 %v2481
    %4134 = vmatpush.bf16.msra.mxu0 %v2473
    %4135 = vmatpush.bf16.msra.mxu0 %v2465
    %4136 = vmatpush.bf16.msra.mxu0 %v2457
    %4137 = vmatpush.bf16.msra.mxu0 %v2449
    %4138 = vmatmul.bf16.gmra.mxu0 %v50
    %v4139 = vpop.f32.mrf.mxu0
    %v4140 = vadd.f32 %v4127, %v4139
    %v4141 = vpop.f32.mrf.mxu0
    %4142 = vdwg.mxu0
    %4143 = vmatpush.bf16.msra.mxu0 %v2569
    %4144 = vmatpush.bf16.msra.mxu0 %v2561
    %4145 = vmatpush.bf16.msra.mxu0 %v2553
    %4146 = vmatpush.bf16.msra.mxu0 %v2545
    %4147 = vmatpush.bf16.msra.mxu0 %v2537
    %4148 = vmatpush.bf16.msra.mxu0 %v2529
    %4149 = vmatpush.bf16.msra.mxu0 %v2521
    %4150 = vmatpush.bf16.msra.mxu0 %v2513
    %4151 = vmatmul.bf16.gmra.mxu0 %v51
    %v4152 = vpop.f32.mrf.mxu0
    %v4153 = vadd.f32 %v4140, %v4152
    %v4154 = vpop.f32.mrf.mxu0
    %4155 = vdwg.mxu0
    %4156 = vmatpush.bf16.msra.mxu0 %v2633
    %4157 = vmatpush.bf16.msra.mxu0 %v2625
    %4158 = vmatpush.bf16.msra.mxu0 %v2617
    %4159 = vmatpush.bf16.msra.mxu0 %v2609
    %4160 = vmatpush.bf16.msra.mxu0 %v2601
    %4161 = vmatpush.bf16.msra.mxu0 %v2593
    %4162 = vmatpush.bf16.msra.mxu0 %v2585
    %4163 = vmatpush.bf16.msra.mxu0 %v2577
    %4164 = vmatmul.bf16.gmra.mxu0 %v52
    %v4165 = vpop.f32.mrf.mxu0
    %v4166 = vadd.f32 %v4153, %v4165
    %v4167 = vpop.f32.mrf.mxu0
    %4168 = vdwg.mxu0
    %4169 = vmatpush.bf16.msra.mxu0 %v2697
    %4170 = vmatpush.bf16.msra.mxu0 %v2689
    %4171 = vmatpush.bf16.msra.mxu0 %v2681
    %4172 = vmatpush.bf16.msra.mxu0 %v2673
    %4173 = vmatpush.bf16.msra.mxu0 %v2665
    %4174 = vmatpush.bf16.msra.mxu0 %v2657
    %4175 = vmatpush.bf16.msra.mxu0 %v2649
    %4176 = vmatpush.bf16.msra.mxu0 %v2641
    %4177 = vmatmul.bf16.gmra.mxu0 %v53
    %v4178 = vpop.f32.mrf.mxu0
    %v4179 = vadd.f32 %v4166, %v4178
    %v4180 = vpop.f32.mrf.mxu0
    %4181 = vdwg.mxu0
    %4182 = vmatpush.bf16.msra.mxu0 %v2761
    %4183 = vmatpush.bf16.msra.mxu0 %v2753
    %4184 = vmatpush.bf16.msra.mxu0 %v2745
    %4185 = vmatpush.bf16.msra.mxu0 %v2737
    %4186 = vmatpush.bf16.msra.mxu0 %v2729
    %4187 = vmatpush.bf16.msra.mxu0 %v2721
    %4188 = vmatpush.bf16.msra.mxu0 %v2713
    %4189 = vmatpush.bf16.msra.mxu0 %v2705
    %4190 = vmatmul.bf16.gmra.mxu0 %v54
    %v4191 = vpop.f32.mrf.mxu0
    %v4192 = vadd.f32 %v4179, %v4191
    %v4193 = vpop.f32.mrf.mxu0
    %4194 = vdwg.mxu0
    %4195 = vmatpush.bf16.msra.mxu0 %v2825
    %4196 = vmatpush.bf16.msra.mxu0 %v2817
    %4197 = vmatpush.bf16.msra.mxu0 %v2809
    %4198 = vmatpush.bf16.msra.mxu0 %v2801
    %4199 = vmatpush.bf16.msra.mxu0 %v2793
    %4200 = vmatpush.bf16.msra.mxu0 %v2785
    %4201 = vmatpush.bf16.msra.mxu0 %v2777
    %4202 = vmatpush.bf16.msra.mxu0 %v2769
    %4203 = vmatmul.bf16.gmra.mxu0 %v55
    %v4204 = vpop.f32.mrf.mxu0
    %v4205 = vadd.f32 %v4192, %v4204
    %v4206 = vpop.f32.mrf.mxu0
    %4207 = vdwg.mxu0
    %4208 = vmatpush.bf16.msra.mxu0 %v2889
    %4209 = vmatpush.bf16.msra.mxu0 %v2881
    %4210 = vmatpush.bf16.msra.mxu0 %v2873
    %4211 = vmatpush.bf16.msra.mxu0 %v2865
    %4212 = vmatpush.bf16.msra.mxu0 %v2857
    %4213 = vmatpush.bf16.msra.mxu0 %v2849
    %4214 = vmatpush.bf16.msra.mxu0 %v2841
    %4215 = vmatpush.bf16.msra.mxu0 %v2833
    %4216 = vmatmul.bf16.gmra.mxu0 %v56
    %v4217 = vpop.f32.mrf.mxu0
    %v4218 = vadd.f32 %v4205, %v4217
    %v4219 = vpop.f32.mrf.mxu0
    %4220 = vdwg.mxu0
    %4221 = vmatpush.bf16.msra.mxu0 %v2953
    %4222 = vmatpush.bf16.msra.mxu0 %v2945
    %4223 = vmatpush.bf16.msra.mxu0 %v2937
    %4224 = vmatpush.bf16.msra.mxu0 %v2929
    %4225 = vmatpush.bf16.msra.mxu0 %v2921
    %4226 = vmatpush.bf16.msra.mxu0 %v2913
    %4227 = vmatpush.bf16.msra.mxu0 %v2905
    %4228 = vmatpush.bf16.msra.mxu0 %v2897
    %4229 = vmatmul.bf16.gmra.mxu0 %v57
    %v4230 = vpop.f32.mrf.mxu0
    %v4231 = vadd.f32 %v4218, %v4230
    %v4232 = vpop.f32.mrf.mxu0
    %4233 = vdwg.mxu0
    %4234 = vmatpush.bf16.msra.mxu0 %v2442
    %4235 = vmatpush.bf16.msra.mxu0 %v2434
    %4236 = vmatpush.bf16.msra.mxu0 %v2426
    %4237 = vmatpush.bf16.msra.mxu0 %v2418
    %4238 = vmatpush.bf16.msra.mxu0 %v2410
    %4239 = vmatpush.bf16.msra.mxu0 %v2402
    %4240 = vmatpush.bf16.msra.mxu0 %v2394
    %4241 = vmatpush.bf16.msra.mxu0 %v2386
    %4242 = vmatmul.bf16.gmra.mxu0 %v49
    %v4243 = vpop.f32.mrf.mxu0
    %v4244 = vadd.f32 %v642, %v4243
    %v4245 = vpop.f32.mrf.mxu0
    %4246 = vdwg.mxu0
    %4247 = vmatpush.bf16.msra.mxu0 %v2506
    %4248 = vmatpush.bf16.msra.mxu0 %v2498
    %4249 = vmatpush.bf16.msra.mxu0 %v2490
    %4250 = vmatpush.bf16.msra.mxu0 %v2482
    %4251 = vmatpush.bf16.msra.mxu0 %v2474
    %4252 = vmatpush.bf16.msra.mxu0 %v2466
    %4253 = vmatpush.bf16.msra.mxu0 %v2458
    %4254 = vmatpush.bf16.msra.mxu0 %v2450
    %4255 = vmatmul.bf16.gmra.mxu0 %v50
    %v4256 = vpop.f32.mrf.mxu0
    %v4257 = vadd.f32 %v4244, %v4256
    %v4258 = vpop.f32.mrf.mxu0
    %4259 = vdwg.mxu0
    %4260 = vmatpush.bf16.msra.mxu0 %v2570
    %4261 = vmatpush.bf16.msra.mxu0 %v2562
    %4262 = vmatpush.bf16.msra.mxu0 %v2554
    %4263 = vmatpush.bf16.msra.mxu0 %v2546
    %4264 = vmatpush.bf16.msra.mxu0 %v2538
    %4265 = vmatpush.bf16.msra.mxu0 %v2530
    %4266 = vmatpush.bf16.msra.mxu0 %v2522
    %4267 = vmatpush.bf16.msra.mxu0 %v2514
    %4268 = vmatmul.bf16.gmra.mxu0 %v51
    %v4269 = vpop.f32.mrf.mxu0
    %v4270 = vadd.f32 %v4257, %v4269
    %v4271 = vpop.f32.mrf.mxu0
    %4272 = vdwg.mxu0
    %4273 = vmatpush.bf16.msra.mxu0 %v2634
    %4274 = vmatpush.bf16.msra.mxu0 %v2626
    %4275 = vmatpush.bf16.msra.mxu0 %v2618
    %4276 = vmatpush.bf16.msra.mxu0 %v2610
    %4277 = vmatpush.bf16.msra.mxu0 %v2602
    %4278 = vmatpush.bf16.msra.mxu0 %v2594
    %4279 = vmatpush.bf16.msra.mxu0 %v2586
    %4280 = vmatpush.bf16.msra.mxu0 %v2578
    %4281 = vmatmul.bf16.gmra.mxu0 %v52
    %v4282 = vpop.f32.mrf.mxu0
    %v4283 = vadd.f32 %v4270, %v4282
    %v4284 = vpop.f32.mrf.mxu0
    %4285 = vdwg.mxu0
    %4286 = vmatpush.bf16.msra.mxu0 %v2698
    %4287 = vmatpush.bf16.msra.mxu0 %v2690
    %4288 = vmatpush.bf16.msra.mxu0 %v2682
    %4289 = vmatpush.bf16.msra.mxu0 %v2674
    %4290 = vmatpush.bf16.msra.mxu0 %v2666
    %4291 = vmatpush.bf16.msra.mxu0 %v2658
    %4292 = vmatpush.bf16.msra.mxu0 %v2650
    %4293 = vmatpush.bf16.msra.mxu0 %v2642
    %4294 = vmatmul.bf16.gmra.mxu0 %v53
    %v4295 = vpop.f32.mrf.mxu0
    %v4296 = vadd.f32 %v4283, %v4295
    %v4297 = vpop.f32.mrf.mxu0
    %4298 = vdwg.mxu0
    %4299 = vmatpush.bf16.msra.mxu0 %v2762
    %4300 = vmatpush.bf16.msra.mxu0 %v2754
    %4301 = vmatpush.bf16.msra.mxu0 %v2746
    %4302 = vmatpush.bf16.msra.mxu0 %v2738
    %4303 = vmatpush.bf16.msra.mxu0 %v2730
    %4304 = vmatpush.bf16.msra.mxu0 %v2722
    %4305 = vmatpush.bf16.msra.mxu0 %v2714
    %4306 = vmatpush.bf16.msra.mxu0 %v2706
    %4307 = vmatmul.bf16.gmra.mxu0 %v54
    %v4308 = vpop.f32.mrf.mxu0
    %v4309 = vadd.f32 %v4296, %v4308
    %v4310 = vpop.f32.mrf.mxu0
    %4311 = vdwg.mxu0
    %4312 = vmatpush.bf16.msra.mxu0 %v2826
    %4313 = vmatpush.bf16.msra.mxu0 %v2818
    %4314 = vmatpush.bf16.msra.mxu0 %v2810
    %4315 = vmatpush.bf16.msra.mxu0 %v2802
    %4316 = vmatpush.bf16.msra.mxu0 %v2794
    %4317 = vmatpush.bf16.msra.mxu0 %v2786
    %4318 = vmatpush.bf16.msra.mxu0 %v2778
    %4319 = vmatpush.bf16.msra.mxu0 %v2770
    %4320 = vmatmul.bf16.gmra.mxu0 %v55
    %v4321 = vpop.f32.mrf.mxu0
    %v4322 = vadd.f32 %v4309, %v4321
    %v4323 = vpop.f32.mrf.mxu0
    %4324 = vdwg.mxu0
    %4325 = vmatpush.bf16.msra.mxu0 %v2890
    %4326 = vmatpush.bf16.msra.mxu0 %v2882
    %4327 = vmatpush.bf16.msra.mxu0 %v2874
    %4328 = vmatpush.bf16.msra.mxu0 %v2866
    %4329 = vmatpush.bf16.msra.mxu0 %v2858
    %4330 = vmatpush.bf16.msra.mxu0 %v2850
    %4331 = vmatpush.bf16.msra.mxu0 %v2842
    %4332 = vmatpush.bf16.msra.mxu0 %v2834
    %4333 = vmatmul.bf16.gmra.mxu0 %v56
    %v4334 = vpop.f32.mrf.mxu0
    %v4335 = vadd.f32 %v4322, %v4334
    %v4336 = vpop.f32.mrf.mxu0
    %4337 = vdwg.mxu0
    %4338 = vmatpush.bf16.msra.mxu0 %v2954
    %4339 = vmatpush.bf16.msra.mxu0 %v2946
    %4340 = vmatpush.bf16.msra.mxu0 %v2938
    %4341 = vmatpush.bf16.msra.mxu0 %v2930
    %4342 = vmatpush.bf16.msra.mxu0 %v2922
    %4343 = vmatpush.bf16.msra.mxu0 %v2914
    %4344 = vmatpush.bf16.msra.mxu0 %v2906
    %4345 = vmatpush.bf16.msra.mxu0 %v2898
    %4346 = vmatmul.bf16.gmra.mxu0 %v57
    %v4347 = vpop.f32.mrf.mxu0
    %v4348 = vadd.f32 %v4335, %v4347
    %v4349 = vpop.f32.mrf.mxu0
    %4350 = vdwg.mxu0
    %4351 = vmatpush.bf16.msra.mxu0 %v2443
    %4352 = vmatpush.bf16.msra.mxu0 %v2435
    %4353 = vmatpush.bf16.msra.mxu0 %v2427
    %4354 = vmatpush.bf16.msra.mxu0 %v2419
    %4355 = vmatpush.bf16.msra.mxu0 %v2411
    %4356 = vmatpush.bf16.msra.mxu0 %v2403
    %4357 = vmatpush.bf16.msra.mxu0 %v2395
    %4358 = vmatpush.bf16.msra.mxu0 %v2387
    %4359 = vmatmul.bf16.gmra.mxu0 %v49
    %v4360 = vpop.f32.mrf.mxu0
    %v4361 = vadd.f32 %v643, %v4360
    %v4362 = vpop.f32.mrf.mxu0
    %4363 = vdwg.mxu0
    %4364 = vmatpush.bf16.msra.mxu0 %v2507
    %4365 = vmatpush.bf16.msra.mxu0 %v2499
    %4366 = vmatpush.bf16.msra.mxu0 %v2491
    %4367 = vmatpush.bf16.msra.mxu0 %v2483
    %4368 = vmatpush.bf16.msra.mxu0 %v2475
    %4369 = vmatpush.bf16.msra.mxu0 %v2467
    %4370 = vmatpush.bf16.msra.mxu0 %v2459
    %4371 = vmatpush.bf16.msra.mxu0 %v2451
    %4372 = vmatmul.bf16.gmra.mxu0 %v50
    %v4373 = vpop.f32.mrf.mxu0
    %v4374 = vadd.f32 %v4361, %v4373
    %v4375 = vpop.f32.mrf.mxu0
    %4376 = vdwg.mxu0
    %4377 = vmatpush.bf16.msra.mxu0 %v2571
    %4378 = vmatpush.bf16.msra.mxu0 %v2563
    %4379 = vmatpush.bf16.msra.mxu0 %v2555
    %4380 = vmatpush.bf16.msra.mxu0 %v2547
    %4381 = vmatpush.bf16.msra.mxu0 %v2539
    %4382 = vmatpush.bf16.msra.mxu0 %v2531
    %4383 = vmatpush.bf16.msra.mxu0 %v2523
    %4384 = vmatpush.bf16.msra.mxu0 %v2515
    %4385 = vmatmul.bf16.gmra.mxu0 %v51
    %v4386 = vpop.f32.mrf.mxu0
    %v4387 = vadd.f32 %v4374, %v4386
    %v4388 = vpop.f32.mrf.mxu0
    %4389 = vdwg.mxu0
    %4390 = vmatpush.bf16.msra.mxu0 %v2635
    %4391 = vmatpush.bf16.msra.mxu0 %v2627
    %4392 = vmatpush.bf16.msra.mxu0 %v2619
    %4393 = vmatpush.bf16.msra.mxu0 %v2611
    %4394 = vmatpush.bf16.msra.mxu0 %v2603
    %4395 = vmatpush.bf16.msra.mxu0 %v2595
    %4396 = vmatpush.bf16.msra.mxu0 %v2587
    %4397 = vmatpush.bf16.msra.mxu0 %v2579
    %4398 = vmatmul.bf16.gmra.mxu0 %v52
    %v4399 = vpop.f32.mrf.mxu0
    %v4400 = vadd.f32 %v4387, %v4399
    %v4401 = vpop.f32.mrf.mxu0
    %4402 = vdwg.mxu0
    %4403 = vmatpush.bf16.msra.mxu0 %v2699
    %4404 = vmatpush.bf16.msra.mxu0 %v2691
    %4405 = vmatpush.bf16.msra.mxu0 %v2683
    %4406 = vmatpush.bf16.msra.mxu0 %v2675
    %4407 = vmatpush.bf16.msra.mxu0 %v2667
    %4408 = vmatpush.bf16.msra.mxu0 %v2659
    %4409 = vmatpush.bf16.msra.mxu0 %v2651
    %4410 = vmatpush.bf16.msra.mxu0 %v2643
    %4411 = vmatmul.bf16.gmra.mxu0 %v53
    %v4412 = vpop.f32.mrf.mxu0
    %v4413 = vadd.f32 %v4400, %v4412
    %v4414 = vpop.f32.mrf.mxu0
    %4415 = vdwg.mxu0
    %4416 = vmatpush.bf16.msra.mxu0 %v2763
    %4417 = vmatpush.bf16.msra.mxu0 %v2755
    %4418 = vmatpush.bf16.msra.mxu0 %v2747
    %4419 = vmatpush.bf16.msra.mxu0 %v2739
    %4420 = vmatpush.bf16.msra.mxu0 %v2731
    %4421 = vmatpush.bf16.msra.mxu0 %v2723
    %4422 = vmatpush.bf16.msra.mxu0 %v2715
    %4423 = vmatpush.bf16.msra.mxu0 %v2707
    %4424 = vmatmul.bf16.gmra.mxu0 %v54
    %v4425 = vpop.f32.mrf.mxu0
    %v4426 = vadd.f32 %v4413, %v4425
    %v4427 = vpop.f32.mrf.mxu0
    %4428 = vdwg.mxu0
    %4429 = vmatpush.bf16.msra.mxu0 %v2827
    %4430 = vmatpush.bf16.msra.mxu0 %v2819
    %4431 = vmatpush.bf16.msra.mxu0 %v2811
    %4432 = vmatpush.bf16.msra.mxu0 %v2803
    %4433 = vmatpush.bf16.msra.mxu0 %v2795
    %4434 = vmatpush.bf16.msra.mxu0 %v2787
    %4435 = vmatpush.bf16.msra.mxu0 %v2779
    %4436 = vmatpush.bf16.msra.mxu0 %v2771
    %4437 = vmatmul.bf16.gmra.mxu0 %v55
    %v4438 = vpop.f32.mrf.mxu0
    %v4439 = vadd.f32 %v4426, %v4438
    %v4440 = vpop.f32.mrf.mxu0
    %4441 = vdwg.mxu0
    %4442 = vmatpush.bf16.msra.mxu0 %v2891
    %4443 = vmatpush.bf16.msra.mxu0 %v2883
    %4444 = vmatpush.bf16.msra.mxu0 %v2875
    %4445 = vmatpush.bf16.msra.mxu0 %v2867
    %4446 = vmatpush.bf16.msra.mxu0 %v2859
    %4447 = vmatpush.bf16.msra.mxu0 %v2851
    %4448 = vmatpush.bf16.msra.mxu0 %v2843
    %4449 = vmatpush.bf16.msra.mxu0 %v2835
    %4450 = vmatmul.bf16.gmra.mxu0 %v56
    %v4451 = vpop.f32.mrf.mxu0
    %v4452 = vadd.f32 %v4439, %v4451
    %v4453 = vpop.f32.mrf.mxu0
    %4454 = vdwg.mxu0
    %4455 = vmatpush.bf16.msra.mxu0 %v2955
    %4456 = vmatpush.bf16.msra.mxu0 %v2947
    %4457 = vmatpush.bf16.msra.mxu0 %v2939
    %4458 = vmatpush.bf16.msra.mxu0 %v2931
    %4459 = vmatpush.bf16.msra.mxu0 %v2923
    %4460 = vmatpush.bf16.msra.mxu0 %v2915
    %4461 = vmatpush.bf16.msra.mxu0 %v2907
    %4462 = vmatpush.bf16.msra.mxu0 %v2899
    %4463 = vmatmul.bf16.gmra.mxu0 %v57
    %v4464 = vpop.f32.mrf.mxu0
    %v4465 = vadd.f32 %v4452, %v4464
    %v4466 = vpop.f32.mrf.mxu0
    %4467 = vdwg.mxu0
    %v4468 = vmax.f32 %v3646, 0.0
    %v4469 = vmax.f32 %v3763, 0.0
    %v4470 = vmax.f32 %v3880, 0.0
    %v4471 = vmax.f32 %v3997, 0.0
    %v4472 = vmax.f32 %v4114, 0.0
    %v4473 = vmax.f32 %v4231, 0.0
    %v4474 = vmax.f32 %v4348, 0.0
    %v4475 = vmax.f32 %v4465, 0.0
    %v4476 = vpack.c.bf16 %v4468, %v4468
    %v4477 = vpack.c.bf16 %v4469, %v4469
    %v4478 = vpack.c.bf16 %v4470, %v4470
    %v4479 = vpack.c.bf16 %v4471, %v4471
    %v4480 = vpack.c.bf16 %v4472, %v4472
    %v4481 = vpack.c.bf16 %v4473, %v4473
    %v4482 = vpack.c.bf16 %v4474, %v4474
    %v4483 = vpack.c.bf16 %v4475, %v4475
    %v4484 = vld [vmem:[%s3] sm:$0xf]
    %v4485 = vld [vmem:[%s3 + $0x4] sm:$0xf]
    %v4486 = vld [vmem:[%s3 + $0x8] sm:$0xf]
    %v4487 = vld [vmem:[%s3 + $0xc] sm:$0xf]
    %v4488 = vld [vmem:[%s3 + $0x10] sm:$0xf]
    %v4489 = vld [vmem:[%s3 + $0x14] sm:$0xf]
    %v4490 = vld [vmem:[%s3 + $0x18] sm:$0xf]
    %v4491 = vld [vmem:[%s3 + $0x1c] sm:$0xf]
    %v4492 = vld [vmem:[%s3 + $0x20] sm:$0xf]
    %v4493 = vld [vmem:[%s3 + $0x24] sm:$0xf]
    %v4494 = vld [vmem:[%s3 + $0x28] sm:$0xf]
    %v4495 = vld [vmem:[%s3 + $0x2c] sm:$0xf]
    %v4496 = vld [vmem:[%s3 + $0x30] sm:$0xf]
    %v4497 = vld [vmem:[%s3 + $0x34] sm:$0xf]
    %v4498 = vld [vmem:[%s3 + $0x38] sm:$0xf]
    %v4499 = vld [vmem:[%s3 + $0x3c] sm:$0xf]
    %v4500 = vld [vmem:[%s3 + $0x40] sm:$0xf]
    %v4501 = vld [vmem:[%s3 + $0x44] sm:$0xf]
    %v4502 = vld [vmem:[%s3 + $0x48] sm:$0xf]
    %v4503 = vld [vmem:[%s3 + $0x4c] sm:$0xf]
    %v4504 = vld [vmem:[%s3 + $0x50] sm:$0xf]
    %v4505 = vld [vmem:[%s3 + $0x54] sm:$0xf]
    %v4506 = vld [vmem:[%s3 + $0x58] sm:$0xf]
    %v4507 = vld [vmem:[%s3 + $0x5c] sm:$0xf]
    %v4508 = vld [vmem:[%s3 + $0x60] sm:$0xf]
    %v4509 = vld [vmem:[%s3 + $0x64] sm:$0xf]
    %v4510 = vld [vmem:[%s3 + $0x68] sm:$0xf]
    %v4511 = vld [vmem:[%s3 + $0x6c] sm:$0xf]
    %v4512 = vld [vmem:[%s3 + $0x70] sm:$0xf]
    %v4513 = vld [vmem:[%s3 + $0x74] sm:$0xf]
    %v4514 = vld [vmem:[%s3 + $0x78] sm:$0xf]
    %v4515 = vld [vmem:[%s3 + $0x7c] sm:$0xf]
    %v4516 = vld [vmem:[%s3 + $0x80] sm:$0xf]
    %v4517 = vld [vmem:[%s3 + $0x84] sm:$0xf]
    %v4518 = vld [vmem:[%s3 + $0x88] sm:$0xf]
    %v4519 = vld [vmem:[%s3 + $0x8c] sm:$0xf]
    %v4520 = vld [vmem:[%s3 + $0x90] sm:$0xf]
    %v4521 = vld [vmem:[%s3 + $0x94] sm:$0xf]
    %v4522 = vld [vmem:[%s3 + $0x98] sm:$0xf]
    %v4523 = vld [vmem:[%s3 + $0x9c] sm:$0xf]
    %v4524 = vld [vmem:[%s3 + $0xa0] sm:$0xf]
    %v4525 = vld [vmem:[%s3 + $0xa4] sm:$0xf]
    %v4526 = vld [vmem:[%s3 + $0xa8] sm:$0xf]
    %v4527 = vld [vmem:[%s3 + $0xac] sm:$0xf]
    %v4528 = vld [vmem:[%s3 + $0xb0] sm:$0xf]
    %v4529 = vld [vmem:[%s3 + $0xb4] sm:$0xf]
    %v4530 = vld [vmem:[%s3 + $0xb8] sm:$0xf]
    %v4531 = vld [vmem:[%s3 + $0xbc] sm:$0xf]
    %v4532 = vld [vmem:[%s3 + $0xc0] sm:$0xf]
    %v4533 = vld [vmem:[%s3 + $0xc4] sm:$0xf]
    %v4534 = vld [vmem:[%s3 + $0xc8] sm:$0xf]
    %v4535 = vld [vmem:[%s3 + $0xcc] sm:$0xf]
    %v4536 = vld [vmem:[%s3 + $0xd0] sm:$0xf]
    %v4537 = vld [vmem:[%s3 + $0xd4] sm:$0xf]
    %v4538 = vld [vmem:[%s3 + $0xd8] sm:$0xf]
    %v4539 = vld [vmem:[%s3 + $0xdc] sm:$0xf]
    %v4540 = vld [vmem:[%s3 + $0xe0] sm:$0xf]
    %v4541 = vld [vmem:[%s3 + $0xe4] sm:$0xf]
    %v4542 = vld [vmem:[%s3 + $0xe8] sm:$0xf]
    %v4543 = vld [vmem:[%s3 + $0xec] sm:$0xf]
    %v4544 = vld [vmem:[%s3 + $0xf0] sm:$0xf]
    %v4545 = vld [vmem:[%s3 + $0xf4] sm:$0xf]
    %v4546 = vld [vmem:[%s3 + $0xf8] sm:$0xf]
    %v4547 = vld [vmem:[%s3 + $0xfc] sm:$0xf]
    %v4548 = vld [vmem:[%s3 + $0x100] sm:$0xf]
    %v4549 = vld [vmem:[%s3 + $0x104] sm:$0xf]
    %v4550 = vld [vmem:[%s3 + $0x108] sm:$0xf]
    %v4551 = vld [vmem:[%s3 + $0x10c] sm:$0xf]
    %v4552 = vld [vmem:[%s3 + $0x110] sm:$0xf]
    %v4553 = vld [vmem:[%s3 + $0x114] sm:$0xf]
    %v4554 = vld [vmem:[%s3 + $0x118] sm:$0xf]
    %v4555 = vld [vmem:[%s3 + $0x11c] sm:$0xf]
    %v4556 = vld [vmem:[%s3 + $0x120] sm:$0xf]
    %v4557 = vld [vmem:[%s3 + $0x124] sm:$0xf]
    %v4558 = vld [vmem:[%s3 + $0x128] sm:$0xf]
    %v4559 = vld [vmem:[%s3 + $0x12c] sm:$0xf]
    %v4560 = vld [vmem:[%s3 + $0x130] sm:$0xf]
    %v4561 = vld [vmem:[%s3 + $0x134] sm:$0xf]
    %v4562 = vld [vmem:[%s3 + $0x138] sm:$0xf]
    %v4563 = vld [vmem:[%s3 + $0x13c] sm:$0xf]
    %v4564 = vld [vmem:[%s3 + $0x140] sm:$0xf]
    %v4565 = vld [vmem:[%s3 + $0x144] sm:$0xf]
    %v4566 = vld [vmem:[%s3 + $0x148] sm:$0xf]
    %v4567 = vld [vmem:[%s3 + $0x14c] sm:$0xf]
    %v4568 = vld [vmem:[%s3 + $0x150] sm:$0xf]
    %v4569 = vld [vmem:[%s3 + $0x154] sm:$0xf]
    %v4570 = vld [vmem:[%s3 + $0x158] sm:$0xf]
    %v4571 = vld [vmem:[%s3 + $0x15c] sm:$0xf]
    %v4572 = vld [vmem:[%s3 + $0x160] sm:$0xf]
    %v4573 = vld [vmem:[%s3 + $0x164] sm:$0xf]
    %v4574 = vld [vmem:[%s3 + $0x168] sm:$0xf]
    %v4575 = vld [vmem:[%s3 + $0x16c] sm:$0xf]
    %v4576 = vld [vmem:[%s3 + $0x170] sm:$0xf]
    %v4577 = vld [vmem:[%s3 + $0x174] sm:$0xf]
    %v4578 = vld [vmem:[%s3 + $0x178] sm:$0xf]
    %v4579 = vld [vmem:[%s3 + $0x17c] sm:$0xf]
    %v4580 = vld [vmem:[%s3 + $0x180] sm:$0xf]
    %v4581 = vld [vmem:[%s3 + $0x184] sm:$0xf]
    %v4582 = vld [vmem:[%s3 + $0x188] sm:$0xf]
    %v4583 = vld [vmem:[%s3 + $0x18c] sm:$0xf]
    %v4584 = vld [vmem:[%s3 + $0x190] sm:$0xf]
    %v4585 = vld [vmem:[%s3 + $0x194] sm:$0xf]
    %v4586 = vld [vmem:[%s3 + $0x198] sm:$0xf]
    %v4587 = vld [vmem:[%s3 + $0x19c] sm:$0xf]
    %v4588 = vld [vmem:[%s3 + $0x1a0] sm:$0xf]
    %v4589 = vld [vmem:[%s3 + $0x1a4] sm:$0xf]
    %v4590 = vld [vmem:[%s3 + $0x1a8] sm:$0xf]
    %v4591 = vld [vmem:[%s3 + $0x1ac] sm:$0xf]
    %v4592 = vld [vmem:[%s3 + $0x1b0] sm:$0xf]
    %v4593 = vld [vmem:[%s3 + $0x1b4] sm:$0xf]
    %v4594 = vld [vmem:[%s3 + $0x1b8] sm:$0xf]
    %v4595 = vld [vmem:[%s3 + $0x1bc] sm:$0xf]
    %v4596 = vld [vmem:[%s3 + $0x1c0] sm:$0xf]
    %v4597 = vld [vmem:[%s3 + $0x1c4] sm:$0xf]
    %v4598 = vld [vmem:[%s3 + $0x1c8] sm:$0xf]
    %v4599 = vld [vmem:[%s3 + $0x1cc] sm:$0xf]
    %v4600 = vld [vmem:[%s3 + $0x1d0] sm:$0xf]
    %v4601 = vld [vmem:[%s3 + $0x1d4] sm:$0xf]
    %v4602 = vld [vmem:[%s3 + $0x1d8] sm:$0xf]
    %v4603 = vld [vmem:[%s3 + $0x1dc] sm:$0xf]
    %v4604 = vld [vmem:[%s3 + $0x1e0] sm:$0xf]
    %v4605 = vld [vmem:[%s3 + $0x1e4] sm:$0xf]
    %v4606 = vld [vmem:[%s3 + $0x1e8] sm:$0xf]
    %v4607 = vld [vmem:[%s3 + $0x1ec] sm:$0xf]
    %v4608 = vld [vmem:[%s3 + $0x1f0] sm:$0xf]
    %v4609 = vld [vmem:[%s3 + $0x1f4] sm:$0xf]
    %v4610 = vld [vmem:[%s3 + $0x1f8] sm:$0xf]
    %v4611 = vld [vmem:[%s3 + $0x1fc] sm:$0xf]
    %v4612 = vld [vmem:[%s4] sm:$0x1]
    %v4614 = vperm.slane %v4612, 0
    %v4744 = vunpack.c.l.b16 %v4484
    %v4745 = vunpack.c.l.b16 %v4485
    %v4746 = vunpack.c.l.b16 %v4486
    %v4747 = vunpack.c.l.b16 %v4487
    %v4748 = vunpack.c.l.b16 %v4488
    %v4749 = vunpack.c.l.b16 %v4489
    %v4750 = vunpack.c.l.b16 %v4490
    %v4751 = vunpack.c.l.b16 %v4491
    %v4752 = vunpack.c.l.b16 %v4492
    %v4753 = vunpack.c.l.b16 %v4493
    %v4754 = vunpack.c.l.b16 %v4494
    %v4755 = vunpack.c.l.b16 %v4495
    %v4756 = vunpack.c.l.b16 %v4496
    %v4757 = vunpack.c.l.b16 %v4497
    %v4758 = vunpack.c.l.b16 %v4498
    %v4759 = vunpack.c.l.b16 %v4499
    %v4760 = vunpack.c.l.b16 %v4500
    %v4761 = vunpack.c.l.b16 %v4501
    %v4762 = vunpack.c.l.b16 %v4502
    %v4763 = vunpack.c.l.b16 %v4503
    %v4764 = vunpack.c.l.b16 %v4504
    %v4765 = vunpack.c.l.b16 %v4505
    %v4766 = vunpack.c.l.b16 %v4506
    %v4767 = vunpack.c.l.b16 %v4507
    %v4768 = vunpack.c.l.b16 %v4508
    %v4769 = vunpack.c.l.b16 %v4509
    %v4770 = vunpack.c.l.b16 %v4510
    %v4771 = vunpack.c.l.b16 %v4511
    %v4772 = vunpack.c.l.b16 %v4512
    %v4773 = vunpack.c.l.b16 %v4513
    %v4774 = vunpack.c.l.b16 %v4514
    %v4775 = vunpack.c.l.b16 %v4515
    %v4776 = vunpack.c.l.b16 %v4516
    %v4777 = vunpack.c.l.b16 %v4517
    %v4778 = vunpack.c.l.b16 %v4518
    %v4779 = vunpack.c.l.b16 %v4519
    %v4780 = vunpack.c.l.b16 %v4520
    %v4781 = vunpack.c.l.b16 %v4521
    %v4782 = vunpack.c.l.b16 %v4522
    %v4783 = vunpack.c.l.b16 %v4523
    %v4784 = vunpack.c.l.b16 %v4524
    %v4785 = vunpack.c.l.b16 %v4525
    %v4786 = vunpack.c.l.b16 %v4526
    %v4787 = vunpack.c.l.b16 %v4527
    %v4788 = vunpack.c.l.b16 %v4528
    %v4789 = vunpack.c.l.b16 %v4529
    %v4790 = vunpack.c.l.b16 %v4530
    %v4791 = vunpack.c.l.b16 %v4531
    %v4792 = vunpack.c.l.b16 %v4532
    %v4793 = vunpack.c.l.b16 %v4533
    %v4794 = vunpack.c.l.b16 %v4534
    %v4795 = vunpack.c.l.b16 %v4535
    %v4796 = vunpack.c.l.b16 %v4536
    %v4797 = vunpack.c.l.b16 %v4537
    %v4798 = vunpack.c.l.b16 %v4538
    %v4799 = vunpack.c.l.b16 %v4539
    %v4800 = vunpack.c.l.b16 %v4540
    %v4801 = vunpack.c.l.b16 %v4541
    %v4802 = vunpack.c.l.b16 %v4542
    %v4803 = vunpack.c.l.b16 %v4543
    %v4804 = vunpack.c.l.b16 %v4544
    %v4805 = vunpack.c.l.b16 %v4545
    %v4806 = vunpack.c.l.b16 %v4546
    %v4807 = vunpack.c.l.b16 %v4547
    %v4808 = vunpack.c.l.b16 %v4548
    %v4809 = vunpack.c.l.b16 %v4549
    %v4810 = vunpack.c.l.b16 %v4550
    %v4811 = vunpack.c.l.b16 %v4551
    %v4812 = vunpack.c.l.b16 %v4552
    %v4813 = vunpack.c.l.b16 %v4553
    %v4814 = vunpack.c.l.b16 %v4554
    %v4815 = vunpack.c.l.b16 %v4555
    %v4816 = vunpack.c.l.b16 %v4556
    %v4817 = vunpack.c.l.b16 %v4557
    %v4818 = vunpack.c.l.b16 %v4558
    %v4819 = vunpack.c.l.b16 %v4559
    %v4820 = vunpack.c.l.b16 %v4560
    %v4821 = vunpack.c.l.b16 %v4561
    %v4822 = vunpack.c.l.b16 %v4562
    %v4823 = vunpack.c.l.b16 %v4563
    %v4824 = vunpack.c.l.b16 %v4564
    %v4825 = vunpack.c.l.b16 %v4565
    %v4826 = vunpack.c.l.b16 %v4566
    %v4827 = vunpack.c.l.b16 %v4567
    %v4828 = vunpack.c.l.b16 %v4568
    %v4829 = vunpack.c.l.b16 %v4569
    %v4830 = vunpack.c.l.b16 %v4570
    %v4831 = vunpack.c.l.b16 %v4571
    %v4832 = vunpack.c.l.b16 %v4572
    %v4833 = vunpack.c.l.b16 %v4573
    %v4834 = vunpack.c.l.b16 %v4574
    %v4835 = vunpack.c.l.b16 %v4575
    %v4836 = vunpack.c.l.b16 %v4576
    %v4837 = vunpack.c.l.b16 %v4577
    %v4838 = vunpack.c.l.b16 %v4578
    %v4839 = vunpack.c.l.b16 %v4579
    %v4840 = vunpack.c.l.b16 %v4580
    %v4841 = vunpack.c.l.b16 %v4581
    %v4842 = vunpack.c.l.b16 %v4582
    %v4843 = vunpack.c.l.b16 %v4583
    %v4844 = vunpack.c.l.b16 %v4584
    %v4845 = vunpack.c.l.b16 %v4585
    %v4846 = vunpack.c.l.b16 %v4586
    %v4847 = vunpack.c.l.b16 %v4587
    %v4848 = vunpack.c.l.b16 %v4588
    %v4849 = vunpack.c.l.b16 %v4589
    %v4850 = vunpack.c.l.b16 %v4590
    %v4851 = vunpack.c.l.b16 %v4591
    %v4852 = vunpack.c.l.b16 %v4592
    %v4853 = vunpack.c.l.b16 %v4593
    %v4854 = vunpack.c.l.b16 %v4594
    %v4855 = vunpack.c.l.b16 %v4595
    %v4856 = vunpack.c.l.b16 %v4596
    %v4857 = vunpack.c.l.b16 %v4597
    %v4858 = vunpack.c.l.b16 %v4598
    %v4859 = vunpack.c.l.b16 %v4599
    %v4860 = vunpack.c.l.b16 %v4600
    %v4861 = vunpack.c.l.b16 %v4601
    %v4862 = vunpack.c.l.b16 %v4602
    %v4863 = vunpack.c.l.b16 %v4603
    %v4864 = vunpack.c.l.b16 %v4604
    %v4865 = vunpack.c.l.b16 %v4605
    %v4866 = vunpack.c.l.b16 %v4606
    %v4867 = vunpack.c.l.b16 %v4607
    %v4868 = vunpack.c.l.b16 %v4608
    %v4869 = vunpack.c.l.b16 %v4609
    %v4870 = vunpack.c.l.b16 %v4610
    %v4871 = vunpack.c.l.b16 %v4611
    %v4872 = vpack.c.b16 %v4745, %v4744
    %v4873 = vpack.c.b16 %v4747, %v4746
    %v4874 = vpack.c.b16 %v4749, %v4748
    %v4875 = vpack.c.b16 %v4751, %v4750
    %v4876 = vpack.c.b16 %v4753, %v4752
    %v4877 = vpack.c.b16 %v4755, %v4754
    %v4878 = vpack.c.b16 %v4757, %v4756
    %v4879 = vpack.c.b16 %v4759, %v4758
    %v4880 = vpack.c.b16 %v4761, %v4760
    %v4881 = vpack.c.b16 %v4763, %v4762
    %v4882 = vpack.c.b16 %v4765, %v4764
    %v4883 = vpack.c.b16 %v4767, %v4766
    %v4884 = vpack.c.b16 %v4769, %v4768
    %v4885 = vpack.c.b16 %v4771, %v4770
    %v4886 = vpack.c.b16 %v4773, %v4772
    %v4887 = vpack.c.b16 %v4775, %v4774
    %v4888 = vpack.c.b16 %v4777, %v4776
    %v4889 = vpack.c.b16 %v4779, %v4778
    %v4890 = vpack.c.b16 %v4781, %v4780
    %v4891 = vpack.c.b16 %v4783, %v4782
    %v4892 = vpack.c.b16 %v4785, %v4784
    %v4893 = vpack.c.b16 %v4787, %v4786
    %v4894 = vpack.c.b16 %v4789, %v4788
    %v4895 = vpack.c.b16 %v4791, %v4790
    %v4896 = vpack.c.b16 %v4793, %v4792
    %v4897 = vpack.c.b16 %v4795, %v4794
    %v4898 = vpack.c.b16 %v4797, %v4796
    %v4899 = vpack.c.b16 %v4799, %v4798
    %v4900 = vpack.c.b16 %v4801, %v4800
    %v4901 = vpack.c.b16 %v4803, %v4802
    %v4902 = vpack.c.b16 %v4805, %v4804
    %v4903 = vpack.c.b16 %v4807, %v4806
    %v4904 = vpack.c.b16 %v4809, %v4808
    %v4905 = vpack.c.b16 %v4811, %v4810
    %v4906 = vpack.c.b16 %v4813, %v4812
    %v4907 = vpack.c.b16 %v4815, %v4814
    %v4908 = vpack.c.b16 %v4817, %v4816
    %v4909 = vpack.c.b16 %v4819, %v4818
    %v4910 = vpack.c.b16 %v4821, %v4820
    %v4911 = vpack.c.b16 %v4823, %v4822
    %v4912 = vpack.c.b16 %v4825, %v4824
    %v4913 = vpack.c.b16 %v4827, %v4826
    %v4914 = vpack.c.b16 %v4829, %v4828
    %v4915 = vpack.c.b16 %v4831, %v4830
    %v4916 = vpack.c.b16 %v4833, %v4832
    %v4917 = vpack.c.b16 %v4835, %v4834
    %v4918 = vpack.c.b16 %v4837, %v4836
    %v4919 = vpack.c.b16 %v4839, %v4838
    %v4920 = vpack.c.b16 %v4841, %v4840
    %v4921 = vpack.c.b16 %v4843, %v4842
    %v4922 = vpack.c.b16 %v4845, %v4844
    %v4923 = vpack.c.b16 %v4847, %v4846
    %v4924 = vpack.c.b16 %v4849, %v4848
    %v4925 = vpack.c.b16 %v4851, %v4850
    %v4926 = vpack.c.b16 %v4853, %v4852
    %v4927 = vpack.c.b16 %v4855, %v4854
    %v4928 = vpack.c.b16 %v4857, %v4856
    %v4929 = vpack.c.b16 %v4859, %v4858
    %v4930 = vpack.c.b16 %v4861, %v4860
    %v4931 = vpack.c.b16 %v4863, %v4862
    %v4932 = vpack.c.b16 %v4865, %v4864
    %v4933 = vpack.c.b16 %v4867, %v4866
    %v4934 = vpack.c.b16 %v4869, %v4868
    %v4935 = vpack.c.b16 %v4871, %v4870
    %5000 = vmatpush.bf16.msra.mxu0 %v4879
    %5001 = vmatpush.bf16.msra.mxu0 %v4878
    %5002 = vmatpush.bf16.msra.mxu0 %v4877
    %5003 = vmatpush.bf16.msra.mxu0 %v4876
    %5004 = vmatpush.bf16.msra.mxu0 %v4875
    %5005 = vmatpush.bf16.msra.mxu0 %v4874
    %5006 = vmatpush.bf16.msra.mxu0 %v4873
    %5007 = vmatpush.bf16.msra.mxu0 %v4872
    %5008 = vmatmul.bf16.gmra.mxu0 %v4476
    %v5009 = vpop.f32.mrf.mxu0
    %v5010 = vadd.f32 %v4614, %v5009
    %v5011 = vpop.f32.mrf.mxu0
    %5012 = vdwg.mxu0
    %5013 = vmatpush.bf16.msra.mxu0 %v4887
    %5014 = vmatpush.bf16.msra.mxu0 %v4886
    %5015 = vmatpush.bf16.msra.mxu0 %v4885
    %5016 = vmatpush.bf16.msra.mxu0 %v4884
    %5017 = vmatpush.bf16.msra.mxu0 %v4883
    %5018 = vmatpush.bf16.msra.mxu0 %v4882
    %5019 = vmatpush.bf16.msra.mxu0 %v4881
    %5020 = vmatpush.bf16.msra.mxu0 %v4880
    %5021 = vmatmul.bf16.gmra.mxu0 %v4477
    %v5022 = vpop.f32.mrf.mxu0
    %v5023 = vadd.f32 %v5010, %v5022
    %v5024 = vpop.f32.mrf.mxu0
    %5025 = vdwg.mxu0
    %5026 = vmatpush.bf16.msra.mxu0 %v4895
    %5027 = vmatpush.bf16.msra.mxu0 %v4894
    %5028 = vmatpush.bf16.msra.mxu0 %v4893
    %5029 = vmatpush.bf16.msra.mxu0 %v4892
    %5030 = vmatpush.bf16.msra.mxu0 %v4891
    %5031 = vmatpush.bf16.msra.mxu0 %v4890
    %5032 = vmatpush.bf16.msra.mxu0 %v4889
    %5033 = vmatpush.bf16.msra.mxu0 %v4888
    %5034 = vmatmul.bf16.gmra.mxu0 %v4478
    %v5035 = vpop.f32.mrf.mxu0
    %v5036 = vadd.f32 %v5023, %v5035
    %v5037 = vpop.f32.mrf.mxu0
    %5038 = vdwg.mxu0
    %5039 = vmatpush.bf16.msra.mxu0 %v4903
    %5040 = vmatpush.bf16.msra.mxu0 %v4902
    %5041 = vmatpush.bf16.msra.mxu0 %v4901
    %5042 = vmatpush.bf16.msra.mxu0 %v4900
    %5043 = vmatpush.bf16.msra.mxu0 %v4899
    %5044 = vmatpush.bf16.msra.mxu0 %v4898
    %5045 = vmatpush.bf16.msra.mxu0 %v4897
    %5046 = vmatpush.bf16.msra.mxu0 %v4896
    %5047 = vmatmul.bf16.gmra.mxu0 %v4479
    %v5048 = vpop.f32.mrf.mxu0
    %v5049 = vadd.f32 %v5036, %v5048
    %v5050 = vpop.f32.mrf.mxu0
    %5051 = vdwg.mxu0
    %5052 = vmatpush.bf16.msra.mxu0 %v4911
    %5053 = vmatpush.bf16.msra.mxu0 %v4910
    %5054 = vmatpush.bf16.msra.mxu0 %v4909
    %5055 = vmatpush.bf16.msra.mxu0 %v4908
    %5056 = vmatpush.bf16.msra.mxu0 %v4907
    %5057 = vmatpush.bf16.msra.mxu0 %v4906
    %5058 = vmatpush.bf16.msra.mxu0 %v4905
    %5059 = vmatpush.bf16.msra.mxu0 %v4904
    %5060 = vmatmul.bf16.gmra.mxu0 %v4480
    %v5061 = vpop.f32.mrf.mxu0
    %v5062 = vadd.f32 %v5049, %v5061
    %v5063 = vpop.f32.mrf.mxu0
    %5064 = vdwg.mxu0
    %5065 = vmatpush.bf16.msra.mxu0 %v4919
    %5066 = vmatpush.bf16.msra.mxu0 %v4918
    %5067 = vmatpush.bf16.msra.mxu0 %v4917
    %5068 = vmatpush.bf16.msra.mxu0 %v4916
    %5069 = vmatpush.bf16.msra.mxu0 %v4915
    %5070 = vmatpush.bf16.msra.mxu0 %v4914
    %5071 = vmatpush.bf16.msra.mxu0 %v4913
    %5072 = vmatpush.bf16.msra.mxu0 %v4912
    %5073 = vmatmul.bf16.gmra.mxu0 %v4481
    %v5074 = vpop.f32.mrf.mxu0
    %v5075 = vadd.f32 %v5062, %v5074
    %v5076 = vpop.f32.mrf.mxu0
    %5077 = vdwg.mxu0
    %5078 = vmatpush.bf16.msra.mxu0 %v4927
    %5079 = vmatpush.bf16.msra.mxu0 %v4926
    %5080 = vmatpush.bf16.msra.mxu0 %v4925
    %5081 = vmatpush.bf16.msra.mxu0 %v4924
    %5082 = vmatpush.bf16.msra.mxu0 %v4923
    %5083 = vmatpush.bf16.msra.mxu0 %v4922
    %5084 = vmatpush.bf16.msra.mxu0 %v4921
    %5085 = vmatpush.bf16.msra.mxu0 %v4920
    %5086 = vmatmul.bf16.gmra.mxu0 %v4482
    %v5087 = vpop.f32.mrf.mxu0
    %v5088 = vadd.f32 %v5075, %v5087
    %v5089 = vpop.f32.mrf.mxu0
    %5090 = vdwg.mxu0
    %5091 = vmatpush.bf16.msra.mxu0 %v4935
    %5092 = vmatpush.bf16.msra.mxu0 %v4934
    %5093 = vmatpush.bf16.msra.mxu0 %v4933
    %5094 = vmatpush.bf16.msra.mxu0 %v4932
    %5095 = vmatpush.bf16.msra.mxu0 %v4931
    %5096 = vmatpush.bf16.msra.mxu0 %v4930
    %5097 = vmatpush.bf16.msra.mxu0 %v4929
    %5098 = vmatpush.bf16.msra.mxu0 %v4928
    %5099 = vmatmul.bf16.gmra.mxu0 %v4483
    %v5100 = vpop.f32.mrf.mxu0
    %v5101 = vadd.f32 %v5088, %v5100
    %v5102 = vpop.f32.mrf.mxu0
    %5103 = vdwg.mxu0
    %5104 = vst [vmem:[#allocation2] sm:$0x3] %v5101
    // Predicated region
    $region22: #{cnn_forward.3} parent=1 // pred_check
      _
    $region23: #{cnn_forward.3} parent=1 // pred_check_branch
      %5106 = sbr.rel (0) target = $region25
    $region24: #{cnn_forward.3} parent=1 // pred_region
      %5108 = vsyncadd [#allocation3], 0
      %s5110 = sshll.u32 [#allocation2], 4
      %s5111 = int_to_ptr.vmem [resolvable:$true] %s5110
      %s5112 = sshll.u32 %s5, 4
      %s5113 = int_to_ptr.hbm [resolvable:$true] %s5112
      %5115 = dma.vmem_to_hbm [thread:$0]  %s5111, 32, %s5113, [#allocation3]
    $region25: #{cnn_forward.3} parent=1 // pred_fallthru
      _
    // Predicated region
    $region26: #{cnn_forward.3} parent=1 // pred_check
      _
    $region27: #{cnn_forward.3} parent=1 // pred_check_branch
      %5117 = sbr.rel (0) target = $region29
    $region28: #{cnn_forward.3} parent=1 // pred_region
      %5119 = dma.done [#allocation3], 32
    $region29: #{cnn_forward.3} parent=1 // pred_fallthru
      _
    %5120 = vsyncpa [#allocation3], 1

// kernel: cnn_forward.2
$region0: #{cnn_forward.2}
  #allocation0 [shape = 'u32[]', space=smem, size = 0x4, offset = 0x4, fixed_abs, tag = 'smem constant byte address 0x4 - core index']
  #allocation1 [shape = 'u32[72,128]{1,0:T(1,128)}', space=vmem, size = 0x9000, scoped, tag = 'internal scratch']
  #allocation2 [shape = 'f32[200,128]{1,0:T(8,128)}', space=vmem, size = 0x19000, scoped, tag = 'scratch operand']
  #allocation3 [shape = 'f32[56,128]{1,0:T(8,128)}', space=vmem, size = 0x7000, scoped, tag = 'scratch operand']
  %s0 = inlined_call_operand.vmem [shape: bf16[2,784,32], index: 0, kind: input, shape index: {}]
  %s1 = inlined_call_operand.vmem [shape: bf16[32,128], index: 1, kind: input, shape index: {}]
  %s2 = inlined_call_operand.vmem [shape: f32[1,128], index: 2, kind: input, shape index: {}]
  %s3 = inlined_call_operand.vmem [shape: bf16[1152,128], index: 3, kind: input, shape index: {}]
  %s4 = inlined_call_operand.vmem [shape: f32[1,128], index: 4, kind: input, shape index: {}]
  %s5 = inlined_call_operand.vmem [shape: f32[2,36,32], index: 5, kind: output, shape index: {}]
  %s6 = sld [smem:[#allocation0]]
  $region53: #{cnn_forward.2} parent=0
    _
  %s8 = ssub.s32 1, %s6
  %s9 = scalar_select 0, %s8, %s6
  loop: start=0, step=1, limit=4
  $region2: #{cnn_forward.2} parent=0 // loop_pre_header
    _
  $region3: #{cnn_forward.2} parent=0 // loop_header
    %s11 = sphi 0, %s15
    %p12 = scmp.ge.s32.totalorder %s11, 4
    %s21 = sphi 0, %s23
    %s24 = sphi 0, %s21
    %s25 = sphi 0, %s24
    %s41 = sphi 0, %s25
    %s45 = sphi 0, %s45
    %s47 = sphi 0, %s45
    %s48 = sphi 0, %s47
    %s62 = sphi 0, %s48
    %s66 = sphi 0, %s66
    %s68 = sphi 0, %s66
    %s69 = sphi 0, %s68
    %s83 = sphi 0, %s69
    %s87 = sphi 0, %s87
    %s89 = sphi 0, %s87
    %s90 = sphi 0, %s89
    %s104 = sphi 0, %s90
    %s108 = sphi 0, %s108
    %s110 = sphi 0, %s108
    %s111 = sphi 0, %s110
    %s125 = sphi 0, %s111
    %s131 = sphi 0, %s133
    %s134 = sphi 0, %s131
    %s135 = sphi 0, %s134
    %s151 = sphi 0, %s135
  $region4: #{cnn_forward.2} parent=0 // loop_header_branch
    %14 = sbr.rel (%p12) target = $region8
  $region5: #{cnn_forward.2} parent=0 // loop_body
    %s16 = ssub.s32 %s11, 1
    %s17 = ssub.s32 %s11, 2
    %s18 = sadd.s32 %s11, 1
    %s19 = ssub.s32 %s11, %s18
    %p20 = scmp.eq.s32.totalorder %s19, 0
    %s22 = sadd.s32 %s21, 1
    %s23 = scalar_select %p20, %s21, %s22
    %p26 = pneg %p20
    %p27 = scmp.eq.s32.totalorder %s11, 1
    %p28 = por %p26, %p27
    %p29 = scmp.ne.s32.totalorder %s21, %s24
    %p30 = scmp.eq.s32.totalorder %s11, 0
    %p31 = por %p29, %p30
    %p32 = scmp.ne.s32.totalorder %s21, %s24
    %p33 = scmp.eq.s32.totalorder %s16, 1
    %p34 = por %p32, %p33
    %p35 = scmp.ne.s32.totalorder %s24, %s25
    %p36 = scmp.eq.s32.totalorder %s16, 0
    %p37 = por %p35, %p36
    %p38 = scmp.ne.s32.totalorder %s24, %s25
    %p39 = scmp.eq.s32.totalorder %s17, 1
    %p40 = por %p38, %p39
    %p42 = scmp.ne.s32.totalorder %s25, %s41
    %p43 = scmp.eq.s32.totalorder %s17, 0
    %p44 = por %p42, %p43
    %s46 = sadd.s32 %s45, 1
    %p49 = scmp.eq.s32.totalorder %s11, 1
    %p50 = scmp.ne.s32.totalorder %s45, %s47
    %p51 = scmp.eq.s32.totalorder %s11, 0
    %p52 = por %p50, %p51
    %p53 = scmp.ne.s32.totalorder %s45, %s47
    %p54 = scmp.eq.s32.totalorder %s16, 1
    %p55 = por %p53, %p54
    %p56 = scmp.ne.s32.totalorder %s47, %s48
    %p57 = scmp.eq.s32.totalorder %s16, 0
    %p58 = por %p56, %p57
    %p59 = scmp.ne.s32.totalorder %s47, %s48
    %p60 = scmp.eq.s32.totalorder %s17, 1
    %p61 = por %p59, %p60
    %p63 = scmp.ne.s32.totalorder %s48, %s62
    %p64 = scmp.eq.s32.totalorder %s17, 0
    %p65 = por %p63, %p64
    %s67 = sadd.s32 %s66, 1
    %p70 = scmp.eq.s32.totalorder %s11, 1
    %p71 = scmp.ne.s32.totalorder %s66, %s68
    %p72 = scmp.eq.s32.totalorder %s11, 0
    %p73 = por %p71, %p72
    %p74 = scmp.ne.s32.totalorder %s66, %s68
    %p75 = scmp.eq.s32.totalorder %s16, 1
    %p76 = por %p74, %p75
    %p77 = scmp.ne.s32.totalorder %s68, %s69
    %p78 = scmp.eq.s32.totalorder %s16, 0
    %p79 = por %p77, %p78
    %p80 = scmp.ne.s32.totalorder %s68, %s69
    %p81 = scmp.eq.s32.totalorder %s17, 1
    %p82 = por %p80, %p81
    %p84 = scmp.ne.s32.totalorder %s69, %s83
    %p85 = scmp.eq.s32.totalorder %s17, 0
    %p86 = por %p84, %p85
    %s88 = sadd.s32 %s87, 1
    %p91 = scmp.eq.s32.totalorder %s11, 1
    %p92 = scmp.ne.s32.totalorder %s87, %s89
    %p93 = scmp.eq.s32.totalorder %s11, 0
    %p94 = por %p92, %p93
    %p95 = scmp.ne.s32.totalorder %s87, %s89
    %p96 = scmp.eq.s32.totalorder %s16, 1
    %p97 = por %p95, %p96
    %p98 = scmp.ne.s32.totalorder %s89, %s90
    %p99 = scmp.eq.s32.totalorder %s16, 0
    %p100 = por %p98, %p99
    %p101 = scmp.ne.s32.totalorder %s89, %s90
    %p102 = scmp.eq.s32.totalorder %s17, 1
    %p103 = por %p101, %p102
    %p105 = scmp.ne.s32.totalorder %s90, %s104
    %p106 = scmp.eq.s32.totalorder %s17, 0
    %p107 = por %p105, %p106
    %s109 = sadd.s32 %s108, 1
    %p112 = scmp.eq.s32.totalorder %s11, 1
    %p113 = scmp.ne.s32.totalorder %s108, %s110
    %p114 = scmp.eq.s32.totalorder %s11, 0
    %p115 = por %p113, %p114
    %p116 = scmp.ne.s32.totalorder %s108, %s110
    %p117 = scmp.eq.s32.totalorder %s16, 1
    %p118 = por %p116, %p117
    %p119 = scmp.ne.s32.totalorder %s110, %s111
    %p120 = scmp.eq.s32.totalorder %s16, 0
    %p121 = por %p119, %p120
    %p122 = scmp.ne.s32.totalorder %s110, %s111
    %p123 = scmp.eq.s32.totalorder %s17, 1
    %p124 = por %p122, %p123
    %p126 = scmp.ne.s32.totalorder %s111, %s125
    %p127 = scmp.eq.s32.totalorder %s17, 0
    %p128 = por %p126, %p127
    %s129 = ssub.s32 %s11, %s18
    %p130 = scmp.eq.s32.totalorder %s129, 0
    %s132 = sadd.s32 %s131, 1
    %s133 = scalar_select %p130, %s131, %s132
    %p136 = pneg %p130
    %p137 = scmp.eq.s32.totalorder %s11, 1
    %p138 = por %p136, %p137
    %p139 = scmp.ne.s32.totalorder %s131, %s134
    %p140 = scmp.eq.s32.totalorder %s11, 0
    %p141 = por %p139, %p140
    %p142 = scmp.ne.s32.totalorder %s131, %s134
    %p143 = scmp.eq.s32.totalorder %s16, 1
    %p144 = por %p142, %p143
    %p145 = scmp.ne.s32.totalorder %s134, %s135
    %p146 = scmp.eq.s32.totalorder %s16, 0
    %p147 = por %p145, %p146
    %p148 = scmp.ne.s32.totalorder %s134, %s135
    %p149 = scmp.eq.s32.totalorder %s17, 1
    %p150 = por %p148, %p149
    %p152 = scmp.ne.s32.totalorder %s135, %s151
    %p153 = scmp.eq.s32.totalorder %s17, 0
    %p154 = por %p152, %p153
    %p155 = scmp.le.s32.totalorder 1, %s11
    %p156 = scmp.lt.s32.totalorder %s11, 3
    %p157 = pnand %p155, %p156
    %p158 = pneg %p157
    // Predicated region
    $region9: #{cnn_forward.2} parent=5 // pred_check
      _
    $region10: #{cnn_forward.2} parent=5 // pred_check_branch
      %160 = sbr.rel (%p157) target = $region12
    $region11: #{cnn_forward.2} parent=5 // pred_region
      %s161 = ssub.s32 %s11, 1
      // Predicated region
      $region13: #{cnn_forward.2} parent=11 // pred_check
        %p162 = pneg %p58
      $region14: #{cnn_forward.2} parent=11 // pred_check_branch
        %164 = sbr.rel (%p162) target = $region16
      $region15: #{cnn_forward.2} parent=11 // pred_region
        _
      $region16: #{cnn_forward.2} parent=11 // pred_fallthru
        _
      // Predicated region
      $region17: #{cnn_forward.2} parent=11 // pred_check
        %p165 = pneg %p79
      $region18: #{cnn_forward.2} parent=11 // pred_check_branch
        %167 = sbr.rel (%p165) target = $region20
      $region19: #{cnn_forward.2} parent=11 // pred_region
        _
      $region20: #{cnn_forward.2} parent=11 // pred_fallthru
        _
      // Predicated region
      $region21: #{cnn_forward.2} parent=11 // pred_check
        %p168 = pneg %p100
      $region22: #{cnn_forward.2} parent=11 // pred_check_branch
        %170 = sbr.rel (%p168) target = $region24
      $region23: #{cnn_forward.2} parent=11 // pred_region
        _
      $region24: #{cnn_forward.2} parent=11 // pred_fallthru
        _
      // Predicated region
      $region25: #{cnn_forward.2} parent=11 // pred_check
        %p171 = pneg %p121
      $region26: #{cnn_forward.2} parent=11 // pred_check_branch
        %173 = sbr.rel (%p171) target = $region28
      $region27: #{cnn_forward.2} parent=11 // pred_region
        _
      $region28: #{cnn_forward.2} parent=11 // pred_fallthru
        _
    $region12: #{cnn_forward.2} parent=5 // pred_fallthru
      _
    %p174 = scmp.lt.s32.totalorder %s11, 2
    // Predicated region
    $region29: #{cnn_forward.2} parent=5 // pred_check
      %p175 = pneg %p174
    $region30: #{cnn_forward.2} parent=5 // pred_check_branch
      %177 = sbr.rel (%p175) target = $region32
    $region31: #{cnn_forward.2} parent=5 // pred_region
      // Predicated region
      $region33: #{cnn_forward.2} parent=31 // pred_check
        %p178 = pneg %p31
      $region34: #{cnn_forward.2} parent=31 // pred_check_branch
        %180 = sbr.rel (%p178) target = $region36
      $region35: #{cnn_forward.2} parent=31 // pred_region
        %p181 = scmp.lt.s32.totalorder %s11, 1
        %s182 = scalar_select %p181, %s11, 1
        %s183 = smul.addr %s182, 98
        %s184 = smul.addr %s183, 4
        %s185 = scalar_lea.vmem %s0, %s184
      $region36: #{cnn_forward.2} parent=31 // pred_fallthru
        _
    $region32: #{cnn_forward.2} parent=5 // pred_fallthru
      _
    %p186 = scmp.le.s32.totalorder 1, %s11
    %p187 = scmp.lt.s32.totalorder %s11, 3
    %p188 = pnand %p186, %p187
    %p189 = pneg %p188
    // Predicated region
    $region37: #{cnn_forward.2} parent=5 // pred_check
      _
    $region38: #{cnn_forward.2} parent=5 // pred_check_branch
      %191 = sbr.rel (%p188) target = $region40
    $region39: #{cnn_forward.2} parent=5 // pred_region
      %s192 = ssub.s32 %s11, 1
      %p193 = scmp.lt.s32.totalorder %s16, 1
      %s194 = scalar_select %p193, %s16, 1
      %s195 = smul.addr %s194, 98
      %s196 = smul.addr %s195, 4
      %s197 = scalar_lea.vmem %s0, %s196
      %p198 = pneg %p37
      %p199 = pneg %p34
      %p200 = pneg %p58
      %p201 = pneg %p55
      %p202 = pneg %p79
      %p203 = pneg %p76
      %p204 = pneg %p100
      %p205 = pneg %p97
      %p206 = pneg %p121
      %p207 = pneg %p118
      %p208 = pneg %p147
      %p209 = pneg %p144
      %p210 = scmp.lt.s32.totalorder %s16, 1
      %s211 = scalar_select %p210, %s16, 1
      %s212 = smul.addr %s211, 5
      %s213 = smul.addr %s212, 8
      %s214 = scalar_lea.vmem %s5, %s213
      %p215 = scmp.lt.s32.totalorder %s16, 1
      %s216 = scalar_select %p215, %s16, 1
      %s217 = smul.addr %s216, 98
      %s218 = smul.addr %s217, 4
      %s219 = scalar_lea.vmem %s0, %s218
      %p220 = scmp.lt.s32.totalorder %s16, 1
      %s221 = scalar_select %p220, %s16, 1
      %s222 = smul.addr %s221, 5
      %s223 = smul.addr %s222, 8
      %s224 = scalar_lea.vmem %s5, %s223
      %v226 = vld [vmem:[%s1] sm:$0xf]
      %v227 = vld [vmem:[%s1 + $0x4] sm:$0xf]
      %v228 = vld [vmem:[%s1 + $0x8] sm:$0xf]
      %v229 = vld [vmem:[%s1 + $0xc] sm:$0xf]
      %v230 = vld [vmem:[%s2] sm:$0x1]
      %v231 = vld [vmem:[%s4] sm:$0x1]
      %232 = vst [vmem:[#allocation2 + $0xc4] sm:$0xf] 0.0
      %v233 = vld [vmem:[%s219] sm:$0xf]
      %v234 = vld [vmem:[%s219 + $0x4] sm:$0xf]
      %v235 = vld [vmem:[%s219 + $0x8] sm:$0xf]
      %v236 = vld [vmem:[%s219 + $0xc] sm:$0xf]
      %v237 = vld [vmem:[%s219 + $0x10] sm:$0xf]
      %v238 = vld [vmem:[%s219 + $0x14] sm:$0xf]
      %v239 = vld [vmem:[%s219 + $0x18] sm:$0xf]
      %v247 = vunpack.c.l.b16 %v233
      %v248 = vunpack.c.l.b16 %v234
      %v249 = vunpack.c.l.b16 %v235
      %v250 = vunpack.c.l.b16 %v236
      %v251 = vunpack.c.l.b16 %v237
      %v252 = vunpack.c.l.b16 %v238
      %v253 = vunpack.c.l.b16 %v239
      %v254 = vpack.c.b16 %v248, %v247
      %v255 = vpack.c.b16 %v250, %v249
      %v256 = vpack.c.b16 %v252, %v251
      %v257 = vpack.c.b16 %v253, %v253
      %v262 = vunpack.c.l.b16 %v226
      %v263 = vunpack.c.l.b16 %v227
      %v264 = vunpack.c.l.b16 %v228
      %v265 = vunpack.c.l.b16 %v229
      %v266 = vpack.c.b16 %v263, %v262
      %v267 = vpack.c.b16 %v265, %v264
      %vm270 = vcmask 261120
      %v272 = vsel %vm270, %v254, 0
      %v275 = vsel %vm270, %v255, 0
      %v278 = vsel %vm270, %v256, 0
      %v281 = vsel %vm270, %v257, 0
      %283 = vmatpush.bf16.msra.mxu0 0
      %284 = vmatpush.bf16.msra.mxu0 0
      %285 = vmatpush.bf16.msra.mxu0 0
      %286 = vmatpush.bf16.msra.mxu0 0
      %287 = vmatpush.bf16.msra.mxu0 0
      %288 = vmatpush.bf16.msra.mxu0 0
      %289 = vmatpush.bf16.msra.mxu0 %v267
      %290 = vmatpush.bf16.msra.mxu0 %v266
      %291 = vmatmul.bf16.gmra.mxu0 %v272
      %v292 = vpop.f32.mrf.mxu0
      %v293 = vadd.f32 0.0, %v292
      %v294 = vpop.f32.mrf.mxu0
      %v295 = vadd.f32 0.0, %v294
      %296 = vmatmul.bf16.gmra.mxu0 %v275
      %v297 = vpop.f32.mrf.mxu0
      %v298 = vadd.f32 0.0, %v297
      %v299 = vpop.f32.mrf.mxu0
      %v300 = vadd.f32 0.0, %v299
      %301 = vmatmul.bf16.gmra.mxu0 %v278
      %v302 = vpop.f32.mrf.mxu0
      %v303 = vadd.f32 0.0, %v302
      %v304 = vpop.f32.mrf.mxu0
      %v305 = vadd.f32 0.0, %v304
      %306 = vmatmul.bf16.gmra.mxu0 %v281
      %v307 = vpop.f32.mrf.mxu0
      %v308 = vadd.f32 0.0, %v307
      %v309 = vpop.f32.mrf.mxu0
      %310 = vdwg.mxu0
      %311 = vst [vmem:[#allocation3] sm:$0xff] %v293
      %312 = vst [vmem:[#allocation3 + $0x8] sm:$0xff] %v295
      %313 = vst [vmem:[#allocation3 + $0x10] sm:$0xff] %v298
      %314 = vst [vmem:[#allocation3 + $0x18] sm:$0xff] %v300
      %315 = vst [vmem:[#allocation3 + $0x20] sm:$0xff] %v303
      %316 = vst [vmem:[#allocation3 + $0x28] sm:$0xff] %v305
      %317 = vst [vmem:[#allocation3 + $0x30] sm:$0xff] %v308
      %v318 = vld [vmem:[#allocation3] ss:$2 sm:$0xff]
      %s319 = scalar_lea.vmem [#allocation3], 16
      %v320 = vld [vmem:[%s319] ss:$2 sm:$0x3f]
      %s321 = scalar_lea.vmem [#allocation3], 1
      %v322 = vld [vmem:[%s321] ss:$2 sm:$0xff]
      %s323 = scalar_lea.vmem [#allocation3], 17
      %v324 = vld [vmem:[%s323] ss:$2 sm:$0x3f]
      %v325 = vmax.f32 %v318, %v322
      %v326 = vmax.f32 %v320, %v324
      %s327 = scalar_lea.vmem [#allocation3], 28
      %v328 = vld [vmem:[%s327] ss:$2 sm:$0xff]
      %s329 = scalar_lea.vmem [#allocation3], 44
      %v330 = vld [vmem:[%s329] ss:$2 sm:$0x3f]
      %s331 = scalar_lea.vmem [#allocation3], 29
      %v332 = vld [vmem:[%s331] ss:$2 sm:$0xff]
      %s333 = scalar_lea.vmem [#allocation3], 45
      %v334 = vld [vmem:[%s333] ss:$2 sm:$0x3f]
      %v335 = vmax.f32 %v328, %v332
      %v336 = vmax.f32 %v330, %v334
      %v337 = vmax.f32 %v325, %v335
      %v338 = vmax.f32 %v326, %v336
      %v340 = vperm.slane %v230, 0
      %v342 = vadd.f32 %v337, %v340
      %v343 = vadd.f32 %v338, %v340
      %v344 = vmax.f32 %v342, 0.0
      %v345 = vmax.f32 %v343, 0.0
      %346 = vst [vmem:[#allocation2] sm:$0xff] %v344
      %347 = vst [vmem:[#allocation2 + $0x8] sm:$0x3f] %v345
      %v348 = vld [vmem:[%s219 + $0x1c] sm:$0xf]
      %v349 = vld [vmem:[%s219 + $0x20] sm:$0xf]
      %v350 = vld [vmem:[%s219 + $0x24] sm:$0xf]
      %v351 = vld [vmem:[%s219 + $0x28] sm:$0xf]
      %v352 = vld [vmem:[%s219 + $0x2c] sm:$0xf]
      %v353 = vld [vmem:[%s219 + $0x30] sm:$0xf]
      %v354 = vld [vmem:[%s219 + $0x34] sm:$0xf]
      %v362 = vunpack.c.l.b16 %v348
      %v363 = vunpack.c.l.b16 %v349
      %v364 = vunpack.c.l.b16 %v350
      %v365 = vunpack.c.l.b16 %v351
      %v366 = vunpack.c.l.b16 %v352
      %v367 = vunpack.c.l.b16 %v353
      %v368 = vunpack.c.l.b16 %v354
      %v369 = vpack.c.b16 %v363, %v362
      %v370 = vpack.c.b16 %v365, %v364
      %v371 = vpack.c.b16 %v367, %v366
      %v372 = vpack.c.b16 %v368, %v368
      %v374 = vsel %vm270, %v369, 0
      %v377 = vsel %vm270, %v370, 0
      %v380 = vsel %vm270, %v371, 0
      %v383 = vsel %vm270, %v372, 0
      %385 = vmatpush.bf16.msra.mxu0 0
      %386 = vmatpush.bf16.msra.mxu0 0
      %387 = vmatpush.bf16.msra.mxu0 0
      %388 = vmatpush.bf16.msra.mxu0 0
      %389 = vmatpush.bf16.msra.mxu0 0
      %390 = vmatpush.bf16.msra.mxu0 0
      %391 = vmatpush.bf16.msra.mxu0 %v267
      %392 = vmatpush.bf16.msra.mxu0 %v266
      %393 = vmatmul.bf16.gmra.mxu0 %v374
      %v394 = vpop.f32.mrf.mxu0
      %v395 = vadd.f32 0.0, %v394
      %v396 = vpop.f32.mrf.mxu0
      %v397 = vadd.f32 0.0, %v396
      %398 = vmatmul.bf16.gmra.mxu0 %v377
      %v399 = vpop.f32.mrf.mxu0
      %v400 = vadd.f32 0.0, %v399
      %v401 = vpop.f32.mrf.mxu0
      %v402 = vadd.f32 0.0, %v401
      %403 = vmatmul.bf16.gmra.mxu0 %v380
      %v404 = vpop.f32.mrf.mxu0
      %v405 = vadd.f32 0.0, %v404
      %v406 = vpop.f32.mrf.mxu0
      %v407 = vadd.f32 0.0, %v406
      %408 = vmatmul.bf16.gmra.mxu0 %v383
      %v409 = vpop.f32.mrf.mxu0
      %v410 = vadd.f32 0.0, %v409
      %v411 = vpop.f32.mrf.mxu0
      %412 = vdwg.mxu0
      %413 = vst [vmem:[#allocation3] sm:$0xff] %v395
      %414 = vst [vmem:[#allocation3 + $0x8] sm:$0xff] %v397
      %415 = vst [vmem:[#allocation3 + $0x10] sm:$0xff] %v400
      %416 = vst [vmem:[#allocation3 + $0x18] sm:$0xff] %v402
      %417 = vst [vmem:[#allocation3 + $0x20] sm:$0xff] %v405
      %418 = vst [vmem:[#allocation3 + $0x28] sm:$0xff] %v407
      %419 = vst [vmem:[#allocation3 + $0x30] sm:$0xff] %v410
      %v420 = vld [vmem:[#allocation3] ss:$2 sm:$0xff]
      %v421 = vld [vmem:[%s319] ss:$2 sm:$0x3f]
      %v422 = vld [vmem:[%s321] ss:$2 sm:$0xff]
      %v423 = vld [vmem:[%s323] ss:$2 sm:$0x3f]
      %v424 = vmax.f32 %v420, %v422
      %v425 = vmax.f32 %v421, %v423
      %v426 = vld [vmem:[%s327] ss:$2 sm:$0xff]
      %v427 = vld [vmem:[%s329] ss:$2 sm:$0x3f]
      %v428 = vld [vmem:[%s331] ss:$2 sm:$0xff]
      %v429 = vld [vmem:[%s333] ss:$2 sm:$0x3f]
      %v430 = vmax.f32 %v426, %v428
      %v431 = vmax.f32 %v427, %v429
      %v432 = vmax.f32 %v424, %v430
      %v433 = vmax.f32 %v425, %v431
      %v434 = vadd.f32 %v432, %v340
      %v435 = vadd.f32 %v433, %v340
      %v436 = vmax.f32 %v434, 0.0
      %v437 = vmax.f32 %v435, 0.0
      %438 = vst [vmem:[#allocation2 + $0xe] sm:$0xff] %v436
      %439 = vst [vmem:[#allocation2 + $0x16] sm:$0x3f] %v437
      %v440 = vld [vmem:[%s219 + $0x38] sm:$0xf]
      %v441 = vld [vmem:[%s219 + $0x3c] sm:$0xf]
      %v442 = vld [vmem:[%s219 + $0x40] sm:$0xf]
      %v443 = vld [vmem:[%s219 + $0x44] sm:$0xf]
      %v444 = vld [vmem:[%s219 + $0x48] sm:$0xf]
      %v445 = vld [vmem:[%s219 + $0x4c] sm:$0xf]
      %v446 = vld [vmem:[%s219 + $0x50] sm:$0xf]
      %v454 = vunpack.c.l.b16 %v440
      %v455 = vunpack.c.l.b16 %v441
      %v456 = vunpack.c.l.b16 %v442
      %v457 = vunpack.c.l.b16 %v443
      %v458 = vunpack.c.l.b16 %v444
      %v459 = vunpack.c.l.b16 %v445
      %v460 = vunpack.c.l.b16 %v446
      %v461 = vpack.c.b16 %v455, %v454
      %v462 = vpack.c.b16 %v457, %v456
      %v463 = vpack.c.b16 %v459, %v458
      %v464 = vpack.c.b16 %v460, %v460
      %v466 = vsel %vm270, %v461, 0
      %v469 = vsel %vm270, %v462, 0
      %v472 = vsel %vm270, %v463, 0
      %v475 = vsel %vm270, %v464, 0
      %477 = vmatpush.bf16.msra.mxu0 0
      %478 = vmatpush.bf16.msra.mxu0 0
      %479 = vmatpush.bf16.msra.mxu0 0
      %480 = vmatpush.bf16.msra.mxu0 0
      %481 = vmatpush.bf16.msra.mxu0 0
      %482 = vmatpush.bf16.msra.mxu0 0
      %483 = vmatpush.bf16.msra.mxu0 %v267
      %484 = vmatpush.bf16.msra.mxu0 %v266
      %485 = vmatmul.bf16.gmra.mxu0 %v466
      %v486 = vpop.f32.mrf.mxu0
      %v487 = vadd.f32 0.0, %v486
      %v488 = vpop.f32.mrf.mxu0
      %v489 = vadd.f32 0.0, %v488
      %490 = vmatmul.bf16.gmra.mxu0 %v469
      %v491 = vpop.f32.mrf.mxu0
      %v492 = vadd.f32 0.0, %v491
      %v493 = vpop.f32.mrf.mxu0
      %v494 = vadd.f32 0.0, %v493
      %495 = vmatmul.bf16.gmra.mxu0 %v472
      %v496 = vpop.f32.mrf.mxu0
      %v497 = vadd.f32 0.0, %v496
      %v498 = vpop.f32.mrf.mxu0
      %v499 = vadd.f32 0.0, %v498
      %500 = vmatmul.bf16.gmra.mxu0 %v475
      %v501 = vpop.f32.mrf.mxu0
      %v502 = vadd.f32 0.0, %v501
      %v503 = vpop.f32.mrf.mxu0
      %504 = vdwg.mxu0
      %505 = vst [vmem:[#allocation3] sm:$0xff] %v487
      %506 = vst [vmem:[#allocation3 + $0x8] sm:$0xff] %v489
      %507 = vst [vmem:[#allocation3 + $0x10] sm:$0xff] %v492
      %508 = vst [vmem:[#allocation3 + $0x18] sm:$0xff] %v494
      %509 = vst [vmem:[#allocation3 + $0x20] sm:$0xff] %v497
      %510 = vst [vmem:[#allocation3 + $0x28] sm:$0xff] %v499
      %511 = vst [vmem:[#allocation3 + $0x30] sm:$0xff] %v502
      %v512 = vld [vmem:[#allocation3] ss:$2 sm:$0xff]
      %v513 = vld [vmem:[%s319] ss:$2 sm:$0x3f]
      %v514 = vld [vmem:[%s321] ss:$2 sm:$0xff]
      %v515 = vld [vmem:[%s323] ss:$2 sm:$0x3f]
      %v516 = vmax.f32 %v512, %v514
      %v517 = vmax.f32 %v513, %v515
      %v518 = vld [vmem:[%s327] ss:$2 sm:$0xff]
      %v519 = vld [vmem:[%s329] ss:$2 sm:$0x3f]
      %v520 = vld [vmem:[%s331] ss:$2 sm:$0xff]
      %v521 = vld [vmem:[%s333] ss:$2 sm:$0x3f]
      %v522 = vmax.f32 %v518, %v520
      %v523 = vmax.f32 %v519, %v521
      %v524 = vmax.f32 %v516, %v522
      %v525 = vmax.f32 %v517, %v523
      %v526 = vadd.f32 %v524, %v340
      %v527 = vadd.f32 %v525, %v340
      %v528 = vmax.f32 %v526, 0.0
      %v529 = vmax.f32 %v527, 0.0
      %530 = vst [vmem:[#allocation2 + $0x1c] sm:$0xff] %v528
      %531 = vst [vmem:[#allocation2 + $0x24] sm:$0x3f] %v529
      %v532 = vld [vmem:[%s219 + $0x54] sm:$0xf]
      %v533 = vld [vmem:[%s219 + $0x58] sm:$0xf]
      %v534 = vld [vmem:[%s219 + $0x5c] sm:$0xf]
      %v535 = vld [vmem:[%s219 + $0x60] sm:$0xf]
      %v536 = vld [vmem:[%s219 + $0x64] sm:$0xf]
      %v537 = vld [vmem:[%s219 + $0x68] sm:$0xf]
      %v538 = vld [vmem:[%s219 + $0x6c] sm:$0xf]
      %v546 = vunpack.c.l.b16 %v532
      %v547 = vunpack.c.l.b16 %v533
      %v548 = vunpack.c.l.b16 %v534
      %v549 = vunpack.c.l.b16 %v535
      %v550 = vunpack.c.l.b16 %v536
      %v551 = vunpack.c.l.b16 %v537
      %v552 = vunpack.c.l.b16 %v538
      %v553 = vpack.c.b16 %v547, %v546
      %v554 = vpack.c.b16 %v549, %v548
      %v555 = vpack.c.b16 %v551, %v550
      %v556 = vpack.c.b16 %v552, %v552
      %v558 = vsel %vm270, %v553, 0
      %v561 = vsel %vm270, %v554, 0
      %v564 = vsel %vm270, %v555, 0
      %v567 = vsel %vm270, %v556, 0
      %569 = vmatpush.bf16.msra.mxu0 0
      %570 = vmatpush.bf16.msra.mxu0 0
      %571 = vmatpush.bf16.msra.mxu0 0
      %572 = vmatpush.bf16.msra.mxu0 0
      %573 = vmatpush.bf16.msra.mxu0 0
      %574 = vmatpush.bf16.msra.mxu0 0
      %575 = vmatpush.bf16.msra.mxu0 %v267
      %576 = vmatpush.bf16.msra.mxu0 %v266
      %577 = vmatmul.bf16.gmra.mxu0 %v558
      %v578 = vpop.f32.mrf.mxu0
      %v579 = vadd.f32 0.0, %v578
      %v580 = vpop.f32.mrf.mxu0
      %v581 = vadd.f32 0.0, %v580
      %582 = vmatmul.bf16.gmra.mxu0 %v561
      %v583 = vpop.f32.mrf.mxu0
      %v584 = vadd.f32 0.0, %v583
      %v585 = vpop.f32.mrf.mxu0
      %v586 = vadd.f32 0.0, %v585
      %587 = vmatmul.bf16.gmra.mxu0 %v564
      %v588 = vpop.f32.mrf.mxu0
      %v589 = vadd.f32 0.0, %v588
      %v590 = vpop.f32.mrf.mxu0
      %v591 = vadd.f32 0.0, %v590
      %592 = vmatmul.bf16.gmra.mxu0 %v567
      %v593 = vpop.f32.mrf.mxu0
      %v594 = vadd.f32 0.0, %v593
      %v595 = vpop.f32.mrf.mxu0
      %596 = vdwg.mxu0
      %597 = vst [vmem:[#allocation3] sm:$0xff] %v579
      %598 = vst [vmem:[#allocation3 + $0x8] sm:$0xff] %v581
      %599 = vst [vmem:[#allocation3 + $0x10] sm:$0xff] %v584
      %600 = vst [vmem:[#allocation3 + $0x18] sm:$0xff] %v586
      %601 = vst [vmem:[#allocation3 + $0x20] sm:$0xff] %v589
      %602 = vst [vmem:[#allocation3 + $0x28] sm:$0xff] %v591
      %603 = vst [vmem:[#allocation3 + $0x30] sm:$0xff] %v594
      %v604 = vld [vmem:[#allocation3] ss:$2 sm:$0xff]
      %v605 = vld [vmem:[%s319] ss:$2 sm:$0x3f]
      %v606 = vld [vmem:[%s321] ss:$2 sm:$0xff]
      %v607 = vld [vmem:[%s323] ss:$2 sm:$0x3f]
      %v608 = vmax.f32 %v604, %v606
      %v609 = vmax.f32 %v605, %v607
      %v610 = vld [vmem:[%s327] ss:$2 sm:$0xff]
      %v611 = vld [vmem:[%s329] ss:$2 sm:$0x3f]
      %v612 = vld [vmem:[%s331] ss:$2 sm:$0xff]
      %v613 = vld [vmem:[%s333] ss:$2 sm:$0x3f]
      %v614 = vmax.f32 %v610, %v612
      %v615 = vmax.f32 %v611, %v613
      %v616 = vmax.f32 %v608, %v614
      %v617 = vmax.f32 %v609, %v615
      %v618 = vadd.f32 %v616, %v340
      %v619 = vadd.f32 %v617, %v340
      %v620 = vmax.f32 %v618, 0.0
      %v621 = vmax.f32 %v619, 0.0
      %622 = vst [vmem:[#allocation2 + $0x2a] sm:$0xff] %v620
      %623 = vst [vmem:[#allocation2 + $0x32] sm:$0x3f] %v621
      %v624 = vld [vmem:[%s219 + $0x70] sm:$0xf]
      %v625 = vld [vmem:[%s219 + $0x74] sm:$0xf]
      %v626 = vld [vmem:[%s219 + $0x78] sm:$0xf]
      %v627 = vld [vmem:[%s219 + $0x7c] sm:$0xf]
      %v628 = vld [vmem:[%s219 + $0x80] sm:$0xf]
      %v629 = vld [vmem:[%s219 + $0x84] sm:$0xf]
      %v630 = vld [vmem:[%s219 + $0x88] sm:$0xf]
      %v638 = vunpack.c.l.b16 %v624
      %v639 = vunpack.c.l.b16 %v625
      %v640 = vunpack.c.l.b16 %v626
      %v641 = vunpack.c.l.b16 %v627
      %v642 = vunpack.c.l.b16 %v628
      %v643 = vunpack.c.l.b16 %v629
      %v644 = vunpack.c.l.b16 %v630
      %v645 = vpack.c.b16 %v639, %v638
      %v646 = vpack.c.b16 %v641, %v640
      %v647 = vpack.c.b16 %v643, %v642
      %v648 = vpack.c.b16 %v644, %v644
      %v650 = vsel %vm270, %v645, 0
      %v653 = vsel %vm270, %v646, 0
      %v656 = vsel %vm270, %v647, 0
      %v659 = vsel %vm270, %v648, 0
      %661 = vmatpush.bf16.msra.mxu0 0
      %662 = vmatpush.bf16.msra.mxu0 0
      %663 = vmatpush.bf16.msra.mxu0 0
      %664 = vmatpush.bf16.msra.mxu0 0
      %665 = vmatpush.bf16.msra.mxu0 0
      %666 = vmatpush.bf16.msra.mxu0 0
      %667 = vmatpush.bf16.msra.mxu0 %v267
      %668 = vmatpush.bf16.msra.mxu0 %v266
      %669 = vmatmul.bf16.gmra.mxu0 %v650
      %v670 = vpop.f32.mrf.mxu0
      %v671 = vadd.f32 0.0, %v670
      %v672 = vpop.f32.mrf.mxu0
      %v673 = vadd.f32 0.0, %v672
      %674 = vmatmul.bf16.gmra.mxu0 %v653
      %v675 = vpop.f32.mrf.mxu0
      %v676 = vadd.f32 0.0, %v675
      %v677 = vpop.f32.mrf.mxu0
      %v678 = vadd.f32 0.0, %v677
      %679 = vmatmul.bf16.gmra.mxu0 %v656
      %v680 = vpop.f32.mrf.mxu0
      %v681 = vadd.f32 0.0, %v680
      %v682 = vpop.f32.mrf.mxu0
      %v683 = vadd.f32 0.0, %v682
      %684 = vmatmul.bf16.gmra.mxu0 %v659
      %v685 = vpop.f32.mrf.mxu0
      %v686 = vadd.f32 0.0, %v685
      %v687 = vpop.f32.mrf.mxu0
      %688 = vdwg.mxu0
      %689 = vst [vmem:[#allocation3] sm:$0xff] %v671
      %690 = vst [vmem:[#allocation3 + $0x8] sm:$0xff] %v673
      %691 = vst [vmem:[#allocation3 + $0x10] sm:$0xff] %v676
      %692 = vst [vmem:[#allocation3 + $0x18] sm:$0xff] %v678
      %693 = vst [vmem:[#allocation3 + $0x20] sm:$0xff] %v681
      %694 = vst [vmem:[#allocation3 + $0x28] sm:$0xff] %v683
      %695 = vst [vmem:[#allocation3 + $0x30] sm:$0xff] %v686
      %v696 = vld [vmem:[#allocation3] ss:$2 sm:$0xff]
      %v697 = vld [vmem:[%s319] ss:$2 sm:$0x3f]
      %v698 = vld [vmem:[%s321] ss:$2 sm:$0xff]
      %v699 = vld [vmem:[%s323] ss:$2 sm:$0x3f]
      %v700 = vmax.f32 %v696, %v698
      %v701 = vmax.f32 %v697, %v699
      %v702 = vld [vmem:[%s327] ss:$2 sm:$0xff]
      %v703 = vld [vmem:[%s329] ss:$2 sm:$0x3f]
      %v704 = vld [vmem:[%s331] ss:$2 sm:$0xff]
      %v705 = vld [vmem:[%s333] ss:$2 sm:$0x3f]
      %v706 = vmax.f32 %v702, %v704
      %v707 = vmax.f32 %v703, %v705
      %v708 = vmax.f32 %v700, %v706
      %v709 = vmax.f32 %v701, %v707
      %v710 = vadd.f32 %v708, %v340
      %v711 = vadd.f32 %v709, %v340
      %v712 = vmax.f32 %v710, 0.0
      %v713 = vmax.f32 %v711, 0.0
      %714 = vst [vmem:[#allocation2 + $0x38] sm:$0xff] %v712
      %715 = vst [vmem:[#allocation2 + $0x40] sm:$0x3f] %v713
      %v716 = vld [vmem:[%s219 + $0x8c] sm:$0xf]
      %v717 = vld [vmem:[%s219 + $0x90] sm:$0xf]
      %v718 = vld [vmem:[%s219 + $0x94] sm:$0xf]
      %v719 = vld [vmem:[%s219 + $0x98] sm:$0xf]
      %v720 = vld [vmem:[%s219 + $0x9c] sm:$0xf]
      %v721 = vld [vmem:[%s219 + $0xa0] sm:$0xf]
      %v722 = vld [vmem:[%s219 + $0xa4] sm:$0xf]
      %v730 = vunpack.c.l.b16 %v716
      %v731 = vunpack.c.l.b16 %v717
      %v732 = vunpack.c.l.b16 %v718
      %v733 = vunpack.c.l.b16 %v719
      %v734 = vunpack.c.l.b16 %v720
      %v735 = vunpack.c.l.b16 %v721
      %v736 = vunpack.c.l.b16 %v722
      %v737 = vpack.c.b16 %v731, %v730
      %v738 = vpack.c.b16 %v733, %v732
      %v739 = vpack.c.b16 %v735, %v734
      %v740 = vpack.c.b16 %v736, %v736
      %v742 = vsel %vm270, %v737, 0
      %v745 = vsel %vm270, %v738, 0
      %v748 = vsel %vm270, %v739, 0
      %v751 = vsel %vm270, %v740, 0
      %753 = vmatpush.bf16.msra.mxu0 0
      %754 = vmatpush.bf16.msra.mxu0 0
      %755 = vmatpush.bf16.msra.mxu0 0
      %756 = vmatpush.bf16.msra.mxu0 0
      %757 = vmatpush.bf16.msra.mxu0 0
      %758 = vmatpush.bf16.msra.mxu0 0
      %759 = vmatpush.bf16.msra.mxu0 %v267
      %760 = vmatpush.bf16.msra.mxu0 %v266
      %761 = vmatmul.bf16.gmra.mxu0 %v742
      %v762 = vpop.f32.mrf.mxu0
      %v763 = vadd.f32 0.0, %v762
      %v764 = vpop.f32.mrf.mxu0
      %v765 = vadd.f32 0.0, %v764
      %766 = vmatmul.bf16.gmra.mxu0 %v745
      %v767 = vpop.f32.mrf.mxu0
      %v768 = vadd.f32 0.0, %v767
      %v769 = vpop.f32.mrf.mxu0
      %v770 = vadd.f32 0.0, %v769
      %771 = vmatmul.bf16.gmra.mxu0 %v748
      %v772 = vpop.f32.mrf.mxu0
      %v773 = vadd.f32 0.0, %v772
      %v774 = vpop.f32.mrf.mxu0
      %v775 = vadd.f32 0.0, %v774
      %776 = vmatmul.bf16.gmra.mxu0 %v751
      %v777 = vpop.f32.mrf.mxu0
      %v778 = vadd.f32 0.0, %v777
      %v779 = vpop.f32.mrf.mxu0
      %780 = vdwg.mxu0
      %781 = vst [vmem:[#allocation3] sm:$0xff] %v763
      %782 = vst [vmem:[#allocation3 + $0x8] sm:$0xff] %v765
      %783 = vst [vmem:[#allocation3 + $0x10] sm:$0xff] %v768
      %784 = vst [vmem:[#allocation3 + $0x18] sm:$0xff] %v770
      %785 = vst [vmem:[#allocation3 + $0x20] sm:$0xff] %v773
      %786 = vst [vmem:[#allocation3 + $0x28] sm:$0xff] %v775
      %787 = vst [vmem:[#allocation3 + $0x30] sm:$0xff] %v778
      %v788 = vld [vmem:[#allocation3] ss:$2 sm:$0xff]
      %v789 = vld [vmem:[%s319] ss:$2 sm:$0x3f]
      %v790 = vld [vmem:[%s321] ss:$2 sm:$0xff]
      %v791 = vld [vmem:[%s323] ss:$2 sm:$0x3f]
      %v792 = vmax.f32 %v788, %v790
      %v793 = vmax.f32 %v789, %v791
      %v794 = vld [vmem:[%s327] ss:$2 sm:$0xff]
      %v795 = vld [vmem:[%s329] ss:$2 sm:$0x3f]
      %v796 = vld [vmem:[%s331] ss:$2 sm:$0xff]
      %v797 = vld [vmem:[%s333] ss:$2 sm:$0x3f]
      %v798 = vmax.f32 %v794, %v796
      %v799 = vmax.f32 %v795, %v797
      %v800 = vmax.f32 %v792, %v798
      %v801 = vmax.f32 %v793, %v799
      %v802 = vadd.f32 %v800, %v340
      %v803 = vadd.f32 %v801, %v340
      %v804 = vmax.f32 %v802, 0.0
      %v805 = vmax.f32 %v803, 0.0
      %806 = vst [vmem:[#allocation2 + $0x46] sm:$0xff] %v804
      %807 = vst [vmem:[#allocation2 + $0x4e] sm:$0x3f] %v805
      %v808 = vld [vmem:[%s219 + $0xa8] sm:$0xf]
      %v809 = vld [vmem:[%s219 + $0xac] sm:$0xf]
      %v810 = vld [vmem:[%s219 + $0xb0] sm:$0xf]
      %v811 = vld [vmem:[%s219 + $0xb4] sm:$0xf]
      %v812 = vld [vmem:[%s219 + $0xb8] sm:$0xf]
      %v813 = vld [vmem:[%s219 + $0xbc] sm:$0xf]
      %v814 = vld [vmem:[%s219 + $0xc0] sm:$0xf]
      %v822 = vunpack.c.l.b16 %v808
      %v823 = vunpack.c.l.b16 %v809
      %v824 = vunpack.c.l.b16 %v810
      %v825 = vunpack.c.l.b16 %v811
      %v826 = vunpack.c.l.b16 %v812
      %v827 = vunpack.c.l.b16 %v813
      %v828 = vunpack.c.l.b16 %v814
      %v829 = vpack.c.b16 %v823, %v822
      %v830 = vpack.c.b16 %v825, %v824
      %v831 = vpack.c.b16 %v827, %v826
      %v832 = vpack.c.b16 %v828, %v828
      %v834 = vsel %vm270, %v829, 0
      %v837 = vsel %vm270, %v830, 0
      %v840 = vsel %vm270, %v831, 0
      %v843 = vsel %vm270, %v832, 0
      %845 = vmatpush.bf16.msra.mxu0 0
      %846 = vmatpush.bf16.msra.mxu0 0
      %847 = vmatpush.bf16.msra.mxu0 0
      %848 = vmatpush.bf16.msra.mxu0 0
      %849 = vmatpush.bf16.msra.mxu0 0
      %850 = vmatpush.bf16.msra.mxu0 0
      %851 = vmatpush.bf16.msra.mxu0 %v267
      %852 = vmatpush.bf16.msra.mxu0 %v266
      %853 = vmatmul.bf16.gmra.mxu0 %v834
      %v854 = vpop.f32.mrf.mxu0
      %v855 = vadd.f32 0.0, %v854
      %v856 = vpop.f32.mrf.mxu0
      %v857 = vadd.f32 0.0, %v856
      %858 = vmatmul.bf16.gmra.mxu0 %v837
      %v859 = vpop.f32.mrf.mxu0
      %v860 = vadd.f32 0.0, %v859
      %v861 = vpop.f32.mrf.mxu0
      %v862 = vadd.f32 0.0, %v861
      %863 = vmatmul.bf16.gmra.mxu0 %v840
      %v864 = vpop.f32.mrf.mxu0
      %v865 = vadd.f32 0.0, %v864
      %v866 = vpop.f32.mrf.mxu0
      %v867 = vadd.f32 0.0, %v866
      %868 = vmatmul.bf16.gmra.mxu0 %v843
      %v869 = vpop.f32.mrf.mxu0
      %v870 = vadd.f32 0.0, %v869
      %v871 = vpop.f32.mrf.mxu0
      %872 = vdwg.mxu0
      %873 = vst [vmem:[#allocation3] sm:$0xff] %v855
      %874 = vst [vmem:[#allocation3 + $0x8] sm:$0xff] %v857
      %875 = vst [vmem:[#allocation3 + $0x10] sm:$0xff] %v860
      %876 = vst [vmem:[#allocation3 + $0x18] sm:$0xff] %v862
      %877 = vst [vmem:[#allocation3 + $0x20] sm:$0xff] %v865
      %878 = vst [vmem:[#allocation3 + $0x28] sm:$0xff] %v867
      %879 = vst [vmem:[#allocation3 + $0x30] sm:$0xff] %v870
      %v880 = vld [vmem:[#allocation3] ss:$2 sm:$0xff]
      %v881 = vld [vmem:[%s319] ss:$2 sm:$0x3f]
      %v882 = vld [vmem:[%s321] ss:$2 sm:$0xff]
      %v883 = vld [vmem:[%s323] ss:$2 sm:$0x3f]
      %v884 = vmax.f32 %v880, %v882
      %v885 = vmax.f32 %v881, %v883
      %v886 = vld [vmem:[%s327] ss:$2 sm:$0xff]
      %v887 = vld [vmem:[%s329] ss:$2 sm:$0x3f]
      %v888 = vld [vmem:[%s331] ss:$2 sm:$0xff]
      %v889 = vld [vmem:[%s333] ss:$2 sm:$0x3f]
      %v890 = vmax.f32 %v886, %v888
      %v891 = vmax.f32 %v887, %v889
      %v892 = vmax.f32 %v884, %v890
      %v893 = vmax.f32 %v885, %v891
      %v894 = vadd.f32 %v892, %v340
      %v895 = vadd.f32 %v893, %v340
      %v896 = vmax.f32 %v894, 0.0
      %v897 = vmax.f32 %v895, 0.0
      %898 = vst [vmem:[#allocation2 + $0x54] sm:$0xff] %v896
      %899 = vst [vmem:[#allocation2 + $0x5c] sm:$0x3f] %v897
      %v900 = vld [vmem:[%s219 + $0xc4] sm:$0xf]
      %v901 = vld [vmem:[%s219 + $0xc8] sm:$0xf]
      %v902 = vld [vmem:[%s219 + $0xcc] sm:$0xf]
      %v903 = vld [vmem:[%s219 + $0xd0] sm:$0xf]
      %v904 = vld [vmem:[%s219 + $0xd4] sm:$0xf]
      %v905 = vld [vmem:[%s219 + $0xd8] sm:$0xf]
      %v906 = vld [vmem:[%s219 + $0xdc] sm:$0xf]
      %v914 = vunpack.c.l.b16 %v900
      %v915 = vunpack.c.l.b16 %v901
      %v916 = vunpack.c.l.b16 %v902
      %v917 = vunpack.c.l.b16 %v903
      %v918 = vunpack.c.l.b16 %v904
      %v919 = vunpack.c.l.b16 %v905
      %v920 = vunpack.c.l.b16 %v906
      %v921 = vpack.c.b16 %v915, %v914
      %v922 = vpack.c.b16 %v917, %v916
      %v923 = vpack.c.b16 %v919, %v918
      %v924 = vpack.c.b16 %v920, %v920
      %v926 = vsel %vm270, %v921, 0
      %v929 = vsel %vm270, %v922, 0
      %v932 = vsel %vm270, %v923, 0
      %v935 = vsel %vm270, %v924, 0
      %937 = vmatpush.bf16.msra.mxu0 0
      %938 = vmatpush.bf16.msra.mxu0 0
      %939 = vmatpush.bf16.msra.mxu0 0
      %940 = vmatpush.bf16.msra.mxu0 0
      %941 = vmatpush.bf16.msra.mxu0 0
      %942 = vmatpush.bf16.msra.mxu0 0
      %943 = vmatpush.bf16.msra.mxu0 %v267
      %944 = vmatpush.bf16.msra.mxu0 %v266
      %945 = vmatmul.bf16.gmra.mxu0 %v926
      %v946 = vpop.f32.mrf.mxu0
      %v947 = vadd.f32 0.0, %v946
      %v948 = vpop.f32.mrf.mxu0
      %v949 = vadd.f32 0.0, %v948
      %950 = vmatmul.bf16.gmra.mxu0 %v929
      %v951 = vpop.f32.mrf.mxu0
      %v952 = vadd.f32 0.0, %v951
      %v953 = vpop.f32.mrf.mxu0
      %v954 = vadd.f32 0.0, %v953
      %955 = vmatmul.bf16.gmra.mxu0 %v932
      %v956 = vpop.f32.mrf.mxu0
      %v957 = vadd.f32 0.0, %v956
      %v958 = vpop.f32.mrf.mxu0
      %v959 = vadd.f32 0.0, %v958
      %960 = vmatmul.bf16.gmra.mxu0 %v935
      %v961 = vpop.f32.mrf.mxu0
      %v962 = vadd.f32 0.0, %v961
      %v963 = vpop.f32.mrf.mxu0
      %964 = vdwg.mxu0
      %965 = vst [vmem:[#allocation3] sm:$0xff] %v947
      %966 = vst [vmem:[#allocation3 + $0x8] sm:$0xff] %v949
      %967 = vst [vmem:[#allocation3 + $0x10] sm:$0xff] %v952
      %968 = vst [vmem:[#allocation3 + $0x18] sm:$0xff] %v954
      %969 = vst [vmem:[#allocation3 + $0x20] sm:$0xff] %v957
      %970 = vst [vmem:[#allocation3 + $0x28] sm:$0xff] %v959
      %971 = vst [vmem:[#allocation3 + $0x30] sm:$0xff] %v962
      %v972 = vld [vmem:[#allocation3] ss:$2 sm:$0xff]
      %v973 = vld [vmem:[%s319] ss:$2 sm:$0x3f]
      %v974 = vld [vmem:[%s321] ss:$2 sm:$0xff]
      %v975 = vld [vmem:[%s323] ss:$2 sm:$0x3f]
      %v976 = vmax.f32 %v972, %v974
      %v977 = vmax.f32 %v973, %v975
      %v978 = vld [vmem:[%s327] ss:$2 sm:$0xff]
      %v979 = vld [vmem:[%s329] ss:$2 sm:$0x3f]
      %v980 = vld [vmem:[%s331] ss:$2 sm:$0xff]
      %v981 = vld [vmem:[%s333] ss:$2 sm:$0x3f]
      %v982 = vmax.f32 %v978, %v980
      %v983 = vmax.f32 %v979, %v981
      %v984 = vmax.f32 %v976, %v982
      %v985 = vmax.f32 %v977, %v983
      %v986 = vadd.f32 %v984, %v340
      %v987 = vadd.f32 %v985, %v340
      %v988 = vmax.f32 %v986, 0.0
      %v989 = vmax.f32 %v987, 0.0
      %990 = vst [vmem:[#allocation2 + $0x62] sm:$0xff] %v988
      %991 = vst [vmem:[#allocation2 + $0x6a] sm:$0x3f] %v989
      %v992 = vld [vmem:[%s219 + $0xe0] sm:$0xf]
      %v993 = vld [vmem:[%s219 + $0xe4] sm:$0xf]
      %v994 = vld [vmem:[%s219 + $0xe8] sm:$0xf]
      %v995 = vld [vmem:[%s219 + $0xec] sm:$0xf]
      %v996 = vld [vmem:[%s219 + $0xf0] sm:$0xf]
      %v997 = vld [vmem:[%s219 + $0xf4] sm:$0xf]
      %v998 = vld [vmem:[%s219 + $0xf8] sm:$0xf]
      %v1006 = vunpack.c.l.b16 %v992
      %v1007 = vunpack.c.l.b16 %v993
      %v1008 = vunpack.c.l.b16 %v994
      %v1009 = vunpack.c.l.b16 %v995
      %v1010 = vunpack.c.l.b16 %v996
      %v1011 = vunpack.c.l.b16 %v997
      %v1012 = vunpack.c.l.b16 %v998
      %v1013 = vpack.c.b16 %v1007, %v1006
      %v1014 = vpack.c.b16 %v1009, %v1008
      %v1015 = vpack.c.b16 %v1011, %v1010
      %v1016 = vpack.c.b16 %v1012, %v1012
      %v1018 = vsel %vm270, %v1013, 0
      %v1021 = vsel %vm270, %v1014, 0
      %v1024 = vsel %vm270, %v1015, 0
      %v1027 = vsel %vm270, %v1016, 0
      %1029 = vmatpush.bf16.msra.mxu0 0
      %1030 = vmatpush.bf16.msra.mxu0 0
      %1031 = vmatpush.bf16.msra.mxu0 0
      %1032 = vmatpush.bf16.msra.mxu0 0
      %1033 = vmatpush.bf16.msra.mxu0 0
      %1034 = vmatpush.bf16.msra.mxu0 0
      %1035 = vmatpush.bf16.msra.mxu0 %v267
      %1036 = vmatpush.bf16.msra.mxu0 %v266
      %1037 = vmatmul.bf16.gmra.mxu0 %v1018
      %v1038 = vpop.f32.mrf.mxu0
      %v1039 = vadd.f32 0.0, %v1038
      %v1040 = vpop.f32.mrf.mxu0
      %v1041 = vadd.f32 0.0, %v1040
      %1042 = vmatmul.bf16.gmra.mxu0 %v1021
      %v1043 = vpop.f32.mrf.mxu0
      %v1044 = vadd.f32 0.0, %v1043
      %v1045 = vpop.f32.mrf.mxu0
      %v1046 = vadd.f32 0.0, %v1045
      %1047 = vmatmul.bf16.gmra.mxu0 %v1024
      %v1048 = vpop.f32.mrf.mxu0
      %v1049 = vadd.f32 0.0, %v1048
      %v1050 = vpop.f32.mrf.mxu0
      %v1051 = vadd.f32 0.0, %v1050
      %1052 = vmatmul.bf16.gmra.mxu0 %v1027
      %v1053 = vpop.f32.mrf.mxu0
      %v1054 = vadd.f32 0.0, %v1053
      %v1055 = vpop.f32.mrf.mxu0
      %1056 = vdwg.mxu0
      %1057 = vst [vmem:[#allocation3] sm:$0xff] %v1039
      %1058 = vst [vmem:[#allocation3 + $0x8] sm:$0xff] %v1041
      %1059 = vst [vmem:[#allocation3 + $0x10] sm:$0xff] %v1044
      %1060 = vst [vmem:[#allocation3 + $0x18] sm:$0xff] %v1046
      %1061 = vst [vmem:[#allocation3 + $0x20] sm:$0xff] %v1049
      %1062 = vst [vmem:[#allocation3 + $0x28] sm:$0xff] %v1051
      %1063 = vst [vmem:[#allocation3 + $0x30] sm:$0xff] %v1054
      %v1064 = vld [vmem:[#allocation3] ss:$2 sm:$0xff]
      %v1065 = vld [vmem:[%s319] ss:$2 sm:$0x3f]
      %v1066 = vld [vmem:[%s321] ss:$2 sm:$0xff]
      %v1067 = vld [vmem:[%s323] ss:$2 sm:$0x3f]
      %v1068 = vmax.f32 %v1064, %v1066
      %v1069 = vmax.f32 %v1065, %v1067
      %v1070 = vld [vmem:[%s327] ss:$2 sm:$0xff]
      %v1071 = vld [vmem:[%s329] ss:$2 sm:$0x3f]
      %v1072 = vld [vmem:[%s331] ss:$2 sm:$0xff]
      %v1073 = vld [vmem:[%s333] ss:$2 sm:$0x3f]
      %v1074 = vmax.f32 %v1070, %v1072
      %v1075 = vmax.f32 %v1071, %v1073
      %v1076 = vmax.f32 %v1068, %v1074
      %v1077 = vmax.f32 %v1069, %v1075
      %v1078 = vadd.f32 %v1076, %v340
      %v1079 = vadd.f32 %v1077, %v340
      %v1080 = vmax.f32 %v1078, 0.0
      %v1081 = vmax.f32 %v1079, 0.0
      %1082 = vst [vmem:[#allocation2 + $0x70] sm:$0xff] %v1080
      %1083 = vst [vmem:[#allocation2 + $0x78] sm:$0x3f] %v1081
      %v1084 = vld [vmem:[%s219 + $0xfc] sm:$0xf]
      %v1085 = vld [vmem:[%s219 + $0x100] sm:$0xf]
      %v1086 = vld [vmem:[%s219 + $0x104] sm:$0xf]
      %v1087 = vld [vmem:[%s219 + $0x108] sm:$0xf]
      %v1088 = vld [vmem:[%s219 + $0x10c] sm:$0xf]
      %v1089 = vld [vmem:[%s219 + $0x110] sm:$0xf]
      %v1090 = vld [vmem:[%s219 + $0x114] sm:$0xf]
      %v1098 = vunpack.c.l.b16 %v1084
      %v1099 = vunpack.c.l.b16 %v1085
      %v1100 = vunpack.c.l.b16 %v1086
      %v1101 = vunpack.c.l.b16 %v1087
      %v1102 = vunpack.c.l.b16 %v1088
      %v1103 = vunpack.c.l.b16 %v1089
      %v1104 = vunpack.c.l.b16 %v1090
      %v1105 = vpack.c.b16 %v1099, %v1098
      %v1106 = vpack.c.b16 %v1101, %v1100
      %v1107 = vpack.c.b16 %v1103, %v1102
      %v1108 = vpack.c.b16 %v1104, %v1104
      %v1110 = vsel %vm270, %v1105, 0
      %v1113 = vsel %vm270, %v1106, 0
      %v1116 = vsel %vm270, %v1107, 0
      %v1119 = vsel %vm270, %v1108, 0
      %1121 = vmatpush.bf16.msra.mxu0 0
      %1122 = vmatpush.bf16.msra.mxu0 0
      %1123 = vmatpush.bf16.msra.mxu0 0
      %1124 = vmatpush.bf16.msra.mxu0 0
      %1125 = vmatpush.bf16.msra.mxu0 0
      %1126 = vmatpush.bf16.msra.mxu0 0
      %1127 = vmatpush.bf16.msra.mxu0 %v267
      %1128 = vmatpush.bf16.msra.mxu0 %v266
      %1129 = vmatmul.bf16.gmra.mxu0 %v1110
      %v1130 = vpop.f32.mrf.mxu0
      %v1131 = vadd.f32 0.0, %v1130
      %v1132 = vpop.f32.mrf.mxu0
      %v1133 = vadd.f32 0.0, %v1132
      %1134 = vmatmul.bf16.gmra.mxu0 %v1113
      %v1135 = vpop.f32.mrf.mxu0
      %v1136 = vadd.f32 0.0, %v1135
      %v1137 = vpop.f32.mrf.mxu0
      %v1138 = vadd.f32 0.0, %v1137
      %1139 = vmatmul.bf16.gmra.mxu0 %v1116
      %v1140 = vpop.f32.mrf.mxu0
      %v1141 = vadd.f32 0.0, %v1140
      %v1142 = vpop.f32.mrf.mxu0
      %v1143 = vadd.f32 0.0, %v1142
      %1144 = vmatmul.bf16.gmra.mxu0 %v1119
      %v1145 = vpop.f32.mrf.mxu0
      %v1146 = vadd.f32 0.0, %v1145
      %v1147 = vpop.f32.mrf.mxu0
      %1148 = vdwg.mxu0
      %1149 = vst [vmem:[#allocation3] sm:$0xff] %v1131
      %1150 = vst [vmem:[#allocation3 + $0x8] sm:$0xff] %v1133
      %1151 = vst [vmem:[#allocation3 + $0x10] sm:$0xff] %v1136
      %1152 = vst [vmem:[#allocation3 + $0x18] sm:$0xff] %v1138
      %1153 = vst [vmem:[#allocation3 + $0x20] sm:$0xff] %v1141
      %1154 = vst [vmem:[#allocation3 + $0x28] sm:$0xff] %v1143
      %1155 = vst [vmem:[#allocation3 + $0x30] sm:$0xff] %v1146
      %v1156 = vld [vmem:[#allocation3] ss:$2 sm:$0xff]
      %v1157 = vld [vmem:[%s319] ss:$2 sm:$0x3f]
      %v1158 = vld [vmem:[%s321] ss:$2 sm:$0xff]
      %v1159 = vld [vmem:[%s323] ss:$2 sm:$0x3f]
      %v1160 = vmax.f32 %v1156, %v1158
      %v1161 = vmax.f32 %v1157, %v1159
      %v1162 = vld [vmem:[%s327] ss:$2 sm:$0xff]
      %v1163 = vld [vmem:[%s329] ss:$2 sm:$0x3f]
      %v1164 = vld [vmem:[%s331] ss:$2 sm:$0xff]
      %v1165 = vld [vmem:[%s333] ss:$2 sm:$0x3f]
      %v1166 = vmax.f32 %v1162, %v1164
      %v1167 = vmax.f32 %v1163, %v1165
      %v1168 = vmax.f32 %v1160, %v1166
      %v1169 = vmax.f32 %v1161, %v1167
      %v1170 = vadd.f32 %v1168, %v340
      %v1171 = vadd.f32 %v1169, %v340
      %v1172 = vmax.f32 %v1170, 0.0
      %v1173 = vmax.f32 %v1171, 0.0
      %1174 = vst [vmem:[#allocation2 + $0x7e] sm:$0xff] %v1172
      %1175 = vst [vmem:[#allocation2 + $0x86] sm:$0x3f] %v1173
      %v1176 = vld [vmem:[%s219 + $0x118] sm:$0xf]
      %v1177 = vld [vmem:[%s219 + $0x11c] sm:$0xf]
      %v1178 = vld [vmem:[%s219 + $0x120] sm:$0xf]
      %v1179 = vld [vmem:[%s219 + $0x124] sm:$0xf]
      %v1180 = vld [vmem:[%s219 + $0x128] sm:$0xf]
      %v1181 = vld [vmem:[%s219 + $0x12c] sm:$0xf]
      %v1182 = vld [vmem:[%s219 + $0x130] sm:$0xf]
      %v1190 = vunpack.c.l.b16 %v1176
      %v1191 = vunpack.c.l.b16 %v1177
      %v1192 = vunpack.c.l.b16 %v1178
      %v1193 = vunpack.c.l.b16 %v1179
      %v1194 = vunpack.c.l.b16 %v1180
      %v1195 = vunpack.c.l.b16 %v1181
      %v1196 = vunpack.c.l.b16 %v1182
      %v1197 = vpack.c.b16 %v1191, %v1190
      %v1198 = vpack.c.b16 %v1193, %v1192
      %v1199 = vpack.c.b16 %v1195, %v1194
      %v1200 = vpack.c.b16 %v1196, %v1196
      %v1202 = vsel %vm270, %v1197, 0
      %v1205 = vsel %vm270, %v1198, 0
      %v1208 = vsel %vm270, %v1199, 0
      %v1211 = vsel %vm270, %v1200, 0
      %1213 = vmatpush.bf16.msra.mxu0 0
      %1214 = vmatpush.bf16.msra.mxu0 0
      %1215 = vmatpush.bf16.msra.mxu0 0
      %1216 = vmatpush.bf16.msra.mxu0 0
      %1217 = vmatpush.bf16.msra.mxu0 0
      %1218 = vmatpush.bf16.msra.mxu0 0
      %1219 = vmatpush.bf16.msra.mxu0 %v267
      %1220 = vmatpush.bf16.msra.mxu0 %v266
      %1221 = vmatmul.bf16.gmra.mxu0 %v1202
      %v1222 = vpop.f32.mrf.mxu0
      %v1223 = vadd.f32 0.0, %v1222
      %v1224 = vpop.f32.mrf.mxu0
      %v1225 = vadd.f32 0.0, %v1224
      %1226 = vmatmul.bf16.gmra.mxu0 %v1205
      %v1227 = vpop.f32.mrf.mxu0
      %v1228 = vadd.f32 0.0, %v1227
      %v1229 = vpop.f32.mrf.mxu0
      %v1230 = vadd.f32 0.0, %v1229
      %1231 = vmatmul.bf16.gmra.mxu0 %v1208
      %v1232 = vpop.f32.mrf.mxu0
      %v1233 = vadd.f32 0.0, %v1232
      %v1234 = vpop.f32.mrf.mxu0
      %v1235 = vadd.f32 0.0, %v1234
      %1236 = vmatmul.bf16.gmra.mxu0 %v1211
      %v1237 = vpop.f32.mrf.mxu0
      %v1238 = vadd.f32 0.0, %v1237
      %v1239 = vpop.f32.mrf.mxu0
      %1240 = vdwg.mxu0
      %1241 = vst [vmem:[#allocation3] sm:$0xff] %v1223
      %1242 = vst [vmem:[#allocation3 + $0x8] sm:$0xff] %v1225
      %1243 = vst [vmem:[#allocation3 + $0x10] sm:$0xff] %v1228
      %1244 = vst [vmem:[#allocation3 + $0x18] sm:$0xff] %v1230
      %1245 = vst [vmem:[#allocation3 + $0x20] sm:$0xff] %v1233
      %1246 = vst [vmem:[#allocation3 + $0x28] sm:$0xff] %v1235
      %1247 = vst [vmem:[#allocation3 + $0x30] sm:$0xff] %v1238
      %v1248 = vld [vmem:[#allocation3] ss:$2 sm:$0xff]
      %v1249 = vld [vmem:[%s319] ss:$2 sm:$0x3f]
      %v1250 = vld [vmem:[%s321] ss:$2 sm:$0xff]
      %v1251 = vld [vmem:[%s323] ss:$2 sm:$0x3f]
      %v1252 = vmax.f32 %v1248, %v1250
      %v1253 = vmax.f32 %v1249, %v1251
      %v1254 = vld [vmem:[%s327] ss:$2 sm:$0xff]
      %v1255 = vld [vmem:[%s329] ss:$2 sm:$0x3f]
      %v1256 = vld [vmem:[%s331] ss:$2 sm:$0xff]
      %v1257 = vld [vmem:[%s333] ss:$2 sm:$0x3f]
      %v1258 = vmax.f32 %v1254, %v1256
      %v1259 = vmax.f32 %v1255, %v1257
      %v1260 = vmax.f32 %v1252, %v1258
      %v1261 = vmax.f32 %v1253, %v1259
      %v1262 = vadd.f32 %v1260, %v340
      %v1263 = vadd.f32 %v1261, %v340
      %v1264 = vmax.f32 %v1262, 0.0
      %v1265 = vmax.f32 %v1263, 0.0
      %1266 = vst [vmem:[#allocation2 + $0x8c] sm:$0xff] %v1264
      %1267 = vst [vmem:[#allocation2 + $0x94] sm:$0x3f] %v1265
      %v1268 = vld [vmem:[%s219 + $0x134] sm:$0xf]
      %v1269 = vld [vmem:[%s219 + $0x138] sm:$0xf]
      %v1270 = vld [vmem:[%s219 + $0x13c] sm:$0xf]
      %v1271 = vld [vmem:[%s219 + $0x140] sm:$0xf]
      %v1272 = vld [vmem:[%s219 + $0x144] sm:$0xf]
      %v1273 = vld [vmem:[%s219 + $0x148] sm:$0xf]
      %v1274 = vld [vmem:[%s219 + $0x14c] sm:$0xf]
      %v1282 = vunpack.c.l.b16 %v1268
      %v1283 = vunpack.c.l.b16 %v1269
      %v1284 = vunpack.c.l.b16 %v1270
      %v1285 = vunpack.c.l.b16 %v1271
      %v1286 = vunpack.c.l.b16 %v1272
      %v1287 = vunpack.c.l.b16 %v1273
      %v1288 = vunpack.c.l.b16 %v1274
      %v1289 = vpack.c.b16 %v1283, %v1282
      %v1290 = vpack.c.b16 %v1285, %v1284
      %v1291 = vpack.c.b16 %v1287, %v1286
      %v1292 = vpack.c.b16 %v1288, %v1288
      %v1294 = vsel %vm270, %v1289, 0
      %v1297 = vsel %vm270, %v1290, 0
      %v1300 = vsel %vm270, %v1291, 0
      %v1303 = vsel %vm270, %v1292, 0
      %1305 = vmatpush.bf16.msra.mxu0 0
      %1306 = vmatpush.bf16.msra.mxu0 0
      %1307 = vmatpush.bf16.msra.mxu0 0
      %1308 = vmatpush.bf16.msra.mxu0 0
      %1309 = vmatpush.bf16.msra.mxu0 0
      %1310 = vmatpush.bf16.msra.mxu0 0
      %1311 = vmatpush.bf16.msra.mxu0 %v267
      %1312 = vmatpush.bf16.msra.mxu0 %v266
      %1313 = vmatmul.bf16.gmra.mxu0 %v1294
      %v1314 = vpop.f32.mrf.mxu0
      %v1315 = vadd.f32 0.0, %v1314
      %v1316 = vpop.f32.mrf.mxu0
      %v1317 = vadd.f32 0.0, %v1316
      %1318 = vmatmul.bf16.gmra.mxu0 %v1297
      %v1319 = vpop.f32.mrf.mxu0
      %v1320 = vadd.f32 0.0, %v1319
      %v1321 = vpop.f32.mrf.mxu0
      %v1322 = vadd.f32 0.0, %v1321
      %1323 = vmatmul.bf16.gmra.mxu0 %v1300
      %v1324 = vpop.f32.mrf.mxu0
      %v1325 = vadd.f32 0.0, %v1324
      %v1326 = vpop.f32.mrf.mxu0
      %v1327 = vadd.f32 0.0, %v1326
      %1328 = vmatmul.bf16.gmra.mxu0 %v1303
      %v1329 = vpop.f32.mrf.mxu0
      %v1330 = vadd.f32 0.0, %v1329
      %v1331 = vpop.f32.mrf.mxu0
      %1332 = vdwg.mxu0
      %1333 = vst [vmem:[#allocation3] sm:$0xff] %v1315
      %1334 = vst [vmem:[#allocation3 + $0x8] sm:$0xff] %v1317
      %1335 = vst [vmem:[#allocation3 + $0x10] sm:$0xff] %v1320
      %1336 = vst [vmem:[#allocation3 + $0x18] sm:$0xff] %v1322
      %1337 = vst [vmem:[#allocation3 + $0x20] sm:$0xff] %v1325
      %1338 = vst [vmem:[#allocation3 + $0x28] sm:$0xff] %v1327
      %1339 = vst [vmem:[#allocation3 + $0x30] sm:$0xff] %v1330
      %v1340 = vld [vmem:[#allocation3] ss:$2 sm:$0xff]
      %v1341 = vld [vmem:[%s319] ss:$2 sm:$0x3f]
      %v1342 = vld [vmem:[%s321] ss:$2 sm:$0xff]
      %v1343 = vld [vmem:[%s323] ss:$2 sm:$0x3f]
      %v1344 = vmax.f32 %v1340, %v1342
      %v1345 = vmax.f32 %v1341, %v1343
      %v1346 = vld [vmem:[%s327] ss:$2 sm:$0xff]
      %v1347 = vld [vmem:[%s329] ss:$2 sm:$0x3f]
      %v1348 = vld [vmem:[%s331] ss:$2 sm:$0xff]
      %v1349 = vld [vmem:[%s333] ss:$2 sm:$0x3f]
      %v1350 = vmax.f32 %v1346, %v1348
      %v1351 = vmax.f32 %v1347, %v1349
      %v1352 = vmax.f32 %v1344, %v1350
      %v1353 = vmax.f32 %v1345, %v1351
      %v1354 = vadd.f32 %v1352, %v340
      %v1355 = vadd.f32 %v1353, %v340
      %v1356 = vmax.f32 %v1354, 0.0
      %v1357 = vmax.f32 %v1355, 0.0
      %1358 = vst [vmem:[#allocation2 + $0x9a] sm:$0xff] %v1356
      %1359 = vst [vmem:[#allocation2 + $0xa2] sm:$0x3f] %v1357
      %v1360 = vld [vmem:[%s219 + $0x150] sm:$0xf]
      %v1361 = vld [vmem:[%s219 + $0x154] sm:$0xf]
      %v1362 = vld [vmem:[%s219 + $0x158] sm:$0xf]
      %v1363 = vld [vmem:[%s219 + $0x15c] sm:$0xf]
      %v1364 = vld [vmem:[%s219 + $0x160] sm:$0xf]
      %v1365 = vld [vmem:[%s219 + $0x164] sm:$0xf]
      %v1366 = vld [vmem:[%s219 + $0x168] sm:$0xf]
      %v1374 = vunpack.c.l.b16 %v1360
      %v1375 = vunpack.c.l.b16 %v1361
      %v1376 = vunpack.c.l.b16 %v1362
      %v1377 = vunpack.c.l.b16 %v1363
      %v1378 = vunpack.c.l.b16 %v1364
      %v1379 = vunpack.c.l.b16 %v1365
      %v1380 = vunpack.c.l.b16 %v1366
      %v1381 = vpack.c.b16 %v1375, %v1374
      %v1382 = vpack.c.b16 %v1377, %v1376
      %v1383 = vpack.c.b16 %v1379, %v1378
      %v1384 = vpack.c.b16 %v1380, %v1380
      %v1386 = vsel %vm270, %v1381, 0
      %v1389 = vsel %vm270, %v1382, 0
      %v1392 = vsel %vm270, %v1383, 0
      %v1395 = vsel %vm270, %v1384, 0
      %1397 = vmatpush.bf16.msra.mxu0 0
      %1398 = vmatpush.bf16.msra.mxu0 0
      %1399 = vmatpush.bf16.msra.mxu0 0
      %1400 = vmatpush.bf16.msra.mxu0 0
      %1401 = vmatpush.bf16.msra.mxu0 0
      %1402 = vmatpush.bf16.msra.mxu0 0
      %1403 = vmatpush.bf16.msra.mxu0 %v267
      %1404 = vmatpush.bf16.msra.mxu0 %v266
      %1405 = vmatmul.bf16.gmra.mxu0 %v1386
      %v1406 = vpop.f32.mrf.mxu0
      %v1407 = vadd.f32 0.0, %v1406
      %v1408 = vpop.f32.mrf.mxu0
      %v1409 = vadd.f32 0.0, %v1408
      %1410 = vmatmul.bf16.gmra.mxu0 %v1389
      %v1411 = vpop.f32.mrf.mxu0
      %v1412 = vadd.f32 0.0, %v1411
      %v1413 = vpop.f32.mrf.mxu0
      %v1414 = vadd.f32 0.0, %v1413
      %1415 = vmatmul.bf16.gmra.mxu0 %v1392
      %v1416 = vpop.f32.mrf.mxu0
      %v1417 = vadd.f32 0.0, %v1416
      %v1418 = vpop.f32.mrf.mxu0
      %v1419 = vadd.f32 0.0, %v1418
      %1420 = vmatmul.bf16.gmra.mxu0 %v1395
      %v1421 = vpop.f32.mrf.mxu0
      %v1422 = vadd.f32 0.0, %v1421
      %v1423 = vpop.f32.mrf.mxu0
      %1424 = vdwg.mxu0
      %1425 = vst [vmem:[#allocation3] sm:$0xff] %v1407
      %1426 = vst [vmem:[#allocation3 + $0x8] sm:$0xff] %v1409
      %1427 = vst [vmem:[#allocation3 + $0x10] sm:$0xff] %v1412
      %1428 = vst [vmem:[#allocation3 + $0x18] sm:$0xff] %v1414
      %1429 = vst [vmem:[#allocation3 + $0x20] sm:$0xff] %v1417
      %1430 = vst [vmem:[#allocation3 + $0x28] sm:$0xff] %v1419
      %1431 = vst [vmem:[#allocation3 + $0x30] sm:$0xff] %v1422
      %v1432 = vld [vmem:[#allocation3] ss:$2 sm:$0xff]
      %v1433 = vld [vmem:[%s319] ss:$2 sm:$0x3f]
      %v1434 = vld [vmem:[%s321] ss:$2 sm:$0xff]
      %v1435 = vld [vmem:[%s323] ss:$2 sm:$0x3f]
      %v1436 = vmax.f32 %v1432, %v1434
      %v1437 = vmax.f32 %v1433, %v1435
      %v1438 = vld [vmem:[%s327] ss:$2 sm:$0xff]
      %v1439 = vld [vmem:[%s329] ss:$2 sm:$0x3f]
      %v1440 = vld [vmem:[%s331] ss:$2 sm:$0xff]
      %v1441 = vld [vmem:[%s333] ss:$2 sm:$0x3f]
      %v1442 = vmax.f32 %v1438, %v1440
      %v1443 = vmax.f32 %v1439, %v1441
      %v1444 = vmax.f32 %v1436, %v1442
      %v1445 = vmax.f32 %v1437, %v1443
      %v1446 = vadd.f32 %v1444, %v340
      %v1447 = vadd.f32 %v1445, %v340
      %v1448 = vmax.f32 %v1446, 0.0
      %v1449 = vmax.f32 %v1447, 0.0
      %1450 = vst [vmem:[#allocation2 + $0xa8] sm:$0xff] %v1448
      %1451 = vst [vmem:[#allocation2 + $0xb0] sm:$0x3f] %v1449
      %v1452 = vld [vmem:[%s219 + $0x16c] sm:$0xf]
      %v1453 = vld [vmem:[%s219 + $0x170] sm:$0xf]
      %v1454 = vld [vmem:[%s219 + $0x174] sm:$0xf]
      %v1455 = vld [vmem:[%s219 + $0x178] sm:$0xf]
      %v1456 = vld [vmem:[%s219 + $0x17c] sm:$0xf]
      %v1457 = vld [vmem:[%s219 + $0x180] sm:$0xf]
      %v1458 = vld [vmem:[%s219 + $0x184] sm:$0xf]
      %v1466 = vunpack.c.l.b16 %v1452
      %v1467 = vunpack.c.l.b16 %v1453
      %v1468 = vunpack.c.l.b16 %v1454
      %v1469 = vunpack.c.l.b16 %v1455
      %v1470 = vunpack.c.l.b16 %v1456
      %v1471 = vunpack.c.l.b16 %v1457
      %v1472 = vunpack.c.l.b16 %v1458
      %v1473 = vpack.c.b16 %v1467, %v1466
      %v1474 = vpack.c.b16 %v1469, %v1468
      %v1475 = vpack.c.b16 %v1471, %v1470
      %v1476 = vpack.c.b16 %v1472, %v1472
      %v1478 = vsel %vm270, %v1473, 0
      %v1481 = vsel %vm270, %v1474, 0
      %v1484 = vsel %vm270, %v1475, 0
      %v1487 = vsel %vm270, %v1476, 0
      %1489 = vmatpush.bf16.msra.mxu0 0
      %1490 = vmatpush.bf16.msra.mxu0 0
      %1491 = vmatpush.bf16.msra.mxu0 0
      %1492 = vmatpush.bf16.msra.mxu0 0
      %1493 = vmatpush.bf16.msra.mxu0 0
      %1494 = vmatpush.bf16.msra.mxu0 0
      %1495 = vmatpush.bf16.msra.mxu0 %v267
      %1496 = vmatpush.bf16.msra.mxu0 %v266
      %1497 = vmatmul.bf16.gmra.mxu0 %v1478
      %v1498 = vpop.f32.mrf.mxu0
      %v1499 = vadd.f32 0.0, %v1498
      %v1500 = vpop.f32.mrf.mxu0
      %v1501 = vadd.f32 0.0, %v1500
      %1502 = vmatmul.bf16.gmra.mxu0 %v1481
      %v1503 = vpop.f32.mrf.mxu0
      %v1504 = vadd.f32 0.0, %v1503
      %v1505 = vpop.f32.mrf.mxu0
      %v1506 = vadd.f32 0.0, %v1505
      %1507 = vmatmul.bf16.gmra.mxu0 %v1484
      %v1508 = vpop.f32.mrf.mxu0
      %v1509 = vadd.f32 0.0, %v1508
      %v1510 = vpop.f32.mrf.mxu0
      %v1511 = vadd.f32 0.0, %v1510
      %1512 = vmatmul.bf16.gmra.mxu0 %v1487
      %v1513 = vpop.f32.mrf.mxu0
      %v1514 = vadd.f32 0.0, %v1513
      %v1515 = vpop.f32.mrf.mxu0
      %1516 = vdwg.mxu0
      %1517 = vst [vmem:[#allocation3] sm:$0xff] %v1499
      %1518 = vst [vmem:[#allocation3 + $0x8] sm:$0xff] %v1501
      %1519 = vst [vmem:[#allocation3 + $0x10] sm:$0xff] %v1504
      %1520 = vst [vmem:[#allocation3 + $0x18] sm:$0xff] %v1506
      %1521 = vst [vmem:[#allocation3 + $0x20] sm:$0xff] %v1509
      %1522 = vst [vmem:[#allocation3 + $0x28] sm:$0xff] %v1511
      %1523 = vst [vmem:[#allocation3 + $0x30] sm:$0xff] %v1514
      %v1524 = vld [vmem:[#allocation3] ss:$2 sm:$0xff]
      %v1525 = vld [vmem:[%s319] ss:$2 sm:$0x3f]
      %v1526 = vld [vmem:[%s321] ss:$2 sm:$0xff]
      %v1527 = vld [vmem:[%s323] ss:$2 sm:$0x3f]
      %v1528 = vmax.f32 %v1524, %v1526
      %v1529 = vmax.f32 %v1525, %v1527
      %v1530 = vld [vmem:[%s327] ss:$2 sm:$0xff]
      %v1531 = vld [vmem:[%s329] ss:$2 sm:$0x3f]
      %v1532 = vld [vmem:[%s331] ss:$2 sm:$0xff]
      %v1533 = vld [vmem:[%s333] ss:$2 sm:$0x3f]
      %v1534 = vmax.f32 %v1530, %v1532
      %v1535 = vmax.f32 %v1531, %v1533
      %v1536 = vmax.f32 %v1528, %v1534
      %v1537 = vmax.f32 %v1529, %v1535
      %v1538 = vadd.f32 %v1536, %v340
      %v1539 = vadd.f32 %v1537, %v340
      %v1540 = vmax.f32 %v1538, 0.0
      %v1541 = vmax.f32 %v1539, 0.0
      %1542 = vst [vmem:[#allocation2 + $0xb6] sm:$0xff] %v1540
      %1543 = vst [vmem:[#allocation2 + $0xbe] sm:$0x3f] %v1541
      %v1544 = vld [vmem:[#allocation2] sm:$0xff]
      %v1545 = vld [vmem:[#allocation2 + $0x8] sm:$0xff]
      %v1546 = vld [vmem:[#allocation2 + $0x10] sm:$0xff]
      %v1547 = vld [vmem:[#allocation2 + $0x18] sm:$0xf]
      %v1548 = vpack.c.bf16 %v1545, %v1544
      %v1549 = vpack.c.bf16 %v1547, %v1546
      %v1550 = vld [vmem:[%s3] sm:$0xf]
      %v1551 = vld [vmem:[%s3 + $0x4] sm:$0xf]
      %v1552 = vld [vmem:[%s3 + $0x8] sm:$0xf]
      %v1553 = vld [vmem:[%s3 + $0xc] sm:$0xf]
      %v1554 = vld [vmem:[%s3 + $0x10] sm:$0xf]
      %v1555 = vld [vmem:[%s3 + $0x14] sm:$0xf]
      %v1556 = vld [vmem:[%s3 + $0x18] sm:$0xf]
      %v1557 = vld [vmem:[%s3 + $0x1c] sm:$0xf]
      %v1558 = vld [vmem:[%s3 + $0x20] sm:$0xf]
      %v1559 = vld [vmem:[%s3 + $0x24] sm:$0xf]
      %v1560 = vld [vmem:[%s3 + $0x28] sm:$0xf]
      %v1561 = vld [vmem:[%s3 + $0x2c] sm:$0xf]
      %v1562 = vld [vmem:[%s3 + $0x30] sm:$0xf]
      %v1563 = vld [vmem:[%s3 + $0x34] sm:$0xf]
      %v1564 = vld [vmem:[%s3 + $0x38] sm:$0xf]
      %v1565 = vld [vmem:[%s3 + $0x3c] sm:$0xf]
      %v1566 = vld [vmem:[#allocation2 + $0x1] sm:$0xff]
      %v1567 = vld [vmem:[#allocation2 + $0x9] sm:$0xff]
      %v1568 = vld [vmem:[#allocation2 + $0x11] sm:$0xff]
      %v1569 = vld [vmem:[#allocation2 + $0x19] sm:$0xf]
      %v1570 = vpack.c.bf16 %v1567, %v1566
      %v1571 = vpack.c.bf16 %v1569, %v1568
      %v1572 = vld [vmem:[%s3 + $0x40] sm:$0xf]
      %v1573 = vld [vmem:[%s3 + $0x44] sm:$0xf]
      %v1574 = vld [vmem:[%s3 + $0x48] sm:$0xf]
      %v1575 = vld [vmem:[%s3 + $0x4c] sm:$0xf]
      %v1576 = vld [vmem:[%s3 + $0x50] sm:$0xf]
      %v1577 = vld [vmem:[%s3 + $0x54] sm:$0xf]
      %v1578 = vld [vmem:[%s3 + $0x58] sm:$0xf]
      %v1579 = vld [vmem:[%s3 + $0x5c] sm:$0xf]
      %v1580 = vld [vmem:[%s3 + $0x60] sm:$0xf]
      %v1581 = vld [vmem:[%s3 + $0x64] sm:$0xf]
      %v1582 = vld [vmem:[%s3 + $0x68] sm:$0xf]
      %v1583 = vld [vmem:[%s3 + $0x6c] sm:$0xf]
      %v1584 = vld [vmem:[%s3 + $0x70] sm:$0xf]
      %v1585 = vld [vmem:[%s3 + $0x74] sm:$0xf]
      %v1586 = vld [vmem:[%s3 + $0x78] sm:$0xf]
      %v1587 = vld [vmem:[%s3 + $0x7c] sm:$0xf]
      %v1604 = vunpack.c.l.b16 %v1572
      %v1605 = vunpack.c.l.b16 %v1573
      %v1606 = vunpack.c.l.b16 %v1574
      %v1607 = vunpack.c.l.b16 %v1575
      %v1608 = vunpack.c.l.b16 %v1576
      %v1609 = vunpack.c.l.b16 %v1577
      %v1610 = vunpack.c.l.b16 %v1578
      %v1611 = vunpack.c.l.b16 %v1579
      %v1612 = vunpack.c.l.b16 %v1580
      %v1613 = vunpack.c.l.b16 %v1581
      %v1614 = vunpack.c.l.b16 %v1582
      %v1615 = vunpack.c.l.b16 %v1583
      %v1616 = vunpack.c.l.b16 %v1584
      %v1617 = vunpack.c.l.b16 %v1585
      %v1618 = vunpack.c.l.b16 %v1586
      %v1619 = vunpack.c.l.b16 %v1587
      %v1620 = vpack.c.b16 %v1605, %v1604
      %v1621 = vpack.c.b16 %v1607, %v1606
      %v1622 = vpack.c.b16 %v1609, %v1608
      %v1623 = vpack.c.b16 %v1611, %v1610
      %v1624 = vpack.c.b16 %v1613, %v1612
      %v1625 = vpack.c.b16 %v1615, %v1614
      %v1626 = vpack.c.b16 %v1617, %v1616
      %v1627 = vpack.c.b16 %v1619, %v1618
      %1636 = vmatpush.bf16.msra.mxu0 %v1627
      %1637 = vmatpush.bf16.msra.mxu0 %v1626
      %1638 = vmatpush.bf16.msra.mxu0 %v1625
      %1639 = vmatpush.bf16.msra.mxu0 %v1624
      %1640 = vmatpush.bf16.msra.mxu0 %v1623
      %1641 = vmatpush.bf16.msra.mxu0 %v1622
      %1642 = vmatpush.bf16.msra.mxu0 %v1621
      %1643 = vmatpush.bf16.msra.mxu0 %v1620
      %1644 = vmatmul.bf16.gmra.mxu0 %v1570
      %v1645 = vpop.f32.mrf.mxu0
      %v1646 = vadd.f32 0.0, %v1645
      %v1647 = vpop.f32.mrf.mxu0
      %v1648 = vadd.f32 0.0, %v1647
      %1649 = vmatmul.bf16.gmra.mxu0 %v1571
      %v1650 = vpop.f32.mrf.mxu0
      %v1651 = vadd.f32 0.0, %v1650
      %v1652 = vpop.f32.mrf.mxu0
      %v1653 = vadd.f32 0.0, %v1652
      %1654 = vdwg.mxu0
      %v1671 = vunpack.c.l.b16 %v1550
      %v1672 = vunpack.c.l.b16 %v1551
      %v1673 = vunpack.c.l.b16 %v1552
      %v1674 = vunpack.c.l.b16 %v1553
      %v1675 = vunpack.c.l.b16 %v1554
      %v1676 = vunpack.c.l.b16 %v1555
      %v1677 = vunpack.c.l.b16 %v1556
      %v1678 = vunpack.c.l.b16 %v1557
      %v1679 = vunpack.c.l.b16 %v1558
      %v1680 = vunpack.c.l.b16 %v1559
      %v1681 = vunpack.c.l.b16 %v1560
      %v1682 = vunpack.c.l.b16 %v1561
      %v1683 = vunpack.c.l.b16 %v1562
      %v1684 = vunpack.c.l.b16 %v1563
      %v1685 = vunpack.c.l.b16 %v1564
      %v1686 = vunpack.c.l.b16 %v1565
      %v1687 = vpack.c.b16 %v1672, %v1671
      %v1688 = vpack.c.b16 %v1674, %v1673
      %v1689 = vpack.c.b16 %v1676, %v1675
      %v1690 = vpack.c.b16 %v1678, %v1677
      %v1691 = vpack.c.b16 %v1680, %v1679
      %v1692 = vpack.c.b16 %v1682, %v1681
      %v1693 = vpack.c.b16 %v1684, %v1683
      %v1694 = vpack.c.b16 %v1686, %v1685
      %1703 = vmatpush.bf16.msra.mxu0 %v1694
      %1704 = vmatpush.bf16.msra.mxu0 %v1693
      %1705 = vmatpush.bf16.msra.mxu0 %v1692
      %1706 = vmatpush.bf16.msra.mxu0 %v1691
      %1707 = vmatpush.bf16.msra.mxu0 %v1690
      %1708 = vmatpush.bf16.msra.mxu0 %v1689
      %1709 = vmatpush.bf16.msra.mxu0 %v1688
      %1710 = vmatpush.bf16.msra.mxu0 %v1687
      %1711 = vmatmul.bf16.gmra.mxu0 %v1548
      %v1712 = vpop.f32.mrf.mxu0
      %v1713 = vadd.f32 %v1646, %v1712
      %v1714 = vpop.f32.mrf.mxu0
      %v1715 = vadd.f32 %v1648, %v1714
      %1716 = vmatmul.bf16.gmra.mxu0 %v1549
      %v1717 = vpop.f32.mrf.mxu0
      %v1718 = vadd.f32 %v1651, %v1717
      %v1719 = vpop.f32.mrf.mxu0
      %v1720 = vadd.f32 %v1653, %v1719
      %1721 = vdwg.mxu0
      %v1722 = vld [vmem:[#allocation2 + $0x2] sm:$0xff]
      %v1723 = vld [vmem:[#allocation2 + $0xa] sm:$0xff]
      %v1724 = vld [vmem:[#allocation2 + $0x12] sm:$0xff]
      %v1725 = vld [vmem:[#allocation2 + $0x1a] sm:$0xf]
      %v1726 = vpack.c.bf16 %v1723, %v1722
      %v1727 = vpack.c.bf16 %v1725, %v1724
      %v1728 = vld [vmem:[%s3 + $0x80] sm:$0xf]
      %v1729 = vld [vmem:[%s3 + $0x84] sm:$0xf]
      %v1730 = vld [vmem:[%s3 + $0x88] sm:$0xf]
      %v1731 = vld [vmem:[%s3 + $0x8c] sm:$0xf]
      %v1732 = vld [vmem:[%s3 + $0x90] sm:$0xf]
      %v1733 = vld [vmem:[%s3 + $0x94] sm:$0xf]
      %v1734 = vld [vmem:[%s3 + $0x98] sm:$0xf]
      %v1735 = vld [vmem:[%s3 + $0x9c] sm:$0xf]
      %v1736 = vld [vmem:[%s3 + $0xa0] sm:$0xf]
      %v1737 = vld [vmem:[%s3 + $0xa4] sm:$0xf]
      %v1738 = vld [vmem:[%s3 + $0xa8] sm:$0xf]
      %v1739 = vld [vmem:[%s3 + $0xac] sm:$0xf]
      %v1740 = vld [vmem:[%s3 + $0xb0] sm:$0xf]
      %v1741 = vld [vmem:[%s3 + $0xb4] sm:$0xf]
      %v1742 = vld [vmem:[%s3 + $0xb8] sm:$0xf]
      %v1743 = vld [vmem:[%s3 + $0xbc] sm:$0xf]
      %v1760 = vunpack.c.l.b16 %v1728
      %v1761 = vunpack.c.l.b16 %v1729
      %v1762 = vunpack.c.l.b16 %v1730
      %v1763 = vunpack.c.l.b16 %v1731
      %v1764 = vunpack.c.l.b16 %v1732
      %v1765 = vunpack.c.l.b16 %v1733
      %v1766 = vunpack.c.l.b16 %v1734
      %v1767 = vunpack.c.l.b16 %v1735
      %v1768 = vunpack.c.l.b16 %v1736
      %v1769 = vunpack.c.l.b16 %v1737
      %v1770 = vunpack.c.l.b16 %v1738
      %v1771 = vunpack.c.l.b16 %v1739
      %v1772 = vunpack.c.l.b16 %v1740
      %v1773 = vunpack.c.l.b16 %v1741
      %v1774 = vunpack.c.l.b16 %v1742
      %v1775 = vunpack.c.l.b16 %v1743
      %v1776 = vpack.c.b16 %v1761, %v1760
      %v1777 = vpack.c.b16 %v1763, %v1762
      %v1778 = vpack.c.b16 %v1765, %v1764
      %v1779 = vpack.c.b16 %v1767, %v1766
      %v1780 = vpack.c.b16 %v1769, %v1768
      %v1781 = vpack.c.b16 %v1771, %v1770
      %v1782 = vpack.c.b16 %v1773, %v1772
      %v1783 = vpack.c.b16 %v1775, %v1774
      %1792 = vmatpush.bf16.msra.mxu0 %v1783
      %1793 = vmatpush.bf16.msra.mxu0 %v1782
      %1794 = vmatpush.bf16.msra.mxu0 %v1781
      %1795 = vmatpush.bf16.msra.mxu0 %v1780
      %1796 = vmatpush.bf16.msra.mxu0 %v1779
      %1797 = vmatpush.bf16.msra.mxu0 %v1778
      %1798 = vmatpush.bf16.msra.mxu0 %v1777
      %1799 = vmatpush.bf16.msra.mxu0 %v1776
      %1800 = vmatmul.bf16.gmra.mxu0 %v1726
      %v1801 = vpop.f32.mrf.mxu0
      %v1802 = vadd.f32 0.0, %v1801
      %v1803 = vpop.f32.mrf.mxu0
      %v1804 = vadd.f32 0.0, %v1803
      %1805 = vmatmul.bf16.gmra.mxu0 %v1727
      %v1806 = vpop.f32.mrf.mxu0
      %v1807 = vadd.f32 0.0, %v1806
      %v1808 = vpop.f32.mrf.mxu0
      %v1809 = vadd.f32 0.0, %v1808
      %1810 = vdwg.mxu0
      %v1811 = vadd.f32 %v1713, %v1802
      %v1812 = vadd.f32 %v1715, %v1804
      %v1813 = vadd.f32 %v1718, %v1807
      %v1814 = vadd.f32 %v1720, %v1809
      %v1815 = vld [vmem:[#allocation2 + $0xe] sm:$0xff]
      %v1816 = vld [vmem:[#allocation2 + $0x16] sm:$0xff]
      %v1817 = vld [vmem:[#allocation2 + $0x1e] sm:$0xff]
      %v1818 = vld [vmem:[#allocation2 + $0x26] sm:$0xf]
      %v1819 = vpack.c.bf16 %v1816, %v1815
      %v1820 = vpack.c.bf16 %v1818, %v1817
      %v1821 = vld [vmem:[%s3 + $0xc0] sm:$0xf]
      %v1822 = vld [vmem:[%s3 + $0xc4] sm:$0xf]
      %v1823 = vld [vmem:[%s3 + $0xc8] sm:$0xf]
      %v1824 = vld [vmem:[%s3 + $0xcc] sm:$0xf]
      %v1825 = vld [vmem:[%s3 + $0xd0] sm:$0xf]
      %v1826 = vld [vmem:[%s3 + $0xd4] sm:$0xf]
      %v1827 = vld [vmem:[%s3 + $0xd8] sm:$0xf]
      %v1828 = vld [vmem:[%s3 + $0xdc] sm:$0xf]
      %v1829 = vld [vmem:[%s3 + $0xe0] sm:$0xf]
      %v1830 = vld [vmem:[%s3 + $0xe4] sm:$0xf]
      %v1831 = vld [vmem:[%s3 + $0xe8] sm:$0xf]
      %v1832 = vld [vmem:[%s3 + $0xec] sm:$0xf]
      %v1833 = vld [vmem:[%s3 + $0xf0] sm:$0xf]
      %v1834 = vld [vmem:[%s3 + $0xf4] sm:$0xf]
      %v1835 = vld [vmem:[%s3 + $0xf8] sm:$0xf]
      %v1836 = vld [vmem:[%s3 + $0xfc] sm:$0xf]
      %v1853 = vunpack.c.l.b16 %v1821
      %v1854 = vunpack.c.l.b16 %v1822
      %v1855 = vunpack.c.l.b16 %v1823
      %v1856 = vunpack.c.l.b16 %v1824
      %v1857 = vunpack.c.l.b16 %v1825
      %v1858 = vunpack.c.l.b16 %v1826
      %v1859 = vunpack.c.l.b16 %v1827
      %v1860 = vunpack.c.l.b16 %v1828
      %v1861 = vunpack.c.l.b16 %v1829
      %v1862 = vunpack.c.l.b16 %v1830
      %v1863 = vunpack.c.l.b16 %v1831
      %v1864 = vunpack.c.l.b16 %v1832
      %v1865 = vunpack.c.l.b16 %v1833
      %v1866 = vunpack.c.l.b16 %v1834
      %v1867 = vunpack.c.l.b16 %v1835
      %v1868 = vunpack.c.l.b16 %v1836
      %v1869 = vpack.c.b16 %v1854, %v1853
      %v1870 = vpack.c.b16 %v1856, %v1855
      %v1871 = vpack.c.b16 %v1858, %v1857
      %v1872 = vpack.c.b16 %v1860, %v1859
      %v1873 = vpack.c.b16 %v1862, %v1861
      %v1874 = vpack.c.b16 %v1864, %v1863
      %v1875 = vpack.c.b16 %v1866, %v1865
      %v1876 = vpack.c.b16 %v1868, %v1867
      %1885 = vmatpush.bf16.msra.mxu0 %v1876
      %1886 = vmatpush.bf16.msra.mxu0 %v1875
      %1887 = vmatpush.bf16.msra.mxu0 %v1874
      %1888 = vmatpush.bf16.msra.mxu0 %v1873
      %1889 = vmatpush.bf16.msra.mxu0 %v1872
      %1890 = vmatpush.bf16.msra.mxu0 %v1871
      %1891 = vmatpush.bf16.msra.mxu0 %v1870
      %1892 = vmatpush.bf16.msra.mxu0 %v1869
      %1893 = vmatmul.bf16.gmra.mxu0 %v1819
      %v1894 = vpop.f32.mrf.mxu0
      %v1895 = vadd.f32 0.0, %v1894
      %v1896 = vpop.f32.mrf.mxu0
      %v1897 = vadd.f32 0.0, %v1896
      %1898 = vmatmul.bf16.gmra.mxu0 %v1820
      %v1899 = vpop.f32.mrf.mxu0
      %v1900 = vadd.f32 0.0, %v1899
      %v1901 = vpop.f32.mrf.mxu0
      %v1902 = vadd.f32 0.0, %v1901
      %1903 = vdwg.mxu0
      %v1904 = vadd.f32 %v1811, %v1895
      %v1905 = vadd.f32 %v1812, %v1897
      %v1906 = vadd.f32 %v1813, %v1900
      %v1907 = vadd.f32 %v1814, %v1902
      %v1908 = vld [vmem:[#allocation2 + $0xf] sm:$0xff]
      %v1909 = vld [vmem:[#allocation2 + $0x17] sm:$0xff]
      %v1910 = vld [vmem:[#allocation2 + $0x1f] sm:$0xff]
      %v1911 = vld [vmem:[#allocation2 + $0x27] sm:$0xf]
      %v1912 = vpack.c.bf16 %v1909, %v1908
      %v1913 = vpack.c.bf16 %v1911, %v1910
      %v1914 = vld [vmem:[%s3 + $0x100] sm:$0xf]
      %v1915 = vld [vmem:[%s3 + $0x104] sm:$0xf]
      %v1916 = vld [vmem:[%s3 + $0x108] sm:$0xf]
      %v1917 = vld [vmem:[%s3 + $0x10c] sm:$0xf]
      %v1918 = vld [vmem:[%s3 + $0x110] sm:$0xf]
      %v1919 = vld [vmem:[%s3 + $0x114] sm:$0xf]
      %v1920 = vld [vmem:[%s3 + $0x118] sm:$0xf]
      %v1921 = vld [vmem:[%s3 + $0x11c] sm:$0xf]
      %v1922 = vld [vmem:[%s3 + $0x120] sm:$0xf]
      %v1923 = vld [vmem:[%s3 + $0x124] sm:$0xf]
      %v1924 = vld [vmem:[%s3 + $0x128] sm:$0xf]
      %v1925 = vld [vmem:[%s3 + $0x12c] sm:$0xf]
      %v1926 = vld [vmem:[%s3 + $0x130] sm:$0xf]
      %v1927 = vld [vmem:[%s3 + $0x134] sm:$0xf]
      %v1928 = vld [vmem:[%s3 + $0x138] sm:$0xf]
      %v1929 = vld [vmem:[%s3 + $0x13c] sm:$0xf]
      %v1946 = vunpack.c.l.b16 %v1914
      %v1947 = vunpack.c.l.b16 %v1915
      %v1948 = vunpack.c.l.b16 %v1916
      %v1949 = vunpack.c.l.b16 %v1917
      %v1950 = vunpack.c.l.b16 %v1918
      %v1951 = vunpack.c.l.b16 %v1919
      %v1952 = vunpack.c.l.b16 %v1920
      %v1953 = vunpack.c.l.b16 %v1921
      %v1954 = vunpack.c.l.b16 %v1922
      %v1955 = vunpack.c.l.b16 %v1923
      %v1956 = vunpack.c.l.b16 %v1924
      %v1957 = vunpack.c.l.b16 %v1925
      %v1958 = vunpack.c.l.b16 %v1926
      %v1959 = vunpack.c.l.b16 %v1927
      %v1960 = vunpack.c.l.b16 %v1928
      %v1961 = vunpack.c.l.b16 %v1929
      %v1962 = vpack.c.b16 %v1947, %v1946
      %v1963 = vpack.c.b16 %v1949, %v1948
      %v1964 = vpack.c.b16 %v1951, %v1950
      %v1965 = vpack.c.b16 %v1953, %v1952
      %v1966 = vpack.c.b16 %v1955, %v1954
      %v1967 = vpack.c.b16 %v1957, %v1956
      %v1968 = vpack.c.b16 %v1959, %v1958
      %v1969 = vpack.c.b16 %v1961, %v1960
      %1978 = vmatpush.bf16.msra.mxu0 %v1969
      %1979 = vmatpush.bf16.msra.mxu0 %v1968
      %1980 = vmatpush.bf16.msra.mxu0 %v1967
      %1981 = vmatpush.bf16.msra.mxu0 %v1966
      %1982 = vmatpush.bf16.msra.mxu0 %v1965
      %1983 = vmatpush.bf16.msra.mxu0 %v1964
      %1984 = vmatpush.bf16.msra.mxu0 %v1963
      %1985 = vmatpush.bf16.msra.mxu0 %v1962
      %1986 = vmatmul.bf16.gmra.mxu0 %v1912
      %v1987 = vpop.f32.mrf.mxu0
      %v1988 = vadd.f32 0.0, %v1987
      %v1989 = vpop.f32.mrf.mxu0
      %v1990 = vadd.f32 0.0, %v1989
      %1991 = vmatmul.bf16.gmra.mxu0 %v1913
      %v1992 = vpop.f32.mrf.mxu0
      %v1993 = vadd.f32 0.0, %v1992
      %v1994 = vpop.f32.mrf.mxu0
      %v1995 = vadd.f32 0.0, %v1994
      %1996 = vdwg.mxu0
      %v1997 = vadd.f32 %v1904, %v1988
      %v1998 = vadd.f32 %v1905, %v1990
      %v1999 = vadd.f32 %v1906, %v1993
      %v2000 = vadd.f32 %v1907, %v1995
      %v2001 = vld [vmem:[#allocation2 + $0x10] sm:$0xff]
      %v2002 = vld [vmem:[#allocation2 + $0x18] sm:$0xff]
      %v2003 = vld [vmem:[#allocation2 + $0x20] sm:$0xff]
      %v2004 = vld [vmem:[#allocation2 + $0x28] sm:$0xf]
      %v2005 = vpack.c.bf16 %v2002, %v2001
      %v2006 = vpack.c.bf16 %v2004, %v2003
      %v2007 = vld [vmem:[%s3 + $0x140] sm:$0xf]
      %v2008 = vld [vmem:[%s3 + $0x144] sm:$0xf]
      %v2009 = vld [vmem:[%s3 + $0x148] sm:$0xf]
      %v2010 = vld [vmem:[%s3 + $0x14c] sm:$0xf]
      %v2011 = vld [vmem:[%s3 + $0x150] sm:$0xf]
      %v2012 = vld [vmem:[%s3 + $0x154] sm:$0xf]
      %v2013 = vld [vmem:[%s3 + $0x158] sm:$0xf]
      %v2014 = vld [vmem:[%s3 + $0x15c] sm:$0xf]
      %v2015 = vld [vmem:[%s3 + $0x160] sm:$0xf]
      %v2016 = vld [vmem:[%s3 + $0x164] sm:$0xf]
      %v2017 = vld [vmem:[%s3 + $0x168] sm:$0xf]
      %v2018 = vld [vmem:[%s3 + $0x16c] sm:$0xf]
      %v2019 = vld [vmem:[%s3 + $0x170] sm:$0xf]
      %v2020 = vld [vmem:[%s3 + $0x174] sm:$0xf]
      %v2021 = vld [vmem:[%s3 + $0x178] sm:$0xf]
      %v2022 = vld [vmem:[%s3 + $0x17c] sm:$0xf]
      %v2039 = vunpack.c.l.b16 %v2007
      %v2040 = vunpack.c.l.b16 %v2008
      %v2041 = vunpack.c.l.b16 %v2009
      %v2042 = vunpack.c.l.b16 %v2010
      %v2043 = vunpack.c.l.b16 %v2011
      %v2044 = vunpack.c.l.b16 %v2012
      %v2045 = vunpack.c.l.b16 %v2013
      %v2046 = vunpack.c.l.b16 %v2014
      %v2047 = vunpack.c.l.b16 %v2015
      %v2048 = vunpack.c.l.b16 %v2016
      %v2049 = vunpack.c.l.b16 %v2017
      %v2050 = vunpack.c.l.b16 %v2018
      %v2051 = vunpack.c.l.b16 %v2019
      %v2052 = vunpack.c.l.b16 %v2020
      %v2053 = vunpack.c.l.b16 %v2021
      %v2054 = vunpack.c.l.b16 %v2022
      %v2055 = vpack.c.b16 %v2040, %v2039
      %v2056 = vpack.c.b16 %v2042, %v2041
      %v2057 = vpack.c.b16 %v2044, %v2043
      %v2058 = vpack.c.b16 %v2046, %v2045
      %v2059 = vpack.c.b16 %v2048, %v2047
      %v2060 = vpack.c.b16 %v2050, %v2049
      %v2061 = vpack.c.b16 %v2052, %v2051
      %v2062 = vpack.c.b16 %v2054, %v2053
      %2071 = vmatpush.bf16.msra.mxu0 %v2062
      %2072 = vmatpush.bf16.msra.mxu0 %v2061
      %2073 = vmatpush.bf16.msra.mxu0 %v2060
      %2074 = vmatpush.bf16.msra.mxu0 %v2059
      %2075 = vmatpush.bf16.msra.mxu0 %v2058
      %2076 = vmatpush.bf16.msra.mxu0 %v2057
      %2077 = vmatpush.bf16.msra.mxu0 %v2056
      %2078 = vmatpush.bf16.msra.mxu0 %v2055
      %2079 = vmatmul.bf16.gmra.mxu0 %v2005
      %v2080 = vpop.f32.mrf.mxu0
      %v2081 = vadd.f32 0.0, %v2080
      %v2082 = vpop.f32.mrf.mxu0
      %v2083 = vadd.f32 0.0, %v2082
      %2084 = vmatmul.bf16.gmra.mxu0 %v2006
      %v2085 = vpop.f32.mrf.mxu0
      %v2086 = vadd.f32 0.0, %v2085
      %v2087 = vpop.f32.mrf.mxu0
      %v2088 = vadd.f32 0.0, %v2087
      %2089 = vdwg.mxu0
      %v2090 = vadd.f32 %v1997, %v2081
      %v2091 = vadd.f32 %v1998, %v2083
      %v2092 = vadd.f32 %v1999, %v2086
      %v2093 = vadd.f32 %v2000, %v2088
      %v2094 = vld [vmem:[#allocation2 + $0x1c] sm:$0xff]
      %v2095 = vld [vmem:[#allocation2 + $0x24] sm:$0xff]
      %v2096 = vld [vmem:[#allocation2 + $0x2c] sm:$0xff]
      %v2097 = vld [vmem:[#allocation2 + $0x34] sm:$0xf]
      %v2098 = vpack.c.bf16 %v2095, %v2094
      %v2099 = vpack.c.bf16 %v2097, %v2096
      %v2100 = vld [vmem:[%s3 + $0x180] sm:$0xf]
      %v2101 = vld [vmem:[%s3 + $0x184] sm:$0xf]
      %v2102 = vld [vmem:[%s3 + $0x188] sm:$0xf]
      %v2103 = vld [vmem:[%s3 + $0x18c] sm:$0xf]
      %v2104 = vld [vmem:[%s3 + $0x190] sm:$0xf]
      %v2105 = vld [vmem:[%s3 + $0x194] sm:$0xf]
      %v2106 = vld [vmem:[%s3 + $0x198] sm:$0xf]
      %v2107 = vld [vmem:[%s3 + $0x19c] sm:$0xf]
      %v2108 = vld [vmem:[%s3 + $0x1a0] sm:$0xf]
      %v2109 = vld [vmem:[%s3 + $0x1a4] sm:$0xf]
      %v2110 = vld [vmem:[%s3 + $0x1a8] sm:$0xf]
      %v2111 = vld [vmem:[%s3 + $0x1ac] sm:$0xf]
      %v2112 = vld [vmem:[%s3 + $0x1b0] sm:$0xf]
      %v2113 = vld [vmem:[%s3 + $0x1b4] sm:$0xf]
      %v2114 = vld [vmem:[%s3 + $0x1b8] sm:$0xf]
      %v2115 = vld [vmem:[%s3 + $0x1bc] sm:$0xf]
      %v2132 = vunpack.c.l.b16 %v2100
      %v2133 = vunpack.c.l.b16 %v2101
      %v2134 = vunpack.c.l.b16 %v2102
      %v2135 = vunpack.c.l.b16 %v2103
      %v2136 = vunpack.c.l.b16 %v2104
      %v2137 = vunpack.c.l.b16 %v2105
      %v2138 = vunpack.c.l.b16 %v2106
      %v2139 = vunpack.c.l.b16 %v2107
      %v2140 = vunpack.c.l.b16 %v2108
      %v2141 = vunpack.c.l.b16 %v2109
      %v2142 = vunpack.c.l.b16 %v2110
      %v2143 = vunpack.c.l.b16 %v2111
      %v2144 = vunpack.c.l.b16 %v2112
      %v2145 = vunpack.c.l.b16 %v2113
      %v2146 = vunpack.c.l.b16 %v2114
      %v2147 = vunpack.c.l.b16 %v2115
      %v2148 = vpack.c.b16 %v2133, %v2132
      %v2149 = vpack.c.b16 %v2135, %v2134
      %v2150 = vpack.c.b16 %v2137, %v2136
      %v2151 = vpack.c.b16 %v2139, %v2138
      %v2152 = vpack.c.b16 %v2141, %v2140
      %v2153 = vpack.c.b16 %v2143, %v2142
      %v2154 = vpack.c.b16 %v2145, %v2144
      %v2155 = vpack.c.b16 %v2147, %v2146
      %2164 = vmatpush.bf16.msra.mxu0 %v2155
      %2165 = vmatpush.bf16.msra.mxu0 %v2154
      %2166 = vmatpush.bf16.msra.mxu0 %v2153
      %2167 = vmatpush.bf16.msra.mxu0 %v2152
      %2168 = vmatpush.bf16.msra.mxu0 %v2151
      %2169 = vmatpush.bf16.msra.mxu0 %v2150
      %2170 = vmatpush.bf16.msra.mxu0 %v2149
      %2171 = vmatpush.bf16.msra.mxu0 %v2148
      %2172 = vmatmul.bf16.gmra.mxu0 %v2098
      %v2173 = vpop.f32.mrf.mxu0
      %v2174 = vadd.f32 0.0, %v2173
      %v2175 = vpop.f32.mrf.mxu0
      %v2176 = vadd.f32 0.0, %v2175
      %2177 = vmatmul.bf16.gmra.mxu0 %v2099
      %v2178 = vpop.f32.mrf.mxu0
      %v2179 = vadd.f32 0.0, %v2178
      %v2180 = vpop.f32.mrf.mxu0
      %v2181 = vadd.f32 0.0, %v2180
      %2182 = vdwg.mxu0
      %v2183 = vadd.f32 %v2090, %v2174
      %v2184 = vadd.f32 %v2091, %v2176
      %v2185 = vadd.f32 %v2092, %v2179
      %v2186 = vadd.f32 %v2093, %v2181
      %v2187 = vld [vmem:[#allocation2 + $0x1d] sm:$0xff]
      %v2188 = vld [vmem:[#allocation2 + $0x25] sm:$0xff]
      %v2189 = vld [vmem:[#allocation2 + $0x2d] sm:$0xff]
      %v2190 = vld [vmem:[#allocation2 + $0x35] sm:$0xf]
      %v2191 = vpack.c.bf16 %v2188, %v2187
      %v2192 = vpack.c.bf16 %v2190, %v2189
      %v2193 = vld [vmem:[%s3 + $0x1c0] sm:$0xf]
      %v2194 = vld [vmem:[%s3 + $0x1c4] sm:$0xf]
      %v2195 = vld [vmem:[%s3 + $0x1c8] sm:$0xf]
      %v2196 = vld [vmem:[%s3 + $0x1cc] sm:$0xf]
      %v2197 = vld [vmem:[%s3 + $0x1d0] sm:$0xf]
      %v2198 = vld [vmem:[%s3 + $0x1d4] sm:$0xf]
      %v2199 = vld [vmem:[%s3 + $0x1d8] sm:$0xf]
      %v2200 = vld [vmem:[%s3 + $0x1dc] sm:$0xf]
      %v2201 = vld [vmem:[%s3 + $0x1e0] sm:$0xf]
      %v2202 = vld [vmem:[%s3 + $0x1e4] sm:$0xf]
      %v2203 = vld [vmem:[%s3 + $0x1e8] sm:$0xf]
      %v2204 = vld [vmem:[%s3 + $0x1ec] sm:$0xf]
      %v2205 = vld [vmem:[%s3 + $0x1f0] sm:$0xf]
      %v2206 = vld [vmem:[%s3 + $0x1f4] sm:$0xf]
      %v2207 = vld [vmem:[%s3 + $0x1f8] sm:$0xf]
      %v2208 = vld [vmem:[%s3 + $0x1fc] sm:$0xf]
      %v2225 = vunpack.c.l.b16 %v2193
      %v2226 = vunpack.c.l.b16 %v2194
      %v2227 = vunpack.c.l.b16 %v2195
      %v2228 = vunpack.c.l.b16 %v2196
      %v2229 = vunpack.c.l.b16 %v2197
      %v2230 = vunpack.c.l.b16 %v2198
      %v2231 = vunpack.c.l.b16 %v2199
      %v2232 = vunpack.c.l.b16 %v2200
      %v2233 = vunpack.c.l.b16 %v2201
      %v2234 = vunpack.c.l.b16 %v2202
      %v2235 = vunpack.c.l.b16 %v2203
      %v2236 = vunpack.c.l.b16 %v2204
      %v2237 = vunpack.c.l.b16 %v2205
      %v2238 = vunpack.c.l.b16 %v2206
      %v2239 = vunpack.c.l.b16 %v2207
      %v2240 = vunpack.c.l.b16 %v2208
      %v2241 = vpack.c.b16 %v2226, %v2225
      %v2242 = vpack.c.b16 %v2228, %v2227
      %v2243 = vpack.c.b16 %v2230, %v2229
      %v2244 = vpack.c.b16 %v2232, %v2231
      %v2245 = vpack.c.b16 %v2234, %v2233
      %v2246 = vpack.c.b16 %v2236, %v2235
      %v2247 = vpack.c.b16 %v2238, %v2237
      %v2248 = vpack.c.b16 %v2240, %v2239
      %2257 = vmatpush.bf16.msra.mxu0 %v2248
      %2258 = vmatpush.bf16.msra.mxu0 %v2247
      %2259 = vmatpush.bf16.msra.mxu0 %v2246
      %2260 = vmatpush.bf16.msra.mxu0 %v2245
      %2261 = vmatpush.bf16.msra.mxu0 %v2244
      %2262 = vmatpush.bf16.msra.mxu0 %v2243
      %2263 = vmatpush.bf16.msra.mxu0 %v2242
      %2264 = vmatpush.bf16.msra.mxu0 %v2241
      %2265 = vmatmul.bf16.gmra.mxu0 %v2191
      %v2266 = vpop.f32.mrf.mxu0
      %v2267 = vadd.f32 0.0, %v2266
      %v2268 = vpop.f32.mrf.mxu0
      %v2269 = vadd.f32 0.0, %v2268
      %2270 = vmatmul.bf16.gmra.mxu0 %v2192
      %v2271 = vpop.f32.mrf.mxu0
      %v2272 = vadd.f32 0.0, %v2271
      %v2273 = vpop.f32.mrf.mxu0
      %v2274 = vadd.f32 0.0, %v2273
      %2275 = vdwg.mxu0
      %v2276 = vadd.f32 %v2183, %v2267
      %v2277 = vadd.f32 %v2184, %v2269
      %v2278 = vadd.f32 %v2185, %v2272
      %v2279 = vadd.f32 %v2186, %v2274
      %v2280 = vld [vmem:[#allocation2 + $0x1e] sm:$0xff]
      %v2281 = vld [vmem:[#allocation2 + $0x26] sm:$0xff]
      %v2282 = vld [vmem:[#allocation2 + $0x2e] sm:$0xff]
      %v2283 = vld [vmem:[#allocation2 + $0x36] sm:$0xf]
      %v2284 = vpack.c.bf16 %v2281, %v2280
      %v2285 = vpack.c.bf16 %v2283, %v2282
      %v2286 = vld [vmem:[%s3 + $0x200] sm:$0xf]
      %v2287 = vld [vmem:[%s3 + $0x204] sm:$0xf]
      %v2288 = vld [vmem:[%s3 + $0x208] sm:$0xf]
      %v2289 = vld [vmem:[%s3 + $0x20c] sm:$0xf]
      %v2290 = vld [vmem:[%s3 + $0x210] sm:$0xf]
      %v2291 = vld [vmem:[%s3 + $0x214] sm:$0xf]
      %v2292 = vld [vmem:[%s3 + $0x218] sm:$0xf]
      %v2293 = vld [vmem:[%s3 + $0x21c] sm:$0xf]
      %v2294 = vld [vmem:[%s3 + $0x220] sm:$0xf]
      %v2295 = vld [vmem:[%s3 + $0x224] sm:$0xf]
      %v2296 = vld [vmem:[%s3 + $0x228] sm:$0xf]
      %v2297 = vld [vmem:[%s3 + $0x22c] sm:$0xf]
      %v2298 = vld [vmem:[%s3 + $0x230] sm:$0xf]
      %v2299 = vld [vmem:[%s3 + $0x234] sm:$0xf]
      %v2300 = vld [vmem:[%s3 + $0x238] sm:$0xf]
      %v2301 = vld [vmem:[%s3 + $0x23c] sm:$0xf]
      %v2318 = vunpack.c.l.b16 %v2286
      %v2319 = vunpack.c.l.b16 %v2287
      %v2320 = vunpack.c.l.b16 %v2288
      %v2321 = vunpack.c.l.b16 %v2289
      %v2322 = vunpack.c.l.b16 %v2290
      %v2323 = vunpack.c.l.b16 %v2291
      %v2324 = vunpack.c.l.b16 %v2292
      %v2325 = vunpack.c.l.b16 %v2293
      %v2326 = vunpack.c.l.b16 %v2294
      %v2327 = vunpack.c.l.b16 %v2295
      %v2328 = vunpack.c.l.b16 %v2296
      %v2329 = vunpack.c.l.b16 %v2297
      %v2330 = vunpack.c.l.b16 %v2298
      %v2331 = vunpack.c.l.b16 %v2299
      %v2332 = vunpack.c.l.b16 %v2300
      %v2333 = vunpack.c.l.b16 %v2301
      %v2334 = vpack.c.b16 %v2319, %v2318
      %v2335 = vpack.c.b16 %v2321, %v2320
      %v2336 = vpack.c.b16 %v2323, %v2322
      %v2337 = vpack.c.b16 %v2325, %v2324
      %v2338 = vpack.c.b16 %v2327, %v2326
      %v2339 = vpack.c.b16 %v2329, %v2328
      %v2340 = vpack.c.b16 %v2331, %v2330
      %v2341 = vpack.c.b16 %v2333, %v2332
      %2350 = vmatpush.bf16.msra.mxu0 %v2341
      %2351 = vmatpush.bf16.msra.mxu0 %v2340
      %2352 = vmatpush.bf16.msra.mxu0 %v2339
      %2353 = vmatpush.bf16.msra.mxu0 %v2338
      %2354 = vmatpush.bf16.msra.mxu0 %v2337
      %2355 = vmatpush.bf16.msra.mxu0 %v2336
      %2356 = vmatpush.bf16.msra.mxu0 %v2335
      %2357 = vmatpush.bf16.msra.mxu0 %v2334
      %2358 = vmatmul.bf16.gmra.mxu0 %v2284
      %v2359 = vpop.f32.mrf.mxu0
      %v2360 = vadd.f32 0.0, %v2359
      %v2361 = vpop.f32.mrf.mxu0
      %v2362 = vadd.f32 0.0, %v2361
      %2363 = vmatmul.bf16.gmra.mxu0 %v2285
      %v2364 = vpop.f32.mrf.mxu0
      %v2365 = vadd.f32 0.0, %v2364
      %v2366 = vpop.f32.mrf.mxu0
      %v2367 = vadd.f32 0.0, %v2366
      %2368 = vdwg.mxu0
      %v2369 = vadd.f32 %v2276, %v2360
      %v2370 = vadd.f32 %v2277, %v2362
      %v2371 = vadd.f32 %v2278, %v2365
      %v2372 = vadd.f32 %v2279, %v2367
      %2373 = vst [vmem:[#allocation3] sm:$0xff] %v2369
      %2374 = vst [vmem:[#allocation3 + $0x8] sm:$0xff] %v2370
      %2375 = vst [vmem:[#allocation3 + $0x10] sm:$0xff] %v2371
      %2376 = vst [vmem:[#allocation3 + $0x18] sm:$0xf] %v2372
      %v2377 = vld [vmem:[#allocation3] ss:$2 sm:$0x3f]
      %v2378 = vld [vmem:[%s321] ss:$2 sm:$0x3f]
      %v2379 = vmax.f32 %v2377, %v2378
      %s2380 = scalar_lea.vmem [#allocation3], 14
      %v2381 = vld [vmem:[%s2380] ss:$2 sm:$0x3f]
      %s2382 = scalar_lea.vmem [#allocation3], 15
      %v2383 = vld [vmem:[%s2382] ss:$2 sm:$0x3f]
      %v2384 = vmax.f32 %v2381, %v2383
      %v2385 = vmax.f32 %v2379, %v2384
      %v2387 = vperm.slane %v231, 0
      %v2389 = vadd.f32 %v2385, %v2387
      %v2390 = vmax.f32 %v2389, 0.0
      %vm2391 = vcmask 259072
      %2392 = vst.msk [vmem:[%s224] sm:$0x3f] %vm2391, %v2390
      %v2393 = vld [vmem:[#allocation2 + $0x1c] sm:$0xff]
      %v2394 = vld [vmem:[#allocation2 + $0x24] sm:$0xff]
      %v2395 = vld [vmem:[#allocation2 + $0x2c] sm:$0xff]
      %v2396 = vld [vmem:[#allocation2 + $0x34] sm:$0xf]
      %v2397 = vpack.c.bf16 %v2394, %v2393
      %v2398 = vpack.c.bf16 %v2396, %v2395
      %v2399 = vld [vmem:[%s3] sm:$0xf]
      %v2400 = vld [vmem:[%s3 + $0x4] sm:$0xf]
      %v2401 = vld [vmem:[%s3 + $0x8] sm:$0xf]
      %v2402 = vld [vmem:[%s3 + $0xc] sm:$0xf]
      %v2403 = vld [vmem:[%s3 + $0x10] sm:$0xf]
      %v2404 = vld [vmem:[%s3 + $0x14] sm:$0xf]
      %v2405 = vld [vmem:[%s3 + $0x18] sm:$0xf]
      %v2406 = vld [vmem:[%s3 + $0x1c] sm:$0xf]
      %v2407 = vld [vmem:[%s3 + $0x20] sm:$0xf]
      %v2408 = vld [vmem:[%s3 + $0x24] sm:$0xf]
      %v2409 = vld [vmem:[%s3 + $0x28] sm:$0xf]
      %v2410 = vld [vmem:[%s3 + $0x2c] sm:$0xf]
      %v2411 = vld [vmem:[%s3 + $0x30] sm:$0xf]
      %v2412 = vld [vmem:[%s3 + $0x34] sm:$0xf]
      %v2413 = vld [vmem:[%s3 + $0x38] sm:$0xf]
      %v2414 = vld [vmem:[%s3 + $0x3c] sm:$0xf]
      %v2415 = vld [vmem:[#allocation2 + $0x1d] sm:$0xff]
      %v2416 = vld [vmem:[#allocation2 + $0x25] sm:$0xff]
      %v2417 = vld [vmem:[#allocation2 + $0x2d] sm:$0xff]
      %v2418 = vld [vmem:[#allocation2 + $0x35] sm:$0xf]
      %v2419 = vpack.c.bf16 %v2416, %v2415
      %v2420 = vpack.c.bf16 %v2418, %v2417
      %v2421 = vld [vmem:[%s3 + $0x40] sm:$0xf]
      %v2422 = vld [vmem:[%s3 + $0x44] sm:$0xf]
      %v2423 = vld [vmem:[%s3 + $0x48] sm:$0xf]
      %v2424 = vld [vmem:[%s3 + $0x4c] sm:$0xf]
      %v2425 = vld [vmem:[%s3 + $0x50] sm:$0xf]
      %v2426 = vld [vmem:[%s3 + $0x54] sm:$0xf]
      %v2427 = vld [vmem:[%s3 + $0x58] sm:$0xf]
      %v2428 = vld [vmem:[%s3 + $0x5c] sm:$0xf]
      %v2429 = vld [vmem:[%s3 + $0x60] sm:$0xf]
      %v2430 = vld [vmem:[%s3 + $0x64] sm:$0xf]
      %v2431 = vld [vmem:[%s3 + $0x68] sm:$0xf]
      %v2432 = vld [vmem:[%s3 + $0x6c] sm:$0xf]
      %v2433 = vld [vmem:[%s3 + $0x70] sm:$0xf]
      %v2434 = vld [vmem:[%s3 + $0x74] sm:$0xf]
      %v2435 = vld [vmem:[%s3 + $0x78] sm:$0xf]
      %v2436 = vld [vmem:[%s3 + $0x7c] sm:$0xf]
      %v2453 = vunpack.c.l.b16 %v2421
      %v2454 = vunpack.c.l.b16 %v2422
      %v2455 = vunpack.c.l.b16 %v2423
      %v2456 = vunpack.c.l.b16 %v2424
      %v2457 = vunpack.c.l.b16 %v2425
      %v2458 = vunpack.c.l.b16 %v2426
      %v2459 = vunpack.c.l.b16 %v2427
      %v2460 = vunpack.c.l.b16 %v2428
      %v2461 = vunpack.c.l.b16 %v2429
      %v2462 = vunpack.c.l.b16 %v2430
      %v2463 = vunpack.c.l.b16 %v2431
      %v2464 = vunpack.c.l.b16 %v2432
      %v2465 = vunpack.c.l.b16 %v2433
      %v2466 = vunpack.c.l.b16 %v2434
      %v2467 = vunpack.c.l.b16 %v2435
      %v2468 = vunpack.c.l.b16 %v2436
      %v2469 = vpack.c.b16 %v2454, %v2453
      %v2470 = vpack.c.b16 %v2456, %v2455
      %v2471 = vpack.c.b16 %v2458, %v2457
      %v2472 = vpack.c.b16 %v2460, %v2459
      %v2473 = vpack.c.b16 %v2462, %v2461
      %v2474 = vpack.c.b16 %v2464, %v2463
      %v2475 = vpack.c.b16 %v2466, %v2465
      %v2476 = vpack.c.b16 %v2468, %v2467
      %2485 = vmatpush.bf16.msra.mxu0 %v2476
      %2486 = vmatpush.bf16.msra.mxu0 %v2475
      %2487 = vmatpush.bf16.msra.mxu0 %v2474
      %2488 = vmatpush.bf16.msra.mxu0 %v2473
      %2489 = vmatpush.bf16.msra.mxu0 %v2472
      %2490 = vmatpush.bf16.msra.mxu0 %v2471
      %2491 = vmatpush.bf16.msra.mxu0 %v2470
      %2492 = vmatpush.bf16.msra.mxu0 %v2469
      %2493 = vmatmul.bf16.gmra.mxu0 %v2419
      %v2494 = vpop.f32.mrf.mxu0
      %v2495 = vadd.f32 0.0, %v2494
      %v2496 = vpop.f32.mrf.mxu0
      %v2497 = vadd.f32 0.0, %v2496
      %2498 = vmatmul.bf16.gmra.mxu0 %v2420
      %v2499 = vpop.f32.mrf.mxu0
      %v2500 = vadd.f32 0.0, %v2499
      %v2501 = vpop.f32.mrf.mxu0
      %v2502 = vadd.f32 0.0, %v2501
      %2503 = vdwg.mxu0
      %v2520 = vunpack.c.l.b16 %v2399
      %v2521 = vunpack.c.l.b16 %v2400
      %v2522 = vunpack.c.l.b16 %v2401
      %v2523 = vunpack.c.l.b16 %v2402
      %v2524 = vunpack.c.l.b16 %v2403
      %v2525 = vunpack.c.l.b16 %v2404
      %v2526 = vunpack.c.l.b16 %v2405
      %v2527 = vunpack.c.l.b16 %v2406
      %v2528 = vunpack.c.l.b16 %v2407
      %v2529 = vunpack.c.l.b16 %v2408
      %v2530 = vunpack.c.l.b16 %v2409
      %v2531 = vunpack.c.l.b16 %v2410
      %v2532 = vunpack.c.l.b16 %v2411
      %v2533 = vunpack.c.l.b16 %v2412
      %v2534 = vunpack.c.l.b16 %v2413
      %v2535 = vunpack.c.l.b16 %v2414
      %v2536 = vpack.c.b16 %v2521, %v2520
      %v2537 = vpack.c.b16 %v2523, %v2522
      %v2538 = vpack.c.b16 %v2525, %v2524
      %v2539 = vpack.c.b16 %v2527, %v2526
      %v2540 = vpack.c.b16 %v2529, %v2528
      %v2541 = vpack.c.b16 %v2531, %v2530
      %v2542 = vpack.c.b16 %v2533, %v2532
      %v2543 = vpack.c.b16 %v2535, %v2534
      %2552 = vmatpush.bf16.msra.mxu0 %v2543
      %2553 = vmatpush.bf16.msra.mxu0 %v2542
      %2554 = vmatpush.bf16.msra.mxu0 %v2541
      %2555 = vmatpush.bf16.msra.mxu0 %v2540
      %2556 = vmatpush.bf16.msra.mxu0 %v2539
      %2557 = vmatpush.bf16.msra.mxu0 %v2538
      %2558 = vmatpush.bf16.msra.mxu0 %v2537
      %2559 = vmatpush.bf16.msra.mxu0 %v2536
      %2560 = vmatmul.bf16.gmra.mxu0 %v2397
      %v2561 = vpop.f32.mrf.mxu0
      %v2562 = vadd.f32 %v2495, %v2561
      %v2563 = vpop.f32.mrf.mxu0
      %v2564 = vadd.f32 %v2497, %v2563
      %2565 = vmatmul.bf16.gmra.mxu0 %v2398
      %v2566 = vpop.f32.mrf.mxu0
      %v2567 = vadd.f32 %v2500, %v2566
      %v2568 = vpop.f32.mrf.mxu0
      %v2569 = vadd.f32 %v2502, %v2568
      %2570 = vdwg.mxu0
      %v2571 = vld [vmem:[#allocation2 + $0x1e] sm:$0xff]
      %v2572 = vld [vmem:[#allocation2 + $0x26] sm:$0xff]
      %v2573 = vld [vmem:[#allocation2 + $0x2e] sm:$0xff]
      %v2574 = vld [vmem:[#allocation2 + $0x36] sm:$0xf]
      %v2575 = vpack.c.bf16 %v2572, %v2571
      %v2576 = vpack.c.bf16 %v2574, %v2573
      %v2577 = vld [vmem:[%s3 + $0x80] sm:$0xf]
      %v2578 = vld [vmem:[%s3 + $0x84] sm:$0xf]
      %v2579 = vld [vmem:[%s3 + $0x88] sm:$0xf]
      %v2580 = vld [vmem:[%s3 + $0x8c] sm:$0xf]
      %v2581 = vld [vmem:[%s3 + $0x90] sm:$0xf]
      %v2582 = vld [vmem:[%s3 + $0x94] sm:$0xf]
      %v2583 = vld [vmem:[%s3 + $0x98] sm:$0xf]
      %v2584 = vld [vmem:[%s3 + $0x9c] sm:$0xf]
      %v2585 = vld [vmem:[%s3 + $0xa0] sm:$0xf]
      %v2586 = vld [vmem:[%s3 + $0xa4] sm:$0xf]
      %v2587 = vld [vmem:[%s3 + $0xa8] sm:$0xf]
      %v2588 = vld [vmem:[%s3 + $0xac] sm:$0xf]
      %v2589 = vld [vmem:[%s3 + $0xb0] sm:$0xf]
      %v2590 = vld [vmem:[%s3 + $0xb4] sm:$0xf]
      %v2591 = vld [vmem:[%s3 + $0xb8] sm:$0xf]
      %v2592 = vld [vmem:[%s3 + $0xbc] sm:$0xf]
      %v2609 = vunpack.c.l.b16 %v2577
      %v2610 = vunpack.c.l.b16 %v2578
      %v2611 = vunpack.c.l.b16 %v2579
      %v2612 = vunpack.c.l.b16 %v2580
      %v2613 = vunpack.c.l.b16 %v2581
      %v2614 = vunpack.c.l.b16 %v2582
      %v2615 = vunpack.c.l.b16 %v2583
      %v2616 = vunpack.c.l.b16 %v2584
      %v2617 = vunpack.c.l.b16 %v2585
      %v2618 = vunpack.c.l.b16 %v2586
      %v2619 = vunpack.c.l.b16 %v2587
      %v2620 = vunpack.c.l.b16 %v2588
      %v2621 = vunpack.c.l.b16 %v2589
      %v2622 = vunpack.c.l.b16 %v2590
      %v2623 = vunpack.c.l.b16 %v2591
      %v2624 = vunpack.c.l.b16 %v2592
      %v2625 = vpack.c.b16 %v2610, %v2609
      %v2626 = vpack.c.b16 %v2612, %v2611
      %v2627 = vpack.c.b16 %v2614, %v2613
      %v2628 = vpack.c.b16 %v2616, %v2615
      %v2629 = vpack.c.b16 %v2618, %v2617
      %v2630 = vpack.c.b16 %v2620, %v2619
      %v2631 = vpack.c.b16 %v2622, %v2621
      %v2632 = vpack.c.b16 %v2624, %v2623
      %2641 = vmatpush.bf16.msra.mxu0 %v2632
      %2642 = vmatpush.bf16.msra.mxu0 %v2631
      %2643 = vmatpush.bf16.msra.mxu0 %v2630
      %2644 = vmatpush.bf16.msra.mxu0 %v2629
      %2645 = vmatpush.bf16.msra.mxu0 %v2628
      %2646 = vmatpush.bf16.msra.mxu0 %v2627
      %2647 = vmatpush.bf16.msra.mxu0 %v2626
      %2648 = vmatpush.bf16.msra.mxu0 %v2625
      %2649 = vmatmul.bf16.gmra.mxu0 %v2575
      %v2650 = vpop.f32.mrf.mxu0
      %v2651 = vadd.f32 0.0, %v2650
      %v2652 = vpop.f32.mrf.mxu0
      %v2653 = vadd.f32 0.0, %v2652
      %2654 = vmatmul.bf16.gmra.mxu0 %v2576
      %v2655 = vpop.f32.mrf.mxu0
      %v2656 = vadd.f32 0.0, %v2655
      %v2657 = vpop.f32.mrf.mxu0
      %v2658 = vadd.f32 0.0, %v2657
      %2659 = vdwg.mxu0
      %v2660 = vadd.f32 %v2562, %v2651
      %v2661 = vadd.f32 %v2564, %v2653
      %v2662 = vadd.f32 %v2567, %v2656
      %v2663 = vadd.f32 %v2569, %v2658
      %v2664 = vld [vmem:[#allocation2 + $0x2a] sm:$0xff]
      %v2665 = vld [vmem:[#allocation2 + $0x32] sm:$0xff]
      %v2666 = vld [vmem:[#allocation2 + $0x3a] sm:$0xff]
      %v2667 = vld [vmem:[#allocation2 + $0x42] sm:$0xf]
      %v2668 = vpack.c.bf16 %v2665, %v2664
      %v2669 = vpack.c.bf16 %v2667, %v2666
      %v2670 = vld [vmem:[%s3 + $0xc0] sm:$0xf]
      %v2671 = vld [vmem:[%s3 + $0xc4] sm:$0xf]
      %v2672 = vld [vmem:[%s3 + $0xc8] sm:$0xf]
      %v2673 = vld [vmem:[%s3 + $0xcc] sm:$0xf]
      %v2674 = vld [vmem:[%s3 + $0xd0] sm:$0xf]
      %v2675 = vld [vmem:[%s3 + $0xd4] sm:$0xf]
      %v2676 = vld [vmem:[%s3 + $0xd8] sm:$0xf]
      %v2677 = vld [vmem:[%s3 + $0xdc] sm:$0xf]
      %v2678 = vld [vmem:[%s3 + $0xe0] sm:$0xf]
      %v2679 = vld [vmem:[%s3 + $0xe4] sm:$0xf]
      %v2680 = vld [vmem:[%s3 + $0xe8] sm:$0xf]
      %v2681 = vld [vmem:[%s3 + $0xec] sm:$0xf]
      %v2682 = vld [vmem:[%s3 + $0xf0] sm:$0xf]
      %v2683 = vld [vmem:[%s3 + $0xf4] sm:$0xf]
      %v2684 = vld [vmem:[%s3 + $0xf8] sm:$0xf]
      %v2685 = vld [vmem:[%s3 + $0xfc] sm:$0xf]
      %v2702 = vunpack.c.l.b16 %v2670
      %v2703 = vunpack.c.l.b16 %v2671
      %v2704 = vunpack.c.l.b16 %v2672
      %v2705 = vunpack.c.l.b16 %v2673
      %v2706 = vunpack.c.l.b16 %v2674
      %v2707 = vunpack.c.l.b16 %v2675
      %v2708 = vunpack.c.l.b16 %v2676
      %v2709 = vunpack.c.l.b16 %v2677
      %v2710 = vunpack.c.l.b16 %v2678
      %v2711 = vunpack.c.l.b16 %v2679
      %v2712 = vunpack.c.l.b16 %v2680
      %v2713 = vunpack.c.l.b16 %v2681
      %v2714 = vunpack.c.l.b16 %v2682
      %v2715 = vunpack.c.l.b16 %v2683
      %v2716 = vunpack.c.l.b16 %v2684
      %v2717 = vunpack.c.l.b16 %v2685
      %v2718 = vpack.c.b16 %v2703, %v2702
      %v2719 = vpack.c.b16 %v2705, %v2704
      %v2720 = vpack.c.b16 %v2707, %v2706
      %v2721 = vpack.c.b16 %v2709, %v2708
      %v2722 = vpack.c.b16 %v2711, %v2710
      %v2723 = vpack.c.b16 %v2713, %v2712
      %v2724 = vpack.c.b16 %v2715, %v2714
      %v2725 = vpack.c.b16 %v2717, %v2716
      %2734 = vmatpush.bf16.msra.mxu0 %v2725
      %2735 = vmatpush.bf16.msra.mxu0 %v2724
      %2736 = vmatpush.bf16.msra.mxu0 %v2723
      %2737 = vmatpush.bf16.msra.mxu0 %v2722
      %2738 = vmatpush.bf16.msra.mxu0 %v2721
      %2739 = vmatpush.bf16.msra.mxu0 %v2720
      %2740 = vmatpush.bf16.msra.mxu0 %v2719
      %2741 = vmatpush.bf16.msra.mxu0 %v2718
      %2742 = vmatmul.bf16.gmra.mxu0 %v2668
      %v2743 = vpop.f32.mrf.mxu0
      %v2744 = vadd.f32 0.0, %v2743
      %v2745 = vpop.f32.mrf.mxu0
      %v2746 = vadd.f32 0.0, %v2745
      %2747 = vmatmul.bf16.gmra.mxu0 %v2669
      %v2748 = vpop.f32.mrf.mxu0
      %v2749 = vadd.f32 0.0, %v2748
      %v2750 = vpop.f32.mrf.mxu0
      %v2751 = vadd.f32 0.0, %v2750
      %2752 = vdwg.mxu0
      %v2753 = vadd.f32 %v2660, %v2744
      %v2754 = vadd.f32 %v2661, %v2746
      %v2755 = vadd.f32 %v2662, %v2749
      %v2756 = vadd.f32 %v2663, %v2751
      %v2757 = vld [vmem:[#allocation2 + $0x2b] sm:$0xff]
      %v2758 = vld [vmem:[#allocation2 + $0x33] sm:$0xff]
      %v2759 = vld [vmem:[#allocation2 + $0x3b] sm:$0xff]
      %v2760 = vld [vmem:[#allocation2 + $0x43] sm:$0xf]
      %v2761 = vpack.c.bf16 %v2758, %v2757
      %v2762 = vpack.c.bf16 %v2760, %v2759
      %v2763 = vld [vmem:[%s3 + $0x100] sm:$0xf]
      %v2764 = vld [vmem:[%s3 + $0x104] sm:$0xf]
      %v2765 = vld [vmem:[%s3 + $0x108] sm:$0xf]
      %v2766 = vld [vmem:[%s3 + $0x10c] sm:$0xf]
      %v2767 = vld [vmem:[%s3 + $0x110] sm:$0xf]
      %v2768 = vld [vmem:[%s3 + $0x114] sm:$0xf]
      %v2769 = vld [vmem:[%s3 + $0x118] sm:$0xf]
      %v2770 = vld [vmem:[%s3 + $0x11c] sm:$0xf]
      %v2771 = vld [vmem:[%s3 + $0x120] sm:$0xf]
      %v2772 = vld [vmem:[%s3 + $0x124] sm:$0xf]
      %v2773 = vld [vmem:[%s3 + $0x128] sm:$0xf]
      %v2774 = vld [vmem:[%s3 + $0x12c] sm:$0xf]
      %v2775 = vld [vmem:[%s3 + $0x130] sm:$0xf]
      %v2776 = vld [vmem:[%s3 + $0x134] sm:$0xf]
      %v2777 = vld [vmem:[%s3 + $0x138] sm:$0xf]
      %v2778 = vld [vmem:[%s3 + $0x13c] sm:$0xf]
      %v2795 = vunpack.c.l.b16 %v2763
      %v2796 = vunpack.c.l.b16 %v2764
      %v2797 = vunpack.c.l.b16 %v2765
      %v2798 = vunpack.c.l.b16 %v2766
      %v2799 = vunpack.c.l.b16 %v2767
      %v2800 = vunpack.c.l.b16 %v2768
      %v2801 = vunpack.c.l.b16 %v2769
      %v2802 = vunpack.c.l.b16 %v2770
      %v2803 = vunpack.c.l.b16 %v2771
      %v2804 = vunpack.c.l.b16 %v2772
      %v2805 = vunpack.c.l.b16 %v2773
      %v2806 = vunpack.c.l.b16 %v2774
      %v2807 = vunpack.c.l.b16 %v2775
      %v2808 = vunpack.c.l.b16 %v2776
      %v2809 = vunpack.c.l.b16 %v2777
      %v2810 = vunpack.c.l.b16 %v2778
      %v2811 = vpack.c.b16 %v2796, %v2795
      %v2812 = vpack.c.b16 %v2798, %v2797
      %v2813 = vpack.c.b16 %v2800, %v2799
      %v2814 = vpack.c.b16 %v2802, %v2801
      %v2815 = vpack.c.b16 %v2804, %v2803
      %v2816 = vpack.c.b16 %v2806, %v2805
      %v2817 = vpack.c.b16 %v2808, %v2807
      %v2818 = vpack.c.b16 %v2810, %v2809
      %2827 = vmatpush.bf16.msra.mxu0 %v2818
      %2828 = vmatpush.bf16.msra.mxu0 %v2817
      %2829 = vmatpush.bf16.msra.mxu0 %v2816
      %2830 = vmatpush.bf16.msra.mxu0 %v2815
      %2831 = vmatpush.bf16.msra.mxu0 %v2814
      %2832 = vmatpush.bf16.msra.mxu0 %v2813
      %2833 = vmatpush.bf16.msra.mxu0 %v2812
      %2834 = vmatpush.bf16.msra.mxu0 %v2811
      %2835 = vmatmul.bf16.gmra.mxu0 %v2761
      %v2836 = vpop.f32.mrf.mxu0
      %v2837 = vadd.f32 0.0, %v2836
      %v2838 = vpop.f32.mrf.mxu0
      %v2839 = vadd.f32 0.0, %v2838
      %2840 = vmatmul.bf16.gmra.mxu0 %v2762
      %v2841 = vpop.f32.mrf.mxu0
      %v2842 = vadd.f32 0.0, %v2841
      %v2843 = vpop.f32.mrf.mxu0
      %v2844 = vadd.f32 0.0, %v2843
      %2845 = vdwg.mxu0
      %v2846 = vadd.f32 %v2753, %v2837
      %v2847 = vadd.f32 %v2754, %v2839
      %v2848 = vadd.f32 %v2755, %v2842
      %v2849 = vadd.f32 %v2756, %v2844
      %v2850 = vld [vmem:[#allocation2 + $0x2c] sm:$0xff]
      %v2851 = vld [vmem:[#allocation2 + $0x34] sm:$0xff]
      %v2852 = vld [vmem:[#allocation2 + $0x3c] sm:$0xff]
      %v2853 = vld [vmem:[#allocation2 + $0x44] sm:$0xf]
      %v2854 = vpack.c.bf16 %v2851, %v2850
      %v2855 = vpack.c.bf16 %v2853, %v2852
      %v2856 = vld [vmem:[%s3 + $0x140] sm:$0xf]
      %v2857 = vld [vmem:[%s3 + $0x144] sm:$0xf]
      %v2858 = vld [vmem:[%s3 + $0x148] sm:$0xf]
      %v2859 = vld [vmem:[%s3 + $0x14c] sm:$0xf]
      %v2860 = vld [vmem:[%s3 + $0x150] sm:$0xf]
      %v2861 = vld [vmem:[%s3 + $0x154] sm:$0xf]
      %v2862 = vld [vmem:[%s3 + $0x158] sm:$0xf]
      %v2863 = vld [vmem:[%s3 + $0x15c] sm:$0xf]
      %v2864 = vld [vmem:[%s3 + $0x160] sm:$0xf]
      %v2865 = vld [vmem:[%s3 + $0x164] sm:$0xf]
      %v2866 = vld [vmem:[%s3 + $0x168] sm:$0xf]
      %v2867 = vld [vmem:[%s3 + $0x16c] sm:$0xf]
      %v2868 = vld [vmem:[%s3 + $0x170] sm:$0xf]
      %v2869 = vld [vmem:[%s3 + $0x174] sm:$0xf]
      %v2870 = vld [vmem:[%s3 + $0x178] sm:$0xf]
      %v2871 = vld [vmem:[%s3 + $0x17c] sm:$0xf]
      %v2888 = vunpack.c.l.b16 %v2856
      %v2889 = vunpack.c.l.b16 %v2857
      %v2890 = vunpack.c.l.b16 %v2858
      %v2891 = vunpack.c.l.b16 %v2859
      %v2892 = vunpack.c.l.b16 %v2860
      %v2893 = vunpack.c.l.b16 %v2861
      %v2894 = vunpack.c.l.b16 %v2862
      %v2895 = vunpack.c.l.b16 %v2863
      %v2896 = vunpack.c.l.b16 %v2864
      %v2897 = vunpack.c.l.b16 %v2865
      %v2898 = vunpack.c.l.b16 %v2866
      %v2899 = vunpack.c.l.b16 %v2867
      %v2900 = vunpack.c.l.b16 %v2868
      %v2901 = vunpack.c.l.b16 %v2869
      %v2902 = vunpack.c.l.b16 %v2870
      %v2903 = vunpack.c.l.b16 %v2871
      %v2904 = vpack.c.b16 %v2889, %v2888
      %v2905 = vpack.c.b16 %v2891, %v2890
      %v2906 = vpack.c.b16 %v2893, %v2892
      %v2907 = vpack.c.b16 %v2895, %v2894
      %v2908 = vpack.c.b16 %v2897, %v2896
      %v2909 = vpack.c.b16 %v2899, %v2898
      %v2910 = vpack.c.b16 %v2901, %v2900
      %v2911 = vpack.c.b16 %v2903, %v2902
      %2920 = vmatpush.bf16.msra.mxu0 %v2911
      %2921 = vmatpush.bf16.msra.mxu0 %v2910
      %2922 = vmatpush.bf16.msra.mxu0 %v2909
      %2923 = vmatpush.bf16.msra.mxu0 %v2908
      %2924 = vmatpush.bf16.msra.mxu0 %v2907
      %2925 = vmatpush.bf16.msra.mxu0 %v2906
      %2926 = vmatpush.bf16.msra.mxu0 %v2905
      %2927 = vmatpush.bf16.msra.mxu0 %v2904
      %2928 = vmatmul.bf16.gmra.mxu0 %v2854
      %v2929 = vpop.f32.mrf.mxu0
      %v2930 = vadd.f32 0.0, %v2929
      %v2931 = vpop.f32.mrf.mxu0
      %v2932 = vadd.f32 0.0, %v2931
      %2933 = vmatmul.bf16.gmra.mxu0 %v2855
      %v2934 = vpop.f32.mrf.mxu0
      %v2935 = vadd.f32 0.0, %v2934
      %v2936 = vpop.f32.mrf.mxu0
      %v2937 = vadd.f32 0.0, %v2936
      %2938 = vdwg.mxu0
      %v2939 = vadd.f32 %v2846, %v2930
      %v2940 = vadd.f32 %v2847, %v2932
      %v2941 = vadd.f32 %v2848, %v2935
      %v2942 = vadd.f32 %v2849, %v2937
      %v2943 = vld [vmem:[#allocation2 + $0x38] sm:$0xff]
      %v2944 = vld [vmem:[#allocation2 + $0x40] sm:$0xff]
      %v2945 = vld [vmem:[#allocation2 + $0x48] sm:$0xff]
      %v2946 = vld [vmem:[#allocation2 + $0x50] sm:$0xf]
      %v2947 = vpack.c.bf16 %v2944, %v2943
      %v2948 = vpack.c.bf16 %v2946, %v2945
      %v2949 = vld [vmem:[%s3 + $0x180] sm:$0xf]
      %v2950 = vld [vmem:[%s3 + $0x184] sm:$0xf]
      %v2951 = vld [vmem:[%s3 + $0x188] sm:$0xf]
      %v2952 = vld [vmem:[%s3 + $0x18c] sm:$0xf]
      %v2953 = vld [vmem:[%s3 + $0x190] sm:$0xf]
      %v2954 = vld [vmem:[%s3 + $0x194] sm:$0xf]
      %v2955 = vld [vmem:[%s3 + $0x198] sm:$0xf]
      %v2956 = vld [vmem:[%s3 + $0x19c] sm:$0xf]
      %v2957 = vld [vmem:[%s3 + $0x1a0] sm:$0xf]
      %v2958 = vld [vmem:[%s3 + $0x1a4] sm:$0xf]
      %v2959 = vld [vmem:[%s3 + $0x1a8] sm:$0xf]
      %v2960 = vld [vmem:[%s3 + $0x1ac] sm:$0xf]
      %v2961 = vld [vmem:[%s3 + $0x1b0] sm:$0xf]
      %v2962 = vld [vmem:[%s3 + $0x1b4] sm:$0xf]
      %v2963 = vld [vmem:[%s3 + $0x1b8] sm:$0xf]
      %v2964 = vld [vmem:[%s3 + $0x1bc] sm:$0xf]
      %v2981 = vunpack.c.l.b16 %v2949
      %v2982 = vunpack.c.l.b16 %v2950
      %v2983 = vunpack.c.l.b16 %v2951
      %v2984 = vunpack.c.l.b16 %v2952
      %v2985 = vunpack.c.l.b16 %v2953
      %v2986 = vunpack.c.l.b16 %v2954
      %v2987 = vunpack.c.l.b16 %v2955
      %v2988 = vunpack.c.l.b16 %v2956
      %v2989 = vunpack.c.l.b16 %v2957
      %v2990 = vunpack.c.l.b16 %v2958
      %v2991 = vunpack.c.l.b16 %v2959
      %v2992 = vunpack.c.l.b16 %v2960
      %v2993 = vunpack.c.l.b16 %v2961
      %v2994 = vunpack.c.l.b16 %v2962
      %v2995 = vunpack.c.l.b16 %v2963
      %v2996 = vunpack.c.l.b16 %v2964
      %v2997 = vpack.c.b16 %v2982, %v2981
      %v2998 = vpack.c.b16 %v2984, %v2983
      %v2999 = vpack.c.b16 %v2986, %v2985
      %v3000 = vpack.c.b16 %v2988, %v2987
      %v3001 = vpack.c.b16 %v2990, %v2989
      %v3002 = vpack.c.b16 %v2992, %v2991
      %v3003 = vpack.c.b16 %v2994, %v2993
      %v3004 = vpack.c.b16 %v2996, %v2995
      %3013 = vmatpush.bf16.msra.mxu0 %v3004
      %3014 = vmatpush.bf16.msra.mxu0 %v3003
      %3015 = vmatpush.bf16.msra.mxu0 %v3002
      %3016 = vmatpush.bf16.msra.mxu0 %v3001
      %3017 = vmatpush.bf16.msra.mxu0 %v3000
      %3018 = vmatpush.bf16.msra.mxu0 %v2999
      %3019 = vmatpush.bf16.msra.mxu0 %v2998
      %3020 = vmatpush.bf16.msra.mxu0 %v2997
      %3021 = vmatmul.bf16.gmra.mxu0 %v2947
      %v3022 = vpop.f32.mrf.mxu0
      %v3023 = vadd.f32 0.0, %v3022
      %v3024 = vpop.f32.mrf.mxu0
      %v3025 = vadd.f32 0.0, %v3024
      %3026 = vmatmul.bf16.gmra.mxu0 %v2948
      %v3027 = vpop.f32.mrf.mxu0
      %v3028 = vadd.f32 0.0, %v3027
      %v3029 = vpop.f32.mrf.mxu0
      %v3030 = vadd.f32 0.0, %v3029
      %3031 = vdwg.mxu0
      %v3032 = vadd.f32 %v2939, %v3023
      %v3033 = vadd.f32 %v2940, %v3025
      %v3034 = vadd.f32 %v2941, %v3028
      %v3035 = vadd.f32 %v2942, %v3030
      %v3036 = vld [vmem:[#allocation2 + $0x39] sm:$0xff]
      %v3037 = vld [vmem:[#allocation2 + $0x41] sm:$0xff]
      %v3038 = vld [vmem:[#allocation2 + $0x49] sm:$0xff]
      %v3039 = vld [vmem:[#allocation2 + $0x51] sm:$0xf]
      %v3040 = vpack.c.bf16 %v3037, %v3036
      %v3041 = vpack.c.bf16 %v3039, %v3038
      %v3042 = vld [vmem:[%s3 + $0x1c0] sm:$0xf]
      %v3043 = vld [vmem:[%s3 + $0x1c4] sm:$0xf]
      %v3044 = vld [vmem:[%s3 + $0x1c8] sm:$0xf]
      %v3045 = vld [vmem:[%s3 + $0x1cc] sm:$0xf]
      %v3046 = vld [vmem:[%s3 + $0x1d0] sm:$0xf]
      %v3047 = vld [vmem:[%s3 + $0x1d4] sm:$0xf]
      %v3048 = vld [vmem:[%s3 + $0x1d8] sm:$0xf]
      %v3049 = vld [vmem:[%s3 + $0x1dc] sm:$0xf]
      %v3050 = vld [vmem:[%s3 + $0x1e0] sm:$0xf]
      %v3051 = vld [vmem:[%s3 + $0x1e4] sm:$0xf]
      %v3052 = vld [vmem:[%s3 + $0x1e8] sm:$0xf]
      %v3053 = vld [vmem:[%s3 + $0x1ec] sm:$0xf]
      %v3054 = vld [vmem:[%s3 + $0x1f0] sm:$0xf]
      %v3055 = vld [vmem:[%s3 + $0x1f4] sm:$0xf]
      %v3056 = vld [vmem:[%s3 + $0x1f8] sm:$0xf]
      %v3057 = vld [vmem:[%s3 + $0x1fc] sm:$0xf]
      %v3074 = vunpack.c.l.b16 %v3042
      %v3075 = vunpack.c.l.b16 %v3043
      %v3076 = vunpack.c.l.b16 %v3044
      %v3077 = vunpack.c.l.b16 %v3045
      %v3078 = vunpack.c.l.b16 %v3046
      %v3079 = vunpack.c.l.b16 %v3047
      %v3080 = vunpack.c.l.b16 %v3048
      %v3081 = vunpack.c.l.b16 %v3049
      %v3082 = vunpack.c.l.b16 %v3050
      %v3083 = vunpack.c.l.b16 %v3051
      %v3084 = vunpack.c.l.b16 %v3052
      %v3085 = vunpack.c.l.b16 %v3053
      %v3086 = vunpack.c.l.b16 %v3054
      %v3087 = vunpack.c.l.b16 %v3055
      %v3088 = vunpack.c.l.b16 %v3056
      %v3089 = vunpack.c.l.b16 %v3057
      %v3090 = vpack.c.b16 %v3075, %v3074
      %v3091 = vpack.c.b16 %v3077, %v3076
      %v3092 = vpack.c.b16 %v3079, %v3078
      %v3093 = vpack.c.b16 %v3081, %v3080
      %v3094 = vpack.c.b16 %v3083, %v3082
      %v3095 = vpack.c.b16 %v3085, %v3084
      %v3096 = vpack.c.b16 %v3087, %v3086
      %v3097 = vpack.c.b16 %v3089, %v3088
      %3106 = vmatpush.bf16.msra.mxu0 %v3097
      %3107 = vmatpush.bf16.msra.mxu0 %v3096
      %3108 = vmatpush.bf16.msra.mxu0 %v3095
      %3109 = vmatpush.bf16.msra.mxu0 %v3094
      %3110 = vmatpush.bf16.msra.mxu0 %v3093
      %3111 = vmatpush.bf16.msra.mxu0 %v3092
      %3112 = vmatpush.bf16.msra.mxu0 %v3091
      %3113 = vmatpush.bf16.msra.mxu0 %v3090
      %3114 = vmatmul.bf16.gmra.mxu0 %v3040
      %v3115 = vpop.f32.mrf.mxu0
      %v3116 = vadd.f32 0.0, %v3115
      %v3117 = vpop.f32.mrf.mxu0
      %v3118 = vadd.f32 0.0, %v3117
      %3119 = vmatmul.bf16.gmra.mxu0 %v3041
      %v3120 = vpop.f32.mrf.mxu0
      %v3121 = vadd.f32 0.0, %v3120
      %v3122 = vpop.f32.mrf.mxu0
      %v3123 = vadd.f32 0.0, %v3122
      %3124 = vdwg.mxu0
      %v3125 = vadd.f32 %v3032, %v3116
      %v3126 = vadd.f32 %v3033, %v3118
      %v3127 = vadd.f32 %v3034, %v3121
      %v3128 = vadd.f32 %v3035, %v3123
      %v3129 = vld [vmem:[#allocation2 + $0x3a] sm:$0xff]
      %v3130 = vld [vmem:[#allocation2 + $0x42] sm:$0xff]
      %v3131 = vld [vmem:[#allocation2 + $0x4a] sm:$0xff]
      %v3132 = vld [vmem:[#allocation2 + $0x52] sm:$0xf]
      %v3133 = vpack.c.bf16 %v3130, %v3129
      %v3134 = vpack.c.bf16 %v3132, %v3131
      %v3135 = vld [vmem:[%s3 + $0x200] sm:$0xf]
      %v3136 = vld [vmem:[%s3 + $0x204] sm:$0xf]
      %v3137 = vld [vmem:[%s3 + $0x208] sm:$0xf]
      %v3138 = vld [vmem:[%s3 + $0x20c] sm:$0xf]
      %v3139 = vld [vmem:[%s3 + $0x210] sm:$0xf]
      %v3140 = vld [vmem:[%s3 + $0x214] sm:$0xf]
      %v3141 = vld [vmem:[%s3 + $0x218] sm:$0xf]
      %v3142 = vld [vmem:[%s3 + $0x21c] sm:$0xf]
      %v3143 = vld [vmem:[%s3 + $0x220] sm:$0xf]
      %v3144 = vld [vmem:[%s3 + $0x224] sm:$0xf]
      %v3145 = vld [vmem:[%s3 + $0x228] sm:$0xf]
      %v3146 = vld [vmem:[%s3 + $0x22c] sm:$0xf]
      %v3147 = vld [vmem:[%s3 + $0x230] sm:$0xf]
      %v3148 = vld [vmem:[%s3 + $0x234] sm:$0xf]
      %v3149 = vld [vmem:[%s3 + $0x238] sm:$0xf]
      %v3150 = vld [vmem:[%s3 + $0x23c] sm:$0xf]
      %v3167 = vunpack.c.l.b16 %v3135
      %v3168 = vunpack.c.l.b16 %v3136
      %v3169 = vunpack.c.l.b16 %v3137
      %v3170 = vunpack.c.l.b16 %v3138
      %v3171 = vunpack.c.l.b16 %v3139
      %v3172 = vunpack.c.l.b16 %v3140
      %v3173 = vunpack.c.l.b16 %v3141
      %v3174 = vunpack.c.l.b16 %v3142
      %v3175 = vunpack.c.l.b16 %v3143
      %v3176 = vunpack.c.l.b16 %v3144
      %v3177 = vunpack.c.l.b16 %v3145
      %v3178 = vunpack.c.l.b16 %v3146
      %v3179 = vunpack.c.l.b16 %v3147
      %v3180 = vunpack.c.l.b16 %v3148
      %v3181 = vunpack.c.l.b16 %v3149
      %v3182 = vunpack.c.l.b16 %v3150
      %v3183 = vpack.c.b16 %v3168, %v3167
      %v3184 = vpack.c.b16 %v3170, %v3169
      %v3185 = vpack.c.b16 %v3172, %v3171
      %v3186 = vpack.c.b16 %v3174, %v3173
      %v3187 = vpack.c.b16 %v3176, %v3175
      %v3188 = vpack.c.b16 %v3178, %v3177
      %v3189 = vpack.c.b16 %v3180, %v3179
      %v3190 = vpack.c.b16 %v3182, %v3181
      %3199 = vmatpush.bf16.msra.mxu0 %v3190
      %3200 = vmatpush.bf16.msra.mxu0 %v3189
      %3201 = vmatpush.bf16.msra.mxu0 %v3188
      %3202 = vmatpush.bf16.msra.mxu0 %v3187
      %3203 = vmatpush.bf16.msra.mxu0 %v3186
      %3204 = vmatpush.bf16.msra.mxu0 %v3185
      %3205 = vmatpush.bf16.msra.mxu0 %v3184
      %3206 = vmatpush.bf16.msra.mxu0 %v3183
      %3207 = vmatmul.bf16.gmra.mxu0 %v3133
      %v3208 = vpop.f32.mrf.mxu0
      %v3209 = vadd.f32 0.0, %v3208
      %v3210 = vpop.f32.mrf.mxu0
      %v3211 = vadd.f32 0.0, %v3210
      %3212 = vmatmul.bf16.gmra.mxu0 %v3134
      %v3213 = vpop.f32.mrf.mxu0
      %v3214 = vadd.f32 0.0, %v3213
      %v3215 = vpop.f32.mrf.mxu0
      %v3216 = vadd.f32 0.0, %v3215
      %3217 = vdwg.mxu0
      %v3218 = vadd.f32 %v3125, %v3209
      %v3219 = vadd.f32 %v3126, %v3211
      %v3220 = vadd.f32 %v3127, %v3214
      %v3221 = vadd.f32 %v3128, %v3216
      %3222 = vst [vmem:[#allocation3] sm:$0xff] %v3218
      %3223 = vst [vmem:[#allocation3 + $0x8] sm:$0xff] %v3219
      %3224 = vst [vmem:[#allocation3 + $0x10] sm:$0xff] %v3220
      %3225 = vst [vmem:[#allocation3 + $0x18] sm:$0xf] %v3221
      %v3226 = vld [vmem:[#allocation3] ss:$2 sm:$0x3f]
      %v3227 = vld [vmem:[%s321] ss:$2 sm:$0x3f]
      %v3228 = vmax.f32 %v3226, %v3227
      %v3229 = vld [vmem:[%s2380] ss:$2 sm:$0x3f]
      %v3230 = vld [vmem:[%s2382] ss:$2 sm:$0x3f]
      %v3231 = vmax.f32 %v3229, %v3230
      %v3232 = vmax.f32 %v3228, %v3231
      %v3233 = vadd.f32 %v3232, %v2387
      %v3234 = vmax.f32 %v3233, 0.0
      %3235 = vst.msk [vmem:[%s224 + $0x6] sm:$0x3f] %vm2391, %v3234
      %v3236 = vld [vmem:[#allocation2 + $0x38] sm:$0xff]
      %v3237 = vld [vmem:[#allocation2 + $0x40] sm:$0xff]
      %v3238 = vld [vmem:[#allocation2 + $0x48] sm:$0xff]
      %v3239 = vld [vmem:[#allocation2 + $0x50] sm:$0xf]
      %v3240 = vpack.c.bf16 %v3237, %v3236
      %v3241 = vpack.c.bf16 %v3239, %v3238
      %v3242 = vld [vmem:[%s3] sm:$0xf]
      %v3243 = vld [vmem:[%s3 + $0x4] sm:$0xf]
      %v3244 = vld [vmem:[%s3 + $0x8] sm:$0xf]
      %v3245 = vld [vmem:[%s3 + $0xc] sm:$0xf]
      %v3246 = vld [vmem:[%s3 + $0x10] sm:$0xf]
      %v3247 = vld [vmem:[%s3 + $0x14] sm:$0xf]
      %v3248 = vld [vmem:[%s3 + $0x18] sm:$0xf]
      %v3249 = vld [vmem:[%s3 + $0x1c] sm:$0xf]
      %v3250 = vld [vmem:[%s3 + $0x20] sm:$0xf]
      %v3251 = vld [vmem:[%s3 + $0x24] sm:$0xf]
      %v3252 = vld [vmem:[%s3 + $0x28] sm:$0xf]
      %v3253 = vld [vmem:[%s3 + $0x2c] sm:$0xf]
      %v3254 = vld [vmem:[%s3 + $0x30] sm:$0xf]
      %v3255 = vld [vmem:[%s3 + $0x34] sm:$0xf]
      %v3256 = vld [vmem:[%s3 + $0x38] sm:$0xf]
      %v3257 = vld [vmem:[%s3 + $0x3c] sm:$0xf]
      %v3258 = vld [vmem:[#allocation2 + $0x39] sm:$0xff]
      %v3259 = vld [vmem:[#allocation2 + $0x41] sm:$0xff]
      %v3260 = vld [vmem:[#allocation2 + $0x49] sm:$0xff]
      %v3261 = vld [vmem:[#allocation2 + $0x51] sm:$0xf]
      %v3262 = vpack.c.bf16 %v3259, %v3258
      %v3263 = vpack.c.bf16 %v3261, %v3260
      %v3264 = vld [vmem:[%s3 + $0x40] sm:$0xf]
      %v3265 = vld [vmem:[%s3 + $0x44] sm:$0xf]
      %v3266 = vld [vmem:[%s3 + $0x48] sm:$0xf]
      %v3267 = vld [vmem:[%s3 + $0x4c] sm:$0xf]
      %v3268 = vld [vmem:[%s3 + $0x50] sm:$0xf]
      %v3269 = vld [vmem:[%s3 + $0x54] sm:$0xf]
      %v3270 = vld [vmem:[%s3 + $0x58] sm:$0xf]
      %v3271 = vld [vmem:[%s3 + $0x5c] sm:$0xf]
      %v3272 = vld [vmem:[%s3 + $0x60] sm:$0xf]
      %v3273 = vld [vmem:[%s3 + $0x64] sm:$0xf]
      %v3274 = vld [vmem:[%s3 + $0x68] sm:$0xf]
      %v3275 = vld [vmem:[%s3 + $0x6c] sm:$0xf]
      %v3276 = vld [vmem:[%s3 + $0x70] sm:$0xf]
      %v3277 = vld [vmem:[%s3 + $0x74] sm:$0xf]
      %v3278 = vld [vmem:[%s3 + $0x78] sm:$0xf]
      %v3279 = vld [vmem:[%s3 + $0x7c] sm:$0xf]
      %v3296 = vunpack.c.l.b16 %v3264
      %v3297 = vunpack.c.l.b16 %v3265
      %v3298 = vunpack.c.l.b16 %v3266
      %v3299 = vunpack.c.l.b16 %v3267
      %v3300 = vunpack.c.l.b16 %v3268
      %v3301 = vunpack.c.l.b16 %v3269
      %v3302 = vunpack.c.l.b16 %v3270
      %v3303 = vunpack.c.l.b16 %v3271
      %v3304 = vunpack.c.l.b16 %v3272
      %v3305 = vunpack.c.l.b16 %v3273
      %v3306 = vunpack.c.l.b16 %v3274
      %v3307 = vunpack.c.l.b16 %v3275
      %v3308 = vunpack.c.l.b16 %v3276
      %v3309 = vunpack.c.l.b16 %v3277
      %v3310 = vunpack.c.l.b16 %v3278
      %v3311 = vunpack.c.l.b16 %v3279
      %v3312 = vpack.c.b16 %v3297, %v3296
      %v3313 = vpack.c.b16 %v3299, %v3298
      %v3314 = vpack.c.b16 %v3301, %v3300
      %v3315 = vpack.c.b16 %v3303, %v3302
      %v3316 = vpack.c.b16 %v3305, %v3304
      %v3317 = vpack.c.b16 %v3307, %v3306
      %v3318 = vpack.c.b16 %v3309, %v3308
      %v3319 = vpack.c.b16 %v3311, %v3310
      %3328 = vmatpush.bf16.msra.mxu0 %v3319
      %3329 = vmatpush.bf16.msra.mxu0 %v3318
      %3330 = vmatpush.bf16.msra.mxu0 %v3317
      %3331 = vmatpush.bf16.msra.mxu0 %v3316
      %3332 = vmatpush.bf16.msra.mxu0 %v3315
      %3333 = vmatpush.bf16.msra.mxu0 %v3314
      %3334 = vmatpush.bf16.msra.mxu0 %v3313
      %3335 = vmatpush.bf16.msra.mxu0 %v3312
      %3336 = vmatmul.bf16.gmra.mxu0 %v3262
      %v3337 = vpop.f32.mrf.mxu0
      %v3338 = vadd.f32 0.0, %v3337
      %v3339 = vpop.f32.mrf.mxu0
      %v3340 = vadd.f32 0.0, %v3339
      %3341 = vmatmul.bf16.gmra.mxu0 %v3263
      %v3342 = vpop.f32.mrf.mxu0
      %v3343 = vadd.f32 0.0, %v3342
      %v3344 = vpop.f32.mrf.mxu0
      %v3345 = vadd.f32 0.0, %v3344
      %3346 = vdwg.mxu0
      %v3363 = vunpack.c.l.b16 %v3242
      %v3364 = vunpack.c.l.b16 %v3243
      %v3365 = vunpack.c.l.b16 %v3244
      %v3366 = vunpack.c.l.b16 %v3245
      %v3367 = vunpack.c.l.b16 %v3246
      %v3368 = vunpack.c.l.b16 %v3247
      %v3369 = vunpack.c.l.b16 %v3248
      %v3370 = vunpack.c.l.b16 %v3249
      %v3371 = vunpack.c.l.b16 %v3250
      %v3372 = vunpack.c.l.b16 %v3251
      %v3373 = vunpack.c.l.b16 %v3252
      %v3374 = vunpack.c.l.b16 %v3253
      %v3375 = vunpack.c.l.b16 %v3254
      %v3376 = vunpack.c.l.b16 %v3255
      %v3377 = vunpack.c.l.b16 %v3256
      %v3378 = vunpack.c.l.b16 %v3257
      %v3379 = vpack.c.b16 %v3364, %v3363
      %v3380 = vpack.c.b16 %v3366, %v3365
      %v3381 = vpack.c.b16 %v3368, %v3367
      %v3382 = vpack.c.b16 %v3370, %v3369
      %v3383 = vpack.c.b16 %v3372, %v3371
      %v3384 = vpack.c.b16 %v3374, %v3373
      %v3385 = vpack.c.b16 %v3376, %v3375
      %v3386 = vpack.c.b16 %v3378, %v3377
      %3395 = vmatpush.bf16.msra.mxu0 %v3386
      %3396 = vmatpush.bf16.msra.mxu0 %v3385
      %3397 = vmatpush.bf16.msra.mxu0 %v3384
      %3398 = vmatpush.bf16.msra.mxu0 %v3383
      %3399 = vmatpush.bf16.msra.mxu0 %v3382
      %3400 = vmatpush.bf16.msra.mxu0 %v3381
      %3401 = vmatpush.bf16.msra.mxu0 %v3380
      %3402 = vmatpush.bf16.msra.mxu0 %v3379
      %3403 = vmatmul.bf16.gmra.mxu0 %v3240
      %v3404 = vpop.f32.mrf.mxu0
      %v3405 = vadd.f32 %v3338, %v3404
      %v3406 = vpop.f32.mrf.mxu0
      %v3407 = vadd.f32 %v3340, %v3406
      %3408 = vmatmul.bf16.gmra.mxu0 %v3241
      %v3409 = vpop.f32.mrf.mxu0
      %v3410 = vadd.f32 %v3343, %v3409
      %v3411 = vpop.f32.mrf.mxu0
      %v3412 = vadd.f32 %v3345, %v3411
      %3413 = vdwg.mxu0
      %v3414 = vld [vmem:[#allocation2 + $0x3a] sm:$0xff]
      %v3415 = vld [vmem:[#allocation2 + $0x42] sm:$0xff]
      %v3416 = vld [vmem:[#allocation2 + $0x4a] sm:$0xff]
      %v3417 = vld [vmem:[#allocation2 + $0x52] sm:$0xf]
      %v3418 = vpack.c.bf16 %v3415, %v3414
      %v3419 = vpack.c.bf16 %v3417, %v3416
      %v3420 = vld [vmem:[%s3 + $0x80] sm:$0xf]
      %v3421 = vld [vmem:[%s3 + $0x84] sm:$0xf]
      %v3422 = vld [vmem:[%s3 + $0x88] sm:$0xf]
      %v3423 = vld [vmem:[%s3 + $0x8c] sm:$0xf]
      %v3424 = vld [vmem:[%s3 + $0x90] sm:$0xf]
      %v3425 = vld [vmem:[%s3 + $0x94] sm:$0xf]
      %v3426 = vld [vmem:[%s3 + $0x98] sm:$0xf]
      %v3427 = vld [vmem:[%s3 + $0x9c] sm:$0xf]
      %v3428 = vld [vmem:[%s3 + $0xa0] sm:$0xf]
      %v3429 = vld [vmem:[%s3 + $0xa4] sm:$0xf]
      %v3430 = vld [vmem:[%s3 + $0xa8] sm:$0xf]
      %v3431 = vld [vmem:[%s3 + $0xac] sm:$0xf]
      %v3432 = vld [vmem:[%s3 + $0xb0] sm:$0xf]
      %v3433 = vld [vmem:[%s3 + $0xb4] sm:$0xf]
      %v3434 = vld [vmem:[%s3 + $0xb8] sm:$0xf]
      %v3435 = vld [vmem:[%s3 + $0xbc] sm:$0xf]
      %v3452 = vunpack.c.l.b16 %v3420
      %v3453 = vunpack.c.l.b16 %v3421
      %v3454 = vunpack.c.l.b16 %v3422
      %v3455 = vunpack.c.l.b16 %v3423
      %v3456 = vunpack.c.l.b16 %v3424
      %v3457 = vunpack.c.l.b16 %v3425
      %v3458 = vunpack.c.l.b16 %v3426
      %v3459 = vunpack.c.l.b16 %v3427
      %v3460 = vunpack.c.l.b16 %v3428
      %v3461 = vunpack.c.l.b16 %v3429
      %v3462 = vunpack.c.l.b16 %v3430
      %v3463 = vunpack.c.l.b16 %v3431
      %v3464 = vunpack.c.l.b16 %v3432
      %v3465 = vunpack.c.l.b16 %v3433
      %v3466 = vunpack.c.l.b16 %v3434
      %v3467 = vunpack.c.l.b16 %v3435
      %v3468 = vpack.c.b16 %v3453, %v3452
      %v3469 = vpack.c.b16 %v3455, %v3454
      %v3470 = vpack.c.b16 %v3457, %v3456
      %v3471 = vpack.c.b16 %v3459, %v3458
      %v3472 = vpack.c.b16 %v3461, %v3460
      %v3473 = vpack.c.b16 %v3463, %v3462
      %v3474 = vpack.c.b16 %v3465, %v3464
      %v3475 = vpack.c.b16 %v3467, %v3466
      %3484 = vmatpush.bf16.msra.mxu0 %v3475
      %3485 = vmatpush.bf16.msra.mxu0 %v3474
      %3486 = vmatpush.bf16.msra.mxu0 %v3473
      %3487 = vmatpush.bf16.msra.mxu0 %v3472
      %3488 = vmatpush.bf16.msra.mxu0 %v3471
      %3489 = vmatpush.bf16.msra.mxu0 %v3470
      %3490 = vmatpush.bf16.msra.mxu0 %v3469
      %3491 = vmatpush.bf16.msra.mxu0 %v3468
      %3492 = vmatmul.bf16.gmra.mxu0 %v3418
      %v3493 = vpop.f32.mrf.mxu0
      %v3494 = vadd.f32 0.0, %v3493
      %v3495 = vpop.f32.mrf.mxu0
      %v3496 = vadd.f32 0.0, %v3495
      %3497 = vmatmul.bf16.gmra.mxu0 %v3419
      %v3498 = vpop.f32.mrf.mxu0
      %v3499 = vadd.f32 0.0, %v3498
      %v3500 = vpop.f32.mrf.mxu0
      %v3501 = vadd.f32 0.0, %v3500
      %3502 = vdwg.mxu0
      %v3503 = vadd.f32 %v3405, %v3494
      %v3504 = vadd.f32 %v3407, %v3496
      %v3505 = vadd.f32 %v3410, %v3499
      %v3506 = vadd.f32 %v3412, %v3501
      %v3507 = vld [vmem:[#allocation2 + $0x46] sm:$0xff]
      %v3508 = vld [vmem:[#allocation2 + $0x4e] sm:$0xff]
      %v3509 = vld [vmem:[#allocation2 + $0x56] sm:$0xff]
      %v3510 = vld [vmem:[#allocation2 + $0x5e] sm:$0xf]
      %v3511 = vpack.c.bf16 %v3508, %v3507
      %v3512 = vpack.c.bf16 %v3510, %v3509
      %v3513 = vld [vmem:[%s3 + $0xc0] sm:$0xf]
      %v3514 = vld [vmem:[%s3 + $0xc4] sm:$0xf]
      %v3515 = vld [vmem:[%s3 + $0xc8] sm:$0xf]
      %v3516 = vld [vmem:[%s3 + $0xcc] sm:$0xf]
      %v3517 = vld [vmem:[%s3 + $0xd0] sm:$0xf]
      %v3518 = vld [vmem:[%s3 + $0xd4] sm:$0xf]
      %v3519 = vld [vmem:[%s3 + $0xd8] sm:$0xf]
      %v3520 = vld [vmem:[%s3 + $0xdc] sm:$0xf]
      %v3521 = vld [vmem:[%s3 + $0xe0] sm:$0xf]
      %v3522 = vld [vmem:[%s3 + $0xe4] sm:$0xf]
      %v3523 = vld [vmem:[%s3 + $0xe8] sm:$0xf]
      %v3524 = vld [vmem:[%s3 + $0xec] sm:$0xf]
      %v3525 = vld [vmem:[%s3 + $0xf0] sm:$0xf]
      %v3526 = vld [vmem:[%s3 + $0xf4] sm:$0xf]
      %v3527 = vld [vmem:[%s3 + $0xf8] sm:$0xf]
      %v3528 = vld [vmem:[%s3 + $0xfc] sm:$0xf]
      %v3545 = vunpack.c.l.b16 %v3513
      %v3546 = vunpack.c.l.b16 %v3514
      %v3547 = vunpack.c.l.b16 %v3515
      %v3548 = vunpack.c.l.b16 %v3516
      %v3549 = vunpack.c.l.b16 %v3517
      %v3550 = vunpack.c.l.b16 %v3518
      %v3551 = vunpack.c.l.b16 %v3519
      %v3552 = vunpack.c.l.b16 %v3520
      %v3553 = vunpack.c.l.b16 %v3521
      %v3554 = vunpack.c.l.b16 %v3522
      %v3555 = vunpack.c.l.b16 %v3523
      %v3556 = vunpack.c.l.b16 %v3524
      %v3557 = vunpack.c.l.b16 %v3525
      %v3558 = vunpack.c.l.b16 %v3526
      %v3559 = vunpack.c.l.b16 %v3527
      %v3560 = vunpack.c.l.b16 %v3528
      %v3561 = vpack.c.b16 %v3546, %v3545
      %v3562 = vpack.c.b16 %v3548, %v3547
      %v3563 = vpack.c.b16 %v3550, %v3549
      %v3564 = vpack.c.b16 %v3552, %v3551
      %v3565 = vpack.c.b16 %v3554, %v3553
      %v3566 = vpack.c.b16 %v3556, %v3555
      %v3567 = vpack.c.b16 %v3558, %v3557
      %v3568 = vpack.c.b16 %v3560, %v3559
      %3577 = vmatpush.bf16.msra.mxu0 %v3568
      %3578 = vmatpush.bf16.msra.mxu0 %v3567
      %3579 = vmatpush.bf16.msra.mxu0 %v3566
      %3580 = vmatpush.bf16.msra.mxu0 %v3565
      %3581 = vmatpush.bf16.msra.mxu0 %v3564
      %3582 = vmatpush.bf16.msra.mxu0 %v3563
      %3583 = vmatpush.bf16.msra.mxu0 %v3562
      %3584 = vmatpush.bf16.msra.mxu0 %v3561
      %3585 = vmatmul.bf16.gmra.mxu0 %v3511
      %v3586 = vpop.f32.mrf.mxu0
      %v3587 = vadd.f32 0.0, %v3586
      %v3588 = vpop.f32.mrf.mxu0
      %v3589 = vadd.f32 0.0, %v3588
      %3590 = vmatmul.bf16.gmra.mxu0 %v3512
      %v3591 = vpop.f32.mrf.mxu0
      %v3592 = vadd.f32 0.0, %v3591
      %v3593 = vpop.f32.mrf.mxu0
      %v3594 = vadd.f32 0.0, %v3593
      %3595 = vdwg.mxu0
      %v3596 = vadd.f32 %v3503, %v3587
      %v3597 = vadd.f32 %v3504, %v3589
      %v3598 = vadd.f32 %v3505, %v3592
      %v3599 = vadd.f32 %v3506, %v3594
      %v3600 = vld [vmem:[#allocation2 + $0x47] sm:$0xff]
      %v3601 = vld [vmem:[#allocation2 + $0x4f] sm:$0xff]
      %v3602 = vld [vmem:[#allocation2 + $0x57] sm:$0xff]
      %v3603 = vld [vmem:[#allocation2 + $0x5f] sm:$0xf]
      %v3604 = vpack.c.bf16 %v3601, %v3600
      %v3605 = vpack.c.bf16 %v3603, %v3602
      %v3606 = vld [vmem:[%s3 + $0x100] sm:$0xf]
      %v3607 = vld [vmem:[%s3 + $0x104] sm:$0xf]
      %v3608 = vld [vmem:[%s3 + $0x108] sm:$0xf]
      %v3609 = vld [vmem:[%s3 + $0x10c] sm:$0xf]
      %v3610 = vld [vmem:[%s3 + $0x110] sm:$0xf]
      %v3611 = vld [vmem:[%s3 + $0x114] sm:$0xf]
      %v3612 = vld [vmem:[%s3 + $0x118] sm:$0xf]
      %v3613 = vld [vmem:[%s3 + $0x11c] sm:$0xf]
      %v3614 = vld [vmem:[%s3 + $0x120] sm:$0xf]
      %v3615 = vld [vmem:[%s3 + $0x124] sm:$0xf]
      %v3616 = vld [vmem:[%s3 + $0x128] sm:$0xf]
      %v3617 = vld [vmem:[%s3 + $0x12c] sm:$0xf]
      %v3618 = vld [vmem:[%s3 + $0x130] sm:$0xf]
      %v3619 = vld [vmem:[%s3 + $0x134] sm:$0xf]
      %v3620 = vld [vmem:[%s3 + $0x138] sm:$0xf]
      %v3621 = vld [vmem:[%s3 + $0x13c] sm:$0xf]
      %v3638 = vunpack.c.l.b16 %v3606
      %v3639 = vunpack.c.l.b16 %v3607
      %v3640 = vunpack.c.l.b16 %v3608
      %v3641 = vunpack.c.l.b16 %v3609
      %v3642 = vunpack.c.l.b16 %v3610
      %v3643 = vunpack.c.l.b16 %v3611
      %v3644 = vunpack.c.l.b16 %v3612
      %v3645 = vunpack.c.l.b16 %v3613
      %v3646 = vunpack.c.l.b16 %v3614
      %v3647 = vunpack.c.l.b16 %v3615
      %v3648 = vunpack.c.l.b16 %v3616
      %v3649 = vunpack.c.l.b16 %v3617
      %v3650 = vunpack.c.l.b16 %v3618
      %v3651 = vunpack.c.l.b16 %v3619
      %v3652 = vunpack.c.l.b16 %v3620
      %v3653 = vunpack.c.l.b16 %v3621
      %v3654 = vpack.c.b16 %v3639, %v3638
      %v3655 = vpack.c.b16 %v3641, %v3640
      %v3656 = vpack.c.b16 %v3643, %v3642
      %v3657 = vpack.c.b16 %v3645, %v3644
      %v3658 = vpack.c.b16 %v3647, %v3646
      %v3659 = vpack.c.b16 %v3649, %v3648
      %v3660 = vpack.c.b16 %v3651, %v3650
      %v3661 = vpack.c.b16 %v3653, %v3652
      %3670 = vmatpush.bf16.msra.mxu0 %v3661
      %3671 = vmatpush.bf16.msra.mxu0 %v3660
      %3672 = vmatpush.bf16.msra.mxu0 %v3659
      %3673 = vmatpush.bf16.msra.mxu0 %v3658
      %3674 = vmatpush.bf16.msra.mxu0 %v3657
      %3675 = vmatpush.bf16.msra.mxu0 %v3656
      %3676 = vmatpush.bf16.msra.mxu0 %v3655
      %3677 = vmatpush.bf16.msra.mxu0 %v3654
      %3678 = vmatmul.bf16.gmra.mxu0 %v3604
      %v3679 = vpop.f32.mrf.mxu0
      %v3680 = vadd.f32 0.0, %v3679
      %v3681 = vpop.f32.mrf.mxu0
      %v3682 = vadd.f32 0.0, %v3681
      %3683 = vmatmul.bf16.gmra.mxu0 %v3605
      %v3684 = vpop.f32.mrf.mxu0
      %v3685 = vadd.f32 0.0, %v3684
      %v3686 = vpop.f32.mrf.mxu0
      %v3687 = vadd.f32 0.0, %v3686
      %3688 = vdwg.mxu0
      %v3689 = vadd.f32 %v3596, %v3680
      %v3690 = vadd.f32 %v3597, %v3682
      %v3691 = vadd.f32 %v3598, %v3685
      %v3692 = vadd.f32 %v3599, %v3687
      %v3693 = vld [vmem:[#allocation2 + $0x48] sm:$0xff]
      %v3694 = vld [vmem:[#allocation2 + $0x50] sm:$0xff]
      %v3695 = vld [vmem:[#allocation2 + $0x58] sm:$0xff]
      %v3696 = vld [vmem:[#allocation2 + $0x60] sm:$0xf]
      %v3697 = vpack.c.bf16 %v3694, %v3693
      %v3698 = vpack.c.bf16 %v3696, %v3695
      %v3699 = vld [vmem:[%s3 + $0x140] sm:$0xf]
      %v3700 = vld [vmem:[%s3 + $0x144] sm:$0xf]
      %v3701 = vld [vmem:[%s3 + $0x148] sm:$0xf]
      %v3702 = vld [vmem:[%s3 + $0x14c] sm:$0xf]
      %v3703 = vld [vmem:[%s3 + $0x150] sm:$0xf]
      %v3704 = vld [vmem:[%s3 + $0x154] sm:$0xf]
      %v3705 = vld [vmem:[%s3 + $0x158] sm:$0xf]
      %v3706 = vld [vmem:[%s3 + $0x15c] sm:$0xf]
      %v3707 = vld [vmem:[%s3 + $0x160] sm:$0xf]
      %v3708 = vld [vmem:[%s3 + $0x164] sm:$0xf]
      %v3709 = vld [vmem:[%s3 + $0x168] sm:$0xf]
      %v3710 = vld [vmem:[%s3 + $0x16c] sm:$0xf]
      %v3711 = vld [vmem:[%s3 + $0x170] sm:$0xf]
      %v3712 = vld [vmem:[%s3 + $0x174] sm:$0xf]
      %v3713 = vld [vmem:[%s3 + $0x178] sm:$0xf]
      %v3714 = vld [vmem:[%s3 + $0x17c] sm:$0xf]
      %v3731 = vunpack.c.l.b16 %v3699
      %v3732 = vunpack.c.l.b16 %v3700
      %v3733 = vunpack.c.l.b16 %v3701
      %v3734 = vunpack.c.l.b16 %v3702
      %v3735 = vunpack.c.l.b16 %v3703
      %v3736 = vunpack.c.l.b16 %v3704
      %v3737 = vunpack.c.l.b16 %v3705
      %v3738 = vunpack.c.l.b16 %v3706
      %v3739 = vunpack.c.l.b16 %v3707
      %v3740 = vunpack.c.l.b16 %v3708
      %v3741 = vunpack.c.l.b16 %v3709
      %v3742 = vunpack.c.l.b16 %v3710
      %v3743 = vunpack.c.l.b16 %v3711
      %v3744 = vunpack.c.l.b16 %v3712
      %v3745 = vunpack.c.l.b16 %v3713
      %v3746 = vunpack.c.l.b16 %v3714
      %v3747 = vpack.c.b16 %v3732, %v3731
      %v3748 = vpack.c.b16 %v3734, %v3733
      %v3749 = vpack.c.b16 %v3736, %v3735
      %v3750 = vpack.c.b16 %v3738, %v3737
      %v3751 = vpack.c.b16 %v3740, %v3739
      %v3752 = vpack.c.b16 %v3742, %v3741
      %v3753 = vpack.c.b16 %v3744, %v3743
      %v3754 = vpack.c.b16 %v3746, %v3745
      %3763 = vmatpush.bf16.msra.mxu0 %v3754
      %3764 = vmatpush.bf16.msra.mxu0 %v3753
      %3765 = vmatpush.bf16.msra.mxu0 %v3752
      %3766 = vmatpush.bf16.msra.mxu0 %v3751
      %3767 = vmatpush.bf16.msra.mxu0 %v3750
      %3768 = vmatpush.bf16.msra.mxu0 %v3749
      %3769 = vmatpush.bf16.msra.mxu0 %v3748
      %3770 = vmatpush.bf16.msra.mxu0 %v3747
      %3771 = vmatmul.bf16.gmra.mxu0 %v3697
      %v3772 = vpop.f32.mrf.mxu0
      %v3773 = vadd.f32 0.0, %v3772
      %v3774 = vpop.f32.mrf.mxu0
      %v3775 = vadd.f32 0.0, %v3774
      %3776 = vmatmul.bf16.gmra.mxu0 %v3698
      %v3777 = vpop.f32.mrf.mxu0
      %v3778 = vadd.f32 0.0, %v3777
      %v3779 = vpop.f32.mrf.mxu0
      %v3780 = vadd.f32 0.0, %v3779
      %3781 = vdwg.mxu0
      %v3782 = vadd.f32 %v3689, %v3773
      %v3783 = vadd.f32 %v3690, %v3775
      %v3784 = vadd.f32 %v3691, %v3778
      %v3785 = vadd.f32 %v3692, %v3780
      %v3786 = vld [vmem:[#allocation2 + $0x54] sm:$0xff]
      %v3787 = vld [vmem:[#allocation2 + $0x5c] sm:$0xff]
      %v3788 = vld [vmem:[#allocation2 + $0x64] sm:$0xff]
      %v3789 = vld [vmem:[#allocation2 + $0x6c] sm:$0xf]
      %v3790 = vpack.c.bf16 %v3787, %v3786
      %v3791 = vpack.c.bf16 %v3789, %v3788
      %v3792 = vld [vmem:[%s3 + $0x180] sm:$0xf]
      %v3793 = vld [vmem:[%s3 + $0x184] sm:$0xf]
      %v3794 = vld [vmem:[%s3 + $0x188] sm:$0xf]
      %v3795 = vld [vmem:[%s3 + $0x18c] sm:$0xf]
      %v3796 = vld [vmem:[%s3 + $0x190] sm:$0xf]
      %v3797 = vld [vmem:[%s3 + $0x194] sm:$0xf]
      %v3798 = vld [vmem:[%s3 + $0x198] sm:$0xf]
      %v3799 = vld [vmem:[%s3 + $0x19c] sm:$0xf]
      %v3800 = vld [vmem:[%s3 + $0x1a0] sm:$0xf]
      %v3801 = vld [vmem:[%s3 + $0x1a4] sm:$0xf]
      %v3802 = vld [vmem:[%s3 + $0x1a8] sm:$0xf]
      %v3803 = vld [vmem:[%s3 + $0x1ac] sm:$0xf]
      %v3804 = vld [vmem:[%s3 + $0x1b0] sm:$0xf]
      %v3805 = vld [vmem:[%s3 + $0x1b4] sm:$0xf]
      %v3806 = vld [vmem:[%s3 + $0x1b8] sm:$0xf]
      %v3807 = vld [vmem:[%s3 + $0x1bc] sm:$0xf]
      %v3824 = vunpack.c.l.b16 %v3792
      %v3825 = vunpack.c.l.b16 %v3793
      %v3826 = vunpack.c.l.b16 %v3794
      %v3827 = vunpack.c.l.b16 %v3795
      %v3828 = vunpack.c.l.b16 %v3796
      %v3829 = vunpack.c.l.b16 %v3797
      %v3830 = vunpack.c.l.b16 %v3798
      %v3831 = vunpack.c.l.b16 %v3799
      %v3832 = vunpack.c.l.b16 %v3800
      %v3833 = vunpack.c.l.b16 %v3801
      %v3834 = vunpack.c.l.b16 %v3802
      %v3835 = vunpack.c.l.b16 %v3803
      %v3836 = vunpack.c.l.b16 %v3804
      %v3837 = vunpack.c.l.b16 %v3805
      %v3838 = vunpack.c.l.b16 %v3806
      %v3839 = vunpack.c.l.b16 %v3807
      %v3840 = vpack.c.b16 %v3825, %v3824
      %v3841 = vpack.c.b16 %v3827, %v3826
      %v3842 = vpack.c.b16 %v3829, %v3828
      %v3843 = vpack.c.b16 %v3831, %v3830
      %v3844 = vpack.c.b16 %v3833, %v3832
      %v3845 = vpack.c.b16 %v3835, %v3834
      %v3846 = vpack.c.b16 %v3837, %v3836
      %v3847 = vpack.c.b16 %v3839, %v3838
      %3856 = vmatpush.bf16.msra.mxu0 %v3847
      %3857 = vmatpush.bf16.msra.mxu0 %v3846
      %3858 = vmatpush.bf16.msra.mxu0 %v3845
      %3859 = vmatpush.bf16.msra.mxu0 %v3844
      %3860 = vmatpush.bf16.msra.mxu0 %v3843
      %3861 = vmatpush.bf16.msra.mxu0 %v3842
      %3862 = vmatpush.bf16.msra.mxu0 %v3841
      %3863 = vmatpush.bf16.msra.mxu0 %v3840
      %3864 = vmatmul.bf16.gmra.mxu0 %v3790
      %v3865 = vpop.f32.mrf.mxu0
      %v3866 = vadd.f32 0.0, %v3865
      %v3867 = vpop.f32.mrf.mxu0
      %v3868 = vadd.f32 0.0, %v3867
      %3869 = vmatmul.bf16.gmra.mxu0 %v3791
      %v3870 = vpop.f32.mrf.mxu0
      %v3871 = vadd.f32 0.0, %v3870
      %v3872 = vpop.f32.mrf.mxu0
      %v3873 = vadd.f32 0.0, %v3872
      %3874 = vdwg.mxu0
      %v3875 = vadd.f32 %v3782, %v3866
      %v3876 = vadd.f32 %v3783, %v3868
      %v3877 = vadd.f32 %v3784, %v3871
      %v3878 = vadd.f32 %v3785, %v3873
      %v3879 = vld [vmem:[#allocation2 + $0x55] sm:$0xff]
      %v3880 = vld [vmem:[#allocation2 + $0x5d] sm:$0xff]
      %v3881 = vld [vmem:[#allocation2 + $0x65] sm:$0xff]
      %v3882 = vld [vmem:[#allocation2 + $0x6d] sm:$0xf]
      %v3883 = vpack.c.bf16 %v3880, %v3879
      %v3884 = vpack.c.bf16 %v3882, %v3881
      %v3885 = vld [vmem:[%s3 + $0x1c0] sm:$0xf]
      %v3886 = vld [vmem:[%s3 + $0x1c4] sm:$0xf]
      %v3887 = vld [vmem:[%s3 + $0x1c8] sm:$0xf]
      %v3888 = vld [vmem:[%s3 + $0x1cc] sm:$0xf]
      %v3889 = vld [vmem:[%s3 + $0x1d0] sm:$0xf]
      %v3890 = vld [vmem:[%s3 + $0x1d4] sm:$0xf]
      %v3891 = vld [vmem:[%s3 + $0x1d8] sm:$0xf]
      %v3892 = vld [vmem:[%s3 + $0x1dc] sm:$0xf]
      %v3893 = vld [vmem:[%s3 + $0x1e0] sm:$0xf]
      %v3894 = vld [vmem:[%s3 + $0x1e4] sm:$0xf]
      %v3895 = vld [vmem:[%s3 + $0x1e8] sm:$0xf]
      %v3896 = vld [vmem:[%s3 + $0x1ec] sm:$0xf]
      %v3897 = vld [vmem:[%s3 + $0x1f0] sm:$0xf]
      %v3898 = vld [vmem:[%s3 + $0x1f4] sm:$0xf]
      %v3899 = vld [vmem:[%s3 + $0x1f8] sm:$0xf]
      %v3900 = vld [vmem:[%s3 + $0x1fc] sm:$0xf]
      %v3917 = vunpack.c.l.b16 %v3885
      %v3918 = vunpack.c.l.b16 %v3886
      %v3919 = vunpack.c.l.b16 %v3887
      %v3920 = vunpack.c.l.b16 %v3888
      %v3921 = vunpack.c.l.b16 %v3889
      %v3922 = vunpack.c.l.b16 %v3890
      %v3923 = vunpack.c.l.b16 %v3891
      %v3924 = vunpack.c.l.b16 %v3892
      %v3925 = vunpack.c.l.b16 %v3893
      %v3926 = vunpack.c.l.b16 %v3894
      %v3927 = vunpack.c.l.b16 %v3895
      %v3928 = vunpack.c.l.b16 %v3896
      %v3929 = vunpack.c.l.b16 %v3897
      %v3930 = vunpack.c.l.b16 %v3898
      %v3931 = vunpack.c.l.b16 %v3899
      %v3932 = vunpack.c.l.b16 %v3900
      %v3933 = vpack.c.b16 %v3918, %v3917
      %v3934 = vpack.c.b16 %v3920, %v3919
      %v3935 = vpack.c.b16 %v3922, %v3921
      %v3936 = vpack.c.b16 %v3924, %v3923
      %v3937 = vpack.c.b16 %v3926, %v3925
      %v3938 = vpack.c.b16 %v3928, %v3927
      %v3939 = vpack.c.b16 %v3930, %v3929
      %v3940 = vpack.c.b16 %v3932, %v3931
      %3949 = vmatpush.bf16.msra.mxu0 %v3940
      %3950 = vmatpush.bf16.msra.mxu0 %v3939
      %3951 = vmatpush.bf16.msra.mxu0 %v3938
      %3952 = vmatpush.bf16.msra.mxu0 %v3937
      %3953 = vmatpush.bf16.msra.mxu0 %v3936
      %3954 = vmatpush.bf16.msra.mxu0 %v3935
      %3955 = vmatpush.bf16.msra.mxu0 %v3934
      %3956 = vmatpush.bf16.msra.mxu0 %v3933
      %3957 = vmatmul.bf16.gmra.mxu0 %v3883
      %v3958 = vpop.f32.mrf.mxu0
      %v3959 = vadd.f32 0.0, %v3958
      %v3960 = vpop.f32.mrf.mxu0
      %v3961 = vadd.f32 0.0, %v3960
      %3962 = vmatmul.bf16.gmra.mxu0 %v3884
      %v3963 = vpop.f32.mrf.mxu0
      %v3964 = vadd.f32 0.0, %v3963
      %v3965 = vpop.f32.mrf.mxu0
      %v3966 = vadd.f32 0.0, %v3965
      %3967 = vdwg.mxu0
      %v3968 = vadd.f32 %v3875, %v3959
      %v3969 = vadd.f32 %v3876, %v3961
      %v3970 = vadd.f32 %v3877, %v3964
      %v3971 = vadd.f32 %v3878, %v3966
      %v3972 = vld [vmem:[#allocation2 + $0x56] sm:$0xff]
      %v3973 = vld [vmem:[#allocation2 + $0x5e] sm:$0xff]
      %v3974 = vld [vmem:[#allocation2 + $0x66] sm:$0xff]
      %v3975 = vld [vmem:[#allocation2 + $0x6e] sm:$0xf]
      %v3976 = vpack.c.bf16 %v3973, %v3972
      %v3977 = vpack.c.bf16 %v3975, %v3974
      %v3978 = vld [vmem:[%s3 + $0x200] sm:$0xf]
      %v3979 = vld [vmem:[%s3 + $0x204] sm:$0xf]
      %v3980 = vld [vmem:[%s3 + $0x208] sm:$0xf]
      %v3981 = vld [vmem:[%s3 + $0x20c] sm:$0xf]
      %v3982 = vld [vmem:[%s3 + $0x210] sm:$0xf]
      %v3983 = vld [vmem:[%s3 + $0x214] sm:$0xf]
      %v3984 = vld [vmem:[%s3 + $0x218] sm:$0xf]
      %v3985 = vld [vmem:[%s3 + $0x21c] sm:$0xf]
      %v3986 = vld [vmem:[%s3 + $0x220] sm:$0xf]
      %v3987 = vld [vmem:[%s3 + $0x224] sm:$0xf]
      %v3988 = vld [vmem:[%s3 + $0x228] sm:$0xf]
      %v3989 = vld [vmem:[%s3 + $0x22c] sm:$0xf]
      %v3990 = vld [vmem:[%s3 + $0x230] sm:$0xf]
      %v3991 = vld [vmem:[%s3 + $0x234] sm:$0xf]
      %v3992 = vld [vmem:[%s3 + $0x238] sm:$0xf]
      %v3993 = vld [vmem:[%s3 + $0x23c] sm:$0xf]
      %v4010 = vunpack.c.l.b16 %v3978
      %v4011 = vunpack.c.l.b16 %v3979
      %v4012 = vunpack.c.l.b16 %v3980
      %v4013 = vunpack.c.l.b16 %v3981
      %v4014 = vunpack.c.l.b16 %v3982
      %v4015 = vunpack.c.l.b16 %v3983
      %v4016 = vunpack.c.l.b16 %v3984
      %v4017 = vunpack.c.l.b16 %v3985
      %v4018 = vunpack.c.l.b16 %v3986
      %v4019 = vunpack.c.l.b16 %v3987
      %v4020 = vunpack.c.l.b16 %v3988
      %v4021 = vunpack.c.l.b16 %v3989
      %v4022 = vunpack.c.l.b16 %v3990
      %v4023 = vunpack.c.l.b16 %v3991
      %v4024 = vunpack.c.l.b16 %v3992
      %v4025 = vunpack.c.l.b16 %v3993
      %v4026 = vpack.c.b16 %v4011, %v4010
      %v4027 = vpack.c.b16 %v4013, %v4012
      %v4028 = vpack.c.b16 %v4015, %v4014
      %v4029 = vpack.c.b16 %v4017, %v4016
      %v4030 = vpack.c.b16 %v4019, %v4018
      %v4031 = vpack.c.b16 %v4021, %v4020
      %v4032 = vpack.c.b16 %v4023, %v4022
      %v4033 = vpack.c.b16 %v4025, %v4024
      %4042 = vmatpush.bf16.msra.mxu0 %v4033
      %4043 = vmatpush.bf16.msra.mxu0 %v4032
      %4044 = vmatpush.bf16.msra.mxu0 %v4031
      %4045 = vmatpush.bf16.msra.mxu0 %v4030
      %4046 = vmatpush.bf16.msra.mxu0 %v4029
      %4047 = vmatpush.bf16.msra.mxu0 %v4028
      %4048 = vmatpush.bf16.msra.mxu0 %v4027
      %4049 = vmatpush.bf16.msra.mxu0 %v4026
      %4050 = vmatmul.bf16.gmra.mxu0 %v3976
      %v4051 = vpop.f32.mrf.mxu0
      %v4052 = vadd.f32 0.0, %v4051
      %v4053 = vpop.f32.mrf.mxu0
      %v4054 = vadd.f32 0.0, %v4053
      %4055 = vmatmul.bf16.gmra.mxu0 %v3977
      %v4056 = vpop.f32.mrf.mxu0
      %v4057 = vadd.f32 0.0, %v4056
      %v4058 = vpop.f32.mrf.mxu0
      %v4059 = vadd.f32 0.0, %v4058
      %4060 = vdwg.mxu0
      %v4061 = vadd.f32 %v3968, %v4052
      %v4062 = vadd.f32 %v3969, %v4054
      %v4063 = vadd.f32 %v3970, %v4057
      %v4064 = vadd.f32 %v3971, %v4059
      %4065 = vst [vmem:[#allocation3] sm:$0xff] %v4061
      %4066 = vst [vmem:[#allocation3 + $0x8] sm:$0xff] %v4062
      %4067 = vst [vmem:[#allocation3 + $0x10] sm:$0xff] %v4063
      %4068 = vst [vmem:[#allocation3 + $0x18] sm:$0xf] %v4064
      %v4069 = vld [vmem:[#allocation3] ss:$2 sm:$0x3f]
      %v4070 = vld [vmem:[%s321] ss:$2 sm:$0x3f]
      %v4071 = vmax.f32 %v4069, %v4070
      %v4072 = vld [vmem:[%s2380] ss:$2 sm:$0x3f]
      %v4073 = vld [vmem:[%s2382] ss:$2 sm:$0x3f]
      %v4074 = vmax.f32 %v4072, %v4073
      %v4075 = vmax.f32 %v4071, %v4074
      %v4076 = vadd.f32 %v4075, %v2387
      %v4077 = vmax.f32 %v4076, 0.0
      %4078 = vst.msk [vmem:[%s224 + $0xc] sm:$0x3f] %vm2391, %v4077
      %v4079 = vld [vmem:[#allocation2 + $0x54] sm:$0xff]
      %v4080 = vld [vmem:[#allocation2 + $0x5c] sm:$0xff]
      %v4081 = vld [vmem:[#allocation2 + $0x64] sm:$0xff]
      %v4082 = vld [vmem:[#allocation2 + $0x6c] sm:$0xf]
      %v4083 = vpack.c.bf16 %v4080, %v4079
      %v4084 = vpack.c.bf16 %v4082, %v4081
      %v4085 = vld [vmem:[%s3] sm:$0xf]
      %v4086 = vld [vmem:[%s3 + $0x4] sm:$0xf]
      %v4087 = vld [vmem:[%s3 + $0x8] sm:$0xf]
      %v4088 = vld [vmem:[%s3 + $0xc] sm:$0xf]
      %v4089 = vld [vmem:[%s3 + $0x10] sm:$0xf]
      %v4090 = vld [vmem:[%s3 + $0x14] sm:$0xf]
      %v4091 = vld [vmem:[%s3 + $0x18] sm:$0xf]
      %v4092 = vld [vmem:[%s3 + $0x1c] sm:$0xf]
      %v4093 = vld [vmem:[%s3 + $0x20] sm:$0xf]
      %v4094 = vld [vmem:[%s3 + $0x24] sm:$0xf]
      %v4095 = vld [vmem:[%s3 + $0x28] sm:$0xf]
      %v4096 = vld [vmem:[%s3 + $0x2c] sm:$0xf]
      %v4097 = vld [vmem:[%s3 + $0x30] sm:$0xf]
      %v4098 = vld [vmem:[%s3 + $0x34] sm:$0xf]
      %v4099 = vld [vmem:[%s3 + $0x38] sm:$0xf]
      %v4100 = vld [vmem:[%s3 + $0x3c] sm:$0xf]
      %v4101 = vld [vmem:[#allocation2 + $0x55] sm:$0xff]
      %v4102 = vld [vmem:[#allocation2 + $0x5d] sm:$0xff]
      %v4103 = vld [vmem:[#allocation2 + $0x65] sm:$0xff]
      %v4104 = vld [vmem:[#allocation2 + $0x6d] sm:$0xf]
      %v4105 = vpack.c.bf16 %v4102, %v4101
      %v4106 = vpack.c.bf16 %v4104, %v4103
      %v4107 = vld [vmem:[%s3 + $0x40] sm:$0xf]
      %v4108 = vld [vmem:[%s3 + $0x44] sm:$0xf]
      %v4109 = vld [vmem:[%s3 + $0x48] sm:$0xf]
      %v4110 = vld [vmem:[%s3 + $0x4c] sm:$0xf]
      %v4111 = vld [vmem:[%s3 + $0x50] sm:$0xf]
      %v4112 = vld [vmem:[%s3 + $0x54] sm:$0xf]
      %v4113 = vld [vmem:[%s3 + $0x58] sm:$0xf]
      %v4114 = vld [vmem:[%s3 + $0x5c] sm:$0xf]
      %v4115 = vld [vmem:[%s3 + $0x60] sm:$0xf]
      %v4116 = vld [vmem:[%s3 + $0x64] sm:$0xf]
      %v4117 = vld [vmem:[%s3 + $0x68] sm:$0xf]
      %v4118 = vld [vmem:[%s3 + $0x6c] sm:$0xf]
      %v4119 = vld [vmem:[%s3 + $0x70] sm:$0xf]
      %v4120 = vld [vmem:[%s3 + $0x74] sm:$0xf]
      %v4121 = vld [vmem:[%s3 + $0x78] sm:$0xf]
      %v4122 = vld [vmem:[%s3 + $0x7c] sm:$0xf]
      %v4139 = vunpack.c.l.b16 %v4107
      %v4140 = vunpack.c.l.b16 %v4108
      %v4141 = vunpack.c.l.b16 %v4109
      %v4142 = vunpack.c.l.b16 %v4110
      %v4143 = vunpack.c.l.b16 %v4111
      %v4144 = vunpack.c.l.b16 %v4112
      %v4145 = vunpack.c.l.b16 %v4113
      %v4146 = vunpack.c.l.b16 %v4114
      %v4147 = vunpack.c.l.b16 %v4115
      %v4148 = vunpack.c.l.b16 %v4116
      %v4149 = vunpack.c.l.b16 %v4117
      %v4150 = vunpack.c.l.b16 %v4118
      %v4151 = vunpack.c.l.b16 %v4119
      %v4152 = vunpack.c.l.b16 %v4120
      %v4153 = vunpack.c.l.b16 %v4121
      %v4154 = vunpack.c.l.b16 %v4122
      %v4155 = vpack.c.b16 %v4140, %v4139
      %v4156 = vpack.c.b16 %v4142, %v4141
      %v4157 = vpack.c.b16 %v4144, %v4143
      %v4158 = vpack.c.b16 %v4146, %v4145
      %v4159 = vpack.c.b16 %v4148, %v4147
      %v4160 = vpack.c.b16 %v4150, %v4149
      %v4161 = vpack.c.b16 %v4152, %v4151
      %v4162 = vpack.c.b16 %v4154, %v4153
      %4171 = vmatpush.bf16.msra.mxu0 %v4162
      %4172 = vmatpush.bf16.msra.mxu0 %v4161
      %4173 = vmatpush.bf16.msra.mxu0 %v4160
      %4174 = vmatpush.bf16.msra.mxu0 %v4159
      %4175 = vmatpush.bf16.msra.mxu0 %v4158
      %4176 = vmatpush.bf16.msra.mxu0 %v4157
      %4177 = vmatpush.bf16.msra.mxu0 %v4156
      %4178 = vmatpush.bf16.msra.mxu0 %v4155
      %4179 = vmatmul.bf16.gmra.mxu0 %v4105
      %v4180 = vpop.f32.mrf.mxu0
      %v4181 = vadd.f32 0.0, %v4180
      %v4182 = vpop.f32.mrf.mxu0
      %v4183 = vadd.f32 0.0, %v4182
      %4184 = vmatmul.bf16.gmra.mxu0 %v4106
      %v4185 = vpop.f32.mrf.mxu0
      %v4186 = vadd.f32 0.0, %v4185
      %v4187 = vpop.f32.mrf.mxu0
      %v4188 = vadd.f32 0.0, %v4187
      %4189 = vdwg.mxu0
      %v4206 = vunpack.c.l.b16 %v4085
      %v4207 = vunpack.c.l.b16 %v4086
      %v4208 = vunpack.c.l.b16 %v4087
      %v4209 = vunpack.c.l.b16 %v4088
      %v4210 = vunpack.c.l.b16 %v4089
      %v4211 = vunpack.c.l.b16 %v4090
      %v4212 = vunpack.c.l.b16 %v4091
      %v4213 = vunpack.c.l.b16 %v4092
      %v4214 = vunpack.c.l.b16 %v4093
      %v4215 = vunpack.c.l.b16 %v4094
      %v4216 = vunpack.c.l.b16 %v4095
      %v4217 = vunpack.c.l.b16 %v4096
      %v4218 = vunpack.c.l.b16 %v4097
      %v4219 = vunpack.c.l.b16 %v4098
      %v4220 = vunpack.c.l.b16 %v4099
      %v4221 = vunpack.c.l.b16 %v4100
      %v4222 = vpack.c.b16 %v4207, %v4206
      %v4223 = vpack.c.b16 %v4209, %v4208
      %v4224 = vpack.c.b16 %v4211, %v4210
      %v4225 = vpack.c.b16 %v4213, %v4212
      %v4226 = vpack.c.b16 %v4215, %v4214
      %v4227 = vpack.c.b16 %v4217, %v4216
      %v4228 = vpack.c.b16 %v4219, %v4218
      %v4229 = vpack.c.b16 %v4221, %v4220
      %4238 = vmatpush.bf16.msra.mxu0 %v4229
      %4239 = vmatpush.bf16.msra.mxu0 %v4228
      %4240 = vmatpush.bf16.msra.mxu0 %v4227
      %4241 = vmatpush.bf16.msra.mxu0 %v4226
      %4242 = vmatpush.bf16.msra.mxu0 %v4225
      %4243 = vmatpush.bf16.msra.mxu0 %v4224
      %4244 = vmatpush.bf16.msra.mxu0 %v4223
      %4245 = vmatpush.bf16.msra.mxu0 %v4222
      %4246 = vmatmul.bf16.gmra.mxu0 %v4083
      %v4247 = vpop.f32.mrf.mxu0
      %v4248 = vadd.f32 %v4181, %v4247
      %v4249 = vpop.f32.mrf.mxu0
      %v4250 = vadd.f32 %v4183, %v4249
      %4251 = vmatmul.bf16.gmra.mxu0 %v4084
      %v4252 = vpop.f32.mrf.mxu0
      %v4253 = vadd.f32 %v4186, %v4252
      %v4254 = vpop.f32.mrf.mxu0
      %v4255 = vadd.f32 %v4188, %v4254
      %4256 = vdwg.mxu0
      %v4257 = vld [vmem:[#allocation2 + $0x56] sm:$0xff]
      %v4258 = vld [vmem:[#allocation2 + $0x5e] sm:$0xff]
      %v4259 = vld [vmem:[#allocation2 + $0x66] sm:$0xff]
      %v4260 = vld [vmem:[#allocation2 + $0x6e] sm:$0xf]
      %v4261 = vpack.c.bf16 %v4258, %v4257
      %v4262 = vpack.c.bf16 %v4260, %v4259
      %v4263 = vld [vmem:[%s3 + $0x80] sm:$0xf]
      %v4264 = vld [vmem:[%s3 + $0x84] sm:$0xf]
      %v4265 = vld [vmem:[%s3 + $0x88] sm:$0xf]
      %v4266 = vld [vmem:[%s3 + $0x8c] sm:$0xf]
      %v4267 = vld [vmem:[%s3 + $0x90] sm:$0xf]
      %v4268 = vld [vmem:[%s3 + $0x94] sm:$0xf]
      %v4269 = vld [vmem:[%s3 + $0x98] sm:$0xf]
      %v4270 = vld [vmem:[%s3 + $0x9c] sm:$0xf]
      %v4271 = vld [vmem:[%s3 + $0xa0] sm:$0xf]
      %v4272 = vld [vmem:[%s3 + $0xa4] sm:$0xf]
      %v4273 = vld [vmem:[%s3 + $0xa8] sm:$0xf]
      %v4274 = vld [vmem:[%s3 + $0xac] sm:$0xf]
      %v4275 = vld [vmem:[%s3 + $0xb0] sm:$0xf]
      %v4276 = vld [vmem:[%s3 + $0xb4] sm:$0xf]
      %v4277 = vld [vmem:[%s3 + $0xb8] sm:$0xf]
      %v4278 = vld [vmem:[%s3 + $0xbc] sm:$0xf]
      %v4295 = vunpack.c.l.b16 %v4263
      %v4296 = vunpack.c.l.b16 %v4264
      %v4297 = vunpack.c.l.b16 %v4265
      %v4298 = vunpack.c.l.b16 %v4266
      %v4299 = vunpack.c.l.b16 %v4267
      %v4300 = vunpack.c.l.b16 %v4268
      %v4301 = vunpack.c.l.b16 %v4269
      %v4302 = vunpack.c.l.b16 %v4270
      %v4303 = vunpack.c.l.b16 %v4271
      %v4304 = vunpack.c.l.b16 %v4272
      %v4305 = vunpack.c.l.b16 %v4273
      %v4306 = vunpack.c.l.b16 %v4274
      %v4307 = vunpack.c.l.b16 %v4275
      %v4308 = vunpack.c.l.b16 %v4276
      %v4309 = vunpack.c.l.b16 %v4277
      %v4310 = vunpack.c.l.b16 %v4278
      %v4311 = vpack.c.b16 %v4296, %v4295
      %v4312 = vpack.c.b16 %v4298, %v4297
      %v4313 = vpack.c.b16 %v4300, %v4299
      %v4314 = vpack.c.b16 %v4302, %v4301
      %v4315 = vpack.c.b16 %v4304, %v4303
      %v4316 = vpack.c.b16 %v4306, %v4305
      %v4317 = vpack.c.b16 %v4308, %v4307
      %v4318 = vpack.c.b16 %v4310, %v4309
      %4327 = vmatpush.bf16.msra.mxu0 %v4318
      %4328 = vmatpush.bf16.msra.mxu0 %v4317
      %4329 = vmatpush.bf16.msra.mxu0 %v4316
      %4330 = vmatpush.bf16.msra.mxu0 %v4315
      %4331 = vmatpush.bf16.msra.mxu0 %v4314
      %4332 = vmatpush.bf16.msra.mxu0 %v4313
      %4333 = vmatpush.bf16.msra.mxu0 %v4312
      %4334 = vmatpush.bf16.msra.mxu0 %v4311
      %4335 = vmatmul.bf16.gmra.mxu0 %v4261
      %v4336 = vpop.f32.mrf.mxu0
      %v4337 = vadd.f32 0.0, %v4336
      %v4338 = vpop.f32.mrf.mxu0
      %v4339 = vadd.f32 0.0, %v4338
      %4340 = vmatmul.bf16.gmra.mxu0 %v4262
      %v4341 = vpop.f32.mrf.mxu0
      %v4342 = vadd.f32 0.0, %v4341
      %v4343 = vpop.f32.mrf.mxu0
      %v4344 = vadd.f32 0.0, %v4343
      %4345 = vdwg.mxu0
      %v4346 = vadd.f32 %v4248, %v4337
      %v4347 = vadd.f32 %v4250, %v4339
      %v4348 = vadd.f32 %v4253, %v4342
      %v4349 = vadd.f32 %v4255, %v4344
      %v4350 = vld [vmem:[#allocation2 + $0x62] sm:$0xff]
      %v4351 = vld [vmem:[#allocation2 + $0x6a] sm:$0xff]
      %v4352 = vld [vmem:[#allocation2 + $0x72] sm:$0xff]
      %v4353 = vld [vmem:[#allocation2 + $0x7a] sm:$0xf]
      %v4354 = vpack.c.bf16 %v4351, %v4350
      %v4355 = vpack.c.bf16 %v4353, %v4352
      %v4356 = vld [vmem:[%s3 + $0xc0] sm:$0xf]
      %v4357 = vld [vmem:[%s3 + $0xc4] sm:$0xf]
      %v4358 = vld [vmem:[%s3 + $0xc8] sm:$0xf]
      %v4359 = vld [vmem:[%s3 + $0xcc] sm:$0xf]
      %v4360 = vld [vmem:[%s3 + $0xd0] sm:$0xf]
      %v4361 = vld [vmem:[%s3 + $0xd4] sm:$0xf]
      %v4362 = vld [vmem:[%s3 + $0xd8] sm:$0xf]
      %v4363 = vld [vmem:[%s3 + $0xdc] sm:$0xf]
      %v4364 = vld [vmem:[%s3 + $0xe0] sm:$0xf]
      %v4365 = vld [vmem:[%s3 + $0xe4] sm:$0xf]
      %v4366 = vld [vmem:[%s3 + $0xe8] sm:$0xf]
      %v4367 = vld [vmem:[%s3 + $0xec] sm:$0xf]
      %v4368 = vld [vmem:[%s3 + $0xf0] sm:$0xf]
      %v4369 = vld [vmem:[%s3 + $0xf4] sm:$0xf]
      %v4370 = vld [vmem:[%s3 + $0xf8] sm:$0xf]
      %v4371 = vld [vmem:[%s3 + $0xfc] sm:$0xf]
      %v4388 = vunpack.c.l.b16 %v4356
      %v4389 = vunpack.c.l.b16 %v4357
      %v4390 = vunpack.c.l.b16 %v4358
      %v4391 = vunpack.c.l.b16 %v4359
      %v4392 = vunpack.c.l.b16 %v4360
      %v4393 = vunpack.c.l.b16 %v4361
      %v4394 = vunpack.c.l.b16 %v4362
      %v4395 = vunpack.c.l.b16 %v4363
      %v4396 = vunpack.c.l.b16 %v4364
      %v4397 = vunpack.c.l.b16 %v4365
      %v4398 = vunpack.c.l.b16 %v4366
      %v4399 = vunpack.c.l.b16 %v4367
      %v4400 = vunpack.c.l.b16 %v4368
      %v4401 = vunpack.c.l.b16 %v4369
      %v4402 = vunpack.c.l.b16 %v4370
      %v4403 = vunpack.c.l.b16 %v4371
      %v4404 = vpack.c.b16 %v4389, %v4388
      %v4405 = vpack.c.b16 %v4391, %v4390
      %v4406 = vpack.c.b16 %v4393, %v4392
      %v4407 = vpack.c.b16 %v4395, %v4394
      %v4408 = vpack.c.b16 %v4397, %v4396
      %v4409 = vpack.c.b16 %v4399, %v4398
      %v4410 = vpack.c.b16 %v4401, %v4400
      %v4411 = vpack.c.b16 %v4403, %v4402
      %4420 = vmatpush.bf16.msra.mxu0 %v4411
      %4421 = vmatpush.bf16.msra.mxu0 %v4410
      %4422 = vmatpush.bf16.msra.mxu0 %v4409
      %4423 = vmatpush.bf16.msra.mxu0 %v4408
      %4424 = vmatpush.bf16.msra.mxu0 %v4407
      %4425 = vmatpush.bf16.msra.mxu0 %v4406
      %4426 = vmatpush.bf16.msra.mxu0 %v4405
      %4427 = vmatpush.bf16.msra.mxu0 %v4404
      %4428 = vmatmul.bf16.gmra.mxu0 %v4354
      %v4429 = vpop.f32.mrf.mxu0
      %v4430 = vadd.f32 0.0, %v4429
      %v4431 = vpop.f32.mrf.mxu0
      %v4432 = vadd.f32 0.0, %v4431
      %4433 = vmatmul.bf16.gmra.mxu0 %v4355
      %v4434 = vpop.f32.mrf.mxu0
      %v4435 = vadd.f32 0.0, %v4434
      %v4436 = vpop.f32.mrf.mxu0
      %v4437 = vadd.f32 0.0, %v4436
      %4438 = vdwg.mxu0
      %v4439 = vadd.f32 %v4346, %v4430
      %v4440 = vadd.f32 %v4347, %v4432
      %v4441 = vadd.f32 %v4348, %v4435
      %v4442 = vadd.f32 %v4349, %v4437
      %v4443 = vld [vmem:[#allocation2 + $0x63] sm:$0xff]
      %v4444 = vld [vmem:[#allocation2 + $0x6b] sm:$0xff]
      %v4445 = vld [vmem:[#allocation2 + $0x73] sm:$0xff]
      %v4446 = vld [vmem:[#allocation2 + $0x7b] sm:$0xf]
      %v4447 = vpack.c.bf16 %v4444, %v4443
      %v4448 = vpack.c.bf16 %v4446, %v4445
      %v4449 = vld [vmem:[%s3 + $0x100] sm:$0xf]
      %v4450 = vld [vmem:[%s3 + $0x104] sm:$0xf]
      %v4451 = vld [vmem:[%s3 + $0x108] sm:$0xf]
      %v4452 = vld [vmem:[%s3 + $0x10c] sm:$0xf]
      %v4453 = vld [vmem:[%s3 + $0x110] sm:$0xf]
      %v4454 = vld [vmem:[%s3 + $0x114] sm:$0xf]
      %v4455 = vld [vmem:[%s3 + $0x118] sm:$0xf]
      %v4456 = vld [vmem:[%s3 + $0x11c] sm:$0xf]
      %v4457 = vld [vmem:[%s3 + $0x120] sm:$0xf]
      %v4458 = vld [vmem:[%s3 + $0x124] sm:$0xf]
      %v4459 = vld [vmem:[%s3 + $0x128] sm:$0xf]
      %v4460 = vld [vmem:[%s3 + $0x12c] sm:$0xf]
      %v4461 = vld [vmem:[%s3 + $0x130] sm:$0xf]
      %v4462 = vld [vmem:[%s3 + $0x134] sm:$0xf]
      %v4463 = vld [vmem:[%s3 + $0x138] sm:$0xf]
      %v4464 = vld [vmem:[%s3 + $0x13c] sm:$0xf]
      %v4481 = vunpack.c.l.b16 %v4449
      %v4482 = vunpack.c.l.b16 %v4450
      %v4483 = vunpack.c.l.b16 %v4451
      %v4484 = vunpack.c.l.b16 %v4452
      %v4485 = vunpack.c.l.b16 %v4453
      %v4486 = vunpack.c.l.b16 %v4454
      %v4487 = vunpack.c.l.b16 %v4455
      %v4488 = vunpack.c.l.b16 %v4456
      %v4489 = vunpack.c.l.b16 %v4457
      %v4490 = vunpack.c.l.b16 %v4458
      %v4491 = vunpack.c.l.b16 %v4459
      %v4492 = vunpack.c.l.b16 %v4460
      %v4493 = vunpack.c.l.b16 %v4461
      %v4494 = vunpack.c.l.b16 %v4462
      %v4495 = vunpack.c.l.b16 %v4463
      %v4496 = vunpack.c.l.b16 %v4464
      %v4497 = vpack.c.b16 %v4482, %v4481
      %v4498 = vpack.c.b16 %v4484, %v4483
      %v4499 = vpack.c.b16 %v4486, %v4485
      %v4500 = vpack.c.b16 %v4488, %v4487
      %v4501 = vpack.c.b16 %v4490, %v4489
      %v4502 = vpack.c.b16 %v4492, %v4491
      %v4503 = vpack.c.b16 %v4494, %v4493
      %v4504 = vpack.c.b16 %v4496, %v4495
      %4513 = vmatpush.bf16.msra.mxu0 %v4504
      %4514 = vmatpush.bf16.msra.mxu0 %v4503
      %4515 = vmatpush.bf16.msra.mxu0 %v4502
      %4516 = vmatpush.bf16.msra.mxu0 %v4501
      %4517 = vmatpush.bf16.msra.mxu0 %v4500
      %4518 = vmatpush.bf16.msra.mxu0 %v4499
      %4519 = vmatpush.bf16.msra.mxu0 %v4498
      %4520 = vmatpush.bf16.msra.mxu0 %v4497
      %4521 = vmatmul.bf16.gmra.mxu0 %v4447
      %v4522 = vpop.f32.mrf.mxu0
      %v4523 = vadd.f32 0.0, %v4522
      %v4524 = vpop.f32.mrf.mxu0
      %v4525 = vadd.f32 0.0, %v4524
      %4526 = vmatmul.bf16.gmra.mxu0 %v4448
      %v4527 = vpop.f32.mrf.mxu0
      %v4528 = vadd.f32 0.0, %v4527
      %v4529 = vpop.f32.mrf.mxu0
      %v4530 = vadd.f32 0.0, %v4529
      %4531 = vdwg.mxu0
      %v4532 = vadd.f32 %v4439, %v4523
      %v4533 = vadd.f32 %v4440, %v4525
      %v4534 = vadd.f32 %v4441, %v4528
      %v4535 = vadd.f32 %v4442, %v4530
      %v4536 = vld [vmem:[#allocation2 + $0x64] sm:$0xff]
      %v4537 = vld [vmem:[#allocation2 + $0x6c] sm:$0xff]
      %v4538 = vld [vmem:[#allocation2 + $0x74] sm:$0xff]
      %v4539 = vld [vmem:[#allocation2 + $0x7c] sm:$0xf]
      %v4540 = vpack.c.bf16 %v4537, %v4536
      %v4541 = vpack.c.bf16 %v4539, %v4538
      %v4542 = vld [vmem:[%s3 + $0x140] sm:$0xf]
      %v4543 = vld [vmem:[%s3 + $0x144] sm:$0xf]
      %v4544 = vld [vmem:[%s3 + $0x148] sm:$0xf]
      %v4545 = vld [vmem:[%s3 + $0x14c] sm:$0xf]
      %v4546 = vld [vmem:[%s3 + $0x150] sm:$0xf]
      %v4547 = vld [vmem:[%s3 + $0x154] sm:$0xf]
      %v4548 = vld [vmem:[%s3 + $0x158] sm:$0xf]
      %v4549 = vld [vmem:[%s3 + $0x15c] sm:$0xf]
      %v4550 = vld [vmem:[%s3 + $0x160] sm:$0xf]
      %v4551 = vld [vmem:[%s3 + $0x164] sm:$0xf]
      %v4552 = vld [vmem:[%s3 + $0x168] sm:$0xf]
      %v4553 = vld [vmem:[%s3 + $0x16c] sm:$0xf]
      %v4554 = vld [vmem:[%s3 + $0x170] sm:$0xf]
      %v4555 = vld [vmem:[%s3 + $0x174] sm:$0xf]
      %v4556 = vld [vmem:[%s3 + $0x178] sm:$0xf]
      %v4557 = vld [vmem:[%s3 + $0x17c] sm:$0xf]
      %v4574 = vunpack.c.l.b16 %v4542
      %v4575 = vunpack.c.l.b16 %v4543
      %v4576 = vunpack.c.l.b16 %v4544
      %v4577 = vunpack.c.l.b16 %v4545
      %v4578 = vunpack.c.l.b16 %v4546
      %v4579 = vunpack.c.l.b16 %v4547
      %v4580 = vunpack.c.l.b16 %v4548
      %v4581 = vunpack.c.l.b16 %v4549
      %v4582 = vunpack.c.l.b16 %v4550
      %v4583 = vunpack.c.l.b16 %v4551
      %v4584 = vunpack.c.l.b16 %v4552
      %v4585 = vunpack.c.l.b16 %v4553
      %v4586 = vunpack.c.l.b16 %v4554
      %v4587 = vunpack.c.l.b16 %v4555
      %v4588 = vunpack.c.l.b16 %v4556
      %v4589 = vunpack.c.l.b16 %v4557
      %v4590 = vpack.c.b16 %v4575, %v4574
      %v4591 = vpack.c.b16 %v4577, %v4576
      %v4592 = vpack.c.b16 %v4579, %v4578
      %v4593 = vpack.c.b16 %v4581, %v4580
      %v4594 = vpack.c.b16 %v4583, %v4582
      %v4595 = vpack.c.b16 %v4585, %v4584
      %v4596 = vpack.c.b16 %v4587, %v4586
      %v4597 = vpack.c.b16 %v4589, %v4588
      %4606 = vmatpush.bf16.msra.mxu0 %v4597
      %4607 = vmatpush.bf16.msra.mxu0 %v4596
      %4608 = vmatpush.bf16.msra.mxu0 %v4595
      %4609 = vmatpush.bf16.msra.mxu0 %v4594
      %4610 = vmatpush.bf16.msra.mxu0 %v4593
      %4611 = vmatpush.bf16.msra.mxu0 %v4592
      %4612 = vmatpush.bf16.msra.mxu0 %v4591
      %4613 = vmatpush.bf16.msra.mxu0 %v4590
      %4614 = vmatmul.bf16.gmra.mxu0 %v4540
      %v4615 = vpop.f32.mrf.mxu0
      %v4616 = vadd.f32 0.0, %v4615
      %v4617 = vpop.f32.mrf.mxu0
      %v4618 = vadd.f32 0.0, %v4617
      %4619 = vmatmul.bf16.gmra.mxu0 %v4541
      %v4620 = vpop.f32.mrf.mxu0
      %v4621 = vadd.f32 0.0, %v4620
      %v4622 = vpop.f32.mrf.mxu0
      %v4623 = vadd.f32 0.0, %v4622
      %4624 = vdwg.mxu0
      %v4625 = vadd.f32 %v4532, %v4616
      %v4626 = vadd.f32 %v4533, %v4618
      %v4627 = vadd.f32 %v4534, %v4621
      %v4628 = vadd.f32 %v4535, %v4623
      %v4629 = vld [vmem:[#allocation2 + $0x70] sm:$0xff]
      %v4630 = vld [vmem:[#allocation2 + $0x78] sm:$0xff]
      %v4631 = vld [vmem:[#allocation2 + $0x80] sm:$0xff]
      %v4632 = vld [vmem:[#allocation2 + $0x88] sm:$0xf]
      %v4633 = vpack.c.bf16 %v4630, %v4629
      %v4634 = vpack.c.bf16 %v4632, %v4631
      %v4635 = vld [vmem:[%s3 + $0x180] sm:$0xf]
      %v4636 = vld [vmem:[%s3 + $0x184] sm:$0xf]
      %v4637 = vld [vmem:[%s3 + $0x188] sm:$0xf]
      %v4638 = vld [vmem:[%s3 + $0x18c] sm:$0xf]
      %v4639 = vld [vmem:[%s3 + $0x190] sm:$0xf]
      %v4640 = vld [vmem:[%s3 + $0x194] sm:$0xf]
      %v4641 = vld [vmem:[%s3 + $0x198] sm:$0xf]
      %v4642 = vld [vmem:[%s3 + $0x19c] sm:$0xf]
      %v4643 = vld [vmem:[%s3 + $0x1a0] sm:$0xf]
      %v4644 = vld [vmem:[%s3 + $0x1a4] sm:$0xf]
      %v4645 = vld [vmem:[%s3 + $0x1a8] sm:$0xf]
      %v4646 = vld [vmem:[%s3 + $0x1ac] sm:$0xf]
      %v4647 = vld [vmem:[%s3 + $0x1b0] sm:$0xf]
      %v4648 = vld [vmem:[%s3 + $0x1b4] sm:$0xf]
      %v4649 = vld [vmem:[%s3 + $0x1b8] sm:$0xf]
      %v4650 = vld [vmem:[%s3 + $0x1bc] sm:$0xf]
      %v4667 = vunpack.c.l.b16 %v4635
      %v4668 = vunpack.c.l.b16 %v4636
      %v4669 = vunpack.c.l.b16 %v4637
      %v4670 = vunpack.c.l.b16 %v4638
      %v4671 = vunpack.c.l.b16 %v4639
      %v4672 = vunpack.c.l.b16 %v4640
      %v4673 = vunpack.c.l.b16 %v4641
      %v4674 = vunpack.c.l.b16 %v4642
      %v4675 = vunpack.c.l.b16 %v4643
      %v4676 = vunpack.c.l.b16 %v4644
      %v4677 = vunpack.c.l.b16 %v4645
      %v4678 = vunpack.c.l.b16 %v4646
      %v4679 = vunpack.c.l.b16 %v4647
      %v4680 = vunpack.c.l.b16 %v4648
      %v4681 = vunpack.c.l.b16 %v4649
      %v4682 = vunpack.c.l.b16 %v4650
      %v4683 = vpack.c.b16 %v4668, %v4667
      %v4684 = vpack.c.b16 %v4670, %v4669
      %v4685 = vpack.c.b16 %v4672, %v4671
      %v4686 = vpack.c.b16 %v4674, %v4673
      %v4687 = vpack.c.b16 %v4676, %v4675
      %v4688 = vpack.c.b16 %v4678, %v4677
      %v4689 = vpack.c.b16 %v4680, %v4679
      %v4690 = vpack.c.b16 %v4682, %v4681
      %4699 = vmatpush.bf16.msra.mxu0 %v4690
      %4700 = vmatpush.bf16.msra.mxu0 %v4689
      %4701 = vmatpush.bf16.msra.mxu0 %v4688
      %4702 = vmatpush.bf16.msra.mxu0 %v4687
      %4703 = vmatpush.bf16.msra.mxu0 %v4686
      %4704 = vmatpush.bf16.msra.mxu0 %v4685
      %4705 = vmatpush.bf16.msra.mxu0 %v4684
      %4706 = vmatpush.bf16.msra.mxu0 %v4683
      %4707 = vmatmul.bf16.gmra.mxu0 %v4633
      %v4708 = vpop.f32.mrf.mxu0
      %v4709 = vadd.f32 0.0, %v4708
      %v4710 = vpop.f32.mrf.mxu0
      %v4711 = vadd.f32 0.0, %v4710
      %4712 = vmatmul.bf16.gmra.mxu0 %v4634
      %v4713 = vpop.f32.mrf.mxu0
      %v4714 = vadd.f32 0.0, %v4713
      %v4715 = vpop.f32.mrf.mxu0
      %v4716 = vadd.f32 0.0, %v4715
      %4717 = vdwg.mxu0
      %v4718 = vadd.f32 %v4625, %v4709
      %v4719 = vadd.f32 %v4626, %v4711
      %v4720 = vadd.f32 %v4627, %v4714
      %v4721 = vadd.f32 %v4628, %v4716
      %v4722 = vld [vmem:[#allocation2 + $0x71] sm:$0xff]
      %v4723 = vld [vmem:[#allocation2 + $0x79] sm:$0xff]
      %v4724 = vld [vmem:[#allocation2 + $0x81] sm:$0xff]
      %v4725 = vld [vmem:[#allocation2 + $0x89] sm:$0xf]
      %v4726 = vpack.c.bf16 %v4723, %v4722
      %v4727 = vpack.c.bf16 %v4725, %v4724
      %v4728 = vld [vmem:[%s3 + $0x1c0] sm:$0xf]
      %v4729 = vld [vmem:[%s3 + $0x1c4] sm:$0xf]
      %v4730 = vld [vmem:[%s3 + $0x1c8] sm:$0xf]
      %v4731 = vld [vmem:[%s3 + $0x1cc] sm:$0xf]
      %v4732 = vld [vmem:[%s3 + $0x1d0] sm:$0xf]
      %v4733 = vld [vmem:[%s3 + $0x1d4] sm:$0xf]
      %v4734 = vld [vmem:[%s3 + $0x1d8] sm:$0xf]
      %v4735 = vld [vmem:[%s3 + $0x1dc] sm:$0xf]
      %v4736 = vld [vmem:[%s3 + $0x1e0] sm:$0xf]
      %v4737 = vld [vmem:[%s3 + $0x1e4] sm:$0xf]
      %v4738 = vld [vmem:[%s3 + $0x1e8] sm:$0xf]
      %v4739 = vld [vmem:[%s3 + $0x1ec] sm:$0xf]
      %v4740 = vld [vmem:[%s3 + $0x1f0] sm:$0xf]
      %v4741 = vld [vmem:[%s3 + $0x1f4] sm:$0xf]
      %v4742 = vld [vmem:[%s3 + $0x1f8] sm:$0xf]
      %v4743 = vld [vmem:[%s3 + $0x1fc] sm:$0xf]
      %v4760 = vunpack.c.l.b16 %v4728
      %v4761 = vunpack.c.l.b16 %v4729
      %v4762 = vunpack.c.l.b16 %v4730
      %v4763 = vunpack.c.l.b16 %v4731
      %v4764 = vunpack.c.l.b16 %v4732
      %v4765 = vunpack.c.l.b16 %v4733
      %v4766 = vunpack.c.l.b16 %v4734
      %v4767 = vunpack.c.l.b16 %v4735
      %v4768 = vunpack.c.l.b16 %v4736
      %v4769 = vunpack.c.l.b16 %v4737
      %v4770 = vunpack.c.l.b16 %v4738
      %v4771 = vunpack.c.l.b16 %v4739
      %v4772 = vunpack.c.l.b16 %v4740
      %v4773 = vunpack.c.l.b16 %v4741
      %v4774 = vunpack.c.l.b16 %v4742
      %v4775 = vunpack.c.l.b16 %v4743
      %v4776 = vpack.c.b16 %v4761, %v4760
      %v4777 = vpack.c.b16 %v4763, %v4762
      %v4778 = vpack.c.b16 %v4765, %v4764
      %v4779 = vpack.c.b16 %v4767, %v4766
      %v4780 = vpack.c.b16 %v4769, %v4768
      %v4781 = vpack.c.b16 %v4771, %v4770
      %v4782 = vpack.c.b16 %v4773, %v4772
      %v4783 = vpack.c.b16 %v4775, %v4774
      %4792 = vmatpush.bf16.msra.mxu0 %v4783
      %4793 = vmatpush.bf16.msra.mxu0 %v4782
      %4794 = vmatpush.bf16.msra.mxu0 %v4781
      %4795 = vmatpush.bf16.msra.mxu0 %v4780
      %4796 = vmatpush.bf16.msra.mxu0 %v4779
      %4797 = vmatpush.bf16.msra.mxu0 %v4778
      %4798 = vmatpush.bf16.msra.mxu0 %v4777
      %4799 = vmatpush.bf16.msra.mxu0 %v4776
      %4800 = vmatmul.bf16.gmra.mxu0 %v4726
      %v4801 = vpop.f32.mrf.mxu0
      %v4802 = vadd.f32 0.0, %v4801
      %v4803 = vpop.f32.mrf.mxu0
      %v4804 = vadd.f32 0.0, %v4803
      %4805 = vmatmul.bf16.gmra.mxu0 %v4727
      %v4806 = vpop.f32.mrf.mxu0
      %v4807 = vadd.f32 0.0, %v4806
      %v4808 = vpop.f32.mrf.mxu0
      %v4809 = vadd.f32 0.0, %v4808
      %4810 = vdwg.mxu0
      %v4811 = vadd.f32 %v4718, %v4802
      %v4812 = vadd.f32 %v4719, %v4804
      %v4813 = vadd.f32 %v4720, %v4807
      %v4814 = vadd.f32 %v4721, %v4809
      %v4815 = vld [vmem:[#allocation2 + $0x72] sm:$0xff]
      %v4816 = vld [vmem:[#allocation2 + $0x7a] sm:$0xff]
      %v4817 = vld [vmem:[#allocation2 + $0x82] sm:$0xff]
      %v4818 = vld [vmem:[#allocation2 + $0x8a] sm:$0xf]
      %v4819 = vpack.c.bf16 %v4816, %v4815
      %v4820 = vpack.c.bf16 %v4818, %v4817
      %v4821 = vld [vmem:[%s3 + $0x200] sm:$0xf]
      %v4822 = vld [vmem:[%s3 + $0x204] sm:$0xf]
      %v4823 = vld [vmem:[%s3 + $0x208] sm:$0xf]
      %v4824 = vld [vmem:[%s3 + $0x20c] sm:$0xf]
      %v4825 = vld [vmem:[%s3 + $0x210] sm:$0xf]
      %v4826 = vld [vmem:[%s3 + $0x214] sm:$0xf]
      %v4827 = vld [vmem:[%s3 + $0x218] sm:$0xf]
      %v4828 = vld [vmem:[%s3 + $0x21c] sm:$0xf]
      %v4829 = vld [vmem:[%s3 + $0x220] sm:$0xf]
      %v4830 = vld [vmem:[%s3 + $0x224] sm:$0xf]
      %v4831 = vld [vmem:[%s3 + $0x228] sm:$0xf]
      %v4832 = vld [vmem:[%s3 + $0x22c] sm:$0xf]
      %v4833 = vld [vmem:[%s3 + $0x230] sm:$0xf]
      %v4834 = vld [vmem:[%s3 + $0x234] sm:$0xf]
      %v4835 = vld [vmem:[%s3 + $0x238] sm:$0xf]
      %v4836 = vld [vmem:[%s3 + $0x23c] sm:$0xf]
      %v4853 = vunpack.c.l.b16 %v4821
      %v4854 = vunpack.c.l.b16 %v4822
      %v4855 = vunpack.c.l.b16 %v4823
      %v4856 = vunpack.c.l.b16 %v4824
      %v4857 = vunpack.c.l.b16 %v4825
      %v4858 = vunpack.c.l.b16 %v4826
      %v4859 = vunpack.c.l.b16 %v4827
      %v4860 = vunpack.c.l.b16 %v4828
      %v4861 = vunpack.c.l.b16 %v4829
      %v4862 = vunpack.c.l.b16 %v4830
      %v4863 = vunpack.c.l.b16 %v4831
      %v4864 = vunpack.c.l.b16 %v4832
      %v4865 = vunpack.c.l.b16 %v4833
      %v4866 = vunpack.c.l.b16 %v4834
      %v4867 = vunpack.c.l.b16 %v4835
      %v4868 = vunpack.c.l.b16 %v4836
      %v4869 = vpack.c.b16 %v4854, %v4853
      %v4870 = vpack.c.b16 %v4856, %v4855
      %v4871 = vpack.c.b16 %v4858, %v4857
      %v4872 = vpack.c.b16 %v4860, %v4859
      %v4873 = vpack.c.b16 %v4862, %v4861
      %v4874 = vpack.c.b16 %v4864, %v4863
      %v4875 = vpack.c.b16 %v4866, %v4865
      %v4876 = vpack.c.b16 %v4868, %v4867
      %4885 = vmatpush.bf16.msra.mxu0 %v4876
      %4886 = vmatpush.bf16.msra.mxu0 %v4875
      %4887 = vmatpush.bf16.msra.mxu0 %v4874
      %4888 = vmatpush.bf16.msra.mxu0 %v4873
      %4889 = vmatpush.bf16.msra.mxu0 %v4872
      %4890 = vmatpush.bf16.msra.mxu0 %v4871
      %4891 = vmatpush.bf16.msra.mxu0 %v4870
      %4892 = vmatpush.bf16.msra.mxu0 %v4869
      %4893 = vmatmul.bf16.gmra.mxu0 %v4819
      %v4894 = vpop.f32.mrf.mxu0
      %v4895 = vadd.f32 0.0, %v4894
      %v4896 = vpop.f32.mrf.mxu0
      %v4897 = vadd.f32 0.0, %v4896
      %4898 = vmatmul.bf16.gmra.mxu0 %v4820
      %v4899 = vpop.f32.mrf.mxu0
      %v4900 = vadd.f32 0.0, %v4899
      %v4901 = vpop.f32.mrf.mxu0
      %v4902 = vadd.f32 0.0, %v4901
      %4903 = vdwg.mxu0
      %v4904 = vadd.f32 %v4811, %v4895
      %v4905 = vadd.f32 %v4812, %v4897
      %v4906 = vadd.f32 %v4813, %v4900
      %v4907 = vadd.f32 %v4814, %v4902
      %4908 = vst [vmem:[#allocation3] sm:$0xff] %v4904
      %4909 = vst [vmem:[#allocation3 + $0x8] sm:$0xff] %v4905
      %4910 = vst [vmem:[#allocation3 + $0x10] sm:$0xff] %v4906
      %4911 = vst [vmem:[#allocation3 + $0x18] sm:$0xf] %v4907
      %v4912 = vld [vmem:[#allocation3] ss:$2 sm:$0x3f]
      %v4913 = vld [vmem:[%s321] ss:$2 sm:$0x3f]
      %v4914 = vmax.f32 %v4912, %v4913
      %v4915 = vld [vmem:[%s2380] ss:$2 sm:$0x3f]
      %v4916 = vld [vmem:[%s2382] ss:$2 sm:$0x3f]
      %v4917 = vmax.f32 %v4915, %v4916
      %v4918 = vmax.f32 %v4914, %v4917
      %v4919 = vadd.f32 %v4918, %v2387
      %v4920 = vmax.f32 %v4919, 0.0
      %4921 = vst.msk [vmem:[%s224 + $0x12] sm:$0x3f] %vm2391, %v4920
      %v4922 = vld [vmem:[#allocation2 + $0x70] sm:$0xff]
      %v4923 = vld [vmem:[#allocation2 + $0x78] sm:$0xff]
      %v4924 = vld [vmem:[#allocation2 + $0x80] sm:$0xff]
      %v4925 = vld [vmem:[#allocation2 + $0x88] sm:$0xf]
      %v4926 = vpack.c.bf16 %v4923, %v4922
      %v4927 = vpack.c.bf16 %v4925, %v4924
      %v4928 = vld [vmem:[%s3] sm:$0xf]
      %v4929 = vld [vmem:[%s3 + $0x4] sm:$0xf]
      %v4930 = vld [vmem:[%s3 + $0x8] sm:$0xf]
      %v4931 = vld [vmem:[%s3 + $0xc] sm:$0xf]
      %v4932 = vld [vmem:[%s3 + $0x10] sm:$0xf]
      %v4933 = vld [vmem:[%s3 + $0x14] sm:$0xf]
      %v4934 = vld [vmem:[%s3 + $0x18] sm:$0xf]
      %v4935 = vld [vmem:[%s3 + $0x1c] sm:$0xf]
      %v4936 = vld [vmem:[%s3 + $0x20] sm:$0xf]
      %v4937 = vld [vmem:[%s3 + $0x24] sm:$0xf]
      %v4938 = vld [vmem:[%s3 + $0x28] sm:$0xf]
      %v4939 = vld [vmem:[%s3 + $0x2c] sm:$0xf]
      %v4940 = vld [vmem:[%s3 + $0x30] sm:$0xf]
      %v4941 = vld [vmem:[%s3 + $0x34] sm:$0xf]
      %v4942 = vld [vmem:[%s3 + $0x38] sm:$0xf]
      %v4943 = vld [vmem:[%s3 + $0x3c] sm:$0xf]
      %v4944 = vld [vmem:[#allocation2 + $0x71] sm:$0xff]
      %v4945 = vld [vmem:[#allocation2 + $0x79] sm:$0xff]
      %v4946 = vld [vmem:[#allocation2 + $0x81] sm:$0xff]
      %v4947 = vld [vmem:[#allocation2 + $0x89] sm:$0xf]
      %v4948 = vpack.c.bf16 %v4945, %v4944
      %v4949 = vpack.c.bf16 %v4947, %v4946
      %v4950 = vld [vmem:[%s3 + $0x40] sm:$0xf]
      %v4951 = vld [vmem:[%s3 + $0x44] sm:$0xf]
      %v4952 = vld [vmem:[%s3 + $0x48] sm:$0xf]
      %v4953 = vld [vmem:[%s3 + $0x4c] sm:$0xf]
      %v4954 = vld [vmem:[%s3 + $0x50] sm:$0xf]
      %v4955 = vld [vmem:[%s3 + $0x54] sm:$0xf]
      %v4956 = vld [vmem:[%s3 + $0x58] sm:$0xf]
      %v4957 = vld [vmem:[%s3 + $0x5c] sm:$0xf]
      %v4958 = vld [vmem:[%s3 + $0x60] sm:$0xf]
      %v4959 = vld [vmem:[%s3 + $0x64] sm:$0xf]
      %v4960 = vld [vmem:[%s3 + $0x68] sm:$0xf]
      %v4961 = vld [vmem:[%s3 + $0x6c] sm:$0xf]
      %v4962 = vld [vmem:[%s3 + $0x70] sm:$0xf]
      %v4963 = vld [vmem:[%s3 + $0x74] sm:$0xf]
      %v4964 = vld [vmem:[%s3 + $0x78] sm:$0xf]
      %v4965 = vld [vmem:[%s3 + $0x7c] sm:$0xf]
      %v4982 = vunpack.c.l.b16 %v4950
      %v4983 = vunpack.c.l.b16 %v4951
      %v4984 = vunpack.c.l.b16 %v4952
      %v4985 = vunpack.c.l.b16 %v4953
      %v4986 = vunpack.c.l.b16 %v4954
      %v4987 = vunpack.c.l.b16 %v4955
      %v4988 = vunpack.c.l.b16 %v4956
      %v4989 = vunpack.c.l.b16 %v4957
      %v4990 = vunpack.c.l.b16 %v4958
      %v4991 = vunpack.c.l.b16 %v4959
      %v4992 = vunpack.c.l.b16 %v4960
      %v4993 = vunpack.c.l.b16 %v4961
      %v4994 = vunpack.c.l.b16 %v4962
      %v4995 = vunpack.c.l.b16 %v4963
      %v4996 = vunpack.c.l.b16 %v4964
      %v4997 = vunpack.c.l.b16 %v4965
      %v4998 = vpack.c.b16 %v4983, %v4982
      %v4999 = vpack.c.b16 %v4985, %v4984
      %v5000 = vpack.c.b16 %v4987, %v4986
      %v5001 = vpack.c.b16 %v4989, %v4988
      %v5002 = vpack.c.b16 %v4991, %v4990
      %v5003 = vpack.c.b16 %v4993, %v4992
      %v5004 = vpack.c.b16 %v4995, %v4994
      %v5005 = vpack.c.b16 %v4997, %v4996
      %5014 = vmatpush.bf16.msra.mxu0 %v5005
      %5015 = vmatpush.bf16.msra.mxu0 %v5004
      %5016 = vmatpush.bf16.msra.mxu0 %v5003
      %5017 = vmatpush.bf16.msra.mxu0 %v5002
      %5018 = vmatpush.bf16.msra.mxu0 %v5001
      %5019 = vmatpush.bf16.msra.mxu0 %v5000
      %5020 = vmatpush.bf16.msra.mxu0 %v4999
      %5021 = vmatpush.bf16.msra.mxu0 %v4998
      %5022 = vmatmul.bf16.gmra.mxu0 %v4948
      %v5023 = vpop.f32.mrf.mxu0
      %v5024 = vadd.f32 0.0, %v5023
      %v5025 = vpop.f32.mrf.mxu0
      %v5026 = vadd.f32 0.0, %v5025
      %5027 = vmatmul.bf16.gmra.mxu0 %v4949
      %v5028 = vpop.f32.mrf.mxu0
      %v5029 = vadd.f32 0.0, %v5028
      %v5030 = vpop.f32.mrf.mxu0
      %v5031 = vadd.f32 0.0, %v5030
      %5032 = vdwg.mxu0
      %v5049 = vunpack.c.l.b16 %v4928
      %v5050 = vunpack.c.l.b16 %v4929
      %v5051 = vunpack.c.l.b16 %v4930
      %v5052 = vunpack.c.l.b16 %v4931
      %v5053 = vunpack.c.l.b16 %v4932
      %v5054 = vunpack.c.l.b16 %v4933
      %v5055 = vunpack.c.l.b16 %v4934
      %v5056 = vunpack.c.l.b16 %v4935
      %v5057 = vunpack.c.l.b16 %v4936
      %v5058 = vunpack.c.l.b16 %v4937
      %v5059 = vunpack.c.l.b16 %v4938
      %v5060 = vunpack.c.l.b16 %v4939
      %v5061 = vunpack.c.l.b16 %v4940
      %v5062 = vunpack.c.l.b16 %v4941
      %v5063 = vunpack.c.l.b16 %v4942
      %v5064 = vunpack.c.l.b16 %v4943
      %v5065 = vpack.c.b16 %v5050, %v5049
      %v5066 = vpack.c.b16 %v5052, %v5051
      %v5067 = vpack.c.b16 %v5054, %v5053
      %v5068 = vpack.c.b16 %v5056, %v5055
      %v5069 = vpack.c.b16 %v5058, %v5057
      %v5070 = vpack.c.b16 %v5060, %v5059
      %v5071 = vpack.c.b16 %v5062, %v5061
      %v5072 = vpack.c.b16 %v5064, %v5063
      %5081 = vmatpush.bf16.msra.mxu0 %v5072
      %5082 = vmatpush.bf16.msra.mxu0 %v5071
      %5083 = vmatpush.bf16.msra.mxu0 %v5070
      %5084 = vmatpush.bf16.msra.mxu0 %v5069
      %5085 = vmatpush.bf16.msra.mxu0 %v5068
      %5086 = vmatpush.bf16.msra.mxu0 %v5067
      %5087 = vmatpush.bf16.msra.mxu0 %v5066
      %5088 = vmatpush.bf16.msra.mxu0 %v5065
      %5089 = vmatmul.bf16.gmra.mxu0 %v4926
      %v5090 = vpop.f32.mrf.mxu0
      %v5091 = vadd.f32 %v5024, %v5090
      %v5092 = vpop.f32.mrf.mxu0
      %v5093 = vadd.f32 %v5026, %v5092
      %5094 = vmatmul.bf16.gmra.mxu0 %v4927
      %v5095 = vpop.f32.mrf.mxu0
      %v5096 = vadd.f32 %v5029, %v5095
      %v5097 = vpop.f32.mrf.mxu0
      %v5098 = vadd.f32 %v5031, %v5097
      %5099 = vdwg.mxu0
      %v5100 = vld [vmem:[#allocation2 + $0x72] sm:$0xff]
      %v5101 = vld [vmem:[#allocation2 + $0x7a] sm:$0xff]
      %v5102 = vld [vmem:[#allocation2 + $0x82] sm:$0xff]
      %v5103 = vld [vmem:[#allocation2 + $0x8a] sm:$0xf]
      %v5104 = vpack.c.bf16 %v5101, %v5100
      %v5105 = vpack.c.bf16 %v5103, %v5102
      %v5106 = vld [vmem:[%s3 + $0x80] sm:$0xf]
      %v5107 = vld [vmem:[%s3 + $0x84] sm:$0xf]
      %v5108 = vld [vmem:[%s3 + $0x88] sm:$0xf]
      %v5109 = vld [vmem:[%s3 + $0x8c] sm:$0xf]
      %v5110 = vld [vmem:[%s3 + $0x90] sm:$0xf]
      %v5111 = vld [vmem:[%s3 + $0x94] sm:$0xf]
      %v5112 = vld [vmem:[%s3 + $0x98] sm:$0xf]
      %v5113 = vld [vmem:[%s3 + $0x9c] sm:$0xf]
      %v5114 = vld [vmem:[%s3 + $0xa0] sm:$0xf]
      %v5115 = vld [vmem:[%s3 + $0xa4] sm:$0xf]
      %v5116 = vld [vmem:[%s3 + $0xa8] sm:$0xf]
      %v5117 = vld [vmem:[%s3 + $0xac] sm:$0xf]
      %v5118 = vld [vmem:[%s3 + $0xb0] sm:$0xf]
      %v5119 = vld [vmem:[%s3 + $0xb4] sm:$0xf]
      %v5120 = vld [vmem:[%s3 + $0xb8] sm:$0xf]
      %v5121 = vld [vmem:[%s3 + $0xbc] sm:$0xf]
      %v5138 = vunpack.c.l.b16 %v5106
      %v5139 = vunpack.c.l.b16 %v5107
      %v5140 = vunpack.c.l.b16 %v5108
      %v5141 = vunpack.c.l.b16 %v5109
      %v5142 = vunpack.c.l.b16 %v5110
      %v5143 = vunpack.c.l.b16 %v5111
      %v5144 = vunpack.c.l.b16 %v5112
      %v5145 = vunpack.c.l.b16 %v5113
      %v5146 = vunpack.c.l.b16 %v5114
      %v5147 = vunpack.c.l.b16 %v5115
      %v5148 = vunpack.c.l.b16 %v5116
      %v5149 = vunpack.c.l.b16 %v5117
      %v5150 = vunpack.c.l.b16 %v5118
      %v5151 = vunpack.c.l.b16 %v5119
      %v5152 = vunpack.c.l.b16 %v5120
      %v5153 = vunpack.c.l.b16 %v5121
      %v5154 = vpack.c.b16 %v5139, %v5138
      %v5155 = vpack.c.b16 %v5141, %v5140
      %v5156 = vpack.c.b16 %v5143, %v5142
      %v5157 = vpack.c.b16 %v5145, %v5144
      %v5158 = vpack.c.b16 %v5147, %v5146
      %v5159 = vpack.c.b16 %v5149, %v5148
      %v5160 = vpack.c.b16 %v5151, %v5150
      %v5161 = vpack.c.b16 %v5153, %v5152
      %5170 = vmatpush.bf16.msra.mxu0 %v5161
      %5171 = vmatpush.bf16.msra.mxu0 %v5160
      %5172 = vmatpush.bf16.msra.mxu0 %v5159
      %5173 = vmatpush.bf16.msra.mxu0 %v5158
      %5174 = vmatpush.bf16.msra.mxu0 %v5157
      %5175 = vmatpush.bf16.msra.mxu0 %v5156
      %5176 = vmatpush.bf16.msra.mxu0 %v5155
      %5177 = vmatpush.bf16.msra.mxu0 %v5154
      %5178 = vmatmul.bf16.gmra.mxu0 %v5104
      %v5179 = vpop.f32.mrf.mxu0
      %v5180 = vadd.f32 0.0, %v5179
      %v5181 = vpop.f32.mrf.mxu0
      %v5182 = vadd.f32 0.0, %v5181
      %5183 = vmatmul.bf16.gmra.mxu0 %v5105
      %v5184 = vpop.f32.mrf.mxu0
      %v5185 = vadd.f32 0.0, %v5184
      %v5186 = vpop.f32.mrf.mxu0
      %v5187 = vadd.f32 0.0, %v5186
      %5188 = vdwg.mxu0
      %v5189 = vadd.f32 %v5091, %v5180
      %v5190 = vadd.f32 %v5093, %v5182
      %v5191 = vadd.f32 %v5096, %v5185
      %v5192 = vadd.f32 %v5098, %v5187
      %v5193 = vld [vmem:[#allocation2 + $0x7e] sm:$0xff]
      %v5194 = vld [vmem:[#allocation2 + $0x86] sm:$0xff]
      %v5195 = vld [vmem:[#allocation2 + $0x8e] sm:$0xff]
      %v5196 = vld [vmem:[#allocation2 + $0x96] sm:$0xf]
      %v5197 = vpack.c.bf16 %v5194, %v5193
      %v5198 = vpack.c.bf16 %v5196, %v5195
      %v5199 = vld [vmem:[%s3 + $0xc0] sm:$0xf]
      %v5200 = vld [vmem:[%s3 + $0xc4] sm:$0xf]
      %v5201 = vld [vmem:[%s3 + $0xc8] sm:$0xf]
      %v5202 = vld [vmem:[%s3 + $0xcc] sm:$0xf]
      %v5203 = vld [vmem:[%s3 + $0xd0] sm:$0xf]
      %v5204 = vld [vmem:[%s3 + $0xd4] sm:$0xf]
      %v5205 = vld [vmem:[%s3 + $0xd8] sm:$0xf]
      %v5206 = vld [vmem:[%s3 + $0xdc] sm:$0xf]
      %v5207 = vld [vmem:[%s3 + $0xe0] sm:$0xf]
      %v5208 = vld [vmem:[%s3 + $0xe4] sm:$0xf]
      %v5209 = vld [vmem:[%s3 + $0xe8] sm:$0xf]
      %v5210 = vld [vmem:[%s3 + $0xec] sm:$0xf]
      %v5211 = vld [vmem:[%s3 + $0xf0] sm:$0xf]
      %v5212 = vld [vmem:[%s3 + $0xf4] sm:$0xf]
      %v5213 = vld [vmem:[%s3 + $0xf8] sm:$0xf]
      %v5214 = vld [vmem:[%s3 + $0xfc] sm:$0xf]
      %v5231 = vunpack.c.l.b16 %v5199
      %v5232 = vunpack.c.l.b16 %v5200
      %v5233 = vunpack.c.l.b16 %v5201
      %v5234 = vunpack.c.l.b16 %v5202
      %v5235 = vunpack.c.l.b16 %v5203
      %v5236 = vunpack.c.l.b16 %v5204
      %v5237 = vunpack.c.l.b16 %v5205
      %v5238 = vunpack.c.l.b16 %v5206
      %v5239 = vunpack.c.l.b16 %v5207
      %v5240 = vunpack.c.l.b16 %v5208
      %v5241 = vunpack.c.l.b16 %v5209
      %v5242 = vunpack.c.l.b16 %v5210
      %v5243 = vunpack.c.l.b16 %v5211
      %v5244 = vunpack.c.l.b16 %v5212
      %v5245 = vunpack.c.l.b16 %v5213
      %v5246 = vunpack.c.l.b16 %v5214
      %v5247 = vpack.c.b16 %v5232, %v5231
      %v5248 = vpack.c.b16 %v5234, %v5233
      %v5249 = vpack.c.b16 %v5236, %v5235
      %v5250 = vpack.c.b16 %v5238, %v5237
      %v5251 = vpack.c.b16 %v5240, %v5239
      %v5252 = vpack.c.b16 %v5242, %v5241
      %v5253 = vpack.c.b16 %v5244, %v5243
      %v5254 = vpack.c.b16 %v5246, %v5245
      %5263 = vmatpush.bf16.msra.mxu0 %v5254
      %5264 = vmatpush.bf16.msra.mxu0 %v5253
      %5265 = vmatpush.bf16.msra.mxu0 %v5252
      %5266 = vmatpush.bf16.msra.mxu0 %v5251
      %5267 = vmatpush.bf16.msra.mxu0 %v5250
      %5268 = vmatpush.bf16.msra.mxu0 %v5249
      %5269 = vmatpush.bf16.msra.mxu0 %v5248
      %5270 = vmatpush.bf16.msra.mxu0 %v5247
      %5271 = vmatmul.bf16.gmra.mxu0 %v5197
      %v5272 = vpop.f32.mrf.mxu0
      %v5273 = vadd.f32 0.0, %v5272
      %v5274 = vpop.f32.mrf.mxu0
      %v5275 = vadd.f32 0.0, %v5274
      %5276 = vmatmul.bf16.gmra.mxu0 %v5198
      %v5277 = vpop.f32.mrf.mxu0
      %v5278 = vadd.f32 0.0, %v5277
      %v5279 = vpop.f32.mrf.mxu0
      %v5280 = vadd.f32 0.0, %v5279
      %5281 = vdwg.mxu0
      %v5282 = vadd.f32 %v5189, %v5273
      %v5283 = vadd.f32 %v5190, %v5275
      %v5284 = vadd.f32 %v5191, %v5278
      %v5285 = vadd.f32 %v5192, %v5280
      %v5286 = vld [vmem:[#allocation2 + $0x7f] sm:$0xff]
      %v5287 = vld [vmem:[#allocation2 + $0x87] sm:$0xff]
      %v5288 = vld [vmem:[#allocation2 + $0x8f] sm:$0xff]
      %v5289 = vld [vmem:[#allocation2 + $0x97] sm:$0xf]
      %v5290 = vpack.c.bf16 %v5287, %v5286
      %v5291 = vpack.c.bf16 %v5289, %v5288
      %v5292 = vld [vmem:[%s3 + $0x100] sm:$0xf]
      %v5293 = vld [vmem:[%s3 + $0x104] sm:$0xf]
      %v5294 = vld [vmem:[%s3 + $0x108] sm:$0xf]
      %v5295 = vld [vmem:[%s3 + $0x10c] sm:$0xf]
      %v5296 = vld [vmem:[%s3 + $0x110] sm:$0xf]
      %v5297 = vld [vmem:[%s3 + $0x114] sm:$0xf]
      %v5298 = vld [vmem:[%s3 + $0x118] sm:$0xf]
      %v5299 = vld [vmem:[%s3 + $0x11c] sm:$0xf]
      %v5300 = vld [vmem:[%s3 + $0x120] sm:$0xf]
      %v5301 = vld [vmem:[%s3 + $0x124] sm:$0xf]
      %v5302 = vld [vmem:[%s3 + $0x128] sm:$0xf]
      %v5303 = vld [vmem:[%s3 + $0x12c] sm:$0xf]
      %v5304 = vld [vmem:[%s3 + $0x130] sm:$0xf]
      %v5305 = vld [vmem:[%s3 + $0x134] sm:$0xf]
      %v5306 = vld [vmem:[%s3 + $0x138] sm:$0xf]
      %v5307 = vld [vmem:[%s3 + $0x13c] sm:$0xf]
      %v5324 = vunpack.c.l.b16 %v5292
      %v5325 = vunpack.c.l.b16 %v5293
      %v5326 = vunpack.c.l.b16 %v5294
      %v5327 = vunpack.c.l.b16 %v5295
      %v5328 = vunpack.c.l.b16 %v5296
      %v5329 = vunpack.c.l.b16 %v5297
      %v5330 = vunpack.c.l.b16 %v5298
      %v5331 = vunpack.c.l.b16 %v5299
      %v5332 = vunpack.c.l.b16 %v5300
      %v5333 = vunpack.c.l.b16 %v5301
      %v5334 = vunpack.c.l.b16 %v5302
      %v5335 = vunpack.c.l.b16 %v5303
      %v5336 = vunpack.c.l.b16 %v5304
      %v5337 = vunpack.c.l.b16 %v5305
      %v5338 = vunpack.c.l.b16 %v5306
      %v5339 = vunpack.c.l.b16 %v5307
      %v5340 = vpack.c.b16 %v5325, %v5324
      %v5341 = vpack.c.b16 %v5327, %v5326
      %v5342 = vpack.c.b16 %v5329, %v5328
      %v5343 = vpack.c.b16 %v5331, %v5330
      %v5344 = vpack.c.b16 %v5333, %v5332
      %v5345 = vpack.c.b16 %v5335, %v5334
      %v5346 = vpack.c.b16 %v5337, %v5336
      %v5347 = vpack.c.b16 %v5339, %v5338
      %5356 = vmatpush.bf16.msra.mxu0 %v5347
      %5357 = vmatpush.bf16.msra.mxu0 %v5346
      %5358 = vmatpush.bf16.msra.mxu0 %v5345
      %5359 = vmatpush.bf16.msra.mxu0 %v5344
      %5360 = vmatpush.bf16.msra.mxu0 %v5343
      %5361 = vmatpush.bf16.msra.mxu0 %v5342
      %5362 = vmatpush.bf16.msra.mxu0 %v5341
      %5363 = vmatpush.bf16.msra.mxu0 %v5340
      %5364 = vmatmul.bf16.gmra.mxu0 %v5290
      %v5365 = vpop.f32.mrf.mxu0
      %v5366 = vadd.f32 0.0, %v5365
      %v5367 = vpop.f32.mrf.mxu0
      %v5368 = vadd.f32 0.0, %v5367
      %5369 = vmatmul.bf16.gmra.mxu0 %v5291
      %v5370 = vpop.f32.mrf.mxu0
      %v5371 = vadd.f32 0.0, %v5370
      %v5372 = vpop.f32.mrf.mxu0
      %v5373 = vadd.f32 0.0, %v5372
      %5374 = vdwg.mxu0
      %v5375 = vadd.f32 %v5282, %v5366
      %v5376 = vadd.f32 %v5283, %v5368
      %v5377 = vadd.f32 %v5284, %v5371
      %v5378 = vadd.f32 %v5285, %v5373
      %v5379 = vld [vmem:[#allocation2 + $0x80] sm:$0xff]
      %v5380 = vld [vmem:[#allocation2 + $0x88] sm:$0xff]
      %v5381 = vld [vmem:[#allocation2 + $0x90] sm:$0xff]
      %v5382 = vld [vmem:[#allocation2 + $0x98] sm:$0xf]
      %v5383 = vpack.c.bf16 %v5380, %v5379
      %v5384 = vpack.c.bf16 %v5382, %v5381
      %v5385 = vld [vmem:[%s3 + $0x140] sm:$0xf]
      %v5386 = vld [vmem:[%s3 + $0x144] sm:$0xf]
      %v5387 = vld [vmem:[%s3 + $0x148] sm:$0xf]
      %v5388 = vld [vmem:[%s3 + $0x14c] sm:$0xf]
      %v5389 = vld [vmem:[%s3 + $0x150] sm:$0xf]
      %v5390 = vld [vmem:[%s3 + $0x154] sm:$0xf]
      %v5391 = vld [vmem:[%s3 + $0x158] sm:$0xf]
      %v5392 = vld [vmem:[%s3 + $0x15c] sm:$0xf]
      %v5393 = vld [vmem:[%s3 + $0x160] sm:$0xf]
      %v5394 = vld [vmem:[%s3 + $0x164] sm:$0xf]
      %v5395 = vld [vmem:[%s3 + $0x168] sm:$0xf]
      %v5396 = vld [vmem:[%s3 + $0x16c] sm:$0xf]
      %v5397 = vld [vmem:[%s3 + $0x170] sm:$0xf]
      %v5398 = vld [vmem:[%s3 + $0x174] sm:$0xf]
      %v5399 = vld [vmem:[%s3 + $0x178] sm:$0xf]
      %v5400 = vld [vmem:[%s3 + $0x17c] sm:$0xf]
      %v5417 = vunpack.c.l.b16 %v5385
      %v5418 = vunpack.c.l.b16 %v5386
      %v5419 = vunpack.c.l.b16 %v5387
      %v5420 = vunpack.c.l.b16 %v5388
      %v5421 = vunpack.c.l.b16 %v5389
      %v5422 = vunpack.c.l.b16 %v5390
      %v5423 = vunpack.c.l.b16 %v5391
      %v5424 = vunpack.c.l.b16 %v5392
      %v5425 = vunpack.c.l.b16 %v5393
      %v5426 = vunpack.c.l.b16 %v5394
      %v5427 = vunpack.c.l.b16 %v5395
      %v5428 = vunpack.c.l.b16 %v5396
      %v5429 = vunpack.c.l.b16 %v5397
      %v5430 = vunpack.c.l.b16 %v5398
      %v5431 = vunpack.c.l.b16 %v5399
      %v5432 = vunpack.c.l.b16 %v5400
      %v5433 = vpack.c.b16 %v5418, %v5417
      %v5434 = vpack.c.b16 %v5420, %v5419
      %v5435 = vpack.c.b16 %v5422, %v5421
      %v5436 = vpack.c.b16 %v5424, %v5423
      %v5437 = vpack.c.b16 %v5426, %v5425
      %v5438 = vpack.c.b16 %v5428, %v5427
      %v5439 = vpack.c.b16 %v5430, %v5429
      %v5440 = vpack.c.b16 %v5432, %v5431
      %5449 = vmatpush.bf16.msra.mxu0 %v5440
      %5450 = vmatpush.bf16.msra.mxu0 %v5439
      %5451 = vmatpush.bf16.msra.mxu0 %v5438
      %5452 = vmatpush.bf16.msra.mxu0 %v5437
      %5453 = vmatpush.bf16.msra.mxu0 %v5436
      %5454 = vmatpush.bf16.msra.mxu0 %v5435
      %5455 = vmatpush.bf16.msra.mxu0 %v5434
      %5456 = vmatpush.bf16.msra.mxu0 %v5433
      %5457 = vmatmul.bf16.gmra.mxu0 %v5383
      %v5458 = vpop.f32.mrf.mxu0
      %v5459 = vadd.f32 0.0, %v5458
      %v5460 = vpop.f32.mrf.mxu0
      %v5461 = vadd.f32 0.0, %v5460
      %5462 = vmatmul.bf16.gmra.mxu0 %v5384
      %v5463 = vpop.f32.mrf.mxu0
      %v5464 = vadd.f32 0.0, %v5463
      %v5465 = vpop.f32.mrf.mxu0
      %v5466 = vadd.f32 0.0, %v5465
      %5467 = vdwg.mxu0
      %v5468 = vadd.f32 %v5375, %v5459
      %v5469 = vadd.f32 %v5376, %v5461
      %v5470 = vadd.f32 %v5377, %v5464
      %v5471 = vadd.f32 %v5378, %v5466
      %v5472 = vld [vmem:[#allocation2 + $0x8c] sm:$0xff]
      %v5473 = vld [vmem:[#allocation2 + $0x94] sm:$0xff]
      %v5474 = vld [vmem:[#allocation2 + $0x9c] sm:$0xff]
      %v5475 = vld [vmem:[#allocation2 + $0xa4] sm:$0xf]
      %v5476 = vpack.c.bf16 %v5473, %v5472
      %v5477 = vpack.c.bf16 %v5475, %v5474
      %v5478 = vld [vmem:[%s3 + $0x180] sm:$0xf]
      %v5479 = vld [vmem:[%s3 + $0x184] sm:$0xf]
      %v5480 = vld [vmem:[%s3 + $0x188] sm:$0xf]
      %v5481 = vld [vmem:[%s3 + $0x18c] sm:$0xf]
      %v5482 = vld [vmem:[%s3 + $0x190] sm:$0xf]
      %v5483 = vld [vmem:[%s3 + $0x194] sm:$0xf]
      %v5484 = vld [vmem:[%s3 + $0x198] sm:$0xf]
      %v5485 = vld [vmem:[%s3 + $0x19c] sm:$0xf]
      %v5486 = vld [vmem:[%s3 + $0x1a0] sm:$0xf]
      %v5487 = vld [vmem:[%s3 + $0x1a4] sm:$0xf]
      %v5488 = vld [vmem:[%s3 + $0x1a8] sm:$0xf]
      %v5489 = vld [vmem:[%s3 + $0x1ac] sm:$0xf]
      %v5490 = vld [vmem:[%s3 + $0x1b0] sm:$0xf]
      %v5491 = vld [vmem:[%s3 + $0x1b4] sm:$0xf]
      %v5492 = vld [vmem:[%s3 + $0x1b8] sm:$0xf]
      %v5493 = vld [vmem:[%s3 + $0x1bc] sm:$0xf]
      %v5510 = vunpack.c.l.b16 %v5478
      %v5511 = vunpack.c.l.b16 %v5479
      %v5512 = vunpack.c.l.b16 %v5480
      %v5513 = vunpack.c.l.b16 %v5481
      %v5514 = vunpack.c.l.b16 %v5482
      %v5515 = vunpack.c.l.b16 %v5483
      %v5516 = vunpack.c.l.b16 %v5484
      %v5517 = vunpack.c.l.b16 %v5485
      %v5518 = vunpack.c.l.b16 %v5486
      %v5519 = vunpack.c.l.b16 %v5487
      %v5520 = vunpack.c.l.b16 %v5488
      %v5521 = vunpack.c.l.b16 %v5489
      %v5522 = vunpack.c.l.b16 %v5490
      %v5523 = vunpack.c.l.b16 %v5491
      %v5524 = vunpack.c.l.b16 %v5492
      %v5525 = vunpack.c.l.b16 %v5493
      %v5526 = vpack.c.b16 %v5511, %v5510
      %v5527 = vpack.c.b16 %v5513, %v5512
      %v5528 = vpack.c.b16 %v5515, %v5514
      %v5529 = vpack.c.b16 %v5517, %v5516
      %v5530 = vpack.c.b16 %v5519, %v5518
      %v5531 = vpack.c.b16 %v5521, %v5520
      %v5532 = vpack.c.b16 %v5523, %v5522
      %v5533 = vpack.c.b16 %v5525, %v5524
      %5542 = vmatpush.bf16.msra.mxu0 %v5533
      %5543 = vmatpush.bf16.msra.mxu0 %v5532
      %5544 = vmatpush.bf16.msra.mxu0 %v5531
      %5545 = vmatpush.bf16.msra.mxu0 %v5530
      %5546 = vmatpush.bf16.msra.mxu0 %v5529
      %5547 = vmatpush.bf16.msra.mxu0 %v5528
      %5548 = vmatpush.bf16.msra.mxu0 %v5527
      %5549 = vmatpush.bf16.msra.mxu0 %v5526
      %5550 = vmatmul.bf16.gmra.mxu0 %v5476
      %v5551 = vpop.f32.mrf.mxu0
      %v5552 = vadd.f32 0.0, %v5551
      %v5553 = vpop.f32.mrf.mxu0
      %v5554 = vadd.f32 0.0, %v5553
      %5555 = vmatmul.bf16.gmra.mxu0 %v5477
      %v5556 = vpop.f32.mrf.mxu0
      %v5557 = vadd.f32 0.0, %v5556
      %v5558 = vpop.f32.mrf.mxu0
      %v5559 = vadd.f32 0.0, %v5558
      %5560 = vdwg.mxu0
      %v5561 = vadd.f32 %v5468, %v5552
      %v5562 = vadd.f32 %v5469, %v5554
      %v5563 = vadd.f32 %v5470, %v5557
      %v5564 = vadd.f32 %v5471, %v5559
      %v5565 = vld [vmem:[#allocation2 + $0x8d] sm:$0xff]
      %v5566 = vld [vmem:[#allocation2 + $0x95] sm:$0xff]
      %v5567 = vld [vmem:[#allocation2 + $0x9d] sm:$0xff]
      %v5568 = vld [vmem:[#allocation2 + $0xa5] sm:$0xf]
      %v5569 = vpack.c.bf16 %v5566, %v5565
      %v5570 = vpack.c.bf16 %v5568, %v5567
      %v5571 = vld [vmem:[%s3 + $0x1c0] sm:$0xf]
      %v5572 = vld [vmem:[%s3 + $0x1c4] sm:$0xf]
      %v5573 = vld [vmem:[%s3 + $0x1c8] sm:$0xf]
      %v5574 = vld [vmem:[%s3 + $0x1cc] sm:$0xf]
      %v5575 = vld [vmem:[%s3 + $0x1d0] sm:$0xf]
      %v5576 = vld [vmem:[%s3 + $0x1d4] sm:$0xf]
      %v5577 = vld [vmem:[%s3 + $0x1d8] sm:$0xf]
      %v5578 = vld [vmem:[%s3 + $0x1dc] sm:$0xf]
      %v5579 = vld [vmem:[%s3 + $0x1e0] sm:$0xf]
      %v5580 = vld [vmem:[%s3 + $0x1e4] sm:$0xf]
      %v5581 = vld [vmem:[%s3 + $0x1e8] sm:$0xf]
      %v5582 = vld [vmem:[%s3 + $0x1ec] sm:$0xf]
      %v5583 = vld [vmem:[%s3 + $0x1f0] sm:$0xf]
      %v5584 = vld [vmem:[%s3 + $0x1f4] sm:$0xf]
      %v5585 = vld [vmem:[%s3 + $0x1f8] sm:$0xf]
      %v5586 = vld [vmem:[%s3 + $0x1fc] sm:$0xf]
      %v5603 = vunpack.c.l.b16 %v5571
      %v5604 = vunpack.c.l.b16 %v5572
      %v5605 = vunpack.c.l.b16 %v5573
      %v5606 = vunpack.c.l.b16 %v5574
      %v5607 = vunpack.c.l.b16 %v5575
      %v5608 = vunpack.c.l.b16 %v5576
      %v5609 = vunpack.c.l.b16 %v5577
      %v5610 = vunpack.c.l.b16 %v5578
      %v5611 = vunpack.c.l.b16 %v5579
      %v5612 = vunpack.c.l.b16 %v5580
      %v5613 = vunpack.c.l.b16 %v5581
      %v5614 = vunpack.c.l.b16 %v5582
      %v5615 = vunpack.c.l.b16 %v5583
      %v5616 = vunpack.c.l.b16 %v5584
      %v5617 = vunpack.c.l.b16 %v5585
      %v5618 = vunpack.c.l.b16 %v5586
      %v5619 = vpack.c.b16 %v5604, %v5603
      %v5620 = vpack.c.b16 %v5606, %v5605
      %v5621 = vpack.c.b16 %v5608, %v5607
      %v5622 = vpack.c.b16 %v5610, %v5609
      %v5623 = vpack.c.b16 %v5612, %v5611
      %v5624 = vpack.c.b16 %v5614, %v5613
      %v5625 = vpack.c.b16 %v5616, %v5615
      %v5626 = vpack.c.b16 %v5618, %v5617
      %5635 = vmatpush.bf16.msra.mxu0 %v5626
      %5636 = vmatpush.bf16.msra.mxu0 %v5625
      %5637 = vmatpush.bf16.msra.mxu0 %v5624
      %5638 = vmatpush.bf16.msra.mxu0 %v5623
      %5639 = vmatpush.bf16.msra.mxu0 %v5622
      %5640 = vmatpush.bf16.msra.mxu0 %v5621
      %5641 = vmatpush.bf16.msra.mxu0 %v5620
      %5642 = vmatpush.bf16.msra.mxu0 %v5619
      %5643 = vmatmul.bf16.gmra.mxu0 %v5569
      %v5644 = vpop.f32.mrf.mxu0
      %v5645 = vadd.f32 0.0, %v5644
      %v5646 = vpop.f32.mrf.mxu0
      %v5647 = vadd.f32 0.0, %v5646
      %5648 = vmatmul.bf16.gmra.mxu0 %v5570
      %v5649 = vpop.f32.mrf.mxu0
      %v5650 = vadd.f32 0.0, %v5649
      %v5651 = vpop.f32.mrf.mxu0
      %v5652 = vadd.f32 0.0, %v5651
      %5653 = vdwg.mxu0
      %v5654 = vadd.f32 %v5561, %v5645
      %v5655 = vadd.f32 %v5562, %v5647
      %v5656 = vadd.f32 %v5563, %v5650
      %v5657 = vadd.f32 %v5564, %v5652
      %v5658 = vld [vmem:[#allocation2 + $0x8e] sm:$0xff]
      %v5659 = vld [vmem:[#allocation2 + $0x96] sm:$0xff]
      %v5660 = vld [vmem:[#allocation2 + $0x9e] sm:$0xff]
      %v5661 = vld [vmem:[#allocation2 + $0xa6] sm:$0xf]
      %v5662 = vpack.c.bf16 %v5659, %v5658
      %v5663 = vpack.c.bf16 %v5661, %v5660
      %v5664 = vld [vmem:[%s3 + $0x200] sm:$0xf]
      %v5665 = vld [vmem:[%s3 + $0x204] sm:$0xf]
      %v5666 = vld [vmem:[%s3 + $0x208] sm:$0xf]
      %v5667 = vld [vmem:[%s3 + $0x20c] sm:$0xf]
      %v5668 = vld [vmem:[%s3 + $0x210] sm:$0xf]
      %v5669 = vld [vmem:[%s3 + $0x214] sm:$0xf]
      %v5670 = vld [vmem:[%s3 + $0x218] sm:$0xf]
      %v5671 = vld [vmem:[%s3 + $0x21c] sm:$0xf]
      %v5672 = vld [vmem:[%s3 + $0x220] sm:$0xf]
      %v5673 = vld [vmem:[%s3 + $0x224] sm:$0xf]
      %v5674 = vld [vmem:[%s3 + $0x228] sm:$0xf]
      %v5675 = vld [vmem:[%s3 + $0x22c] sm:$0xf]
      %v5676 = vld [vmem:[%s3 + $0x230] sm:$0xf]
      %v5677 = vld [vmem:[%s3 + $0x234] sm:$0xf]
      %v5678 = vld [vmem:[%s3 + $0x238] sm:$0xf]
      %v5679 = vld [vmem:[%s3 + $0x23c] sm:$0xf]
      %v5696 = vunpack.c.l.b16 %v5664
      %v5697 = vunpack.c.l.b16 %v5665
      %v5698 = vunpack.c.l.b16 %v5666
      %v5699 = vunpack.c.l.b16 %v5667
      %v5700 = vunpack.c.l.b16 %v5668
      %v5701 = vunpack.c.l.b16 %v5669
      %v5702 = vunpack.c.l.b16 %v5670
      %v5703 = vunpack.c.l.b16 %v5671
      %v5704 = vunpack.c.l.b16 %v5672
      %v5705 = vunpack.c.l.b16 %v5673
      %v5706 = vunpack.c.l.b16 %v5674
      %v5707 = vunpack.c.l.b16 %v5675
      %v5708 = vunpack.c.l.b16 %v5676
      %v5709 = vunpack.c.l.b16 %v5677
      %v5710 = vunpack.c.l.b16 %v5678
      %v5711 = vunpack.c.l.b16 %v5679
      %v5712 = vpack.c.b16 %v5697, %v5696
      %v5713 = vpack.c.b16 %v5699, %v5698
      %v5714 = vpack.c.b16 %v5701, %v5700
      %v5715 = vpack.c.b16 %v5703, %v5702
      %v5716 = vpack.c.b16 %v5705, %v5704
      %v5717 = vpack.c.b16 %v5707, %v5706
      %v5718 = vpack.c.b16 %v5709, %v5708
      %v5719 = vpack.c.b16 %v5711, %v5710
      %5728 = vmatpush.bf16.msra.mxu0 %v5719
      %5729 = vmatpush.bf16.msra.mxu0 %v5718
      %5730 = vmatpush.bf16.msra.mxu0 %v5717
      %5731 = vmatpush.bf16.msra.mxu0 %v5716
      %5732 = vmatpush.bf16.msra.mxu0 %v5715
      %5733 = vmatpush.bf16.msra.mxu0 %v5714
      %5734 = vmatpush.bf16.msra.mxu0 %v5713
      %5735 = vmatpush.bf16.msra.mxu0 %v5712
      %5736 = vmatmul.bf16.gmra.mxu0 %v5662
      %v5737 = vpop.f32.mrf.mxu0
      %v5738 = vadd.f32 0.0, %v5737
      %v5739 = vpop.f32.mrf.mxu0
      %v5740 = vadd.f32 0.0, %v5739
      %5741 = vmatmul.bf16.gmra.mxu0 %v5663
      %v5742 = vpop.f32.mrf.mxu0
      %v5743 = vadd.f32 0.0, %v5742
      %v5744 = vpop.f32.mrf.mxu0
      %v5745 = vadd.f32 0.0, %v5744
      %5746 = vdwg.mxu0
      %v5747 = vadd.f32 %v5654, %v5738
      %v5748 = vadd.f32 %v5655, %v5740
      %v5749 = vadd.f32 %v5656, %v5743
      %v5750 = vadd.f32 %v5657, %v5745
      %5751 = vst [vmem:[#allocation3] sm:$0xff] %v5747
      %5752 = vst [vmem:[#allocation3 + $0x8] sm:$0xff] %v5748
      %5753 = vst [vmem:[#allocation3 + $0x10] sm:$0xff] %v5749
      %5754 = vst [vmem:[#allocation3 + $0x18] sm:$0xf] %v5750
      %v5755 = vld [vmem:[#allocation3] ss:$2 sm:$0x3f]
      %v5756 = vld [vmem:[%s321] ss:$2 sm:$0x3f]
      %v5757 = vmax.f32 %v5755, %v5756
      %v5758 = vld [vmem:[%s2380] ss:$2 sm:$0x3f]
      %v5759 = vld [vmem:[%s2382] ss:$2 sm:$0x3f]
      %v5760 = vmax.f32 %v5758, %v5759
      %v5761 = vmax.f32 %v5757, %v5760
      %v5762 = vadd.f32 %v5761, %v2387
      %v5763 = vmax.f32 %v5762, 0.0
      %5764 = vst.msk [vmem:[%s224 + $0x18] sm:$0x3f] %vm2391, %v5763
      %v5765 = vld [vmem:[#allocation2 + $0x8c] sm:$0xff]
      %v5766 = vld [vmem:[#allocation2 + $0x94] sm:$0xff]
      %v5767 = vld [vmem:[#allocation2 + $0x9c] sm:$0xff]
      %v5768 = vld [vmem:[#allocation2 + $0xa4] sm:$0xf]
      %v5769 = vpack.c.bf16 %v5766, %v5765
      %v5770 = vpack.c.bf16 %v5768, %v5767
      %v5771 = vld [vmem:[%s3] sm:$0xf]
      %v5772 = vld [vmem:[%s3 + $0x4] sm:$0xf]
      %v5773 = vld [vmem:[%s3 + $0x8] sm:$0xf]
      %v5774 = vld [vmem:[%s3 + $0xc] sm:$0xf]
      %v5775 = vld [vmem:[%s3 + $0x10] sm:$0xf]
      %v5776 = vld [vmem:[%s3 + $0x14] sm:$0xf]
      %v5777 = vld [vmem:[%s3 + $0x18] sm:$0xf]
      %v5778 = vld [vmem:[%s3 + $0x1c] sm:$0xf]
      %v5779 = vld [vmem:[%s3 + $0x20] sm:$0xf]
      %v5780 = vld [vmem:[%s3 + $0x24] sm:$0xf]
      %v5781 = vld [vmem:[%s3 + $0x28] sm:$0xf]
      %v5782 = vld [vmem:[%s3 + $0x2c] sm:$0xf]
      %v5783 = vld [vmem:[%s3 + $0x30] sm:$0xf]
      %v5784 = vld [vmem:[%s3 + $0x34] sm:$0xf]
      %v5785 = vld [vmem:[%s3 + $0x38] sm:$0xf]
      %v5786 = vld [vmem:[%s3 + $0x3c] sm:$0xf]
      %v5787 = vld [vmem:[#allocation2 + $0x8d] sm:$0xff]
      %v5788 = vld [vmem:[#allocation2 + $0x95] sm:$0xff]
      %v5789 = vld [vmem:[#allocation2 + $0x9d] sm:$0xff]
      %v5790 = vld [vmem:[#allocation2 + $0xa5] sm:$0xf]
      %v5791 = vpack.c.bf16 %v5788, %v5787
      %v5792 = vpack.c.bf16 %v5790, %v5789
      %v5793 = vld [vmem:[%s3 + $0x40] sm:$0xf]
      %v5794 = vld [vmem:[%s3 + $0x44] sm:$0xf]
      %v5795 = vld [vmem:[%s3 + $0x48] sm:$0xf]
      %v5796 = vld [vmem:[%s3 + $0x4c] sm:$0xf]
      %v5797 = vld [vmem:[%s3 + $0x50] sm:$0xf]
      %v5798 = vld [vmem:[%s3 + $0x54] sm:$0xf]
      %v5799 = vld [vmem:[%s3 + $0x58] sm:$0xf]
      %v5800 = vld [vmem:[%s3 + $0x5c] sm:$0xf]
      %v5801 = vld [vmem:[%s3 + $0x60] sm:$0xf]
      %v5802 = vld [vmem:[%s3 + $0x64] sm:$0xf]
      %v5803 = vld [vmem:[%s3 + $0x68] sm:$0xf]
      %v5804 = vld [vmem:[%s3 + $0x6c] sm:$0xf]
      %v5805 = vld [vmem:[%s3 + $0x70] sm:$0xf]
      %v5806 = vld [vmem:[%s3 + $0x74] sm:$0xf]
      %v5807 = vld [vmem:[%s3 + $0x78] sm:$0xf]
      %v5808 = vld [vmem:[%s3 + $0x7c] sm:$0xf]
      %v5825 = vunpack.c.l.b16 %v5793
      %v5826 = vunpack.c.l.b16 %v5794
      %v5827 = vunpack.c.l.b16 %v5795
      %v5828 = vunpack.c.l.b16 %v5796
      %v5829 = vunpack.c.l.b16 %v5797
      %v5830 = vunpack.c.l.b16 %v5798
      %v5831 = vunpack.c.l.b16 %v5799
      %v5832 = vunpack.c.l.b16 %v5800
      %v5833 = vunpack.c.l.b16 %v5801
      %v5834 = vunpack.c.l.b16 %v5802
      %v5835 = vunpack.c.l.b16 %v5803
      %v5836 = vunpack.c.l.b16 %v5804
      %v5837 = vunpack.c.l.b16 %v5805
      %v5838 = vunpack.c.l.b16 %v5806
      %v5839 = vunpack.c.l.b16 %v5807
      %v5840 = vunpack.c.l.b16 %v5808
      %v5841 = vpack.c.b16 %v5826, %v5825
      %v5842 = vpack.c.b16 %v5828, %v5827
      %v5843 = vpack.c.b16 %v5830, %v5829
      %v5844 = vpack.c.b16 %v5832, %v5831
      %v5845 = vpack.c.b16 %v5834, %v5833
      %v5846 = vpack.c.b16 %v5836, %v5835
      %v5847 = vpack.c.b16 %v5838, %v5837
      %v5848 = vpack.c.b16 %v5840, %v5839
      %5857 = vmatpush.bf16.msra.mxu0 %v5848
      %5858 = vmatpush.bf16.msra.mxu0 %v5847
      %5859 = vmatpush.bf16.msra.mxu0 %v5846
      %5860 = vmatpush.bf16.msra.mxu0 %v5845
      %5861 = vmatpush.bf16.msra.mxu0 %v5844
      %5862 = vmatpush.bf16.msra.mxu0 %v5843
      %5863 = vmatpush.bf16.msra.mxu0 %v5842
      %5864 = vmatpush.bf16.msra.mxu0 %v5841
      %5865 = vmatmul.bf16.gmra.mxu0 %v5791
      %v5866 = vpop.f32.mrf.mxu0
      %v5867 = vadd.f32 0.0, %v5866
      %v5868 = vpop.f32.mrf.mxu0
      %v5869 = vadd.f32 0.0, %v5868
      %5870 = vmatmul.bf16.gmra.mxu0 %v5792
      %v5871 = vpop.f32.mrf.mxu0
      %v5872 = vadd.f32 0.0, %v5871
      %v5873 = vpop.f32.mrf.mxu0
      %v5874 = vadd.f32 0.0, %v5873
      %5875 = vdwg.mxu0
      %v5892 = vunpack.c.l.b16 %v5771
      %v5893 = vunpack.c.l.b16 %v5772
      %v5894 = vunpack.c.l.b16 %v5773
      %v5895 = vunpack.c.l.b16 %v5774
      %v5896 = vunpack.c.l.b16 %v5775
      %v5897 = vunpack.c.l.b16 %v5776
      %v5898 = vunpack.c.l.b16 %v5777
      %v5899 = vunpack.c.l.b16 %v5778
      %v5900 = vunpack.c.l.b16 %v5779
      %v5901 = vunpack.c.l.b16 %v5780
      %v5902 = vunpack.c.l.b16 %v5781
      %v5903 = vunpack.c.l.b16 %v5782
      %v5904 = vunpack.c.l.b16 %v5783
      %v5905 = vunpack.c.l.b16 %v5784
      %v5906 = vunpack.c.l.b16 %v5785
      %v5907 = vunpack.c.l.b16 %v5786
      %v5908 = vpack.c.b16 %v5893, %v5892
      %v5909 = vpack.c.b16 %v5895, %v5894
      %v5910 = vpack.c.b16 %v5897, %v5896
      %v5911 = vpack.c.b16 %v5899, %v5898
      %v5912 = vpack.c.b16 %v5901, %v5900
      %v5913 = vpack.c.b16 %v5903, %v5902
      %v5914 = vpack.c.b16 %v5905, %v5904
      %v5915 = vpack.c.b16 %v5907, %v5906
      %5924 = vmatpush.bf16.msra.mxu0 %v5915
      %5925 = vmatpush.bf16.msra.mxu0 %v5914
      %5926 = vmatpush.bf16.msra.mxu0 %v5913
      %5927 = vmatpush.bf16.msra.mxu0 %v5912
      %5928 = vmatpush.bf16.msra.mxu0 %v5911
      %5929 = vmatpush.bf16.msra.mxu0 %v5910
      %5930 = vmatpush.bf16.msra.mxu0 %v5909
      %5931 = vmatpush.bf16.msra.mxu0 %v5908
      %5932 = vmatmul.bf16.gmra.mxu0 %v5769
      %v5933 = vpop.f32.mrf.mxu0
      %v5934 = vadd.f32 %v5867, %v5933
      %v5935 = vpop.f32.mrf.mxu0
      %v5936 = vadd.f32 %v5869, %v5935
      %5937 = vmatmul.bf16.gmra.mxu0 %v5770
      %v5938 = vpop.f32.mrf.mxu0
      %v5939 = vadd.f32 %v5872, %v5938
      %v5940 = vpop.f32.mrf.mxu0
      %v5941 = vadd.f32 %v5874, %v5940
      %5942 = vdwg.mxu0
      %v5943 = vld [vmem:[#allocation2 + $0x8e] sm:$0xff]
      %v5944 = vld [vmem:[#allocation2 + $0x96] sm:$0xff]
      %v5945 = vld [vmem:[#allocation2 + $0x9e] sm:$0xff]
      %v5946 = vld [vmem:[#allocation2 + $0xa6] sm:$0xf]
      %v5947 = vpack.c.bf16 %v5944, %v5943
      %v5948 = vpack.c.bf16 %v5946, %v5945
      %v5949 = vld [vmem:[%s3 + $0x80] sm:$0xf]
      %v5950 = vld [vmem:[%s3 + $0x84] sm:$0xf]
      %v5951 = vld [vmem:[%s3 + $0x88] sm:$0xf]
      %v5952 = vld [vmem:[%s3 + $0x8c] sm:$0xf]
      %v5953 = vld [vmem:[%s3 + $0x90] sm:$0xf]
      %v5954 = vld [vmem:[%s3 + $0x94] sm:$0xf]
      %v5955 = vld [vmem:[%s3 + $0x98] sm:$0xf]
      %v5956 = vld [vmem:[%s3 + $0x9c] sm:$0xf]
      %v5957 = vld [vmem:[%s3 + $0xa0] sm:$0xf]
      %v5958 = vld [vmem:[%s3 + $0xa4] sm:$0xf]
      %v5959 = vld [vmem:[%s3 + $0xa8] sm:$0xf]
      %v5960 = vld [vmem:[%s3 + $0xac] sm:$0xf]
      %v5961 = vld [vmem:[%s3 + $0xb0] sm:$0xf]
      %v5962 = vld [vmem:[%s3 + $0xb4] sm:$0xf]
      %v5963 = vld [vmem:[%s3 + $0xb8] sm:$0xf]
      %v5964 = vld [vmem:[%s3 + $0xbc] sm:$0xf]
      %v5981 = vunpack.c.l.b16 %v5949
      %v5982 = vunpack.c.l.b16 %v5950
      %v5983 = vunpack.c.l.b16 %v5951
      %v5984 = vunpack.c.l.b16 %v5952
      %v5985 = vunpack.c.l.b16 %v5953
      %v5986 = vunpack.c.l.b16 %v5954
      %v5987 = vunpack.c.l.b16 %v5955
      %v5988 = vunpack.c.l.b16 %v5956
      %v5989 = vunpack.c.l.b16 %v5957
      %v5990 = vunpack.c.l.b16 %v5958
      %v5991 = vunpack.c.l.b16 %v5959
      %v5992 = vunpack.c.l.b16 %v5960
      %v5993 = vunpack.c.l.b16 %v5961
      %v5994 = vunpack.c.l.b16 %v5962
      %v5995 = vunpack.c.l.b16 %v5963
      %v5996 = vunpack.c.l.b16 %v5964
      %v5997 = vpack.c.b16 %v5982, %v5981
      %v5998 = vpack.c.b16 %v5984, %v5983
      %v5999 = vpack.c.b16 %v5986, %v5985
      %v6000 = vpack.c.b16 %v5988, %v5987
      %v6001 = vpack.c.b16 %v5990, %v5989
      %v6002 = vpack.c.b16 %v5992, %v5991
      %v6003 = vpack.c.b16 %v5994, %v5993
      %v6004 = vpack.c.b16 %v5996, %v5995
      %6013 = vmatpush.bf16.msra.mxu0 %v6004
      %6014 = vmatpush.bf16.msra.mxu0 %v6003
      %6015 = vmatpush.bf16.msra.mxu0 %v6002
      %6016 = vmatpush.bf16.msra.mxu0 %v6001
      %6017 = vmatpush.bf16.msra.mxu0 %v6000
      %6018 = vmatpush.bf16.msra.mxu0 %v5999
      %6019 = vmatpush.bf16.msra.mxu0 %v5998
      %6020 = vmatpush.bf16.msra.mxu0 %v5997
      %6021 = vmatmul.bf16.gmra.mxu0 %v5947
      %v6022 = vpop.f32.mrf.mxu0
      %v6023 = vadd.f32 0.0, %v6022
      %v6024 = vpop.f32.mrf.mxu0
      %v6025 = vadd.f32 0.0, %v6024
      %6026 = vmatmul.bf16.gmra.mxu0 %v5948
      %v6027 = vpop.f32.mrf.mxu0
      %v6028 = vadd.f32 0.0, %v6027
      %v6029 = vpop.f32.mrf.mxu0
      %v6030 = vadd.f32 0.0, %v6029
      %6031 = vdwg.mxu0
      %v6032 = vadd.f32 %v5934, %v6023
      %v6033 = vadd.f32 %v5936, %v6025
      %v6034 = vadd.f32 %v5939, %v6028
      %v6035 = vadd.f32 %v5941, %v6030
      %v6036 = vld [vmem:[#allocation2 + $0x9a] sm:$0xff]
      %v6037 = vld [vmem:[#allocation2 + $0xa2] sm:$0xff]
      %v6038 = vld [vmem:[#allocation2 + $0xaa] sm:$0xff]
      %v6039 = vld [vmem:[#allocation2 + $0xb2] sm:$0xf]
      %v6040 = vpack.c.bf16 %v6037, %v6036
      %v6041 = vpack.c.bf16 %v6039, %v6038
      %v6042 = vld [vmem:[%s3 + $0xc0] sm:$0xf]
      %v6043 = vld [vmem:[%s3 + $0xc4] sm:$0xf]
      %v6044 = vld [vmem:[%s3 + $0xc8] sm:$0xf]
      %v6045 = vld [vmem:[%s3 + $0xcc] sm:$0xf]
      %v6046 = vld [vmem:[%s3 + $0xd0] sm:$0xf]
      %v6047 = vld [vmem:[%s3 + $0xd4] sm:$0xf]
      %v6048 = vld [vmem:[%s3 + $0xd8] sm:$0xf]
      %v6049 = vld [vmem:[%s3 + $0xdc] sm:$0xf]
      %v6050 = vld [vmem:[%s3 + $0xe0] sm:$0xf]
      %v6051 = vld [vmem:[%s3 + $0xe4] sm:$0xf]
      %v6052 = vld [vmem:[%s3 + $0xe8] sm:$0xf]
      %v6053 = vld [vmem:[%s3 + $0xec] sm:$0xf]
      %v6054 = vld [vmem:[%s3 + $0xf0] sm:$0xf]
      %v6055 = vld [vmem:[%s3 + $0xf4] sm:$0xf]
      %v6056 = vld [vmem:[%s3 + $0xf8] sm:$0xf]
      %v6057 = vld [vmem:[%s3 + $0xfc] sm:$0xf]
      %v6074 = vunpack.c.l.b16 %v6042
      %v6075 = vunpack.c.l.b16 %v6043
      %v6076 = vunpack.c.l.b16 %v6044
      %v6077 = vunpack.c.l.b16 %v6045
      %v6078 = vunpack.c.l.b16 %v6046
      %v6079 = vunpack.c.l.b16 %v6047
      %v6080 = vunpack.c.l.b16 %v6048
      %v6081 = vunpack.c.l.b16 %v6049
      %v6082 = vunpack.c.l.b16 %v6050
      %v6083 = vunpack.c.l.b16 %v6051
      %v6084 = vunpack.c.l.b16 %v6052
      %v6085 = vunpack.c.l.b16 %v6053
      %v6086 = vunpack.c.l.b16 %v6054
      %v6087 = vunpack.c.l.b16 %v6055
      %v6088 = vunpack.c.l.b16 %v6056
      %v6089 = vunpack.c.l.b16 %v6057
      %v6090 = vpack.c.b16 %v6075, %v6074
      %v6091 = vpack.c.b16 %v6077, %v6076
      %v6092 = vpack.c.b16 %v6079, %v6078
      %v6093 = vpack.c.b16 %v6081, %v6080
      %v6094 = vpack.c.b16 %v6083, %v6082
      %v6095 = vpack.c.b16 %v6085, %v6084
      %v6096 = vpack.c.b16 %v6087, %v6086
      %v6097 = vpack.c.b16 %v6089, %v6088
      %6106 = vmatpush.bf16.msra.mxu0 %v6097
      %6107 = vmatpush.bf16.msra.mxu0 %v6096
      %6108 = vmatpush.bf16.msra.mxu0 %v6095
      %6109 = vmatpush.bf16.msra.mxu0 %v6094
      %6110 = vmatpush.bf16.msra.mxu0 %v6093
      %6111 = vmatpush.bf16.msra.mxu0 %v6092
      %6112 = vmatpush.bf16.msra.mxu0 %v6091
      %6113 = vmatpush.bf16.msra.mxu0 %v6090
      %6114 = vmatmul.bf16.gmra.mxu0 %v6040
      %v6115 = vpop.f32.mrf.mxu0
      %v6116 = vadd.f32 0.0, %v6115
      %v6117 = vpop.f32.mrf.mxu0
      %v6118 = vadd.f32 0.0, %v6117
      %6119 = vmatmul.bf16.gmra.mxu0 %v6041
      %v6120 = vpop.f32.mrf.mxu0
      %v6121 = vadd.f32 0.0, %v6120
      %v6122 = vpop.f32.mrf.mxu0
      %v6123 = vadd.f32 0.0, %v6122
      %6124 = vdwg.mxu0
      %v6125 = vadd.f32 %v6032, %v6116
      %v6126 = vadd.f32 %v6033, %v6118
      %v6127 = vadd.f32 %v6034, %v6121
      %v6128 = vadd.f32 %v6035, %v6123
      %v6129 = vld [vmem:[#allocation2 + $0x9b] sm:$0xff]
      %v6130 = vld [vmem:[#allocation2 + $0xa3] sm:$0xff]
      %v6131 = vld [vmem:[#allocation2 + $0xab] sm:$0xff]
      %v6132 = vld [vmem:[#allocation2 + $0xb3] sm:$0xf]
      %v6133 = vpack.c.bf16 %v6130, %v6129
      %v6134 = vpack.c.bf16 %v6132, %v6131
      %v6135 = vld [vmem:[%s3 + $0x100] sm:$0xf]
      %v6136 = vld [vmem:[%s3 + $0x104] sm:$0xf]
      %v6137 = vld [vmem:[%s3 + $0x108] sm:$0xf]
      %v6138 = vld [vmem:[%s3 + $0x10c] sm:$0xf]
      %v6139 = vld [vmem:[%s3 + $0x110] sm:$0xf]
      %v6140 = vld [vmem:[%s3 + $0x114] sm:$0xf]
      %v6141 = vld [vmem:[%s3 + $0x118] sm:$0xf]
      %v6142 = vld [vmem:[%s3 + $0x11c] sm:$0xf]
      %v6143 = vld [vmem:[%s3 + $0x120] sm:$0xf]
      %v6144 = vld [vmem:[%s3 + $0x124] sm:$0xf]
      %v6145 = vld [vmem:[%s3 + $0x128] sm:$0xf]
      %v6146 = vld [vmem:[%s3 + $0x12c] sm:$0xf]
      %v6147 = vld [vmem:[%s3 + $0x130] sm:$0xf]
      %v6148 = vld [vmem:[%s3 + $0x134] sm:$0xf]
      %v6149 = vld [vmem:[%s3 + $0x138] sm:$0xf]
      %v6150 = vld [vmem:[%s3 + $0x13c] sm:$0xf]
      %v6167 = vunpack.c.l.b16 %v6135
      %v6168 = vunpack.c.l.b16 %v6136
      %v6169 = vunpack.c.l.b16 %v6137
      %v6170 = vunpack.c.l.b16 %v6138
      %v6171 = vunpack.c.l.b16 %v6139
      %v6172 = vunpack.c.l.b16 %v6140
      %v6173 = vunpack.c.l.b16 %v6141
      %v6174 = vunpack.c.l.b16 %v6142
      %v6175 = vunpack.c.l.b16 %v6143
      %v6176 = vunpack.c.l.b16 %v6144
      %v6177 = vunpack.c.l.b16 %v6145
      %v6178 = vunpack.c.l.b16 %v6146
      %v6179 = vunpack.c.l.b16 %v6147
      %v6180 = vunpack.c.l.b16 %v6148
      %v6181 = vunpack.c.l.b16 %v6149
      %v6182 = vunpack.c.l.b16 %v6150
      %v6183 = vpack.c.b16 %v6168, %v6167
      %v6184 = vpack.c.b16 %v6170, %v6169
      %v6185 = vpack.c.b16 %v6172, %v6171
      %v6186 = vpack.c.b16 %v6174, %v6173
      %v6187 = vpack.c.b16 %v6176, %v6175
      %v6188 = vpack.c.b16 %v6178, %v6177
      %v6189 = vpack.c.b16 %v6180, %v6179
      %v6190 = vpack.c.b16 %v6182, %v6181
      %6199 = vmatpush.bf16.msra.mxu0 %v6190
      %6200 = vmatpush.bf16.msra.mxu0 %v6189
      %6201 = vmatpush.bf16.msra.mxu0 %v6188
      %6202 = vmatpush.bf16.msra.mxu0 %v6187
      %6203 = vmatpush.bf16.msra.mxu0 %v6186
      %6204 = vmatpush.bf16.msra.mxu0 %v6185
      %6205 = vmatpush.bf16.msra.mxu0 %v6184
      %6206 = vmatpush.bf16.msra.mxu0 %v6183
      %6207 = vmatmul.bf16.gmra.mxu0 %v6133
      %v6208 = vpop.f32.mrf.mxu0
      %v6209 = vadd.f32 0.0, %v6208
      %v6210 = vpop.f32.mrf.mxu0
      %v6211 = vadd.f32 0.0, %v6210
      %6212 = vmatmul.bf16.gmra.mxu0 %v6134
      %v6213 = vpop.f32.mrf.mxu0
      %v6214 = vadd.f32 0.0, %v6213
      %v6215 = vpop.f32.mrf.mxu0
      %v6216 = vadd.f32 0.0, %v6215
      %6217 = vdwg.mxu0
      %v6218 = vadd.f32 %v6125, %v6209
      %v6219 = vadd.f32 %v6126, %v6211
      %v6220 = vadd.f32 %v6127, %v6214
      %v6221 = vadd.f32 %v6128, %v6216
      %v6222 = vld [vmem:[#allocation2 + $0x9c] sm:$0xff]
      %v6223 = vld [vmem:[#allocation2 + $0xa4] sm:$0xff]
      %v6224 = vld [vmem:[#allocation2 + $0xac] sm:$0xff]
      %v6225 = vld [vmem:[#allocation2 + $0xb4] sm:$0xf]
      %v6226 = vpack.c.bf16 %v6223, %v6222
      %v6227 = vpack.c.bf16 %v6225, %v6224
      %v6228 = vld [vmem:[%s3 + $0x140] sm:$0xf]
      %v6229 = vld [vmem:[%s3 + $0x144] sm:$0xf]
      %v6230 = vld [vmem:[%s3 + $0x148] sm:$0xf]
      %v6231 = vld [vmem:[%s3 + $0x14c] sm:$0xf]
      %v6232 = vld [vmem:[%s3 + $0x150] sm:$0xf]
      %v6233 = vld [vmem:[%s3 + $0x154] sm:$0xf]
      %v6234 = vld [vmem:[%s3 + $0x158] sm:$0xf]
      %v6235 = vld [vmem:[%s3 + $0x15c] sm:$0xf]
      %v6236 = vld [vmem:[%s3 + $0x160] sm:$0xf]
      %v6237 = vld [vmem:[%s3 + $0x164] sm:$0xf]
      %v6238 = vld [vmem:[%s3 + $0x168] sm:$0xf]
      %v6239 = vld [vmem:[%s3 + $0x16c] sm:$0xf]
      %v6240 = vld [vmem:[%s3 + $0x170] sm:$0xf]
      %v6241 = vld [vmem:[%s3 + $0x174] sm:$0xf]
      %v6242 = vld [vmem:[%s3 + $0x178] sm:$0xf]
      %v6243 = vld [vmem:[%s3 + $0x17c] sm:$0xf]
      %v6260 = vunpack.c.l.b16 %v6228
      %v6261 = vunpack.c.l.b16 %v6229
      %v6262 = vunpack.c.l.b16 %v6230
      %v6263 = vunpack.c.l.b16 %v6231
      %v6264 = vunpack.c.l.b16 %v6232
      %v6265 = vunpack.c.l.b16 %v6233
      %v6266 = vunpack.c.l.b16 %v6234
      %v6267 = vunpack.c.l.b16 %v6235
      %v6268 = vunpack.c.l.b16 %v6236
      %v6269 = vunpack.c.l.b16 %v6237
      %v6270 = vunpack.c.l.b16 %v6238
      %v6271 = vunpack.c.l.b16 %v6239
      %v6272 = vunpack.c.l.b16 %v6240
      %v6273 = vunpack.c.l.b16 %v6241
      %v6274 = vunpack.c.l.b16 %v6242
      %v6275 = vunpack.c.l.b16 %v6243
      %v6276 = vpack.c.b16 %v6261, %v6260
      %v6277 = vpack.c.b16 %v6263, %v6262
      %v6278 = vpack.c.b16 %v6265, %v6264
      %v6279 = vpack.c.b16 %v6267, %v6266
      %v6280 = vpack.c.b16 %v6269, %v6268
      %v6281 = vpack.c.b16 %v6271, %v6270
      %v6282 = vpack.c.b16 %v6273, %v6272
      %v6283 = vpack.c.b16 %v6275, %v6274
      %6292 = vmatpush.bf16.msra.mxu0 %v6283
      %6293 = vmatpush.bf16.msra.mxu0 %v6282
      %6294 = vmatpush.bf16.msra.mxu0 %v6281
      %6295 = vmatpush.bf16.msra.mxu0 %v6280
      %6296 = vmatpush.bf16.msra.mxu0 %v6279
      %6297 = vmatpush.bf16.msra.mxu0 %v6278
      %6298 = vmatpush.bf16.msra.mxu0 %v6277
      %6299 = vmatpush.bf16.msra.mxu0 %v6276
      %6300 = vmatmul.bf16.gmra.mxu0 %v6226
      %v6301 = vpop.f32.mrf.mxu0
      %v6302 = vadd.f32 0.0, %v6301
      %v6303 = vpop.f32.mrf.mxu0
      %v6304 = vadd.f32 0.0, %v6303
      %6305 = vmatmul.bf16.gmra.mxu0 %v6227
      %v6306 = vpop.f32.mrf.mxu0
      %v6307 = vadd.f32 0.0, %v6306
      %v6308 = vpop.f32.mrf.mxu0
      %v6309 = vadd.f32 0.0, %v6308
      %6310 = vdwg.mxu0
      %v6311 = vadd.f32 %v6218, %v6302
      %v6312 = vadd.f32 %v6219, %v6304
      %v6313 = vadd.f32 %v6220, %v6307
      %v6314 = vadd.f32 %v6221, %v6309
      %v6315 = vld [vmem:[#allocation2 + $0xa8] sm:$0xff]
      %v6316 = vld [vmem:[#allocation2 + $0xb0] sm:$0xff]
      %v6317 = vld [vmem:[#allocation2 + $0xb8] sm:$0xff]
      %v6318 = vld [vmem:[#allocation2 + $0xc0] sm:$0xf]
      %v6319 = vpack.c.bf16 %v6316, %v6315
      %v6320 = vpack.c.bf16 %v6318, %v6317
      %v6321 = vld [vmem:[%s3 + $0x180] sm:$0xf]
      %v6322 = vld [vmem:[%s3 + $0x184] sm:$0xf]
      %v6323 = vld [vmem:[%s3 + $0x188] sm:$0xf]
      %v6324 = vld [vmem:[%s3 + $0x18c] sm:$0xf]
      %v6325 = vld [vmem:[%s3 + $0x190] sm:$0xf]
      %v6326 = vld [vmem:[%s3 + $0x194] sm:$0xf]
      %v6327 = vld [vmem:[%s3 + $0x198] sm:$0xf]
      %v6328 = vld [vmem:[%s3 + $0x19c] sm:$0xf]
      %v6329 = vld [vmem:[%s3 + $0x1a0] sm:$0xf]
      %v6330 = vld [vmem:[%s3 + $0x1a4] sm:$0xf]
      %v6331 = vld [vmem:[%s3 + $0x1a8] sm:$0xf]
      %v6332 = vld [vmem:[%s3 + $0x1ac] sm:$0xf]
      %v6333 = vld [vmem:[%s3 + $0x1b0] sm:$0xf]
      %v6334 = vld [vmem:[%s3 + $0x1b4] sm:$0xf]
      %v6335 = vld [vmem:[%s3 + $0x1b8] sm:$0xf]
      %v6336 = vld [vmem:[%s3 + $0x1bc] sm:$0xf]
      %v6353 = vunpack.c.l.b16 %v6321
      %v6354 = vunpack.c.l.b16 %v6322
      %v6355 = vunpack.c.l.b16 %v6323
      %v6356 = vunpack.c.l.b16 %v6324
      %v6357 = vunpack.c.l.b16 %v6325
      %v6358 = vunpack.c.l.b16 %v6326
      %v6359 = vunpack.c.l.b16 %v6327
      %v6360 = vunpack.c.l.b16 %v6328
      %v6361 = vunpack.c.l.b16 %v6329
      %v6362 = vunpack.c.l.b16 %v6330
      %v6363 = vunpack.c.l.b16 %v6331
      %v6364 = vunpack.c.l.b16 %v6332
      %v6365 = vunpack.c.l.b16 %v6333
      %v6366 = vunpack.c.l.b16 %v6334
      %v6367 = vunpack.c.l.b16 %v6335
      %v6368 = vunpack.c.l.b16 %v6336
      %v6369 = vpack.c.b16 %v6354, %v6353
      %v6370 = vpack.c.b16 %v6356, %v6355
      %v6371 = vpack.c.b16 %v6358, %v6357
      %v6372 = vpack.c.b16 %v6360, %v6359
      %v6373 = vpack.c.b16 %v6362, %v6361
      %v6374 = vpack.c.b16 %v6364, %v6363
      %v6375 = vpack.c.b16 %v6366, %v6365
      %v6376 = vpack.c.b16 %v6368, %v6367
      %6385 = vmatpush.bf16.msra.mxu0 %v6376
      %6386 = vmatpush.bf16.msra.mxu0 %v6375
      %6387 = vmatpush.bf16.msra.mxu0 %v6374
      %6388 = vmatpush.bf16.msra.mxu0 %v6373
      %6389 = vmatpush.bf16.msra.mxu0 %v6372
      %6390 = vmatpush.bf16.msra.mxu0 %v6371
      %6391 = vmatpush.bf16.msra.mxu0 %v6370
      %6392 = vmatpush.bf16.msra.mxu0 %v6369
      %6393 = vmatmul.bf16.gmra.mxu0 %v6319
      %v6394 = vpop.f32.mrf.mxu0
      %v6395 = vadd.f32 0.0, %v6394
      %v6396 = vpop.f32.mrf.mxu0
      %v6397 = vadd.f32 0.0, %v6396
      %6398 = vmatmul.bf16.gmra.mxu0 %v6320
      %v6399 = vpop.f32.mrf.mxu0
      %v6400 = vadd.f32 0.0, %v6399
      %v6401 = vpop.f32.mrf.mxu0
      %v6402 = vadd.f32 0.0, %v6401
      %6403 = vdwg.mxu0
      %v6404 = vadd.f32 %v6311, %v6395
      %v6405 = vadd.f32 %v6312, %v6397
      %v6406 = vadd.f32 %v6313, %v6400
      %v6407 = vadd.f32 %v6314, %v6402
      %v6408 = vld [vmem:[#allocation2 + $0xa9] sm:$0xff]
      %v6409 = vld [vmem:[#allocation2 + $0xb1] sm:$0xff]
      %v6410 = vld [vmem:[#allocation2 + $0xb9] sm:$0xff]
      %v6411 = vld [vmem:[#allocation2 + $0xc1] sm:$0xf]
      %v6412 = vpack.c.bf16 %v6409, %v6408
      %v6413 = vpack.c.bf16 %v6411, %v6410
      %v6414 = vld [vmem:[%s3 + $0x1c0] sm:$0xf]
      %v6415 = vld [vmem:[%s3 + $0x1c4] sm:$0xf]
      %v6416 = vld [vmem:[%s3 + $0x1c8] sm:$0xf]
      %v6417 = vld [vmem:[%s3 + $0x1cc] sm:$0xf]
      %v6418 = vld [vmem:[%s3 + $0x1d0] sm:$0xf]
      %v6419 = vld [vmem:[%s3 + $0x1d4] sm:$0xf]
      %v6420 = vld [vmem:[%s3 + $0x1d8] sm:$0xf]
      %v6421 = vld [vmem:[%s3 + $0x1dc] sm:$0xf]
      %v6422 = vld [vmem:[%s3 + $0x1e0] sm:$0xf]
      %v6423 = vld [vmem:[%s3 + $0x1e4] sm:$0xf]
      %v6424 = vld [vmem:[%s3 + $0x1e8] sm:$0xf]
      %v6425 = vld [vmem:[%s3 + $0x1ec] sm:$0xf]
      %v6426 = vld [vmem:[%s3 + $0x1f0] sm:$0xf]
      %v6427 = vld [vmem:[%s3 + $0x1f4] sm:$0xf]
      %v6428 = vld [vmem:[%s3 + $0x1f8] sm:$0xf]
      %v6429 = vld [vmem:[%s3 + $0x1fc] sm:$0xf]
      %v6446 = vunpack.c.l.b16 %v6414
      %v6447 = vunpack.c.l.b16 %v6415
      %v6448 = vunpack.c.l.b16 %v6416
      %v6449 = vunpack.c.l.b16 %v6417
      %v6450 = vunpack.c.l.b16 %v6418
      %v6451 = vunpack.c.l.b16 %v6419
      %v6452 = vunpack.c.l.b16 %v6420
      %v6453 = vunpack.c.l.b16 %v6421
      %v6454 = vunpack.c.l.b16 %v6422
      %v6455 = vunpack.c.l.b16 %v6423
      %v6456 = vunpack.c.l.b16 %v6424
      %v6457 = vunpack.c.l.b16 %v6425
      %v6458 = vunpack.c.l.b16 %v6426
      %v6459 = vunpack.c.l.b16 %v6427
      %v6460 = vunpack.c.l.b16 %v6428
      %v6461 = vunpack.c.l.b16 %v6429
      %v6462 = vpack.c.b16 %v6447, %v6446
      %v6463 = vpack.c.b16 %v6449, %v6448
      %v6464 = vpack.c.b16 %v6451, %v6450
      %v6465 = vpack.c.b16 %v6453, %v6452
      %v6466 = vpack.c.b16 %v6455, %v6454
      %v6467 = vpack.c.b16 %v6457, %v6456
      %v6468 = vpack.c.b16 %v6459, %v6458
      %v6469 = vpack.c.b16 %v6461, %v6460
      %6478 = vmatpush.bf16.msra.mxu0 %v6469
      %6479 = vmatpush.bf16.msra.mxu0 %v6468
      %6480 = vmatpush.bf16.msra.mxu0 %v6467
      %6481 = vmatpush.bf16.msra.mxu0 %v6466
      %6482 = vmatpush.bf16.msra.mxu0 %v6465
      %6483 = vmatpush.bf16.msra.mxu0 %v6464
      %6484 = vmatpush.bf16.msra.mxu0 %v6463
      %6485 = vmatpush.bf16.msra.mxu0 %v6462
      %6486 = vmatmul.bf16.gmra.mxu0 %v6412
      %v6487 = vpop.f32.mrf.mxu0
      %v6488 = vadd.f32 0.0, %v6487
      %v6489 = vpop.f32.mrf.mxu0
      %v6490 = vadd.f32 0.0, %v6489
      %6491 = vmatmul.bf16.gmra.mxu0 %v6413
      %v6492 = vpop.f32.mrf.mxu0
      %v6493 = vadd.f32 0.0, %v6492
      %v6494 = vpop.f32.mrf.mxu0
      %v6495 = vadd.f32 0.0, %v6494
      %6496 = vdwg.mxu0
      %v6497 = vadd.f32 %v6404, %v6488
      %v6498 = vadd.f32 %v6405, %v6490
      %v6499 = vadd.f32 %v6406, %v6493
      %v6500 = vadd.f32 %v6407, %v6495
      %v6501 = vld [vmem:[#allocation2 + $0xaa] sm:$0xff]
      %v6502 = vld [vmem:[#allocation2 + $0xb2] sm:$0xff]
      %v6503 = vld [vmem:[#allocation2 + $0xba] sm:$0xff]
      %v6504 = vld [vmem:[#allocation2 + $0xc2] sm:$0xf]
      %v6505 = vpack.c.bf16 %v6502, %v6501
      %v6506 = vpack.c.bf16 %v6504, %v6503
      %v6507 = vld [vmem:[%s3 + $0x200] sm:$0xf]
      %v6508 = vld [vmem:[%s3 + $0x204] sm:$0xf]
      %v6509 = vld [vmem:[%s3 + $0x208] sm:$0xf]
      %v6510 = vld [vmem:[%s3 + $0x20c] sm:$0xf]
      %v6511 = vld [vmem:[%s3 + $0x210] sm:$0xf]
      %v6512 = vld [vmem:[%s3 + $0x214] sm:$0xf]
      %v6513 = vld [vmem:[%s3 + $0x218] sm:$0xf]
      %v6514 = vld [vmem:[%s3 + $0x21c] sm:$0xf]
      %v6515 = vld [vmem:[%s3 + $0x220] sm:$0xf]
      %v6516 = vld [vmem:[%s3 + $0x224] sm:$0xf]
      %v6517 = vld [vmem:[%s3 + $0x228] sm:$0xf]
      %v6518 = vld [vmem:[%s3 + $0x22c] sm:$0xf]
      %v6519 = vld [vmem:[%s3 + $0x230] sm:$0xf]
      %v6520 = vld [vmem:[%s3 + $0x234] sm:$0xf]
      %v6521 = vld [vmem:[%s3 + $0x238] sm:$0xf]
      %v6522 = vld [vmem:[%s3 + $0x23c] sm:$0xf]
      %v6539 = vunpack.c.l.b16 %v6507
      %v6540 = vunpack.c.l.b16 %v6508
      %v6541 = vunpack.c.l.b16 %v6509
      %v6542 = vunpack.c.l.b16 %v6510
      %v6543 = vunpack.c.l.b16 %v6511
      %v6544 = vunpack.c.l.b16 %v6512
      %v6545 = vunpack.c.l.b16 %v6513
      %v6546 = vunpack.c.l.b16 %v6514
      %v6547 = vunpack.c.l.b16 %v6515
      %v6548 = vunpack.c.l.b16 %v6516
      %v6549 = vunpack.c.l.b16 %v6517
      %v6550 = vunpack.c.l.b16 %v6518
      %v6551 = vunpack.c.l.b16 %v6519
      %v6552 = vunpack.c.l.b16 %v6520
      %v6553 = vunpack.c.l.b16 %v6521
      %v6554 = vunpack.c.l.b16 %v6522
      %v6555 = vpack.c.b16 %v6540, %v6539
      %v6556 = vpack.c.b16 %v6542, %v6541
      %v6557 = vpack.c.b16 %v6544, %v6543
      %v6558 = vpack.c.b16 %v6546, %v6545
      %v6559 = vpack.c.b16 %v6548, %v6547
      %v6560 = vpack.c.b16 %v6550, %v6549
      %v6561 = vpack.c.b16 %v6552, %v6551
      %v6562 = vpack.c.b16 %v6554, %v6553
      %6571 = vmatpush.bf16.msra.mxu0 %v6562
      %6572 = vmatpush.bf16.msra.mxu0 %v6561
      %6573 = vmatpush.bf16.msra.mxu0 %v6560
      %6574 = vmatpush.bf16.msra.mxu0 %v6559
      %6575 = vmatpush.bf16.msra.mxu0 %v6558
      %6576 = vmatpush.bf16.msra.mxu0 %v6557
      %6577 = vmatpush.bf16.msra.mxu0 %v6556
      %6578 = vmatpush.bf16.msra.mxu0 %v6555
      %6579 = vmatmul.bf16.gmra.mxu0 %v6505
      %v6580 = vpop.f32.mrf.mxu0
      %v6581 = vadd.f32 0.0, %v6580
      %v6582 = vpop.f32.mrf.mxu0
      %v6583 = vadd.f32 0.0, %v6582
      %6584 = vmatmul.bf16.gmra.mxu0 %v6506
      %v6585 = vpop.f32.mrf.mxu0
      %v6586 = vadd.f32 0.0, %v6585
      %v6587 = vpop.f32.mrf.mxu0
      %v6588 = vadd.f32 0.0, %v6587
      %6589 = vdwg.mxu0
      %v6590 = vadd.f32 %v6497, %v6581
      %v6591 = vadd.f32 %v6498, %v6583
      %v6592 = vadd.f32 %v6499, %v6586
      %v6593 = vadd.f32 %v6500, %v6588
      %6594 = vst [vmem:[#allocation3] sm:$0xff] %v6590
      %6595 = vst [vmem:[#allocation3 + $0x8] sm:$0xff] %v6591
      %6596 = vst [vmem:[#allocation3 + $0x10] sm:$0xff] %v6592
      %6597 = vst [vmem:[#allocation3 + $0x18] sm:$0xf] %v6593
      %v6598 = vld [vmem:[#allocation3] ss:$2 sm:$0x3f]
      %v6599 = vld [vmem:[%s321] ss:$2 sm:$0x3f]
      %v6600 = vmax.f32 %v6598, %v6599
      %v6601 = vld [vmem:[%s2380] ss:$2 sm:$0x3f]
      %v6602 = vld [vmem:[%s2382] ss:$2 sm:$0x3f]
      %v6603 = vmax.f32 %v6601, %v6602
      %v6604 = vmax.f32 %v6600, %v6603
      %v6605 = vadd.f32 %v6604, %v2387
      %v6606 = vmax.f32 %v6605, 0.0
      %6607 = vst.msk [vmem:[%s224 + $0x1e] sm:$0x3f] %vm2391, %v6606
      %p6608 = scmp.lt.s32.totalorder %s16, 1
      %s6609 = scalar_select %p6608, %s16, 1
      %s6610 = smul.addr %s6609, 5
      %s6611 = smul.addr %s6610, 8
      %s6612 = scalar_lea.vmem %s5, %s6611
      // Predicated region
      $region41: #{cnn_forward.2} parent=39 // pred_check
        %p6613 = pneg %p144
      $region42: #{cnn_forward.2} parent=39 // pred_check_branch
        %6615 = sbr.rel (%p6613) target = $region44
      $region43: #{cnn_forward.2} parent=39 // pred_region
        _
      $region44: #{cnn_forward.2} parent=39 // pred_fallthru
        _
    $region40: #{cnn_forward.2} parent=5 // pred_fallthru
      _
    %p6616 = scmp.le.s32.totalorder 2, %s11
    // Predicated region
    $region45: #{cnn_forward.2} parent=5 // pred_check
      %p6617 = pneg %p6616
    $region46: #{cnn_forward.2} parent=5 // pred_check_branch
      %6619 = sbr.rel (%p6617) target = $region48
    $region47: #{cnn_forward.2} parent=5 // pred_region
      %s6620 = ssub.s32 %s11, 2
      // Predicated region
      $region49: #{cnn_forward.2} parent=47 // pred_check
        %p6621 = pneg %p150
      $region50: #{cnn_forward.2} parent=47 // pred_check_branch
        %6623 = sbr.rel (%p6621) target = $region52
      $region51: #{cnn_forward.2} parent=47 // pred_region
        %p6624 = scmp.lt.s32.totalorder %s17, 1
        %s6625 = scalar_select %p6624, %s17, 1
        %s6626 = smul.addr %s6625, 5
        %s6627 = smul.addr %s6626, 8
        %s6628 = scalar_lea.vmem %s5, %s6627
      $region52: #{cnn_forward.2} parent=47 // pred_fallthru
        _
    $region48: #{cnn_forward.2} parent=5 // pred_fallthru
      _
  $region6: #{cnn_forward.2} parent=0 // loop_footer
    %s15 = sadd.s32 1, %s11
  $region7: #{cnn_forward.2} parent=0 // loop_footer_branch
    %10 = sbr.rel target = $region3
  $region8: #{cnn_forward.2} parent=0 // loop_exit
    _

</llo_original>
